<compile_context>
chip_gen: v6e
topology: v6e:2x2x1
jax: 0.10.0
libtpu: 0.0.40
codegen_flags: <defaults>
</compile_context>

<pallas_src>
import functools

import jax
import jax.numpy as jnp
from jax.experimental import pallas as pl
from jax.experimental.pallas import tpu as pltpu


def _round_up(x, m):
    return (x + m - 1) // m * m


# ----------------------------------------------------------------------------
# Pallas kernel: K-tiled  out = act(X @ W + bias)   (bf16 operands, f32 acc)
# ----------------------------------------------------------------------------
def _mm_kernel(x_ref, w_ref, b_ref, o_ref, acc_ref, *, activation):
    k = pl.program_id(1)

    @pl.when(k == 0)
    def _init():
        acc_ref[...] = jnp.zeros_like(acc_ref)

    acc_ref[...] += jnp.dot(x_ref[...], w_ref[...],
                            preferred_element_type=jnp.float32)

    @pl.when(k == pl.num_programs(1) - 1)
    def _finalize():
        y = acc_ref[...] + b_ref[...]
        if activation == "relu":
            y = jnp.maximum(y, 0.0)
        elif activation == "sigmoid":
            y = jax.nn.sigmoid(y)
        o_ref[...] = y.astype(o_ref.dtype)


def matmul_bias_act(x, w, bias, activation):
    """act((x @ w) + bias). x:[M,K], w:[K,N] (BN scale pre-folded), bias:[N]."""
    M, K = x.shape
    K2, N = w.shape
    assert K == K2

    # ---- M tiling: big tiles, but keep >=2 tiles when possible (v7x 2 TCs) --
    if M >= 1024:
        tile_m = 512
    elif M > 8:
        tile_m = _round_up((M + 1) // 2, 8)
    else:
        tile_m = _round_up(max(M, 1), 8)
    Mp = _round_up(M, tile_m)

    # ---- K tiling: cap tile at 1024 so weight blocks stream through VMEM ----
    nk = -(-K // 1024)
    tile_k = _round_up(-(-K // nk), 128)
    Kp = nk * tile_k

    # ---- lane-dense N (unmasked vst) ----------------------------------------
    Np = _round_up(N, 128)

    xp = jnp.pad(x.astype(jnp.bfloat16), ((0, Mp - M), (0, Kp - K)))
    wp = jnp.pad(w.astype(jnp.bfloat16), ((0, Kp - K), (0, Np - N)))
    bp = jnp.pad(bias.reshape(1, N).astype(jnp.float32), ((0, 0), (0, Np - N)))

    out = pl.pallas_call(
        functools.partial(_mm_kernel, activation=activation),
        out_shape=jax.ShapeDtypeStruct((Mp, Np), jnp.float32),
        grid=(Mp // tile_m, Kp // tile_k),
        in_specs=[
            pl.BlockSpec((tile_m, tile_k), lambda i, k: (i, k)),
            pl.BlockSpec((tile_k, Np), lambda i, k: (k, 0)),
            pl.BlockSpec((1, Np), lambda i, k: (0, 0)),
        ],
        out_specs=pl.BlockSpec((tile_m, Np), lambda i, k: (i, 0)),
        scratch_shapes=[pltpu.VMEM((tile_m, Np), jnp.float32)],
        compiler_params=pltpu.CompilerParams(
            dimension_semantics=("parallel", "arbitrary"),
            vmem_limit_bytes=32 * 1024 * 1024),
    )(xp, wp, bp)
    return out[:M, :N]


# ----------------------------------------------------------------------------
# Plain-JAX glue
# ----------------------------------------------------------------------------
def _im2col(x_nhwc, kh, kw, pad):
    # TODO(synk): patch extraction still materializes in HBM; fusing it into
    # the kernel via halo-tiled BlockSpecs would remove an HBM round-trip.
    n, h, w, c = x_nhwc.shape
    xp = jnp.pad(x_nhwc, ((0, 0), (pad, pad), (pad, pad), (0, 0)))
    ho = h + 2 * pad - kh + 1
    wo = w + 2 * pad - kw + 1
    cols = [xp[:, ky:ky + ho, kx:kx + wo, :]
            for ky in range(kh) for kx in range(kw)]
    patches = jnp.concatenate(cols, axis=-1)       # [n, ho, wo, kh*kw*c]
    return patches.reshape(n * ho * wo, kh * kw * c), (n, ho, wo)


def fold_bn(gamma, beta, mean, var, eps=1e-5):
    scale = gamma / jnp.sqrt(var + eps)
    shift = beta - mean * scale
    return scale, shift


def build_deconv_phase_matrix(w_iohw, scale, shift):
    """ConvTranspose2d(k=4, s=2, p=1, bias=False)+BN as a sub-pixel conv.

    Output pixel (2m+py, 2q+px) only touches a 2x2 slice of the 4x4 kernel,
    so the deconv is one stride-1 3x3 conv (pad 1) over the input producing
    4*cout phase channels, followed by a pixel-shuffle interleave.
    Returns w_mat [9*cin, 4*cout] (BN scale folded), bias [4*cout], cout.
    """
    cin, cout, _, _ = w_iohw.shape
    wt = jnp.transpose(w_iohw, (2, 3, 0, 1))        # [ky, kx, cin, cout]
    wp = jnp.zeros((3, 3, cin, 4, cout), jnp.float32)
    for dy in range(2):
        for dx in range(2):
            wp = wp.at[dy,     dx,     :, 0].set(wt[3 - 2 * dy, 3 - 2 * dx])
            wp = wp.at[dy,     1 + dx, :, 1].set(wt[3 - 2 * dy, 2 - 2 * dx])
            wp = wp.at[1 + dy, dx,     :, 2].set(wt[2 - 2 * dy, 3 - 2 * dx])
            wp = wp.at[1 + dy, 1 + dx, :, 3].set(wt[2 - 2 * dy, 2 - 2 * dx])
    wp = wp * scale.reshape(1, 1, 1, 1, cout)       # fold BN scale into W
    w_mat = wp.reshape(9 * cin, 4 * cout)           # K=(ky,kx,ci)  N=(phase,co)
    bias = jnp.tile(shift, 4)
    return w_mat, bias, cout


def deconv_bn_relu(x_nhwc, w_mat, bias, cout):
    n, h, w, _ = x_nhwc.shape
    patches, _ = _im2col(x_nhwc, 3, 3, 1)
    o = matmul_bias_act(patches, w_mat, bias, "relu")      # [n*h*w, 4*cout]
    o = o.reshape(n, h, w, 2, 2, cout)                     # (.., py, px, co)
    o = jnp.transpose(o, (0, 1, 3, 2, 4, 5)).reshape(n, 2 * h, 2 * w, cout)
    return o


# ----------------------------------------------------------------------------
# Model
# ----------------------------------------------------------------------------
class CenterNetEfficientnetPallas:
    def __init__(self, num_classes=20, phi="efficientnet_b0",
                 key=jax.random.PRNGKey(42)):
        backbone_outchannels = {
            "efficientnet_b0": 320, "efficientnet_b1": 320,
            "efficientnet_b2": 352, "efficientnet_b3": 384,
            "efficientnet_b4": 448, "efficientnet_b5": 512,
            "efficientnet_b6": 576, "efficientnet_b7": 640}[phi]
        self.num_classes = num_classes
        self.c_feat = backbone_outchannels
        hidden = 64
        self.hidden = hidden

        keys = iter(jax.random.split(key, 32))

        def conv_w(cout, cin, kh, kw):
            fan_in = cin * kh * kw
            return (jax.random.normal(next(keys), (cout, cin, kh, kw),
                                      jnp.float32) / jnp.sqrt(fan_in))

        def bn_params(c):
            return (jnp.ones((c,), jnp.float32), jnp.zeros((c,), jnp.float32),
                    jnp.zeros((c,), jnp.float32), jnp.ones((c,), jnp.float32))

        # ---- backbone stub (TODO(synk) above): stride-32 patch projection ----
        self.stem_w = (jax.random.normal(
            next(keys), (3 * 32 * 32, backbone_outchannels), jnp.float32)
            / jnp.sqrt(3 * 32 * 32))
        self.stem_b = jnp.zeros((backbone_outchannels,), jnp.float32)

        # ---- decoder: 3 x ConvTranspose2d(k4,s2,p1,bias=False)+BN+ReLU ------
        dec_chans = [backbone_outchannels, 256, 128, 64]
        self.deconv = []
        for cin, cout in zip(dec_chans[:-1], dec_chans[1:]):
            w = (jax.random.normal(next(keys), (cin, cout, 4, 4), jnp.float32)
                 / jnp.sqrt(cin * 16))
            scale, shift = fold_bn(*bn_params(cout))
            self.deconv.append(build_deconv_phase_matrix(w, scale, shift))

        # ---- heads: 3 branches fused into 2 matmuls --------------------------
        branch_outs = [num_classes, 2, 2]
        total_out = sum(branch_outs)
        w1_mats, b1s = [], []
        w2 = jnp.zeros((3 * hidden, total_out), jnp.float32)   # block-diagonal
        b2 = jnp.zeros((total_out,), jnp.float32)
        col = 0
        for bi, out_ch in enumerate(branch_outs):
            w1 = conv_w(hidden, hidden, 3, 3)
            scale, shift = fold_bn(*bn_params(hidden))
            w1m = (jnp.transpose(w1, (2, 3, 1, 0)).reshape(9 * hidden, hidden)
                   * scale.reshape(1, hidden))
            w1_mats.append(w1m)
            b1s.append(shift)
            w2_b = conv_w(out_ch, hidden, 1, 1).reshape(out_ch, hidden).T
            b2_b = jnp.zeros((out_ch,), jnp.float32)            # Conv2d bias init
            w2 = w2.at[bi * hidden:(bi + 1) * hidden, col:col + out_ch].set(w2_b)
            b2 = b2.at[col:col + out_ch].set(b2_b)
            col += out_ch
        self.head_w1 = jnp.concatenate(w1_mats, axis=1)   # [9*64, 192]
        self.head_b1 = jnp.concatenate(b1s, axis=0)       # [192]
        self.head_w2 = w2                                 # [192, nc+4]
        self.head_b2 = b2                                 # [nc+4]

        self._forward = jax.jit(self._forward_impl)

    def _forward_impl(self, x_nchw):
        n, c, h, w = x_nchw.shape
        assert c == 3 and h % 32 == 0 and w % 32 == 0
        x = jnp.transpose(x_nchw, (0, 2, 3, 1)).astype(jnp.float32)   # NHWC

        # ---- backbone stub: stride-32 patchify + Pallas projection ----
        ph, pw = h // 32, w // 32
        patches = (x.reshape(n, ph, 32, pw, 32, c)
                    .transpose(0, 1, 3, 2, 4, 5)
                    .reshape(n * ph * pw, 32 * 32 * c))
        feat = matmul_bias_act(patches, self.stem_w, self.stem_b, "none")
        feat = feat.reshape(n, ph, pw, self.c_feat)

        # ---- decoder: 3 x sub-pixel deconv + BN + ReLU ----
        y = feat
        for (w_mat, bias, cout) in self.deconv:
            y = deconv_bn_relu(y, w_mat, bias, cout)

        # ---- heads (3 branches fused) ----
        hp, (n2, ho, wo) = _im2col(y, 3, 3, 1)                 # shared im2col
        t = matmul_bias_act(hp, self.head_w1, self.head_b1, "relu")   # [M,192]
        o = matmul_bias_act(t, self.head_w2, self.head_b2, "none")    # [M,nc+4]
        o = o.reshape(n2, ho, wo, -1)

        nc = self.num_classes
        hm = jax.nn.sigmoid(o[..., :nc])
        wh = o[..., nc:nc + 2]
        offset = o[..., nc + 2:nc + 4]
        to_nchw = lambda a: jnp.transpose(a, (0, 3, 1, 2))
        return to_nchw(hm), to_nchw(wh), to_nchw(offset)

    def __call__(self, x_nchw):
        return self._forward(x_nchw)


# ----------------------------------------------------------------------------
if __name__ == "__main__":
    num_classes = 20
    model = CenterNetEfficientnetPallas(num_classes=num_classes,
                                        phi="efficientnet_b0")

    # small image input (NCHW, like PyTorch): 2 x 3 x 64 x 64
    x = jax.random.normal(jax.random.PRNGKey(0), (2, 3, 64, 64), jnp.float32)

    hm, wh, offset = model(x)
    jax.block_until_ready((hm, wh, offset))

    # stride-4 output map: 64/32 * 8 = 16
    assert hm.shape == (2, num_classes, 16, 16), hm.shape
    assert wh.shape == (2, 2, 16, 16), wh.shape
    assert offset.shape == (2, 2, 16, 16), offset.shape
    assert bool(jnp.all(jnp.isfinite(hm)))
    assert bool(jnp.all((hm >= 0.0) & (hm <= 1.0)))   # sigmoid range

    print("KERNEL_OK")
</pallas_src>

<mosaic_0001>
module attributes {stable_mosaic.version = 11 : i64} {
  func.func @_mm_kernel(%arg0: i32, %arg1: i32, %arg2: memref<8x1024xbf16, #tpu.memory_space<vmem>>, %arg3: memref<1024x384xbf16, #tpu.memory_space<vmem>>, %arg4: memref<1x384xf32, #tpu.memory_space<vmem>>, %arg5: memref<8x384xf32, #tpu.memory_space<vmem>>, %arg6: memref<8x384xf32, #tpu.memory_space<vmem>>) attributes {dimension_semantics = [#tpu.dimension_semantics<parallel>, #tpu.dimension_semantics<arbitrary>], iteration_bounds = array<i64: 1, 3>, scalar_prefetch = 0 : i64, scratch_operands = 1 : i64, tpu.core_type = #tpu.core_type<tc>, window_params = [{transform_indices = @transform_0, window_bounds = array<i64: 8, 1024>}, {transform_indices = @transform_1, window_bounds = array<i64: 1024, 384>}, {pipeline_mode = #tpu.pipeline_mode<synchronous>, transform_indices = @transform_2, window_bounds = array<i64: 1, 384>}, {transform_indices = @transform_3, window_bounds = array<i64: 8, 384>}]} {
    %c0_i32 = arith.constant 0 : i32
    %0 = arith.cmpi eq, %arg1, %c0_i32 : i32
    %1 = arith.extui %0 : i1 to i32
    %c0_i32_0 = arith.constant 0 : i32
    %2 = arith.cmpi ne, %1, %c0_i32_0 : i32
    scf.if %2 {
      %cst_9 = arith.constant 0.000000e+00 : f32
      %12 = vector.broadcast %cst_9 : f32 to vector<8x384xf32>
      %c0_10 = arith.constant 0 : index
      %c0_11 = arith.constant 0 : index
      %13 = vector.load %arg6[%c0_10, %c0_11] : memref<8x384xf32, #tpu.memory_space<vmem>>, vector<8x384xf32>
      tpu.vector_store %arg6[%c0_10, %c0_11], %12 {strides = array<i32>} : memref<8x384xf32, #tpu.memory_space<vmem>>, vector<8x384xf32>,
    } else {
    }
    %c0 = arith.constant 0 : index
    %c0_1 = arith.constant 0 : index
    %3 = vector.load %arg6[%c0, %c0_1] : memref<8x384xf32, #tpu.memory_space<vmem>>, vector<8x384xf32>
    %c0_2 = arith.constant 0 : index
    %c0_3 = arith.constant 0 : index
    %4 = vector.load %arg2[%c0_2, %c0_3] : memref<8x1024xbf16, #tpu.memory_space<vmem>>, vector<8x1024xbf16>
    %c0_4 = arith.constant 0 : index
    %c0_5 = arith.constant 0 : index
    %5 = vector.load %arg3[%c0_4, %c0_5] : memref<1024x384xbf16, #tpu.memory_space<vmem>>, vector<1024x384xbf16>
    %cst = arith.constant dense<0.000000e+00> : vector<8x384xf32>
    %6 = tpu.matmul %4, %5, %cst {dimension_numbers = #tpu.dot_dimension_numbers<[1], [0], [0], [1], [0, 0, 1, 1], [], []>} : vector<8x1024xbf16>, vector<1024x384xbf16>, vector<8x384xf32> -> vector<8x384xf32>
    %7 = arith.addf %3, %6 : vector<8x384xf32>
    %c0_6 = arith.constant 0 : index
    %c0_7 = arith.constant 0 : index
    %8 = vector.load %arg6[%c0_6, %c0_7] : memref<8x384xf32, #tpu.memory_space<vmem>>, vector<8x384xf32>
    tpu.vector_store %arg6[%c0_6, %c0_7], %7 {strides = array<i32>} : memref<8x384xf32, #tpu.memory_space<vmem>>, vector<8x384xf32>,
    %c2_i32 = arith.constant 2 : i32
    %9 = arith.cmpi eq, %arg1, %c2_i32 : i32
    %10 = arith.extui %9 : i1 to i32
    %c0_i32_8 = arith.constant 0 : i32
    %11 = arith.cmpi ne, %10, %c0_i32_8 : i32
    scf.if %11 {
      %c0_9 = arith.constant 0 : index
      %c0_10 = arith.constant 0 : index
      %12 = vector.load %arg6[%c0_9, %c0_10] : memref<8x384xf32, #tpu.memory_space<vmem>>, vector<8x384xf32>
      %c0_11 = arith.constant 0 : index
      %c0_12 = arith.constant 0 : index
      %13 = vector.load %arg4[%c0_11, %c0_12] : memref<1x384xf32, #tpu.memory_space<vmem>>, vector<1x384xf32>
      %14 = vector.broadcast %13 : vector<1x384xf32> to vector<8x384xf32>
      %15 = arith.addf %12, %14 : vector<8x384xf32>
      %c0_13 = arith.constant 0 : index
      %c0_14 = arith.constant 0 : index
      %16 = vector.load %arg5[%c0_13, %c0_14] : memref<8x384xf32, #tpu.memory_space<vmem>>, vector<8x384xf32>
      tpu.vector_store %arg5[%c0_13, %c0_14], %15 {strides = array<i32>} : memref<8x384xf32, #tpu.memory_space<vmem>>, vector<8x384xf32>,
    } else {
    }
    return
  }
  func.func @transform_0(%arg0: i32, %arg1: i32) -> (i32, i32) {
    %c0_i32 = arith.constant 0 : i32
    return %arg0, %arg1 : i32, i32
  }
  func.func @transform_1(%arg0: i32, %arg1: i32) -> (i32, i32) {
    %c0_i32 = arith.constant 0 : i32
    %c0_i32_0 = arith.constant 0 : i32
    return %arg1, %c0_i32 : i32, i32
  }
  func.func @transform_2(%arg0: i32, %arg1: i32) -> (i32, i32) {
    %c0_i32 = arith.constant 0 : i32
    %c0_i32_0 = arith.constant 0 : i32
    %c0_i32_1 = arith.constant 0 : i32
    return %c0_i32, %c0_i32_0 : i32, i32
  }
  func.func @transform_3(%arg0: i32, %arg1: i32) -> (i32, i32) {
    %c0_i32 = arith.constant 0 : i32
    %c0_i32_0 = arith.constant 0 : i32
    return %arg0, %c0_i32 : i32, i32
  }
}

module attributes {stable_mosaic.version = 11 : i64} {
  func.func @_mm_kernel(%arg0: i32, %arg1: i32, %arg2: memref<8x1024xbf16, #tpu.memory_space<vmem>>, %arg3: memref<1024x1024xbf16, #tpu.memory_space<vmem>>, %arg4: memref<1x1024xf32, #tpu.memory_space<vmem>>, %arg5: memref<8x1024xf32, #tpu.memory_space<vmem>>, %arg6: memref<8x1024xf32, #tpu.memory_space<vmem>>) attributes {dimension_semantics = [#tpu.dimension_semantics<parallel>, #tpu.dimension_semantics<arbitrary>], iteration_bounds = array<i64: 1, 3>, scalar_prefetch = 0 : i64, scratch_operands = 1 : i64, tpu.core_type = #tpu.core_type<tc>, window_params = [{transform_indices = @transform_0, window_bounds = array<i64: 8, 1024>}, {transform_indices = @transform_1, window_bounds = array<i64: 1024, 1024>}, {pipeline_mode = #tpu.pipeline_mode<synchronous>, transform_indices = @transform_2, window_bounds = array<i64: 1, 1024>}, {transform_indices = @transform_3, window_bounds = array<i64: 8, 1024>}]} {
    %c0_i32 = arith.constant 0 : i32
    %0 = arith.cmpi eq, %arg1, %c0_i32 : i32
    %1 = arith.extui %0 : i1 to i32
    %c0_i32_0 = arith.constant 0 : i32
    %2 = arith.cmpi ne, %1, %c0_i32_0 : i32
    scf.if %2 {
      %cst_9 = arith.constant 0.000000e+00 : f32
      %12 = vector.broadcast %cst_9 : f32 to vector<8x1024xf32>
      %c0_10 = arith.constant 0 : index
      %c0_11 = arith.constant 0 : index
      %13 = vector.load %arg6[%c0_10, %c0_11] : memref<8x1024xf32, #tpu.memory_space<vmem>>, vector<8x1024xf32>
      tpu.vector_store %arg6[%c0_10, %c0_11], %12 {strides = array<i32>} : memref<8x1024xf32, #tpu.memory_space<vmem>>, vector<8x1024xf32>,
    } else {
    }
    %c0 = arith.constant 0 : index
    %c0_1 = arith.constant 0 : index
    %3 = vector.load %arg6[%c0, %c0_1] : memref<8x1024xf32, #tpu.memory_space<vmem>>, vector<8x1024xf32>
    %c0_2 = arith.constant 0 : index
    %c0_3 = arith.constant 0 : index
    %4 = vector.load %arg2[%c0_2, %c0_3] : memref<8x1024xbf16, #tpu.memory_space<vmem>>, vector<8x1024xbf16>
    %c0_4 = arith.constant 0 : index
    %c0_5 = arith.constant 0 : index
    %5 = vector.load %arg3[%c0_4, %c0_5] : memref<1024x1024xbf16, #tpu.memory_space<vmem>>, vector<1024x1024xbf16>
    %cst = arith.constant dense<0.000000e+00> : vector<8x1024xf32>
    %6 = tpu.matmul %4, %5, %cst {dimension_numbers = #tpu.dot_dimension_numbers<[1], [0], [0], [1], [0, 0, 1, 1], [], []>} : vector<8x1024xbf16>, vector<1024x1024xbf16>, vector<8x1024xf32> -> vector<8x1024xf32>
    %7 = arith.addf %3, %6 : vector<8x1024xf32>
    %c0_6 = arith.constant 0 : index
    %c0_7 = arith.constant 0 : index
    %8 = vector.load %arg6[%c0_6, %c0_7] : memref<8x1024xf32, #tpu.memory_space<vmem>>, vector<8x1024xf32>
    tpu.vector_store %arg6[%c0_6, %c0_7], %7 {strides = array<i32>} : memref<8x1024xf32, #tpu.memory_space<vmem>>, vector<8x1024xf32>,
    %c2_i32 = arith.constant 2 : i32
    %9 = arith.cmpi eq, %arg1, %c2_i32 : i32
    %10 = arith.extui %9 : i1 to i32
    %c0_i32_8 = arith.constant 0 : i32
    %11 = arith.cmpi ne, %10, %c0_i32_8 : i32
    scf.if %11 {
      %c0_9 = arith.constant 0 : index
      %c0_10 = arith.constant 0 : index
      %12 = vector.load %arg6[%c0_9, %c0_10] : memref<8x1024xf32, #tpu.memory_space<vmem>>, vector<8x1024xf32>
      %c0_11 = arith.constant 0 : index
      %c0_12 = arith.constant 0 : index
      %13 = vector.load %arg4[%c0_11, %c0_12] : memref<1x1024xf32, #tpu.memory_space<vmem>>, vector<1x1024xf32>
      %14 = vector.broadcast %13 : vector<1x1024xf32> to vector<8x1024xf32>
      %15 = arith.addf %12, %14 : vector<8x1024xf32>
      %cst_13 = arith.constant 0.000000e+00 : f32
      %16 = vector.broadcast %cst_13 : f32 to vector<8x1024xf32>
      %17 = arith.maximumf %15, %16 : vector<8x1024xf32>
      %c0_14 = arith.constant 0 : index
      %c0_15 = arith.constant 0 : index
      %18 = vector.load %arg5[%c0_14, %c0_15] : memref<8x1024xf32, #tpu.memory_space<vmem>>, vector<8x1024xf32>
      tpu.vector_store %arg5[%c0_14, %c0_15], %17 {strides = array<i32>} : memref<8x1024xf32, #tpu.memory_space<vmem>>, vector<8x1024xf32>,
    } else {
    }
    return
  }
  func.func @transform_0(%arg0: i32, %arg1: i32) -> (i32, i32) {
    %c0_i32 = arith.constant 0 : i32
    return %arg0, %arg1 : i32, i32
  }
  func.func @transform_1(%arg0: i32, %arg1: i32) -> (i32, i32) {
    %c0_i32 = arith.constant 0 : i32
    %c0_i32_0 = arith.constant 0 : i32
    return %arg1, %c0_i32 : i32, i32
  }
  func.func @transform_2(%arg0: i32, %arg1: i32) -> (i32, i32) {
    %c0_i32 = arith.constant 0 : i32
    %c0_i32_0 = arith.constant 0 : i32
    %c0_i32_1 = arith.constant 0 : i32
    return %c0_i32, %c0_i32_0 : i32, i32
  }
  func.func @transform_3(%arg0: i32, %arg1: i32) -> (i32, i32) {
    %c0_i32 = arith.constant 0 : i32
    %c0_i32_0 = arith.constant 0 : i32
    return %arg0, %c0_i32 : i32, i32
  }
}

module attributes {stable_mosaic.version = 11 : i64} {
  func.func @_mm_kernel(%arg0: i32, %arg1: i32, %arg2: memref<16x768xbf16, #tpu.memory_space<vmem>>, %arg3: memref<768x512xbf16, #tpu.memory_space<vmem>>, %arg4: memref<1x512xf32, #tpu.memory_space<vmem>>, %arg5: memref<16x512xf32, #tpu.memory_space<vmem>>, %arg6: memref<16x512xf32, #tpu.memory_space<vmem>>) attributes {dimension_semantics = [#tpu.dimension_semantics<parallel>, #tpu.dimension_semantics<arbitrary>], iteration_bounds = array<i64: 2, 3>, scalar_prefetch = 0 : i64, scratch_operands = 1 : i64, tpu.core_type = #tpu.core_type<tc>, window_params = [{transform_indices = @transform_0, window_bounds = array<i64: 16, 768>}, {transform_indices = @transform_1, window_bounds = array<i64: 768, 512>}, {pipeline_mode = #tpu.pipeline_mode<synchronous>, transform_indices = @transform_2, window_bounds = array<i64: 1, 512>}, {transform_indices = @transform_3, window_bounds = array<i64: 16, 512>}]} {
    %c0_i32 = arith.constant 0 : i32
    %0 = arith.cmpi eq, %arg1, %c0_i32 : i32
    %1 = arith.extui %0 : i1 to i32
    %c0_i32_0 = arith.constant 0 : i32
    %2 = arith.cmpi ne, %1, %c0_i32_0 : i32
    scf.if %2 {
      %cst_9 = arith.constant 0.000000e+00 : f32
      %12 = vector.broadcast %cst_9 : f32 to vector<16x512xf32>
      %c0_10 = arith.constant 0 : index
      %c0_11 = arith.constant 0 : index
      %13 = vector.load %arg6[%c0_10, %c0_11] : memref<16x512xf32, #tpu.memory_space<vmem>>, vector<16x512xf32>
      tpu.vector_store %arg6[%c0_10, %c0_11], %12 {strides = array<i32>} : memref<16x512xf32, #tpu.memory_space<vmem>>, vector<16x512xf32>,
    } else {
    }
    %c0 = arith.constant 0 : index
    %c0_1 = arith.constant 0 : index
    %3 = vector.load %arg6[%c0, %c0_1] : memref<16x512xf32, #tpu.memory_space<vmem>>, vector<16x512xf32>
    %c0_2 = arith.constant 0 : index
    %c0_3 = arith.constant 0 : index
    %4 = vector.load %arg2[%c0_2, %c0_3] : memref<16x768xbf16, #tpu.memory_space<vmem>>, vector<16x768xbf16>
    %c0_4 = arith.constant 0 : index
    %c0_5 = arith.constant 0 : index
    %5 = vector.load %arg3[%c0_4, %c0_5] : memref<768x512xbf16, #tpu.memory_space<vmem>>, vector<768x512xbf16>
    %cst = arith.constant dense<0.000000e+00> : vector<16x512xf32>
    %6 = tpu.matmul %4, %5, %cst {dimension_numbers = #tpu.dot_dimension_numbers<[1], [0], [0], [1], [0, 0, 1, 1], [], []>} : vector<16x768xbf16>, vector<768x512xbf16>, vector<16x512xf32> -> vector<16x512xf32>
    %7 = arith.addf %3, %6 : vector<16x512xf32>
    %c0_6 = arith.constant 0 : index
    %c0_7 = arith.constant 0 : index
    %8 = vector.load %arg6[%c0_6, %c0_7] : memref<16x512xf32, #tpu.memory_space<vmem>>, vector<16x512xf32>
    tpu.vector_store %arg6[%c0_6, %c0_7], %7 {strides = array<i32>} : memref<16x512xf32, #tpu.memory_space<vmem>>, vector<16x512xf32>,
    %c2_i32 = arith.constant 2 : i32
    %9 = arith.cmpi eq, %arg1, %c2_i32 : i32
    %10 = arith.extui %9 : i1 to i32
    %c0_i32_8 = arith.constant 0 : i32
    %11 = arith.cmpi ne, %10, %c0_i32_8 : i32
    scf.if %11 {
      %c0_9 = arith.constant 0 : index
      %c0_10 = arith.constant 0 : index
      %12 = vector.load %arg6[%c0_9, %c0_10] : memref<16x512xf32, #tpu.memory_space<vmem>>, vector<16x512xf32>
      %c0_11 = arith.constant 0 : index
      %c0_12 = arith.constant 0 : index
      %13 = vector.load %arg4[%c0_11, %c0_12] : memref<1x512xf32, #tpu.memory_space<vmem>>, vector<1x512xf32>
      %14 = vector.broadcast %13 : vector<1x512xf32> to vector<16x512xf32>
      %15 = arith.addf %12, %14 : vector<16x512xf32>
      %cst_13 = arith.constant 0.000000e+00 : f32
      %16 = vector.broadcast %cst_13 : f32 to vector<16x512xf32>
      %17 = arith.maximumf %15, %16 : vector<16x512xf32>
      %c0_14 = arith.constant 0 : index
      %c0_15 = arith.constant 0 : index
      %18 = vector.load %arg5[%c0_14, %c0_15] : memref<16x512xf32, #tpu.memory_space<vmem>>, vector<16x512xf32>
      tpu.vector_store %arg5[%c0_14, %c0_15], %17 {strides = array<i32>} : memref<16x512xf32, #tpu.memory_space<vmem>>, vector<16x512xf32>,
    } else {
    }
    return
  }
  func.func @transform_0(%arg0: i32, %arg1: i32) -> (i32, i32) {
    %c0_i32 = arith.constant 0 : i32
    return %arg0, %arg1 : i32, i32
  }
  func.func @transform_1(%arg0: i32, %arg1: i32) -> (i32, i32) {
    %c0_i32 = arith.constant 0 : i32
    %c0_i32_0 = arith.constant 0 : i32
    return %arg1, %c0_i32 : i32, i32
  }
  func.func @transform_2(%arg0: i32, %arg1: i32) -> (i32, i32) {
    %c0_i32 = arith.constant 0 : i32
    %c0_i32_0 = arith.constant 0 : i32
    %c0_i32_1 = arith.constant 0 : i32
    return %c0_i32, %c0_i32_0 : i32, i32
  }
  func.func @transform_3(%arg0: i32, %arg1: i32) -> (i32, i32) {
    %c0_i32 = arith.constant 0 : i32
    %c0_i32_0 = arith.constant 0 : i32
    return %arg0, %c0_i32 : i32, i32
  }
}

module attributes {stable_mosaic.version = 11 : i64} {
  func.func @_mm_kernel(%arg0: i32, %arg1: i32, %arg2: memref<64x640xbf16, #tpu.memory_space<vmem>>, %arg3: memref<640x256xbf16, #tpu.memory_space<vmem>>, %arg4: memref<1x256xf32, #tpu.memory_space<vmem>>, %arg5: memref<64x256xf32, #tpu.memory_space<vmem>>, %arg6: memref<64x256xf32, #tpu.memory_space<vmem>>) attributes {dimension_semantics = [#tpu.dimension_semantics<parallel>, #tpu.dimension_semantics<arbitrary>], iteration_bounds = array<i64: 2, 2>, scalar_prefetch = 0 : i64, scratch_operands = 1 : i64, tpu.core_type = #tpu.core_type<tc>, window_params = [{transform_indices = @transform_0, window_bounds = array<i64: 64, 640>}, {transform_indices = @transform_1, window_bounds = array<i64: 640, 256>}, {pipeline_mode = #tpu.pipeline_mode<synchronous>, transform_indices = @transform_2, window_bounds = array<i64: 1, 256>}, {transform_indices = @transform_3, window_bounds = array<i64: 64, 256>}]} {
    %c0_i32 = arith.constant 0 : i32
    %0 = arith.cmpi eq, %arg1, %c0_i32 : i32
    %1 = arith.extui %0 : i1 to i32
    %c0_i32_0 = arith.constant 0 : i32
    %2 = arith.cmpi ne, %1, %c0_i32_0 : i32
    scf.if %2 {
      %cst_9 = arith.constant 0.000000e+00 : f32
      %12 = vector.broadcast %cst_9 : f32 to vector<64x256xf32>
      %c0_10 = arith.constant 0 : index
      %c0_11 = arith.constant 0 : index
      %13 = vector.load %arg6[%c0_10, %c0_11] : memref<64x256xf32, #tpu.memory_space<vmem>>, vector<64x256xf32>
      tpu.vector_store %arg6[%c0_10, %c0_11], %12 {strides = array<i32>} : memref<64x256xf32, #tpu.memory_space<vmem>>, vector<64x256xf32>,
    } else {
    }
    %c0 = arith.constant 0 : index
    %c0_1 = arith.constant 0 : index
    %3 = vector.load %arg6[%c0, %c0_1] : memref<64x256xf32, #tpu.memory_space<vmem>>, vector<64x256xf32>
    %c0_2 = arith.constant 0 : index
    %c0_3 = arith.constant 0 : index
    %4 = vector.load %arg2[%c0_2, %c0_3] : memref<64x640xbf16, #tpu.memory_space<vmem>>, vector<64x640xbf16>
    %c0_4 = arith.constant 0 : index
    %c0_5 = arith.constant 0 : index
    %5 = vector.load %arg3[%c0_4, %c0_5] : memref<640x256xbf16, #tpu.memory_space<vmem>>, vector<640x256xbf16>
    %cst = arith.constant dense<0.000000e+00> : vector<64x256xf32>
    %6 = tpu.matmul %4, %5, %cst {dimension_numbers = #tpu.dot_dimension_numbers<[1], [0], [0], [1], [0, 0, 1, 1], [], []>} : vector<64x640xbf16>, vector<640x256xbf16>, vector<64x256xf32> -> vector<64x256xf32>
    %7 = arith.addf %3, %6 : vector<64x256xf32>
    %c0_6 = arith.constant 0 : index
    %c0_7 = arith.constant 0 : index
    %8 = vector.load %arg6[%c0_6, %c0_7] : memref<64x256xf32, #tpu.memory_space<vmem>>, vector<64x256xf32>
    tpu.vector_store %arg6[%c0_6, %c0_7], %7 {strides = array<i32>} : memref<64x256xf32, #tpu.memory_space<vmem>>, vector<64x256xf32>,
    %c1_i32 = arith.constant 1 : i32
    %9 = arith.cmpi eq, %arg1, %c1_i32 : i32
    %10 = arith.extui %9 : i1 to i32
    %c0_i32_8 = arith.constant 0 : i32
    %11 = arith.cmpi ne, %10, %c0_i32_8 : i32
    scf.if %11 {
      %c0_9 = arith.constant 0 : index
      %c0_10 = arith.constant 0 : index
      %12 = vector.load %arg6[%c0_9, %c0_10] : memref<64x256xf32, #tpu.memory_space<vmem>>, vector<64x256xf32>
      %c0_11 = arith.constant 0 : index
      %c0_12 = arith.constant 0 : index
      %13 = vector.load %arg4[%c0_11, %c0_12] : memref<1x256xf32, #tpu.memory_space<vmem>>, vector<1x256xf32>
      %14 = vector.broadcast %13 : vector<1x256xf32> to vector<64x256xf32>
      %15 = arith.addf %12, %14 : vector<64x256xf32>
      %cst_13 = arith.constant 0.000000e+00 : f32
      %16 = vector.broadcast %cst_13 : f32 to vector<64x256xf32>
      %17 = arith.maximumf %15, %16 : vector<64x256xf32>
      %c0_14 = arith.constant 0 : index
      %c0_15 = arith.constant 0 : index
      %18 = vector.load %arg5[%c0_14, %c0_15] : memref<64x256xf32, #tpu.memory_space<vmem>>, vector<64x256xf32>
      tpu.vector_store %arg5[%c0_14, %c0_15], %17 {strides = array<i32>} : memref<64x256xf32, #tpu.memory_space<vmem>>, vector<64x256xf32>,
    } else {
    }
    return
  }
  func.func @transform_0(%arg0: i32, %arg1: i32) -> (i32, i32) {
    %c0_i32 = arith.constant 0 : i32
    return %arg0, %arg1 : i32, i32
  }
  func.func @transform_1(%arg0: i32, %arg1: i32) -> (i32, i32) {
    %c0_i32 = arith.constant 0 : i32
    %c0_i32_0 = arith.constant 0 : i32
    return %arg1, %c0_i32 : i32, i32
  }
  func.func @transform_2(%arg0: i32, %arg1: i32) -> (i32, i32) {
    %c0_i32 = arith.constant 0 : i32
    %c0_i32_0 = arith.constant 0 : i32
    %c0_i32_1 = arith.constant 0 : i32
    return %c0_i32, %c0_i32_0 : i32, i32
  }
  func.func @transform_3(%arg0: i32, %arg1: i32) -> (i32, i32) {
    %c0_i32 = arith.constant 0 : i32
    %c0_i32_0 = arith.constant 0 : i32
    return %arg0, %c0_i32 : i32, i32
  }
}

module attributes {stable_mosaic.version = 11 : i64} {
  func.func @_mm_kernel(%arg0: i32, %arg1: i32, %arg2: memref<256x640xbf16, #tpu.memory_space<vmem>>, %arg3: memref<640x256xbf16, #tpu.memory_space<vmem>>, %arg4: memref<1x256xf32, #tpu.memory_space<vmem>>, %arg5: memref<256x256xf32, #tpu.memory_space<vmem>>, %arg6: memref<256x256xf32, #tpu.memory_space<vmem>>) attributes {dimension_semantics = [#tpu.dimension_semantics<parallel>, #tpu.dimension_semantics<arbitrary>], iteration_bounds = array<i64: 2, 1>, scalar_prefetch = 0 : i64, scratch_operands = 1 : i64, tpu.core_type = #tpu.core_type<tc>, window_params = [{transform_indices = @transform_0, window_bounds = array<i64: 256, 640>}, {transform_indices = @transform_1, window_bounds = array<i64: 640, 256>}, {pipeline_mode = #tpu.pipeline_mode<synchronous>, transform_indices = @transform_2, window_bounds = array<i64: 1, 256>}, {transform_indices = @transform_3, window_bounds = array<i64: 256, 256>}]} {
    %c0_i32 = arith.constant 0 : i32
    %0 = arith.cmpi eq, %arg1, %c0_i32 : i32
    %1 = arith.extui %0 : i1 to i32
    %c0_i32_0 = arith.constant 0 : i32
    %2 = arith.cmpi ne, %1, %c0_i32_0 : i32
    scf.if %2 {
      %cst_10 = arith.constant 0.000000e+00 : f32
      %12 = vector.broadcast %cst_10 : f32 to vector<256x256xf32>
      %c0_11 = arith.constant 0 : index
      %c0_12 = arith.constant 0 : index
      %13 = vector.load %arg6[%c0_11, %c0_12] : memref<256x256xf32, #tpu.memory_space<vmem>>, vector<256x256xf32>
      tpu.vector_store %arg6[%c0_11, %c0_12], %12 {strides = array<i32>} : memref<256x256xf32, #tpu.memory_space<vmem>>, vector<256x256xf32>,
    } else {
    }
    %c0 = arith.constant 0 : index
    %c0_1 = arith.constant 0 : index
    %3 = vector.load %arg6[%c0, %c0_1] : memref<256x256xf32, #tpu.memory_space<vmem>>, vector<256x256xf32>
    %c0_2 = arith.constant 0 : index
    %c0_3 = arith.constant 0 : index
    %4 = vector.load %arg2[%c0_2, %c0_3] : memref<256x640xbf16, #tpu.memory_space<vmem>>, vector<256x640xbf16>
    %c0_4 = arith.constant 0 : index
    %c0_5 = arith.constant 0 : index
    %5 = vector.load %arg3[%c0_4, %c0_5] : memref<640x256xbf16, #tpu.memory_space<vmem>>, vector<640x256xbf16>
    %cst = arith.constant dense<0.000000e+00> : vector<256x256xf32>
    %6 = tpu.matmul %4, %5, %cst {dimension_numbers = #tpu.dot_dimension_numbers<[1], [0], [0], [1], [0, 0, 1, 1], [], []>} : vector<256x640xbf16>, vector<640x256xbf16>, vector<256x256xf32> -> vector<256x256xf32>
    %7 = arith.addf %3, %6 : vector<256x256xf32>
    %c0_6 = arith.constant 0 : index
    %c0_7 = arith.constant 0 : index
    %8 = vector.load %arg6[%c0_6, %c0_7] : memref<256x256xf32, #tpu.memory_space<vmem>>, vector<256x256xf32>
    tpu.vector_store %arg6[%c0_6, %c0_7], %7 {strides = array<i32>} : memref<256x256xf32, #tpu.memory_space<vmem>>, vector<256x256xf32>,
    %c0_i32_8 = arith.constant 0 : i32
    %9 = arith.cmpi eq, %arg1, %c0_i32_8 : i32
    %10 = arith.extui %9 : i1 to i32
    %c0_i32_9 = arith.constant 0 : i32
    %11 = arith.cmpi ne, %10, %c0_i32_9 : i32
    scf.if %11 {
      %c0_10 = arith.constant 0 : index
      %c0_11 = arith.constant 0 : index
      %12 = vector.load %arg6[%c0_10, %c0_11] : memref<256x256xf32, #tpu.memory_space<vmem>>, vector<256x256xf32>
      %c0_12 = arith.constant 0 : index
      %c0_13 = arith.constant 0 : index
      %13 = vector.load %arg4[%c0_12, %c0_13] : memref<1x256xf32, #tpu.memory_space<vmem>>, vector<1x256xf32>
      %14 = vector.broadcast %13 : vector<1x256xf32> to vector<256x256xf32>
      %15 = arith.addf %12, %14 : vector<256x256xf32>
      %cst_14 = arith.constant 0.000000e+00 : f32
      %16 = vector.broadcast %cst_14 : f32 to vector<256x256xf32>
      %17 = arith.maximumf %15, %16 : vector<256x256xf32>
      %c0_15 = arith.constant 0 : index
      %c0_16 = arith.constant 0 : index
      %18 = vector.load %arg5[%c0_15, %c0_16] : memref<256x256xf32, #tpu.memory_space<vmem>>, vector<256x256xf32>
      tpu.vector_store %arg5[%c0_15, %c0_16], %17 {strides = array<i32>} : memref<256x256xf32, #tpu.memory_space<vmem>>, vector<256x256xf32>,
    } else {
    }
    return
  }
  func.func @transform_0(%arg0: i32, %arg1: i32) -> (i32, i32) {
    %c0_i32 = arith.constant 0 : i32
    return %arg0, %arg1 : i32, i32
  }
  func.func @transform_1(%arg0: i32, %arg1: i32) -> (i32, i32) {
    %c0_i32 = arith.constant 0 : i32
    %c0_i32_0 = arith.constant 0 : i32
    return %arg1, %c0_i32 : i32, i32
  }
  func.func @transform_2(%arg0: i32, %arg1: i32) -> (i32, i32) {
    %c0_i32 = arith.constant 0 : i32
    %c0_i32_0 = arith.constant 0 : i32
    %c0_i32_1 = arith.constant 0 : i32
    return %c0_i32, %c0_i32_0 : i32, i32
  }
  func.func @transform_3(%arg0: i32, %arg1: i32) -> (i32, i32) {
    %c0_i32 = arith.constant 0 : i32
    %c0_i32_0 = arith.constant 0 : i32
    return %arg0, %c0_i32 : i32, i32
  }
}

module attributes {stable_mosaic.version = 11 : i64} {
  func.func @_mm_kernel(%arg0: i32, %arg1: i32, %arg2: memref<256x256xbf16, #tpu.memory_space<vmem>>, %arg3: memref<256x128xbf16, #tpu.memory_space<vmem>>, %arg4: memref<1x128xf32, #tpu.memory_space<vmem>>, %arg5: memref<256x128xf32, #tpu.memory_space<vmem>>, %arg6: memref<256x128xf32, #tpu.memory_space<vmem>>) attributes {dimension_semantics = [#tpu.dimension_semantics<parallel>, #tpu.dimension_semantics<arbitrary>], iteration_bounds = array<i64: 2, 1>, scalar_prefetch = 0 : i64, scratch_operands = 1 : i64, tpu.core_type = #tpu.core_type<tc>, window_params = [{transform_indices = @transform_0, window_bounds = array<i64: 256, 256>}, {transform_indices = @transform_1, window_bounds = array<i64: 256, 128>}, {pipeline_mode = #tpu.pipeline_mode<synchronous>, transform_indices = @transform_2, window_bounds = array<i64: 1, 128>}, {transform_indices = @transform_3, window_bounds = array<i64: 256, 128>}]} {
    %c0_i32 = arith.constant 0 : i32
    %0 = arith.cmpi eq, %arg1, %c0_i32 : i32
    %1 = arith.extui %0 : i1 to i32
    %c0_i32_0 = arith.constant 0 : i32
    %2 = arith.cmpi ne, %1, %c0_i32_0 : i32
    scf.if %2 {
      %cst_10 = arith.constant 0.000000e+00 : f32
      %12 = vector.broadcast %cst_10 : f32 to vector<256x128xf32>
      %c0_11 = arith.constant 0 : index
      %c0_12 = arith.constant 0 : index
      %13 = vector.load %arg6[%c0_11, %c0_12] : memref<256x128xf32, #tpu.memory_space<vmem>>, vector<256x128xf32>
      tpu.vector_store %arg6[%c0_11, %c0_12], %12 {strides = array<i32>} : memref<256x128xf32, #tpu.memory_space<vmem>>, vector<256x128xf32>,
    } else {
    }
    %c0 = arith.constant 0 : index
    %c0_1 = arith.constant 0 : index
    %3 = vector.load %arg6[%c0, %c0_1] : memref<256x128xf32, #tpu.memory_space<vmem>>, vector<256x128xf32>
    %c0_2 = arith.constant 0 : index
    %c0_3 = arith.constant 0 : index
    %4 = vector.load %arg2[%c0_2, %c0_3] : memref<256x256xbf16, #tpu.memory_space<vmem>>, vector<256x256xbf16>
    %c0_4 = arith.constant 0 : index
    %c0_5 = arith.constant 0 : index
    %5 = vector.load %arg3[%c0_4, %c0_5] : memref<256x128xbf16, #tpu.memory_space<vmem>>, vector<256x128xbf16>
    %cst = arith.constant dense<0.000000e+00> : vector<256x128xf32>
    %6 = tpu.matmul %4, %5, %cst {dimension_numbers = #tpu.dot_dimension_numbers<[1], [0], [0], [1], [0, 0, 1, 1], [], []>} : vector<256x256xbf16>, vector<256x128xbf16>, vector<256x128xf32> -> vector<256x128xf32>
    %7 = arith.addf %3, %6 : vector<256x128xf32>
    %c0_6 = arith.constant 0 : index
    %c0_7 = arith.constant 0 : index
    %8 = vector.load %arg6[%c0_6, %c0_7] : memref<256x128xf32, #tpu.memory_space<vmem>>, vector<256x128xf32>
    tpu.vector_store %arg6[%c0_6, %c0_7], %7 {strides = array<i32>} : memref<256x128xf32, #tpu.memory_space<vmem>>, vector<256x128xf32>,
    %c0_i32_8 = arith.constant 0 : i32
    %9 = arith.cmpi eq, %arg1, %c0_i32_8 : i32
    %10 = arith.extui %9 : i1 to i32
    %c0_i32_9 = arith.constant 0 : i32
    %11 = arith.cmpi ne, %10, %c0_i32_9 : i32
    scf.if %11 {
      %c0_10 = arith.constant 0 : index
      %c0_11 = arith.constant 0 : index
      %12 = vector.load %arg6[%c0_10, %c0_11] : memref<256x128xf32, #tpu.memory_space<vmem>>, vector<256x128xf32>
      %c0_12 = arith.constant 0 : index
      %c0_13 = arith.constant 0 : index
      %13 = vector.load %arg4[%c0_12, %c0_13] : memref<1x128xf32, #tpu.memory_space<vmem>>, vector<1x128xf32>
      %14 = vector.broadcast %13 : vector<1x128xf32> to vector<256x128xf32>
      %15 = arith.addf %12, %14 : vector<256x128xf32>
      %c0_14 = arith.constant 0 : index
      %c0_15 = arith.constant 0 : index
      %16 = vector.load %arg5[%c0_14, %c0_15] : memref<256x128xf32, #tpu.memory_space<vmem>>, vector<256x128xf32>
      tpu.vector_store %arg5[%c0_14, %c0_15], %15 {strides = array<i32>} : memref<256x128xf32, #tpu.memory_space<vmem>>, vector<256x128xf32>,
    } else {
    }
    return
  }
  func.func @transform_0(%arg0: i32, %arg1: i32) -> (i32, i32) {
    %c0_i32 = arith.constant 0 : i32
    return %arg0, %arg1 : i32, i32
  }
  func.func @transform_1(%arg0: i32, %arg1: i32) -> (i32, i32) {
    %c0_i32 = arith.constant 0 : i32
    %c0_i32_0 = arith.constant 0 : i32
    return %arg1, %c0_i32 : i32, i32
  }
  func.func @transform_2(%arg0: i32, %arg1: i32) -> (i32, i32) {
    %c0_i32 = arith.constant 0 : i32
    %c0_i32_0 = arith.constant 0 : i32
    %c0_i32_1 = arith.constant 0 : i32
    return %c0_i32, %c0_i32_0 : i32, i32
  }
  func.func @transform_3(%arg0: i32, %arg1: i32) -> (i32, i32) {
    %c0_i32 = arith.constant 0 : i32
    %c0_i32_0 = arith.constant 0 : i32
    return %arg0, %c0_i32 : i32, i32
  }
}

</mosaic_0001>

<llo_original>
// kernel: _forward_impl.6
$region0: #{_forward_impl.6}
  #allocation0 [shape = 'u32[]', space=smem, size = 0x4, offset = 0x4, fixed_abs, tag = 'smem constant byte address 0x4 - core index']
  #allocation1 [shape = 'u32[144,128]{1,0:T(1,128)}', space=vmem, size = 0x12000, scoped, tag = 'internal scratch']
  #allocation2 [shape = 'f32[8,384]{1,0:T(8,128)}', space=vmem, size = 0x3000, scoped, tag = 'scratch operand']
  %s0 = inlined_call_operand.vmem [shape: bf16[8,3072], index: 0, kind: input, shape index: {}]
  %s1 = inlined_call_operand.hbm [shape: bf16[3072,384], index: 1, kind: input, shape index: {}]
  %s2 = inlined_call_operand.vmem [shape: f32[1,384], index: 2, kind: input, shape index: {}]
  %s3 = inlined_call_operand.vmem [shape: f32[8,384], index: 3, kind: output, shape index: {}]
  %s4 = sld [smem:[#allocation0]]
  $region57: #{_forward_impl.6} parent=0
    _
  %s6 = ssub.s32 1, %s4
  %s7 = scalar_select 0, %s6, %s4
  $region1: #{_forward_impl.6} parent=0
    #allocation3 [shape = 'u8[1572864]{0}', space=vmem, size = 0x180000, scoped, tag = 'input window, operand 1']
    #allocation4 [shape = 's32[2]{0}', space=sflag, size = 0x8, scoped, tag = 'scoped memory for _forward_impl.6']
    %8 = vsyncpa [#allocation4], 0
    %s9 = scalar_lea.sflag [#allocation4], 1
    %10 = vsyncpa %s9, 0
    loop: start=0, step=1, limit=5
    $region2: #{_forward_impl.6} parent=1 // loop_pre_header
      _
    $region3: #{_forward_impl.6} parent=1 // loop_header
      %s12 = sphi 0, %s16
      %p13 = scmp.ge.s32.totalorder %s12, 5
      %s19 = sphi 0, %s31
      %s20 = sphi 0, %s27
      %s21 = sphi 0, %s19
      %s22 = sphi 0, %s20
      %s23 = sphi 0, %s21
      %s24 = sphi 0, %s22
      %s36 = sphi 0, %s38
      %s39 = sphi 0, %s36
      %s40 = sphi 0, %s39
      %s56 = sphi 0, %s40
      %s62 = sphi 0, %s64
      %s65 = sphi 0, %s62
      %s66 = sphi 0, %s65
      %s82 = sphi 0, %s66
      %s86 = sphi 0, %s86
      %s88 = sphi 0, %s86
      %s89 = sphi 0, %s88
      %s103 = sphi 0, %s89
      %s109 = sphi 0, %s111
      %s112 = sphi 0, %s109
      %s113 = sphi 0, %s112
      %s129 = sphi 0, %s113
    $region4: #{_forward_impl.6} parent=1 // loop_header_branch
      %15 = sbr.rel (%p13) target = $region8
    $region5: #{_forward_impl.6} parent=1 // loop_body
      %s17 = ssub.s32 %s12, 1
      %s18 = ssub.s32 %s12, 2
      %s25 = sadd.s32 1, %s20
      %p26 = scmp.ge.s32.totalorder %s25, 3
      %s27 = scalar_select %p26, 0, %s25
      %s28 = sadd.s32 1, %s19
      %s29 = scalar_select %p26, %s28, %s19
      %p30 = scmp.ge.s32.totalorder %s29, 1
      %s31 = scalar_select %p30, 0, %s29
      %s32 = ssub.s32 %s19, %s31
      %s33 = ssub.s32 %s20, %s27
      %s34 = sor.u32 %s32, %s33
      %p35 = scmp.eq.s32.totalorder %s34, 0
      %s37 = sadd.s32 %s36, 1
      %s38 = scalar_select %p35, %s36, %s37
      %p41 = pneg %p35
      %p42 = scmp.eq.s32.totalorder %s12, 2
      %p43 = por %p41, %p42
      %p44 = scmp.ne.s32.totalorder %s36, %s39
      %p45 = scmp.eq.s32.totalorder %s12, 0
      %p46 = por %p44, %p45
      %p47 = scmp.ne.s32.totalorder %s36, %s39
      %p48 = scmp.eq.s32.totalorder %s17, 2
      %p49 = por %p47, %p48
      %p50 = scmp.ne.s32.totalorder %s39, %s40
      %p51 = scmp.eq.s32.totalorder %s17, 0
      %p52 = por %p50, %p51
      %p53 = scmp.ne.s32.totalorder %s39, %s40
      %p54 = scmp.eq.s32.totalorder %s18, 2
      %p55 = por %p53, %p54
      %p57 = scmp.ne.s32.totalorder %s40, %s56
      %p58 = scmp.eq.s32.totalorder %s18, 0
      %p59 = por %p57, %p58
      %s60 = ssub.s32 %s20, %s27
      %p61 = scmp.eq.s32.totalorder %s60, 0
      %s63 = sadd.s32 %s62, 1
      %s64 = scalar_select %p61, %s62, %s63
      %p67 = pneg %p61
      %p68 = scmp.eq.s32.totalorder %s12, 2
      %p69 = por %p67, %p68
      %p70 = scmp.ne.s32.totalorder %s62, %s65
      %p71 = scmp.eq.s32.totalorder %s12, 0
      %p72 = por %p70, %p71
      %p73 = scmp.ne.s32.totalorder %s62, %s65
      %p74 = scmp.eq.s32.totalorder %s17, 2
      %p75 = por %p73, %p74
      %p76 = scmp.ne.s32.totalorder %s65, %s66
      %p77 = scmp.eq.s32.totalorder %s17, 0
      %p78 = por %p76, %p77
      %p79 = scmp.ne.s32.totalorder %s65, %s66
      %p80 = scmp.eq.s32.totalorder %s18, 2
      %p81 = por %p79, %p80
      %p83 = scmp.ne.s32.totalorder %s66, %s82
      %p84 = scmp.eq.s32.totalorder %s18, 0
      %p85 = por %p83, %p84
      %s87 = sadd.s32 %s86, 1
      %p90 = scmp.eq.s32.totalorder %s12, 2
      %p91 = scmp.ne.s32.totalorder %s86, %s88
      %p92 = scmp.eq.s32.totalorder %s12, 0
      %p93 = por %p91, %p92
      %p94 = scmp.ne.s32.totalorder %s86, %s88
      %p95 = scmp.eq.s32.totalorder %s17, 2
      %p96 = por %p94, %p95
      %p97 = scmp.ne.s32.totalorder %s88, %s89
      %p98 = scmp.eq.s32.totalorder %s17, 0
      %p99 = por %p97, %p98
      %p100 = scmp.ne.s32.totalorder %s88, %s89
      %p101 = scmp.eq.s32.totalorder %s18, 2
      %p102 = por %p100, %p101
      %p104 = scmp.ne.s32.totalorder %s89, %s103
      %p105 = scmp.eq.s32.totalorder %s18, 0
      %p106 = por %p104, %p105
      %s107 = ssub.s32 %s19, %s31
      %p108 = scmp.eq.s32.totalorder %s107, 0
      %s110 = sadd.s32 %s109, 1
      %s111 = scalar_select %p108, %s109, %s110
      %p114 = pneg %p108
      %p115 = scmp.eq.s32.totalorder %s12, 2
      %p116 = por %p114, %p115
      %p117 = scmp.ne.s32.totalorder %s109, %s112
      %p118 = scmp.eq.s32.totalorder %s12, 0
      %p119 = por %p117, %p118
      %p120 = scmp.ne.s32.totalorder %s109, %s112
      %p121 = scmp.eq.s32.totalorder %s17, 2
      %p122 = por %p120, %p121
      %p123 = scmp.ne.s32.totalorder %s112, %s113
      %p124 = scmp.eq.s32.totalorder %s17, 0
      %p125 = por %p123, %p124
      %p126 = scmp.ne.s32.totalorder %s112, %s113
      %p127 = scmp.eq.s32.totalorder %s18, 2
      %p128 = por %p126, %p127
      %p130 = scmp.ne.s32.totalorder %s113, %s129
      %p131 = scmp.eq.s32.totalorder %s18, 0
      %p132 = por %p130, %p131
      %p133 = scmp.le.s32.totalorder 1, %s12
      %p134 = scmp.lt.s32.totalorder %s12, 4
      %p135 = pnand %p133, %p134
      %p136 = pneg %p135
      // Predicated region
      $region9: #{_forward_impl.6} parent=5 // pred_check
        _
      $region10: #{_forward_impl.6} parent=5 // pred_check_branch
        %138 = sbr.rel (%p135) target = $region12
      $region11: #{_forward_impl.6} parent=5 // pred_region
        %s139 = ssub.s32 %s12, 1
        // Predicated region
        $region13: #{_forward_impl.6} parent=11 // pred_check
          %p140 = pneg %p99
        $region14: #{_forward_impl.6} parent=11 // pred_check_branch
          %142 = sbr.rel (%p140) target = $region16
        $region15: #{_forward_impl.6} parent=11 // pred_region
          _
        $region16: #{_forward_impl.6} parent=11 // pred_fallthru
          _
      $region12: #{_forward_impl.6} parent=5 // pred_fallthru
        _
      %p143 = scmp.lt.s32.totalorder %s12, 3
      // Predicated region
      $region17: #{_forward_impl.6} parent=5 // pred_check
        %p144 = pneg %p143
      $region18: #{_forward_impl.6} parent=5 // pred_check_branch
        %146 = sbr.rel (%p144) target = $region20
      $region19: #{_forward_impl.6} parent=5 // pred_region
        // Predicated region
        $region21: #{_forward_impl.6} parent=19 // pred_check
          %p147 = pneg %p46
        $region22: #{_forward_impl.6} parent=19 // pred_check_branch
          %149 = sbr.rel (%p147) target = $region24
        $region23: #{_forward_impl.6} parent=19 // pred_region
          %s150 = smul.u32 8, %s20
          %p151 = scmp.lt.s32.totalorder %s19, 0
          %s152 = scalar_select %p151, %s19, 0
          %p153 = scmp.lt.s32.totalorder %s150, 23
          %s154 = scalar_select %p153, %s150, 23
          %s155 = smul.addr %s152, 24
          %s156 = sadd.s32 %s154, %s155
          %s157 = smul.addr %s156, 4
          %s158 = scalar_lea.vmem %s0, %s157
          %s159 = smul.u32 8, %s20
        $region24: #{_forward_impl.6} parent=19 // pred_fallthru
          _
        // Predicated region
        $region25: #{_forward_impl.6} parent=19 // pred_check
          %p160 = pneg %p72
        $region26: #{_forward_impl.6} parent=19 // pred_check_branch
          %162 = sbr.rel (%p160) target = $region28
        $region27: #{_forward_impl.6} parent=19 // pred_region
          %s163 = sand.u32 %s62, 1
          %s164 = scalar_lea.sflag [#allocation4], %s163
          %s165 = sand.u32 %s62, 1
          %s166 = smul.addr %s165, 1536
          %s167 = scalar_lea.vmem [#allocation3], %s166
          %s168 = smul.u32 128, %s20
          %s170 = ssub.s32 24576, 24576
          %171 = vsyncadd %s164, %s170
          %s172 = smul.addr %s168, 3
          %s173 = smul.addr %s172, 64
          %s174 = scalar_lea.hbm %s1, %s173
          %s175 = sshll.u32 %s167, 4
          %s176 = int_to_ptr.vmem [resolvable:$true] %s175
          %181 = dma.hbm_to_vmem [thread:$0]  %s174, 24576, %s176, %s164, 192, 192, 12
        $region28: #{_forward_impl.6} parent=19 // pred_fallthru
          _
      $region20: #{_forward_impl.6} parent=5 // pred_fallthru
        _
      %p182 = scmp.le.s32.totalorder 1, %s12
      %p183 = scmp.lt.s32.totalorder %s12, 4
      %p184 = pnand %p182, %p183
      %p185 = pneg %p184
      // Predicated region
      $region29: #{_forward_impl.6} parent=5 // pred_check
        _
      $region30: #{_forward_impl.6} parent=5 // pred_check_branch
        %187 = sbr.rel (%p184) target = $region32
      $region31: #{_forward_impl.6} parent=5 // pred_region
        %s188 = ssub.s32 %s12, 1
        %s189 = sand.u32 %s65, 1
        %s190 = scalar_lea.sflag [#allocation4], %s189
        %s191 = sand.u32 %s65, 1
        %s192 = smul.addr %s191, 1536
        %s193 = scalar_lea.vmem [#allocation3], %s192
        // Predicated region
        $region33: #{_forward_impl.6} parent=31 // pred_check
          %p194 = pneg %p78
        $region34: #{_forward_impl.6} parent=31 // pred_check_branch
          %196 = sbr.rel (%p194) target = $region36
        $region35: #{_forward_impl.6} parent=31 // pred_region
          %197 = dma.done %s190, 24576
        $region36: #{_forward_impl.6} parent=31 // pred_fallthru
          _
        %s198 = smul.u32 8, %s22
        %p199 = scmp.lt.s32.totalorder %s21, 0
        %s200 = scalar_select %p199, %s21, 0
        %p201 = scmp.lt.s32.totalorder %s198, 23
        %s202 = scalar_select %p201, %s198, 23
        %s203 = smul.addr %s200, 24
        %s204 = sadd.s32 %s202, %s203
        %s205 = smul.addr %s204, 4
        %s206 = scalar_lea.vmem %s0, %s205
        %p207 = pneg %p52
        %p208 = pneg %p49
        %s209 = sand.u32 %s65, 1
        %s210 = scalar_lea.sflag [#allocation4], %s209
        %s211 = sand.u32 %s65, 1
        %s212 = smul.addr %s211, 1536
        %s213 = scalar_lea.vmem [#allocation3], %s212
        %p214 = pneg %p78
        %p215 = pneg %p75
        %p216 = pneg %p99
        %p217 = pneg %p96
        %p218 = pneg %p125
        %p219 = pneg %p122
        %p220 = scmp.lt.s32.totalorder %s21, 0
        %s221 = scalar_select %p220, %s21, 0
        %s222 = smul.addr %s221, 3
        %s223 = smul.addr %s222, 8
        %s224 = scalar_lea.vmem %s3, %s223
        %s225 = smul.u32 8, %s22
        %p226 = scmp.lt.s32.totalorder %s21, 0
        %s227 = scalar_select %p226, %s21, 0
        %p228 = scmp.lt.s32.totalorder %s225, 23
        %s229 = scalar_select %p228, %s225, 23
        %s230 = smul.addr %s227, 24
        %s231 = sadd.s32 %s229, %s230
        %s232 = smul.addr %s231, 4
        %s233 = scalar_lea.vmem %s0, %s232
        %s234 = smul.u32 8, %s22
        %s235 = smul.u32 128, %s22
        %p236 = scmp.lt.s32.totalorder %s21, 0
        %s237 = scalar_select %p236, %s21, 0
        %s238 = smul.addr %s237, 3
        %s239 = smul.addr %s238, 8
        %s240 = scalar_lea.vmem %s3, %s239
        %p242 = scmp.eq.s32.totalorder %s22, 0
        // Predicated region
        $region37: #{_forward_impl.6} parent=31 // pred_check
          %p243 = pneg %p242
        $region38: #{_forward_impl.6} parent=31 // pred_check_branch
          %245 = sbr.rel (%p243) target = $region40
        $region39: #{_forward_impl.6} parent=31 // pred_region
          %246 = vst [vmem:[#allocation2] sm:$0xff] 0.0
          %247 = vst [vmem:[#allocation2 + $0x8] sm:$0xff] 0.0
          %248 = vst [vmem:[#allocation2 + $0x10] sm:$0xff] 0.0
        $region40: #{_forward_impl.6} parent=31 // pred_fallthru
          _
        %v249 = vld [vmem:[#allocation2] sm:$0xff]
        %v250 = vld [vmem:[#allocation2 + $0x8] sm:$0xff]
        %v251 = vld [vmem:[#allocation2 + $0x10] sm:$0xff]
        %v252 = vld [vmem:[%s233] sm:$0xff]
        %v253 = vld [vmem:[%s233 + $0x8] sm:$0xff]
        %v254 = vld [vmem:[%s233 + $0x10] sm:$0xff]
        %v255 = vld [vmem:[%s233 + $0x18] sm:$0xff]
        %v256 = vld [vmem:[%s193] sm:$0xff]
        %v257 = vld [vmem:[%s193 + $0x8] sm:$0xf]
        %v258 = vld [vmem:[%s193 + $0xc] sm:$0xff]
        %v259 = vld [vmem:[%s193 + $0x14] sm:$0xf]
        %v260 = vld [vmem:[%s193 + $0x18] sm:$0xff]
        %v261 = vld [vmem:[%s193 + $0x20] sm:$0xf]
        %v262 = vld [vmem:[%s193 + $0x24] sm:$0xff]
        %v263 = vld [vmem:[%s193 + $0x2c] sm:$0xf]
        %v264 = vld [vmem:[%s193 + $0x30] sm:$0xff]
        %v265 = vld [vmem:[%s193 + $0x38] sm:$0xf]
        %v266 = vld [vmem:[%s193 + $0x3c] sm:$0xff]
        %v267 = vld [vmem:[%s193 + $0x44] sm:$0xf]
        %v268 = vld [vmem:[%s193 + $0x48] sm:$0xff]
        %v269 = vld [vmem:[%s193 + $0x50] sm:$0xf]
        %v270 = vld [vmem:[%s193 + $0x54] sm:$0xff]
        %v271 = vld [vmem:[%s193 + $0x5c] sm:$0xf]
        %v272 = vld [vmem:[%s193 + $0x60] sm:$0xff]
        %v273 = vld [vmem:[%s193 + $0x68] sm:$0xf]
        %v274 = vld [vmem:[%s193 + $0x6c] sm:$0xff]
        %v275 = vld [vmem:[%s193 + $0x74] sm:$0xf]
        %v276 = vld [vmem:[%s193 + $0x78] sm:$0xff]
        %v277 = vld [vmem:[%s193 + $0x80] sm:$0xf]
        %v278 = vld [vmem:[%s193 + $0x84] sm:$0xff]
        %v279 = vld [vmem:[%s193 + $0x8c] sm:$0xf]
        %v280 = vld [vmem:[%s193 + $0x90] sm:$0xff]
        %v281 = vld [vmem:[%s193 + $0x98] sm:$0xf]
        %v282 = vld [vmem:[%s193 + $0x9c] sm:$0xff]
        %v283 = vld [vmem:[%s193 + $0xa4] sm:$0xf]
        %v284 = vld [vmem:[%s193 + $0xa8] sm:$0xff]
        %v285 = vld [vmem:[%s193 + $0xb0] sm:$0xf]
        %v286 = vld [vmem:[%s193 + $0xb4] sm:$0xff]
        %v287 = vld [vmem:[%s193 + $0xbc] sm:$0xf]
        %v288 = vld [vmem:[%s193 + $0xc0] sm:$0xff]
        %v289 = vld [vmem:[%s193 + $0xc8] sm:$0xf]
        %v290 = vld [vmem:[%s193 + $0xcc] sm:$0xff]
        %v291 = vld [vmem:[%s193 + $0xd4] sm:$0xf]
        %v292 = vld [vmem:[%s193 + $0xd8] sm:$0xff]
        %v293 = vld [vmem:[%s193 + $0xe0] sm:$0xf]
        %v294 = vld [vmem:[%s193 + $0xe4] sm:$0xff]
        %v295 = vld [vmem:[%s193 + $0xec] sm:$0xf]
        %v296 = vld [vmem:[%s193 + $0xf0] sm:$0xff]
        %v297 = vld [vmem:[%s193 + $0xf8] sm:$0xf]
        %v298 = vld [vmem:[%s193 + $0xfc] sm:$0xff]
        %v299 = vld [vmem:[%s193 + $0x104] sm:$0xf]
        %v300 = vld [vmem:[%s193 + $0x108] sm:$0xff]
        %v301 = vld [vmem:[%s193 + $0x110] sm:$0xf]
        %v302 = vld [vmem:[%s193 + $0x114] sm:$0xff]
        %v303 = vld [vmem:[%s193 + $0x11c] sm:$0xf]
        %v304 = vld [vmem:[%s193 + $0x120] sm:$0xff]
        %v305 = vld [vmem:[%s193 + $0x128] sm:$0xf]
        %v306 = vld [vmem:[%s193 + $0x12c] sm:$0xff]
        %v307 = vld [vmem:[%s193 + $0x134] sm:$0xf]
        %v308 = vld [vmem:[%s193 + $0x138] sm:$0xff]
        %v309 = vld [vmem:[%s193 + $0x140] sm:$0xf]
        %v310 = vld [vmem:[%s193 + $0x144] sm:$0xff]
        %v311 = vld [vmem:[%s193 + $0x14c] sm:$0xf]
        %v312 = vld [vmem:[%s193 + $0x150] sm:$0xff]
        %v313 = vld [vmem:[%s193 + $0x158] sm:$0xf]
        %v314 = vld [vmem:[%s193 + $0x15c] sm:$0xff]
        %v315 = vld [vmem:[%s193 + $0x164] sm:$0xf]
        %v316 = vld [vmem:[%s193 + $0x168] sm:$0xff]
        %v317 = vld [vmem:[%s193 + $0x170] sm:$0xf]
        %v318 = vld [vmem:[%s193 + $0x174] sm:$0xff]
        %v319 = vld [vmem:[%s193 + $0x17c] sm:$0xf]
        %v320 = vld [vmem:[%s193 + $0x180] sm:$0xff]
        %v321 = vld [vmem:[%s193 + $0x188] sm:$0xf]
        %v322 = vld [vmem:[%s193 + $0x18c] sm:$0xff]
        %v323 = vld [vmem:[%s193 + $0x194] sm:$0xf]
        %v324 = vld [vmem:[%s193 + $0x198] sm:$0xff]
        %v325 = vld [vmem:[%s193 + $0x1a0] sm:$0xf]
        %v326 = vld [vmem:[%s193 + $0x1a4] sm:$0xff]
        %v327 = vld [vmem:[%s193 + $0x1ac] sm:$0xf]
        %v328 = vld [vmem:[%s193 + $0x1b0] sm:$0xff]
        %v329 = vld [vmem:[%s193 + $0x1b8] sm:$0xf]
        %v330 = vld [vmem:[%s193 + $0x1bc] sm:$0xff]
        %v331 = vld [vmem:[%s193 + $0x1c4] sm:$0xf]
        %v332 = vld [vmem:[%s193 + $0x1c8] sm:$0xff]
        %v333 = vld [vmem:[%s193 + $0x1d0] sm:$0xf]
        %v334 = vld [vmem:[%s193 + $0x1d4] sm:$0xff]
        %v335 = vld [vmem:[%s193 + $0x1dc] sm:$0xf]
        %v336 = vld [vmem:[%s193 + $0x1e0] sm:$0xff]
        %v337 = vld [vmem:[%s193 + $0x1e8] sm:$0xf]
        %v338 = vld [vmem:[%s193 + $0x1ec] sm:$0xff]
        %v339 = vld [vmem:[%s193 + $0x1f4] sm:$0xf]
        %v340 = vld [vmem:[%s193 + $0x1f8] sm:$0xff]
        %v341 = vld [vmem:[%s193 + $0x200] sm:$0xf]
        %v342 = vld [vmem:[%s193 + $0x204] sm:$0xff]
        %v343 = vld [vmem:[%s193 + $0x20c] sm:$0xf]
        %v344 = vld [vmem:[%s193 + $0x210] sm:$0xff]
        %v345 = vld [vmem:[%s193 + $0x218] sm:$0xf]
        %v346 = vld [vmem:[%s193 + $0x21c] sm:$0xff]
        %v347 = vld [vmem:[%s193 + $0x224] sm:$0xf]
        %v348 = vld [vmem:[%s193 + $0x228] sm:$0xff]
        %v349 = vld [vmem:[%s193 + $0x230] sm:$0xf]
        %v350 = vld [vmem:[%s193 + $0x234] sm:$0xff]
        %v351 = vld [vmem:[%s193 + $0x23c] sm:$0xf]
        %v352 = vld [vmem:[%s193 + $0x240] sm:$0xff]
        %v353 = vld [vmem:[%s193 + $0x248] sm:$0xf]
        %v354 = vld [vmem:[%s193 + $0x24c] sm:$0xff]
        %v355 = vld [vmem:[%s193 + $0x254] sm:$0xf]
        %v356 = vld [vmem:[%s193 + $0x258] sm:$0xff]
        %v357 = vld [vmem:[%s193 + $0x260] sm:$0xf]
        %v358 = vld [vmem:[%s193 + $0x264] sm:$0xff]
        %v359 = vld [vmem:[%s193 + $0x26c] sm:$0xf]
        %v360 = vld [vmem:[%s193 + $0x270] sm:$0xff]
        %v361 = vld [vmem:[%s193 + $0x278] sm:$0xf]
        %v362 = vld [vmem:[%s193 + $0x27c] sm:$0xff]
        %v363 = vld [vmem:[%s193 + $0x284] sm:$0xf]
        %v364 = vld [vmem:[%s193 + $0x288] sm:$0xff]
        %v365 = vld [vmem:[%s193 + $0x290] sm:$0xf]
        %v366 = vld [vmem:[%s193 + $0x294] sm:$0xff]
        %v367 = vld [vmem:[%s193 + $0x29c] sm:$0xf]
        %v368 = vld [vmem:[%s193 + $0x2a0] sm:$0xff]
        %v369 = vld [vmem:[%s193 + $0x2a8] sm:$0xf]
        %v370 = vld [vmem:[%s193 + $0x2ac] sm:$0xff]
        %v371 = vld [vmem:[%s193 + $0x2b4] sm:$0xf]
        %v372 = vld [vmem:[%s193 + $0x2b8] sm:$0xff]
        %v373 = vld [vmem:[%s193 + $0x2c0] sm:$0xf]
        %v374 = vld [vmem:[%s193 + $0x2c4] sm:$0xff]
        %v375 = vld [vmem:[%s193 + $0x2cc] sm:$0xf]
        %v376 = vld [vmem:[%s193 + $0x2d0] sm:$0xff]
        %v377 = vld [vmem:[%s193 + $0x2d8] sm:$0xf]
        %v378 = vld [vmem:[%s193 + $0x2dc] sm:$0xff]
        %v379 = vld [vmem:[%s193 + $0x2e4] sm:$0xf]
        %v380 = vld [vmem:[%s193 + $0x2e8] sm:$0xff]
        %v381 = vld [vmem:[%s193 + $0x2f0] sm:$0xf]
        %v382 = vld [vmem:[%s193 + $0x2f4] sm:$0xff]
        %v383 = vld [vmem:[%s193 + $0x2fc] sm:$0xf]
        %v384 = vld [vmem:[%s193 + $0x300] sm:$0xff]
        %v385 = vld [vmem:[%s193 + $0x308] sm:$0xf]
        %v386 = vld [vmem:[%s193 + $0x30c] sm:$0xff]
        %v387 = vld [vmem:[%s193 + $0x314] sm:$0xf]
        %v388 = vld [vmem:[%s193 + $0x318] sm:$0xff]
        %v389 = vld [vmem:[%s193 + $0x320] sm:$0xf]
        %v390 = vld [vmem:[%s193 + $0x324] sm:$0xff]
        %v391 = vld [vmem:[%s193 + $0x32c] sm:$0xf]
        %v392 = vld [vmem:[%s193 + $0x330] sm:$0xff]
        %v393 = vld [vmem:[%s193 + $0x338] sm:$0xf]
        %v394 = vld [vmem:[%s193 + $0x33c] sm:$0xff]
        %v395 = vld [vmem:[%s193 + $0x344] sm:$0xf]
        %v396 = vld [vmem:[%s193 + $0x348] sm:$0xff]
        %v397 = vld [vmem:[%s193 + $0x350] sm:$0xf]
        %v398 = vld [vmem:[%s193 + $0x354] sm:$0xff]
        %v399 = vld [vmem:[%s193 + $0x35c] sm:$0xf]
        %v400 = vld [vmem:[%s193 + $0x360] sm:$0xff]
        %v401 = vld [vmem:[%s193 + $0x368] sm:$0xf]
        %v402 = vld [vmem:[%s193 + $0x36c] sm:$0xff]
        %v403 = vld [vmem:[%s193 + $0x374] sm:$0xf]
        %v404 = vld [vmem:[%s193 + $0x378] sm:$0xff]
        %v405 = vld [vmem:[%s193 + $0x380] sm:$0xf]
        %v406 = vld [vmem:[%s193 + $0x384] sm:$0xff]
        %v407 = vld [vmem:[%s193 + $0x38c] sm:$0xf]
        %v408 = vld [vmem:[%s193 + $0x390] sm:$0xff]
        %v409 = vld [vmem:[%s193 + $0x398] sm:$0xf]
        %v410 = vld [vmem:[%s193 + $0x39c] sm:$0xff]
        %v411 = vld [vmem:[%s193 + $0x3a4] sm:$0xf]
        %v412 = vld [vmem:[%s193 + $0x3a8] sm:$0xff]
        %v413 = vld [vmem:[%s193 + $0x3b0] sm:$0xf]
        %v414 = vld [vmem:[%s193 + $0x3b4] sm:$0xff]
        %v415 = vld [vmem:[%s193 + $0x3bc] sm:$0xf]
        %v416 = vld [vmem:[%s193 + $0x3c0] sm:$0xff]
        %v417 = vld [vmem:[%s193 + $0x3c8] sm:$0xf]
        %v418 = vld [vmem:[%s193 + $0x3cc] sm:$0xff]
        %v419 = vld [vmem:[%s193 + $0x3d4] sm:$0xf]
        %v420 = vld [vmem:[%s193 + $0x3d8] sm:$0xff]
        %v421 = vld [vmem:[%s193 + $0x3e0] sm:$0xf]
        %v422 = vld [vmem:[%s193 + $0x3e4] sm:$0xff]
        %v423 = vld [vmem:[%s193 + $0x3ec] sm:$0xf]
        %v424 = vld [vmem:[%s193 + $0x3f0] sm:$0xff]
        %v425 = vld [vmem:[%s193 + $0x3f8] sm:$0xf]
        %v426 = vld [vmem:[%s193 + $0x3fc] sm:$0xff]
        %v427 = vld [vmem:[%s193 + $0x404] sm:$0xf]
        %v428 = vld [vmem:[%s193 + $0x408] sm:$0xff]
        %v429 = vld [vmem:[%s193 + $0x410] sm:$0xf]
        %v430 = vld [vmem:[%s193 + $0x414] sm:$0xff]
        %v431 = vld [vmem:[%s193 + $0x41c] sm:$0xf]
        %v432 = vld [vmem:[%s193 + $0x420] sm:$0xff]
        %v433 = vld [vmem:[%s193 + $0x428] sm:$0xf]
        %v434 = vld [vmem:[%s193 + $0x42c] sm:$0xff]
        %v435 = vld [vmem:[%s193 + $0x434] sm:$0xf]
        %v436 = vld [vmem:[%s193 + $0x438] sm:$0xff]
        %v437 = vld [vmem:[%s193 + $0x440] sm:$0xf]
        %v438 = vld [vmem:[%s193 + $0x444] sm:$0xff]
        %v439 = vld [vmem:[%s193 + $0x44c] sm:$0xf]
        %v440 = vld [vmem:[%s193 + $0x450] sm:$0xff]
        %v441 = vld [vmem:[%s193 + $0x458] sm:$0xf]
        %v442 = vld [vmem:[%s193 + $0x45c] sm:$0xff]
        %v443 = vld [vmem:[%s193 + $0x464] sm:$0xf]
        %v444 = vld [vmem:[%s193 + $0x468] sm:$0xff]
        %v445 = vld [vmem:[%s193 + $0x470] sm:$0xf]
        %v446 = vld [vmem:[%s193 + $0x474] sm:$0xff]
        %v447 = vld [vmem:[%s193 + $0x47c] sm:$0xf]
        %v448 = vld [vmem:[%s193 + $0x480] sm:$0xff]
        %v449 = vld [vmem:[%s193 + $0x488] sm:$0xf]
        %v450 = vld [vmem:[%s193 + $0x48c] sm:$0xff]
        %v451 = vld [vmem:[%s193 + $0x494] sm:$0xf]
        %v452 = vld [vmem:[%s193 + $0x498] sm:$0xff]
        %v453 = vld [vmem:[%s193 + $0x4a0] sm:$0xf]
        %v454 = vld [vmem:[%s193 + $0x4a4] sm:$0xff]
        %v455 = vld [vmem:[%s193 + $0x4ac] sm:$0xf]
        %v456 = vld [vmem:[%s193 + $0x4b0] sm:$0xff]
        %v457 = vld [vmem:[%s193 + $0x4b8] sm:$0xf]
        %v458 = vld [vmem:[%s193 + $0x4bc] sm:$0xff]
        %v459 = vld [vmem:[%s193 + $0x4c4] sm:$0xf]
        %v460 = vld [vmem:[%s193 + $0x4c8] sm:$0xff]
        %v461 = vld [vmem:[%s193 + $0x4d0] sm:$0xf]
        %v462 = vld [vmem:[%s193 + $0x4d4] sm:$0xff]
        %v463 = vld [vmem:[%s193 + $0x4dc] sm:$0xf]
        %v464 = vld [vmem:[%s193 + $0x4e0] sm:$0xff]
        %v465 = vld [vmem:[%s193 + $0x4e8] sm:$0xf]
        %v466 = vld [vmem:[%s193 + $0x4ec] sm:$0xff]
        %v467 = vld [vmem:[%s193 + $0x4f4] sm:$0xf]
        %v468 = vld [vmem:[%s193 + $0x4f8] sm:$0xff]
        %v469 = vld [vmem:[%s193 + $0x500] sm:$0xf]
        %v470 = vld [vmem:[%s193 + $0x504] sm:$0xff]
        %v471 = vld [vmem:[%s193 + $0x50c] sm:$0xf]
        %v472 = vld [vmem:[%s193 + $0x510] sm:$0xff]
        %v473 = vld [vmem:[%s193 + $0x518] sm:$0xf]
        %v474 = vld [vmem:[%s193 + $0x51c] sm:$0xff]
        %v475 = vld [vmem:[%s193 + $0x524] sm:$0xf]
        %v476 = vld [vmem:[%s193 + $0x528] sm:$0xff]
        %v477 = vld [vmem:[%s193 + $0x530] sm:$0xf]
        %v478 = vld [vmem:[%s193 + $0x534] sm:$0xff]
        %v479 = vld [vmem:[%s193 + $0x53c] sm:$0xf]
        %v480 = vld [vmem:[%s193 + $0x540] sm:$0xff]
        %v481 = vld [vmem:[%s193 + $0x548] sm:$0xf]
        %v482 = vld [vmem:[%s193 + $0x54c] sm:$0xff]
        %v483 = vld [vmem:[%s193 + $0x554] sm:$0xf]
        %v484 = vld [vmem:[%s193 + $0x558] sm:$0xff]
        %v485 = vld [vmem:[%s193 + $0x560] sm:$0xf]
        %v486 = vld [vmem:[%s193 + $0x564] sm:$0xff]
        %v487 = vld [vmem:[%s193 + $0x56c] sm:$0xf]
        %v488 = vld [vmem:[%s193 + $0x570] sm:$0xff]
        %v489 = vld [vmem:[%s193 + $0x578] sm:$0xf]
        %v490 = vld [vmem:[%s193 + $0x57c] sm:$0xff]
        %v491 = vld [vmem:[%s193 + $0x584] sm:$0xf]
        %v492 = vld [vmem:[%s193 + $0x588] sm:$0xff]
        %v493 = vld [vmem:[%s193 + $0x590] sm:$0xf]
        %v494 = vld [vmem:[%s193 + $0x594] sm:$0xff]
        %v495 = vld [vmem:[%s193 + $0x59c] sm:$0xf]
        %v496 = vld [vmem:[%s193 + $0x5a0] sm:$0xff]
        %v497 = vld [vmem:[%s193 + $0x5a8] sm:$0xf]
        %v498 = vld [vmem:[%s193 + $0x5ac] sm:$0xff]
        %v499 = vld [vmem:[%s193 + $0x5b4] sm:$0xf]
        %v500 = vld [vmem:[%s193 + $0x5b8] sm:$0xff]
        %v501 = vld [vmem:[%s193 + $0x5c0] sm:$0xf]
        %v502 = vld [vmem:[%s193 + $0x5c4] sm:$0xff]
        %v503 = vld [vmem:[%s193 + $0x5cc] sm:$0xf]
        %v504 = vld [vmem:[%s193 + $0x5d0] sm:$0xff]
        %v505 = vld [vmem:[%s193 + $0x5d8] sm:$0xf]
        %v506 = vld [vmem:[%s193 + $0x5dc] sm:$0xff]
        %v507 = vld [vmem:[%s193 + $0x5e4] sm:$0xf]
        %v508 = vld [vmem:[%s193 + $0x5e8] sm:$0xff]
        %v509 = vld [vmem:[%s193 + $0x5f0] sm:$0xf]
        %v510 = vld [vmem:[%s193 + $0x5f4] sm:$0xff]
        %v511 = vld [vmem:[%s193 + $0x5fc] sm:$0xf]
        %v516 = vunpack.c.l.b16 %v252
        %v517 = vunpack.c.h.b16 %v252
        %v518 = vunpack.c.l.b16 %v253
        %v519 = vunpack.c.h.b16 %v253
        %v520 = vunpack.c.l.b16 %v254
        %v521 = vunpack.c.h.b16 %v254
        %v522 = vunpack.c.l.b16 %v255
        %v523 = vunpack.c.h.b16 %v255
        %v524 = vpack.c.b16 %v516, %v516
        %v525 = vpack.c.b16 %v517, %v517
        %v526 = vpack.c.b16 %v518, %v518
        %v527 = vpack.c.b16 %v519, %v519
        %v528 = vpack.c.b16 %v520, %v520
        %v529 = vpack.c.b16 %v521, %v521
        %v530 = vpack.c.b16 %v522, %v522
        %v531 = vpack.c.b16 %v523, %v523
        %v796 = vunpack.c.l.b16 %v256
        %v797 = vunpack.c.h.b16 %v256
        %v798 = vunpack.c.l.b16 %v257
        %v799 = vunpack.c.l.b16 %v258
        %v800 = vunpack.c.h.b16 %v258
        %v801 = vunpack.c.l.b16 %v259
        %v802 = vunpack.c.l.b16 %v260
        %v803 = vunpack.c.h.b16 %v260
        %v804 = vunpack.c.l.b16 %v261
        %v805 = vunpack.c.l.b16 %v262
        %v806 = vunpack.c.h.b16 %v262
        %v807 = vunpack.c.l.b16 %v263
        %v808 = vunpack.c.l.b16 %v264
        %v809 = vunpack.c.h.b16 %v264
        %v810 = vunpack.c.l.b16 %v265
        %v811 = vunpack.c.l.b16 %v266
        %v812 = vunpack.c.h.b16 %v266
        %v813 = vunpack.c.l.b16 %v267
        %v814 = vunpack.c.l.b16 %v268
        %v815 = vunpack.c.h.b16 %v268
        %v816 = vunpack.c.l.b16 %v269
        %v817 = vunpack.c.l.b16 %v270
        %v818 = vunpack.c.h.b16 %v270
        %v819 = vunpack.c.l.b16 %v271
        %v820 = vunpack.c.l.b16 %v272
        %v821 = vunpack.c.h.b16 %v272
        %v822 = vunpack.c.l.b16 %v273
        %v823 = vunpack.c.l.b16 %v274
        %v824 = vunpack.c.h.b16 %v274
        %v825 = vunpack.c.l.b16 %v275
        %v826 = vunpack.c.l.b16 %v276
        %v827 = vunpack.c.h.b16 %v276
        %v828 = vunpack.c.l.b16 %v277
        %v829 = vunpack.c.l.b16 %v278
        %v830 = vunpack.c.h.b16 %v278
        %v831 = vunpack.c.l.b16 %v279
        %v832 = vunpack.c.l.b16 %v280
        %v833 = vunpack.c.h.b16 %v280
        %v834 = vunpack.c.l.b16 %v281
        %v835 = vunpack.c.l.b16 %v282
        %v836 = vunpack.c.h.b16 %v282
        %v837 = vunpack.c.l.b16 %v283
        %v838 = vunpack.c.l.b16 %v284
        %v839 = vunpack.c.h.b16 %v284
        %v840 = vunpack.c.l.b16 %v285
        %v841 = vunpack.c.l.b16 %v286
        %v842 = vunpack.c.h.b16 %v286
        %v843 = vunpack.c.l.b16 %v287
        %v844 = vunpack.c.l.b16 %v288
        %v845 = vunpack.c.h.b16 %v288
        %v846 = vunpack.c.l.b16 %v289
        %v847 = vunpack.c.l.b16 %v290
        %v848 = vunpack.c.h.b16 %v290
        %v849 = vunpack.c.l.b16 %v291
        %v850 = vunpack.c.l.b16 %v292
        %v851 = vunpack.c.h.b16 %v292
        %v852 = vunpack.c.l.b16 %v293
        %v853 = vunpack.c.l.b16 %v294
        %v854 = vunpack.c.h.b16 %v294
        %v855 = vunpack.c.l.b16 %v295
        %v856 = vunpack.c.l.b16 %v296
        %v857 = vunpack.c.h.b16 %v296
        %v858 = vunpack.c.l.b16 %v297
        %v859 = vunpack.c.l.b16 %v298
        %v860 = vunpack.c.h.b16 %v298
        %v861 = vunpack.c.l.b16 %v299
        %v862 = vunpack.c.l.b16 %v300
        %v863 = vunpack.c.h.b16 %v300
        %v864 = vunpack.c.l.b16 %v301
        %v865 = vunpack.c.l.b16 %v302
        %v866 = vunpack.c.h.b16 %v302
        %v867 = vunpack.c.l.b16 %v303
        %v868 = vunpack.c.l.b16 %v304
        %v869 = vunpack.c.h.b16 %v304
        %v870 = vunpack.c.l.b16 %v305
        %v871 = vunpack.c.l.b16 %v306
        %v872 = vunpack.c.h.b16 %v306
        %v873 = vunpack.c.l.b16 %v307
        %v874 = vunpack.c.l.b16 %v308
        %v875 = vunpack.c.h.b16 %v308
        %v876 = vunpack.c.l.b16 %v309
        %v877 = vunpack.c.l.b16 %v310
        %v878 = vunpack.c.h.b16 %v310
        %v879 = vunpack.c.l.b16 %v311
        %v880 = vunpack.c.l.b16 %v312
        %v881 = vunpack.c.h.b16 %v312
        %v882 = vunpack.c.l.b16 %v313
        %v883 = vunpack.c.l.b16 %v314
        %v884 = vunpack.c.h.b16 %v314
        %v885 = vunpack.c.l.b16 %v315
        %v886 = vunpack.c.l.b16 %v316
        %v887 = vunpack.c.h.b16 %v316
        %v888 = vunpack.c.l.b16 %v317
        %v889 = vunpack.c.l.b16 %v318
        %v890 = vunpack.c.h.b16 %v318
        %v891 = vunpack.c.l.b16 %v319
        %v892 = vunpack.c.l.b16 %v320
        %v893 = vunpack.c.h.b16 %v320
        %v894 = vunpack.c.l.b16 %v321
        %v895 = vunpack.c.l.b16 %v322
        %v896 = vunpack.c.h.b16 %v322
        %v897 = vunpack.c.l.b16 %v323
        %v898 = vunpack.c.l.b16 %v324
        %v899 = vunpack.c.h.b16 %v324
        %v900 = vunpack.c.l.b16 %v325
        %v901 = vunpack.c.l.b16 %v326
        %v902 = vunpack.c.h.b16 %v326
        %v903 = vunpack.c.l.b16 %v327
        %v904 = vunpack.c.l.b16 %v328
        %v905 = vunpack.c.h.b16 %v328
        %v906 = vunpack.c.l.b16 %v329
        %v907 = vunpack.c.l.b16 %v330
        %v908 = vunpack.c.h.b16 %v330
        %v909 = vunpack.c.l.b16 %v331
        %v910 = vunpack.c.l.b16 %v332
        %v911 = vunpack.c.h.b16 %v332
        %v912 = vunpack.c.l.b16 %v333
        %v913 = vunpack.c.l.b16 %v334
        %v914 = vunpack.c.h.b16 %v334
        %v915 = vunpack.c.l.b16 %v335
        %v916 = vunpack.c.l.b16 %v336
        %v917 = vunpack.c.h.b16 %v336
        %v918 = vunpack.c.l.b16 %v337
        %v919 = vunpack.c.l.b16 %v338
        %v920 = vunpack.c.h.b16 %v338
        %v921 = vunpack.c.l.b16 %v339
        %v922 = vunpack.c.l.b16 %v340
        %v923 = vunpack.c.h.b16 %v340
        %v924 = vunpack.c.l.b16 %v341
        %v925 = vunpack.c.l.b16 %v342
        %v926 = vunpack.c.h.b16 %v342
        %v927 = vunpack.c.l.b16 %v343
        %v928 = vunpack.c.l.b16 %v344
        %v929 = vunpack.c.h.b16 %v344
        %v930 = vunpack.c.l.b16 %v345
        %v931 = vunpack.c.l.b16 %v346
        %v932 = vunpack.c.h.b16 %v346
        %v933 = vunpack.c.l.b16 %v347
        %v934 = vunpack.c.l.b16 %v348
        %v935 = vunpack.c.h.b16 %v348
        %v936 = vunpack.c.l.b16 %v349
        %v937 = vunpack.c.l.b16 %v350
        %v938 = vunpack.c.h.b16 %v350
        %v939 = vunpack.c.l.b16 %v351
        %v940 = vunpack.c.l.b16 %v352
        %v941 = vunpack.c.h.b16 %v352
        %v942 = vunpack.c.l.b16 %v353
        %v943 = vunpack.c.l.b16 %v354
        %v944 = vunpack.c.h.b16 %v354
        %v945 = vunpack.c.l.b16 %v355
        %v946 = vunpack.c.l.b16 %v356
        %v947 = vunpack.c.h.b16 %v356
        %v948 = vunpack.c.l.b16 %v357
        %v949 = vunpack.c.l.b16 %v358
        %v950 = vunpack.c.h.b16 %v358
        %v951 = vunpack.c.l.b16 %v359
        %v952 = vunpack.c.l.b16 %v360
        %v953 = vunpack.c.h.b16 %v360
        %v954 = vunpack.c.l.b16 %v361
        %v955 = vunpack.c.l.b16 %v362
        %v956 = vunpack.c.h.b16 %v362
        %v957 = vunpack.c.l.b16 %v363
        %v958 = vunpack.c.l.b16 %v364
        %v959 = vunpack.c.h.b16 %v364
        %v960 = vunpack.c.l.b16 %v365
        %v961 = vunpack.c.l.b16 %v366
        %v962 = vunpack.c.h.b16 %v366
        %v963 = vunpack.c.l.b16 %v367
        %v964 = vunpack.c.l.b16 %v368
        %v965 = vunpack.c.h.b16 %v368
        %v966 = vunpack.c.l.b16 %v369
        %v967 = vunpack.c.l.b16 %v370
        %v968 = vunpack.c.h.b16 %v370
        %v969 = vunpack.c.l.b16 %v371
        %v970 = vunpack.c.l.b16 %v372
        %v971 = vunpack.c.h.b16 %v372
        %v972 = vunpack.c.l.b16 %v373
        %v973 = vunpack.c.l.b16 %v374
        %v974 = vunpack.c.h.b16 %v374
        %v975 = vunpack.c.l.b16 %v375
        %v976 = vunpack.c.l.b16 %v376
        %v977 = vunpack.c.h.b16 %v376
        %v978 = vunpack.c.l.b16 %v377
        %v979 = vunpack.c.l.b16 %v378
        %v980 = vunpack.c.h.b16 %v378
        %v981 = vunpack.c.l.b16 %v379
        %v982 = vunpack.c.l.b16 %v380
        %v983 = vunpack.c.h.b16 %v380
        %v984 = vunpack.c.l.b16 %v381
        %v985 = vunpack.c.l.b16 %v382
        %v986 = vunpack.c.h.b16 %v382
        %v987 = vunpack.c.l.b16 %v383
        %v988 = vunpack.c.l.b16 %v384
        %v989 = vunpack.c.h.b16 %v384
        %v990 = vunpack.c.l.b16 %v385
        %v991 = vunpack.c.l.b16 %v386
        %v992 = vunpack.c.h.b16 %v386
        %v993 = vunpack.c.l.b16 %v387
        %v994 = vunpack.c.l.b16 %v388
        %v995 = vunpack.c.h.b16 %v388
        %v996 = vunpack.c.l.b16 %v389
        %v997 = vunpack.c.l.b16 %v390
        %v998 = vunpack.c.h.b16 %v390
        %v999 = vunpack.c.l.b16 %v391
        %v1000 = vunpack.c.l.b16 %v392
        %v1001 = vunpack.c.h.b16 %v392
        %v1002 = vunpack.c.l.b16 %v393
        %v1003 = vunpack.c.l.b16 %v394
        %v1004 = vunpack.c.h.b16 %v394
        %v1005 = vunpack.c.l.b16 %v395
        %v1006 = vunpack.c.l.b16 %v396
        %v1007 = vunpack.c.h.b16 %v396
        %v1008 = vunpack.c.l.b16 %v397
        %v1009 = vunpack.c.l.b16 %v398
        %v1010 = vunpack.c.h.b16 %v398
        %v1011 = vunpack.c.l.b16 %v399
        %v1012 = vunpack.c.l.b16 %v400
        %v1013 = vunpack.c.h.b16 %v400
        %v1014 = vunpack.c.l.b16 %v401
        %v1015 = vunpack.c.l.b16 %v402
        %v1016 = vunpack.c.h.b16 %v402
        %v1017 = vunpack.c.l.b16 %v403
        %v1018 = vunpack.c.l.b16 %v404
        %v1019 = vunpack.c.h.b16 %v404
        %v1020 = vunpack.c.l.b16 %v405
        %v1021 = vunpack.c.l.b16 %v406
        %v1022 = vunpack.c.h.b16 %v406
        %v1023 = vunpack.c.l.b16 %v407
        %v1024 = vunpack.c.l.b16 %v408
        %v1025 = vunpack.c.h.b16 %v408
        %v1026 = vunpack.c.l.b16 %v409
        %v1027 = vunpack.c.l.b16 %v410
        %v1028 = vunpack.c.h.b16 %v410
        %v1029 = vunpack.c.l.b16 %v411
        %v1030 = vunpack.c.l.b16 %v412
        %v1031 = vunpack.c.h.b16 %v412
        %v1032 = vunpack.c.l.b16 %v413
        %v1033 = vunpack.c.l.b16 %v414
        %v1034 = vunpack.c.h.b16 %v414
        %v1035 = vunpack.c.l.b16 %v415
        %v1036 = vunpack.c.l.b16 %v416
        %v1037 = vunpack.c.h.b16 %v416
        %v1038 = vunpack.c.l.b16 %v417
        %v1039 = vunpack.c.l.b16 %v418
        %v1040 = vunpack.c.h.b16 %v418
        %v1041 = vunpack.c.l.b16 %v419
        %v1042 = vunpack.c.l.b16 %v420
        %v1043 = vunpack.c.h.b16 %v420
        %v1044 = vunpack.c.l.b16 %v421
        %v1045 = vunpack.c.l.b16 %v422
        %v1046 = vunpack.c.h.b16 %v422
        %v1047 = vunpack.c.l.b16 %v423
        %v1048 = vunpack.c.l.b16 %v424
        %v1049 = vunpack.c.h.b16 %v424
        %v1050 = vunpack.c.l.b16 %v425
        %v1051 = vunpack.c.l.b16 %v426
        %v1052 = vunpack.c.h.b16 %v426
        %v1053 = vunpack.c.l.b16 %v427
        %v1054 = vunpack.c.l.b16 %v428
        %v1055 = vunpack.c.h.b16 %v428
        %v1056 = vunpack.c.l.b16 %v429
        %v1057 = vunpack.c.l.b16 %v430
        %v1058 = vunpack.c.h.b16 %v430
        %v1059 = vunpack.c.l.b16 %v431
        %v1060 = vunpack.c.l.b16 %v432
        %v1061 = vunpack.c.h.b16 %v432
        %v1062 = vunpack.c.l.b16 %v433
        %v1063 = vunpack.c.l.b16 %v434
        %v1064 = vunpack.c.h.b16 %v434
        %v1065 = vunpack.c.l.b16 %v435
        %v1066 = vunpack.c.l.b16 %v436
        %v1067 = vunpack.c.h.b16 %v436
        %v1068 = vunpack.c.l.b16 %v437
        %v1069 = vunpack.c.l.b16 %v438
        %v1070 = vunpack.c.h.b16 %v438
        %v1071 = vunpack.c.l.b16 %v439
        %v1072 = vunpack.c.l.b16 %v440
        %v1073 = vunpack.c.h.b16 %v440
        %v1074 = vunpack.c.l.b16 %v441
        %v1075 = vunpack.c.l.b16 %v442
        %v1076 = vunpack.c.h.b16 %v442
        %v1077 = vunpack.c.l.b16 %v443
        %v1078 = vunpack.c.l.b16 %v444
        %v1079 = vunpack.c.h.b16 %v444
        %v1080 = vunpack.c.l.b16 %v445
        %v1081 = vunpack.c.l.b16 %v446
        %v1082 = vunpack.c.h.b16 %v446
        %v1083 = vunpack.c.l.b16 %v447
        %v1084 = vunpack.c.l.b16 %v448
        %v1085 = vunpack.c.h.b16 %v448
        %v1086 = vunpack.c.l.b16 %v449
        %v1087 = vunpack.c.l.b16 %v450
        %v1088 = vunpack.c.h.b16 %v450
        %v1089 = vunpack.c.l.b16 %v451
        %v1090 = vunpack.c.l.b16 %v452
        %v1091 = vunpack.c.h.b16 %v452
        %v1092 = vunpack.c.l.b16 %v453
        %v1093 = vunpack.c.l.b16 %v454
        %v1094 = vunpack.c.h.b16 %v454
        %v1095 = vunpack.c.l.b16 %v455
        %v1096 = vunpack.c.l.b16 %v456
        %v1097 = vunpack.c.h.b16 %v456
        %v1098 = vunpack.c.l.b16 %v457
        %v1099 = vunpack.c.l.b16 %v458
        %v1100 = vunpack.c.h.b16 %v458
        %v1101 = vunpack.c.l.b16 %v459
        %v1102 = vunpack.c.l.b16 %v460
        %v1103 = vunpack.c.h.b16 %v460
        %v1104 = vunpack.c.l.b16 %v461
        %v1105 = vunpack.c.l.b16 %v462
        %v1106 = vunpack.c.h.b16 %v462
        %v1107 = vunpack.c.l.b16 %v463
        %v1108 = vunpack.c.l.b16 %v464
        %v1109 = vunpack.c.h.b16 %v464
        %v1110 = vunpack.c.l.b16 %v465
        %v1111 = vunpack.c.l.b16 %v466
        %v1112 = vunpack.c.h.b16 %v466
        %v1113 = vunpack.c.l.b16 %v467
        %v1114 = vunpack.c.l.b16 %v468
        %v1115 = vunpack.c.h.b16 %v468
        %v1116 = vunpack.c.l.b16 %v469
        %v1117 = vunpack.c.l.b16 %v470
        %v1118 = vunpack.c.h.b16 %v470
        %v1119 = vunpack.c.l.b16 %v471
        %v1120 = vunpack.c.l.b16 %v472
        %v1121 = vunpack.c.h.b16 %v472
        %v1122 = vunpack.c.l.b16 %v473
        %v1123 = vunpack.c.l.b16 %v474
        %v1124 = vunpack.c.h.b16 %v474
        %v1125 = vunpack.c.l.b16 %v475
        %v1126 = vunpack.c.l.b16 %v476
        %v1127 = vunpack.c.h.b16 %v476
        %v1128 = vunpack.c.l.b16 %v477
        %v1129 = vunpack.c.l.b16 %v478
        %v1130 = vunpack.c.h.b16 %v478
        %v1131 = vunpack.c.l.b16 %v479
        %v1132 = vunpack.c.l.b16 %v480
        %v1133 = vunpack.c.h.b16 %v480
        %v1134 = vunpack.c.l.b16 %v481
        %v1135 = vunpack.c.l.b16 %v482
        %v1136 = vunpack.c.h.b16 %v482
        %v1137 = vunpack.c.l.b16 %v483
        %v1138 = vunpack.c.l.b16 %v484
        %v1139 = vunpack.c.h.b16 %v484
        %v1140 = vunpack.c.l.b16 %v485
        %v1141 = vunpack.c.l.b16 %v486
        %v1142 = vunpack.c.h.b16 %v486
        %v1143 = vunpack.c.l.b16 %v487
        %v1144 = vunpack.c.l.b16 %v488
        %v1145 = vunpack.c.h.b16 %v488
        %v1146 = vunpack.c.l.b16 %v489
        %v1147 = vunpack.c.l.b16 %v490
        %v1148 = vunpack.c.h.b16 %v490
        %v1149 = vunpack.c.l.b16 %v491
        %v1150 = vunpack.c.l.b16 %v492
        %v1151 = vunpack.c.h.b16 %v492
        %v1152 = vunpack.c.l.b16 %v493
        %v1153 = vunpack.c.l.b16 %v494
        %v1154 = vunpack.c.h.b16 %v494
        %v1155 = vunpack.c.l.b16 %v495
        %v1156 = vunpack.c.l.b16 %v496
        %v1157 = vunpack.c.h.b16 %v496
        %v1158 = vunpack.c.l.b16 %v497
        %v1159 = vunpack.c.l.b16 %v498
        %v1160 = vunpack.c.h.b16 %v498
        %v1161 = vunpack.c.l.b16 %v499
        %v1162 = vunpack.c.l.b16 %v500
        %v1163 = vunpack.c.h.b16 %v500
        %v1164 = vunpack.c.l.b16 %v501
        %v1165 = vunpack.c.l.b16 %v502
        %v1166 = vunpack.c.h.b16 %v502
        %v1167 = vunpack.c.l.b16 %v503
        %v1168 = vunpack.c.l.b16 %v504
        %v1169 = vunpack.c.h.b16 %v504
        %v1170 = vunpack.c.l.b16 %v505
        %v1171 = vunpack.c.l.b16 %v506
        %v1172 = vunpack.c.h.b16 %v506
        %v1173 = vunpack.c.l.b16 %v507
        %v1174 = vunpack.c.l.b16 %v508
        %v1175 = vunpack.c.h.b16 %v508
        %v1176 = vunpack.c.l.b16 %v509
        %v1177 = vunpack.c.l.b16 %v510
        %v1178 = vunpack.c.h.b16 %v510
        %v1179 = vunpack.c.l.b16 %v511
        %v1180 = vpack.c.b16 %v799, %v796
        %v1181 = vpack.c.b16 %v800, %v797
        %v1182 = vpack.c.b16 %v801, %v798
        %v1183 = vpack.c.b16 %v805, %v802
        %v1184 = vpack.c.b16 %v806, %v803
        %v1185 = vpack.c.b16 %v807, %v804
        %v1186 = vpack.c.b16 %v811, %v808
        %v1187 = vpack.c.b16 %v812, %v809
        %v1188 = vpack.c.b16 %v813, %v810
        %v1189 = vpack.c.b16 %v817, %v814
        %v1190 = vpack.c.b16 %v818, %v815
        %v1191 = vpack.c.b16 %v819, %v816
        %v1192 = vpack.c.b16 %v823, %v820
        %v1193 = vpack.c.b16 %v824, %v821
        %v1194 = vpack.c.b16 %v825, %v822
        %v1195 = vpack.c.b16 %v829, %v826
        %v1196 = vpack.c.b16 %v830, %v827
        %v1197 = vpack.c.b16 %v831, %v828
        %v1198 = vpack.c.b16 %v835, %v832
        %v1199 = vpack.c.b16 %v836, %v833
        %v1200 = vpack.c.b16 %v837, %v834
        %v1201 = vpack.c.b16 %v841, %v838
        %v1202 = vpack.c.b16 %v842, %v839
        %v1203 = vpack.c.b16 %v843, %v840
        %v1204 = vpack.c.b16 %v847, %v844
        %v1205 = vpack.c.b16 %v848, %v845
        %v1206 = vpack.c.b16 %v849, %v846
        %v1207 = vpack.c.b16 %v853, %v850
        %v1208 = vpack.c.b16 %v854, %v851
        %v1209 = vpack.c.b16 %v855, %v852
        %v1210 = vpack.c.b16 %v859, %v856
        %v1211 = vpack.c.b16 %v860, %v857
        %v1212 = vpack.c.b16 %v861, %v858
        %v1213 = vpack.c.b16 %v865, %v862
        %v1214 = vpack.c.b16 %v866, %v863
        %v1215 = vpack.c.b16 %v867, %v864
        %v1216 = vpack.c.b16 %v871, %v868
        %v1217 = vpack.c.b16 %v872, %v869
        %v1218 = vpack.c.b16 %v873, %v870
        %v1219 = vpack.c.b16 %v877, %v874
        %v1220 = vpack.c.b16 %v878, %v875
        %v1221 = vpack.c.b16 %v879, %v876
        %v1222 = vpack.c.b16 %v883, %v880
        %v1223 = vpack.c.b16 %v884, %v881
        %v1224 = vpack.c.b16 %v885, %v882
        %v1225 = vpack.c.b16 %v889, %v886
        %v1226 = vpack.c.b16 %v890, %v887
        %v1227 = vpack.c.b16 %v891, %v888
        %v1228 = vpack.c.b16 %v895, %v892
        %v1229 = vpack.c.b16 %v896, %v893
        %v1230 = vpack.c.b16 %v897, %v894
        %v1231 = vpack.c.b16 %v901, %v898
        %v1232 = vpack.c.b16 %v902, %v899
        %v1233 = vpack.c.b16 %v903, %v900
        %v1234 = vpack.c.b16 %v907, %v904
        %v1235 = vpack.c.b16 %v908, %v905
        %v1236 = vpack.c.b16 %v909, %v906
        %v1237 = vpack.c.b16 %v913, %v910
        %v1238 = vpack.c.b16 %v914, %v911
        %v1239 = vpack.c.b16 %v915, %v912
        %v1240 = vpack.c.b16 %v919, %v916
        %v1241 = vpack.c.b16 %v920, %v917
        %v1242 = vpack.c.b16 %v921, %v918
        %v1243 = vpack.c.b16 %v925, %v922
        %v1244 = vpack.c.b16 %v926, %v923
        %v1245 = vpack.c.b16 %v927, %v924
        %v1246 = vpack.c.b16 %v931, %v928
        %v1247 = vpack.c.b16 %v932, %v929
        %v1248 = vpack.c.b16 %v933, %v930
        %v1249 = vpack.c.b16 %v937, %v934
        %v1250 = vpack.c.b16 %v938, %v935
        %v1251 = vpack.c.b16 %v939, %v936
        %v1252 = vpack.c.b16 %v943, %v940
        %v1253 = vpack.c.b16 %v944, %v941
        %v1254 = vpack.c.b16 %v945, %v942
        %v1255 = vpack.c.b16 %v949, %v946
        %v1256 = vpack.c.b16 %v950, %v947
        %v1257 = vpack.c.b16 %v951, %v948
        %v1258 = vpack.c.b16 %v955, %v952
        %v1259 = vpack.c.b16 %v956, %v953
        %v1260 = vpack.c.b16 %v957, %v954
        %v1261 = vpack.c.b16 %v961, %v958
        %v1262 = vpack.c.b16 %v962, %v959
        %v1263 = vpack.c.b16 %v963, %v960
        %v1264 = vpack.c.b16 %v967, %v964
        %v1265 = vpack.c.b16 %v968, %v965
        %v1266 = vpack.c.b16 %v969, %v966
        %v1267 = vpack.c.b16 %v973, %v970
        %v1268 = vpack.c.b16 %v974, %v971
        %v1269 = vpack.c.b16 %v975, %v972
        %v1270 = vpack.c.b16 %v979, %v976
        %v1271 = vpack.c.b16 %v980, %v977
        %v1272 = vpack.c.b16 %v981, %v978
        %v1273 = vpack.c.b16 %v985, %v982
        %v1274 = vpack.c.b16 %v986, %v983
        %v1275 = vpack.c.b16 %v987, %v984
        %v1276 = vpack.c.b16 %v991, %v988
        %v1277 = vpack.c.b16 %v992, %v989
        %v1278 = vpack.c.b16 %v993, %v990
        %v1279 = vpack.c.b16 %v997, %v994
        %v1280 = vpack.c.b16 %v998, %v995
        %v1281 = vpack.c.b16 %v999, %v996
        %v1282 = vpack.c.b16 %v1003, %v1000
        %v1283 = vpack.c.b16 %v1004, %v1001
        %v1284 = vpack.c.b16 %v1005, %v1002
        %v1285 = vpack.c.b16 %v1009, %v1006
        %v1286 = vpack.c.b16 %v1010, %v1007
        %v1287 = vpack.c.b16 %v1011, %v1008
        %v1288 = vpack.c.b16 %v1015, %v1012
        %v1289 = vpack.c.b16 %v1016, %v1013
        %v1290 = vpack.c.b16 %v1017, %v1014
        %v1291 = vpack.c.b16 %v1021, %v1018
        %v1292 = vpack.c.b16 %v1022, %v1019
        %v1293 = vpack.c.b16 %v1023, %v1020
        %v1294 = vpack.c.b16 %v1027, %v1024
        %v1295 = vpack.c.b16 %v1028, %v1025
        %v1296 = vpack.c.b16 %v1029, %v1026
        %v1297 = vpack.c.b16 %v1033, %v1030
        %v1298 = vpack.c.b16 %v1034, %v1031
        %v1299 = vpack.c.b16 %v1035, %v1032
        %v1300 = vpack.c.b16 %v1039, %v1036
        %v1301 = vpack.c.b16 %v1040, %v1037
        %v1302 = vpack.c.b16 %v1041, %v1038
        %v1303 = vpack.c.b16 %v1045, %v1042
        %v1304 = vpack.c.b16 %v1046, %v1043
        %v1305 = vpack.c.b16 %v1047, %v1044
        %v1306 = vpack.c.b16 %v1051, %v1048
        %v1307 = vpack.c.b16 %v1052, %v1049
        %v1308 = vpack.c.b16 %v1053, %v1050
        %v1309 = vpack.c.b16 %v1057, %v1054
        %v1310 = vpack.c.b16 %v1058, %v1055
        %v1311 = vpack.c.b16 %v1059, %v1056
        %v1312 = vpack.c.b16 %v1063, %v1060
        %v1313 = vpack.c.b16 %v1064, %v1061
        %v1314 = vpack.c.b16 %v1065, %v1062
        %v1315 = vpack.c.b16 %v1069, %v1066
        %v1316 = vpack.c.b16 %v1070, %v1067
        %v1317 = vpack.c.b16 %v1071, %v1068
        %v1318 = vpack.c.b16 %v1075, %v1072
        %v1319 = vpack.c.b16 %v1076, %v1073
        %v1320 = vpack.c.b16 %v1077, %v1074
        %v1321 = vpack.c.b16 %v1081, %v1078
        %v1322 = vpack.c.b16 %v1082, %v1079
        %v1323 = vpack.c.b16 %v1083, %v1080
        %v1324 = vpack.c.b16 %v1087, %v1084
        %v1325 = vpack.c.b16 %v1088, %v1085
        %v1326 = vpack.c.b16 %v1089, %v1086
        %v1327 = vpack.c.b16 %v1093, %v1090
        %v1328 = vpack.c.b16 %v1094, %v1091
        %v1329 = vpack.c.b16 %v1095, %v1092
        %v1330 = vpack.c.b16 %v1099, %v1096
        %v1331 = vpack.c.b16 %v1100, %v1097
        %v1332 = vpack.c.b16 %v1101, %v1098
        %v1333 = vpack.c.b16 %v1105, %v1102
        %v1334 = vpack.c.b16 %v1106, %v1103
        %v1335 = vpack.c.b16 %v1107, %v1104
        %v1336 = vpack.c.b16 %v1111, %v1108
        %v1337 = vpack.c.b16 %v1112, %v1109
        %v1338 = vpack.c.b16 %v1113, %v1110
        %v1339 = vpack.c.b16 %v1117, %v1114
        %v1340 = vpack.c.b16 %v1118, %v1115
        %v1341 = vpack.c.b16 %v1119, %v1116
        %v1342 = vpack.c.b16 %v1123, %v1120
        %v1343 = vpack.c.b16 %v1124, %v1121
        %v1344 = vpack.c.b16 %v1125, %v1122
        %v1345 = vpack.c.b16 %v1129, %v1126
        %v1346 = vpack.c.b16 %v1130, %v1127
        %v1347 = vpack.c.b16 %v1131, %v1128
        %v1348 = vpack.c.b16 %v1135, %v1132
        %v1349 = vpack.c.b16 %v1136, %v1133
        %v1350 = vpack.c.b16 %v1137, %v1134
        %v1351 = vpack.c.b16 %v1141, %v1138
        %v1352 = vpack.c.b16 %v1142, %v1139
        %v1353 = vpack.c.b16 %v1143, %v1140
        %v1354 = vpack.c.b16 %v1147, %v1144
        %v1355 = vpack.c.b16 %v1148, %v1145
        %v1356 = vpack.c.b16 %v1149, %v1146
        %v1357 = vpack.c.b16 %v1153, %v1150
        %v1358 = vpack.c.b16 %v1154, %v1151
        %v1359 = vpack.c.b16 %v1155, %v1152
        %v1360 = vpack.c.b16 %v1159, %v1156
        %v1361 = vpack.c.b16 %v1160, %v1157
        %v1362 = vpack.c.b16 %v1161, %v1158
        %v1363 = vpack.c.b16 %v1165, %v1162
        %v1364 = vpack.c.b16 %v1166, %v1163
        %v1365 = vpack.c.b16 %v1167, %v1164
        %v1366 = vpack.c.b16 %v1171, %v1168
        %v1367 = vpack.c.b16 %v1172, %v1169
        %v1368 = vpack.c.b16 %v1173, %v1170
        %v1369 = vpack.c.b16 %v1177, %v1174
        %v1370 = vpack.c.b16 %v1178, %v1175
        %v1371 = vpack.c.b16 %v1179, %v1176
        %1564 = vmatprep.subr.bf16.mxu0 %v1202
        %1565 = vmatpush1.bf16.msra.mxu0 %v1201
        %1566 = vmatprep.subr.bf16.mxu0 %v1199
        %1567 = vmatpush1.bf16.msra.mxu0 %v1198
        %1568 = vmatprep.subr.bf16.mxu0 %v1196
        %1569 = vmatpush1.bf16.msra.mxu0 %v1195
        %1570 = vmatprep.subr.bf16.mxu0 %v1193
        %1571 = vmatpush1.bf16.msra.mxu0 %v1192
        %1572 = vmatprep.subr.bf16.mxu0 %v1190
        %1573 = vmatpush1.bf16.msra.mxu0 %v1189
        %1574 = vmatprep.subr.bf16.mxu0 %v1187
        %1575 = vmatpush1.bf16.msra.mxu0 %v1186
        %1576 = vmatprep.subr.bf16.mxu0 %v1184
        %1577 = vmatpush1.bf16.msra.mxu0 %v1183
        %1578 = vmatprep.subr.bf16.mxu0 %v1181
        %1579 = vmatpush1.bf16.msra.mxu0 %v1180
        %1580 = vmatprep.subr.bf16.mxu0 %v1226
        %1581 = vmatpush2.bf16.msra.mxu0 %v1225
        %1582 = vmatprep.subr.bf16.mxu0 %v1223
        %1583 = vmatpush2.bf16.msra.mxu0 %v1222
        %1584 = vmatprep.subr.bf16.mxu0 %v1220
        %1585 = vmatpush2.bf16.msra.mxu0 %v1219
        %1586 = vmatprep.subr.bf16.mxu0 %v1217
        %1587 = vmatpush2.bf16.msra.mxu0 %v1216
        %1588 = vmatprep.subr.bf16.mxu0 %v1214
        %1589 = vmatpush2.bf16.msra.mxu0 %v1213
        %1590 = vmatprep.subr.bf16.mxu0 %v1211
        %1591 = vmatpush2.bf16.msra.mxu0 %v1210
        %1592 = vmatprep.subr.bf16.mxu0 %v1208
        %1593 = vmatpush2.bf16.msra.mxu0 %v1207
        %1594 = vmatprep.subr.bf16.mxu0 %v1205
        %1595 = vmatpush2.bf16.msra.mxu0 %v1204
        %1596 = vmatprep.mubr.bf16.mxu0 %v525
        %1597 = vmatmul.mubr.bf16.gmra.mxu0 %v524
        %v1598 = vpop.f32.mrf.mxu0
        %v1599 = vadd.f32 0.0, %v1598
        %v1600 = vpop.f32.mrf.mxu0
        %v1601 = vadd.f32 0.0, %v1600
        %v1602 = vpop.f32.mrf.mxu0
        %v1603 = vpop.f32.mrf.mxu0
        %1604 = vdwg.mxu0
        %1605 = vmatprep.subr.bf16.mxu0 %v1250
        %1606 = vmatpush1.bf16.msra.mxu0 %v1249
        %1607 = vmatprep.subr.bf16.mxu0 %v1247
        %1608 = vmatpush1.bf16.msra.mxu0 %v1246
        %1609 = vmatprep.subr.bf16.mxu0 %v1244
        %1610 = vmatpush1.bf16.msra.mxu0 %v1243
        %1611 = vmatprep.subr.bf16.mxu0 %v1241
        %1612 = vmatpush1.bf16.msra.mxu0 %v1240
        %1613 = vmatprep.subr.bf16.mxu0 %v1238
        %1614 = vmatpush1.bf16.msra.mxu0 %v1237
        %1615 = vmatprep.subr.bf16.mxu0 %v1235
        %1616 = vmatpush1.bf16.msra.mxu0 %v1234
        %1617 = vmatprep.subr.bf16.mxu0 %v1232
        %1618 = vmatpush1.bf16.msra.mxu0 %v1231
        %1619 = vmatprep.subr.bf16.mxu0 %v1229
        %1620 = vmatpush1.bf16.msra.mxu0 %v1228
        %1621 = vmatprep.subr.bf16.mxu0 %v1274
        %1622 = vmatpush2.bf16.msra.mxu0 %v1273
        %1623 = vmatprep.subr.bf16.mxu0 %v1271
        %1624 = vmatpush2.bf16.msra.mxu0 %v1270
        %1625 = vmatprep.subr.bf16.mxu0 %v1268
        %1626 = vmatpush2.bf16.msra.mxu0 %v1267
        %1627 = vmatprep.subr.bf16.mxu0 %v1265
        %1628 = vmatpush2.bf16.msra.mxu0 %v1264
        %1629 = vmatprep.subr.bf16.mxu0 %v1262
        %1630 = vmatpush2.bf16.msra.mxu0 %v1261
        %1631 = vmatprep.subr.bf16.mxu0 %v1259
        %1632 = vmatpush2.bf16.msra.mxu0 %v1258
        %1633 = vmatprep.subr.bf16.mxu0 %v1256
        %1634 = vmatpush2.bf16.msra.mxu0 %v1255
        %1635 = vmatprep.subr.bf16.mxu0 %v1253
        %1636 = vmatpush2.bf16.msra.mxu0 %v1252
        %1637 = vmatprep.mubr.bf16.mxu0 %v527
        %1638 = vmatmul.mubr.bf16.gmra.mxu0 %v526
        %v1639 = vpop.f32.mrf.mxu0
        %v1640 = vadd.f32 %v1599, %v1639
        %v1641 = vpop.f32.mrf.mxu0
        %v1642 = vadd.f32 %v1601, %v1641
        %v1643 = vpop.f32.mrf.mxu0
        %v1644 = vpop.f32.mrf.mxu0
        %1645 = vdwg.mxu0
        %1646 = vmatprep.subr.bf16.mxu0 %v1298
        %1647 = vmatpush1.bf16.msra.mxu0 %v1297
        %1648 = vmatprep.subr.bf16.mxu0 %v1295
        %1649 = vmatpush1.bf16.msra.mxu0 %v1294
        %1650 = vmatprep.subr.bf16.mxu0 %v1292
        %1651 = vmatpush1.bf16.msra.mxu0 %v1291
        %1652 = vmatprep.subr.bf16.mxu0 %v1289
        %1653 = vmatpush1.bf16.msra.mxu0 %v1288
        %1654 = vmatprep.subr.bf16.mxu0 %v1286
        %1655 = vmatpush1.bf16.msra.mxu0 %v1285
        %1656 = vmatprep.subr.bf16.mxu0 %v1283
        %1657 = vmatpush1.bf16.msra.mxu0 %v1282
        %1658 = vmatprep.subr.bf16.mxu0 %v1280
        %1659 = vmatpush1.bf16.msra.mxu0 %v1279
        %1660 = vmatprep.subr.bf16.mxu0 %v1277
        %1661 = vmatpush1.bf16.msra.mxu0 %v1276
        %1662 = vmatprep.subr.bf16.mxu0 %v1322
        %1663 = vmatpush2.bf16.msra.mxu0 %v1321
        %1664 = vmatprep.subr.bf16.mxu0 %v1319
        %1665 = vmatpush2.bf16.msra.mxu0 %v1318
        %1666 = vmatprep.subr.bf16.mxu0 %v1316
        %1667 = vmatpush2.bf16.msra.mxu0 %v1315
        %1668 = vmatprep.subr.bf16.mxu0 %v1313
        %1669 = vmatpush2.bf16.msra.mxu0 %v1312
        %1670 = vmatprep.subr.bf16.mxu0 %v1310
        %1671 = vmatpush2.bf16.msra.mxu0 %v1309
        %1672 = vmatprep.subr.bf16.mxu0 %v1307
        %1673 = vmatpush2.bf16.msra.mxu0 %v1306
        %1674 = vmatprep.subr.bf16.mxu0 %v1304
        %1675 = vmatpush2.bf16.msra.mxu0 %v1303
        %1676 = vmatprep.subr.bf16.mxu0 %v1301
        %1677 = vmatpush2.bf16.msra.mxu0 %v1300
        %1678 = vmatprep.mubr.bf16.mxu0 %v529
        %1679 = vmatmul.mubr.bf16.gmra.mxu0 %v528
        %v1680 = vpop.f32.mrf.mxu0
        %v1681 = vadd.f32 %v1640, %v1680
        %v1682 = vpop.f32.mrf.mxu0
        %v1683 = vadd.f32 %v1642, %v1682
        %v1684 = vpop.f32.mrf.mxu0
        %v1685 = vpop.f32.mrf.mxu0
        %1686 = vdwg.mxu0
        %1687 = vmatprep.subr.bf16.mxu0 %v1346
        %1688 = vmatpush1.bf16.msra.mxu0 %v1345
        %1689 = vmatprep.subr.bf16.mxu0 %v1343
        %1690 = vmatpush1.bf16.msra.mxu0 %v1342
        %1691 = vmatprep.subr.bf16.mxu0 %v1340
        %1692 = vmatpush1.bf16.msra.mxu0 %v1339
        %1693 = vmatprep.subr.bf16.mxu0 %v1337
        %1694 = vmatpush1.bf16.msra.mxu0 %v1336
        %1695 = vmatprep.subr.bf16.mxu0 %v1334
        %1696 = vmatpush1.bf16.msra.mxu0 %v1333
        %1697 = vmatprep.subr.bf16.mxu0 %v1331
        %1698 = vmatpush1.bf16.msra.mxu0 %v1330
        %1699 = vmatprep.subr.bf16.mxu0 %v1328
        %1700 = vmatpush1.bf16.msra.mxu0 %v1327
        %1701 = vmatprep.subr.bf16.mxu0 %v1325
        %1702 = vmatpush1.bf16.msra.mxu0 %v1324
        %1703 = vmatprep.subr.bf16.mxu0 %v1370
        %1704 = vmatpush2.bf16.msra.mxu0 %v1369
        %1705 = vmatprep.subr.bf16.mxu0 %v1367
        %1706 = vmatpush2.bf16.msra.mxu0 %v1366
        %1707 = vmatprep.subr.bf16.mxu0 %v1364
        %1708 = vmatpush2.bf16.msra.mxu0 %v1363
        %1709 = vmatprep.subr.bf16.mxu0 %v1361
        %1710 = vmatpush2.bf16.msra.mxu0 %v1360
        %1711 = vmatprep.subr.bf16.mxu0 %v1358
        %1712 = vmatpush2.bf16.msra.mxu0 %v1357
        %1713 = vmatprep.subr.bf16.mxu0 %v1355
        %1714 = vmatpush2.bf16.msra.mxu0 %v1354
        %1715 = vmatprep.subr.bf16.mxu0 %v1352
        %1716 = vmatpush2.bf16.msra.mxu0 %v1351
        %1717 = vmatprep.subr.bf16.mxu0 %v1349
        %1718 = vmatpush2.bf16.msra.mxu0 %v1348
        %1719 = vmatprep.mubr.bf16.mxu0 %v531
        %1720 = vmatmul.mubr.bf16.gmra.mxu0 %v530
        %v1721 = vpop.f32.mrf.mxu0
        %v1722 = vadd.f32 %v1681, %v1721
        %v1723 = vpop.f32.mrf.mxu0
        %v1724 = vadd.f32 %v1683, %v1723
        %v1725 = vpop.f32.mrf.mxu0
        %v1726 = vpop.f32.mrf.mxu0
        %1727 = vdwg.mxu0
        %1728 = vmatprep.subr.bf16.mxu0 0
        %1729 = vmatpush1.bf16.msra.mxu0 %v1203
        %1730 = vmatprep.subr.bf16.mxu0 0
        %1731 = vmatpush1.bf16.msra.mxu0 %v1200
        %1732 = vmatprep.subr.bf16.mxu0 0
        %1733 = vmatpush1.bf16.msra.mxu0 %v1197
        %1734 = vmatprep.subr.bf16.mxu0 0
        %1735 = vmatpush1.bf16.msra.mxu0 %v1194
        %1736 = vmatprep.subr.bf16.mxu0 0
        %1737 = vmatpush1.bf16.msra.mxu0 %v1191
        %1738 = vmatprep.subr.bf16.mxu0 0
        %1739 = vmatpush1.bf16.msra.mxu0 %v1188
        %1740 = vmatprep.subr.bf16.mxu0 0
        %1741 = vmatpush1.bf16.msra.mxu0 %v1185
        %1742 = vmatprep.subr.bf16.mxu0 0
        %1743 = vmatpush1.bf16.msra.mxu0 %v1182
        %1744 = vmatprep.subr.bf16.mxu0 0
        %1745 = vmatpush2.bf16.msra.mxu0 %v1227
        %1746 = vmatprep.subr.bf16.mxu0 0
        %1747 = vmatpush2.bf16.msra.mxu0 %v1224
        %1748 = vmatprep.subr.bf16.mxu0 0
        %1749 = vmatpush2.bf16.msra.mxu0 %v1221
        %1750 = vmatprep.subr.bf16.mxu0 0
        %1751 = vmatpush2.bf16.msra.mxu0 %v1218
        %1752 = vmatprep.subr.bf16.mxu0 0
        %1753 = vmatpush2.bf16.msra.mxu0 %v1215
        %1754 = vmatprep.subr.bf16.mxu0 0
        %1755 = vmatpush2.bf16.msra.mxu0 %v1212
        %1756 = vmatprep.subr.bf16.mxu0 0
        %1757 = vmatpush2.bf16.msra.mxu0 %v1209
        %1758 = vmatprep.subr.bf16.mxu0 0
        %1759 = vmatpush2.bf16.msra.mxu0 %v1206
        %1760 = vmatprep.mubr.bf16.mxu0 %v525
        %1761 = vmatmul.mubr.bf16.gmra.mxu0 %v524
        %v1762 = vpop.f32.mrf.mxu0
        %v1763 = vadd.f32 0.0, %v1762
        %v1764 = vpop.f32.mrf.mxu0
        %v1765 = vpop.f32.mrf.mxu0
        %v1766 = vpop.f32.mrf.mxu0
        %1767 = vdwg.mxu0
        %1768 = vmatprep.subr.bf16.mxu0 0
        %1769 = vmatpush1.bf16.msra.mxu0 %v1251
        %1770 = vmatprep.subr.bf16.mxu0 0
        %1771 = vmatpush1.bf16.msra.mxu0 %v1248
        %1772 = vmatprep.subr.bf16.mxu0 0
        %1773 = vmatpush1.bf16.msra.mxu0 %v1245
        %1774 = vmatprep.subr.bf16.mxu0 0
        %1775 = vmatpush1.bf16.msra.mxu0 %v1242
        %1776 = vmatprep.subr.bf16.mxu0 0
        %1777 = vmatpush1.bf16.msra.mxu0 %v1239
        %1778 = vmatprep.subr.bf16.mxu0 0
        %1779 = vmatpush1.bf16.msra.mxu0 %v1236
        %1780 = vmatprep.subr.bf16.mxu0 0
        %1781 = vmatpush1.bf16.msra.mxu0 %v1233
        %1782 = vmatprep.subr.bf16.mxu0 0
        %1783 = vmatpush1.bf16.msra.mxu0 %v1230
        %1784 = vmatprep.subr.bf16.mxu0 0
        %1785 = vmatpush2.bf16.msra.mxu0 %v1275
        %1786 = vmatprep.subr.bf16.mxu0 0
        %1787 = vmatpush2.bf16.msra.mxu0 %v1272
        %1788 = vmatprep.subr.bf16.mxu0 0
        %1789 = vmatpush2.bf16.msra.mxu0 %v1269
        %1790 = vmatprep.subr.bf16.mxu0 0
        %1791 = vmatpush2.bf16.msra.mxu0 %v1266
        %1792 = vmatprep.subr.bf16.mxu0 0
        %1793 = vmatpush2.bf16.msra.mxu0 %v1263
        %1794 = vmatprep.subr.bf16.mxu0 0
        %1795 = vmatpush2.bf16.msra.mxu0 %v1260
        %1796 = vmatprep.subr.bf16.mxu0 0
        %1797 = vmatpush2.bf16.msra.mxu0 %v1257
        %1798 = vmatprep.subr.bf16.mxu0 0
        %1799 = vmatpush2.bf16.msra.mxu0 %v1254
        %1800 = vmatprep.mubr.bf16.mxu0 %v527
        %1801 = vmatmul.mubr.bf16.gmra.mxu0 %v526
        %v1802 = vpop.f32.mrf.mxu0
        %v1803 = vadd.f32 %v1763, %v1802
        %v1804 = vpop.f32.mrf.mxu0
        %v1805 = vpop.f32.mrf.mxu0
        %v1806 = vpop.f32.mrf.mxu0
        %1807 = vdwg.mxu0
        %1808 = vmatprep.subr.bf16.mxu0 0
        %1809 = vmatpush1.bf16.msra.mxu0 %v1299
        %1810 = vmatprep.subr.bf16.mxu0 0
        %1811 = vmatpush1.bf16.msra.mxu0 %v1296
        %1812 = vmatprep.subr.bf16.mxu0 0
        %1813 = vmatpush1.bf16.msra.mxu0 %v1293
        %1814 = vmatprep.subr.bf16.mxu0 0
        %1815 = vmatpush1.bf16.msra.mxu0 %v1290
        %1816 = vmatprep.subr.bf16.mxu0 0
        %1817 = vmatpush1.bf16.msra.mxu0 %v1287
        %1818 = vmatprep.subr.bf16.mxu0 0
        %1819 = vmatpush1.bf16.msra.mxu0 %v1284
        %1820 = vmatprep.subr.bf16.mxu0 0
        %1821 = vmatpush1.bf16.msra.mxu0 %v1281
        %1822 = vmatprep.subr.bf16.mxu0 0
        %1823 = vmatpush1.bf16.msra.mxu0 %v1278
        %1824 = vmatprep.subr.bf16.mxu0 0
        %1825 = vmatpush2.bf16.msra.mxu0 %v1323
        %1826 = vmatprep.subr.bf16.mxu0 0
        %1827 = vmatpush2.bf16.msra.mxu0 %v1320
        %1828 = vmatprep.subr.bf16.mxu0 0
        %1829 = vmatpush2.bf16.msra.mxu0 %v1317
        %1830 = vmatprep.subr.bf16.mxu0 0
        %1831 = vmatpush2.bf16.msra.mxu0 %v1314
        %1832 = vmatprep.subr.bf16.mxu0 0
        %1833 = vmatpush2.bf16.msra.mxu0 %v1311
        %1834 = vmatprep.subr.bf16.mxu0 0
        %1835 = vmatpush2.bf16.msra.mxu0 %v1308
        %1836 = vmatprep.subr.bf16.mxu0 0
        %1837 = vmatpush2.bf16.msra.mxu0 %v1305
        %1838 = vmatprep.subr.bf16.mxu0 0
        %1839 = vmatpush2.bf16.msra.mxu0 %v1302
        %1840 = vmatprep.mubr.bf16.mxu0 %v529
        %1841 = vmatmul.mubr.bf16.gmra.mxu0 %v528
        %v1842 = vpop.f32.mrf.mxu0
        %v1843 = vadd.f32 %v1803, %v1842
        %v1844 = vpop.f32.mrf.mxu0
        %v1845 = vpop.f32.mrf.mxu0
        %v1846 = vpop.f32.mrf.mxu0
        %1847 = vdwg.mxu0
        %1848 = vmatprep.subr.bf16.mxu0 0
        %1849 = vmatpush1.bf16.msra.mxu0 %v1347
        %1850 = vmatprep.subr.bf16.mxu0 0
        %1851 = vmatpush1.bf16.msra.mxu0 %v1344
        %1852 = vmatprep.subr.bf16.mxu0 0
        %1853 = vmatpush1.bf16.msra.mxu0 %v1341
        %1854 = vmatprep.subr.bf16.mxu0 0
        %1855 = vmatpush1.bf16.msra.mxu0 %v1338
        %1856 = vmatprep.subr.bf16.mxu0 0
        %1857 = vmatpush1.bf16.msra.mxu0 %v1335
        %1858 = vmatprep.subr.bf16.mxu0 0
        %1859 = vmatpush1.bf16.msra.mxu0 %v1332
        %1860 = vmatprep.subr.bf16.mxu0 0
        %1861 = vmatpush1.bf16.msra.mxu0 %v1329
        %1862 = vmatprep.subr.bf16.mxu0 0
        %1863 = vmatpush1.bf16.msra.mxu0 %v1326
        %1864 = vmatprep.subr.bf16.mxu0 0
        %1865 = vmatpush2.bf16.msra.mxu0 %v1371
        %1866 = vmatprep.subr.bf16.mxu0 0
        %1867 = vmatpush2.bf16.msra.mxu0 %v1368
        %1868 = vmatprep.subr.bf16.mxu0 0
        %1869 = vmatpush2.bf16.msra.mxu0 %v1365
        %1870 = vmatprep.subr.bf16.mxu0 0
        %1871 = vmatpush2.bf16.msra.mxu0 %v1362
        %1872 = vmatprep.subr.bf16.mxu0 0
        %1873 = vmatpush2.bf16.msra.mxu0 %v1359
        %1874 = vmatprep.subr.bf16.mxu0 0
        %1875 = vmatpush2.bf16.msra.mxu0 %v1356
        %1876 = vmatprep.subr.bf16.mxu0 0
        %1877 = vmatpush2.bf16.msra.mxu0 %v1353
        %1878 = vmatprep.subr.bf16.mxu0 0
        %1879 = vmatpush2.bf16.msra.mxu0 %v1350
        %1880 = vmatprep.mubr.bf16.mxu0 %v531
        %1881 = vmatmul.mubr.bf16.gmra.mxu0 %v530
        %v1882 = vpop.f32.mrf.mxu0
        %v1883 = vadd.f32 %v1843, %v1882
        %v1884 = vpop.f32.mrf.mxu0
        %v1885 = vpop.f32.mrf.mxu0
        %v1886 = vpop.f32.mrf.mxu0
        %1887 = vdwg.mxu0
        %v1888 = vadd.f32 %v249, %v1722
        %v1889 = vadd.f32 %v250, %v1724
        %v1890 = vadd.f32 %v251, %v1883
        %1891 = vst [vmem:[#allocation2] sm:$0xff] %v1888
        %1892 = vst [vmem:[#allocation2 + $0x8] sm:$0xff] %v1889
        %1893 = vst [vmem:[#allocation2 + $0x10] sm:$0xff] %v1890
        %p1894 = scmp.eq.s32.totalorder %s22, 2
        // Predicated region
        $region41: #{_forward_impl.6} parent=31 // pred_check
          %p1895 = pneg %p1894
        $region42: #{_forward_impl.6} parent=31 // pred_check_branch
          %1897 = sbr.rel (%p1895) target = $region44
        $region43: #{_forward_impl.6} parent=31 // pred_region
          %v1898 = vld [vmem:[#allocation2] sm:$0xff]
          %v1899 = vld [vmem:[#allocation2 + $0x8] sm:$0xff]
          %v1900 = vld [vmem:[#allocation2 + $0x10] sm:$0xff]
          %v1901 = vld [vmem:[%s2] sm:$0x7]
          %v1903 = vlaneseq
          %v1904 = vshrl.u32 %v1903, 7
          %v1905 = vsub.s32 0, %v1904
          %v1906 = vrot.slane %v1901, %v1905
          %v1907 = vlaneseq
          %v1908 = vshrl.u32 %v1907, 7
          %v1909 = vsub.s32 1, %v1908
          %v1910 = vrot.slane %v1901, %v1909
          %v1911 = vlaneseq
          %v1912 = vshrl.u32 %v1911, 7
          %v1913 = vsub.s32 2, %v1912
          %v1914 = vrot.slane %v1901, %v1913
          %v1918 = vadd.f32 %v1898, %v1906
          %v1919 = vadd.f32 %v1899, %v1910
          %v1920 = vadd.f32 %v1900, %v1914
          %1921 = vst [vmem:[%s240] sm:$0xff] %v1918
          %1922 = vst [vmem:[%s240 + $0x8] sm:$0xff] %v1919
          %1923 = vst [vmem:[%s240 + $0x10] sm:$0xff] %v1920
        $region44: #{_forward_impl.6} parent=31 // pred_fallthru
          _
        %p1924 = scmp.lt.s32.totalorder %s21, 0
        %s1925 = scalar_select %p1924, %s21, 0
        %s1926 = smul.addr %s1925, 3
        %s1927 = smul.addr %s1926, 8
        %s1928 = scalar_lea.vmem %s3, %s1927
        // Predicated region
        $region45: #{_forward_impl.6} parent=31 // pred_check
          %p1929 = pneg %p122
        $region46: #{_forward_impl.6} parent=31 // pred_check_branch
          %1931 = sbr.rel (%p1929) target = $region48
        $region47: #{_forward_impl.6} parent=31 // pred_region
          _
        $region48: #{_forward_impl.6} parent=31 // pred_fallthru
          _
        // Predicated region
        $region49: #{_forward_impl.6} parent=31 // pred_check
          %p1932 = pneg %p122
        $region50: #{_forward_impl.6} parent=31 // pred_check_branch
          %1934 = sbr.rel (%p1932) target = $region52
        $region51: #{_forward_impl.6} parent=31 // pred_region
          %p1935 = scmp.lt.s32.totalorder %s21, 0
          %s1936 = scalar_select %p1935, %s21, 0
          %s1937 = smul.addr %s1936, 3
          %s1938 = smul.addr %s1937, 8
          %s1939 = scalar_lea.vmem %s3, %s1938
        $region52: #{_forward_impl.6} parent=31 // pred_fallthru
          _
      $region32: #{_forward_impl.6} parent=5 // pred_fallthru
        _
      %p1940 = scmp.le.s32.totalorder 2, %s12
      // Predicated region
      $region53: #{_forward_impl.6} parent=5 // pred_check
        %p1941 = pneg %p1940
      $region54: #{_forward_impl.6} parent=5 // pred_check_branch
        %1943 = sbr.rel (%p1941) target = $region56
      $region55: #{_forward_impl.6} parent=5 // pred_region
        %s1944 = ssub.s32 %s12, 2
      $region56: #{_forward_impl.6} parent=5 // pred_fallthru
        _
    $region6: #{_forward_impl.6} parent=1 // loop_footer
      %s16 = sadd.s32 1, %s12
    $region7: #{_forward_impl.6} parent=1 // loop_footer_branch
      %11 = sbr.rel target = $region3
    $region8: #{_forward_impl.6} parent=1 // loop_exit
      _
    %1945 = vsyncpa [#allocation4], 1
    %s1946 = scalar_lea.sflag [#allocation4], 1
    %1947 = vsyncpa %s1946, 1

// kernel: _forward_impl.7
$region0: #{_forward_impl.7}
  #allocation0 [shape = 'u32[]', space=smem, size = 0x4, offset = 0x4, fixed_abs, tag = 'smem constant byte address 0x4 - core index']
  #allocation1 [shape = 'u32[144,128]{1,0:T(1,128)}', space=vmem, size = 0x12000, scoped, tag = 'internal scratch']
  #allocation2 [shape = 'f32[8,1024]{1,0:T(8,128)}', space=vmem, size = 0x8000, scoped, tag = 'scratch operand']
  %s0 = inlined_call_operand.vmem [shape: bf16[8,3072], index: 0, kind: input, shape index: {}]
  %s1 = inlined_call_operand.vmem [shape: bf16[3072,1024], index: 1, kind: input, shape index: {}]
  %s2 = inlined_call_operand.vmem [shape: f32[1,1024], index: 2, kind: input, shape index: {}]
  %s3 = inlined_call_operand.vmem [shape: f32[8,1024], index: 3, kind: output, shape index: {}]
  %s4 = sld [smem:[#allocation0]]
  $region53: #{_forward_impl.7} parent=0
    _
  %s6 = ssub.s32 1, %s4
  %s7 = scalar_select 0, %s6, %s4
  loop: start=0, step=1, limit=5
  $region2: #{_forward_impl.7} parent=0 // loop_pre_header
    _
  $region3: #{_forward_impl.7} parent=0 // loop_header
    %s9 = sphi 0, %s13
    %p10 = scmp.ge.s32.totalorder %s9, 5
    %s16 = sphi 0, %s28
    %s17 = sphi 0, %s24
    %s18 = sphi 0, %s16
    %s19 = sphi 0, %s17
    %s20 = sphi 0, %s18
    %s21 = sphi 0, %s19
    %s33 = sphi 0, %s35
    %s36 = sphi 0, %s33
    %s37 = sphi 0, %s36
    %s53 = sphi 0, %s37
    %s59 = sphi 0, %s61
    %s62 = sphi 0, %s59
    %s63 = sphi 0, %s62
    %s79 = sphi 0, %s63
    %s83 = sphi 0, %s83
    %s85 = sphi 0, %s83
    %s86 = sphi 0, %s85
    %s100 = sphi 0, %s86
    %s106 = sphi 0, %s108
    %s109 = sphi 0, %s106
    %s110 = sphi 0, %s109
    %s126 = sphi 0, %s110
  $region4: #{_forward_impl.7} parent=0 // loop_header_branch
    %12 = sbr.rel (%p10) target = $region8
  $region5: #{_forward_impl.7} parent=0 // loop_body
    %s14 = ssub.s32 %s9, 1
    %s15 = ssub.s32 %s9, 2
    %s22 = sadd.s32 1, %s17
    %p23 = scmp.ge.s32.totalorder %s22, 3
    %s24 = scalar_select %p23, 0, %s22
    %s25 = sadd.s32 1, %s16
    %s26 = scalar_select %p23, %s25, %s16
    %p27 = scmp.ge.s32.totalorder %s26, 1
    %s28 = scalar_select %p27, 0, %s26
    %s29 = ssub.s32 %s16, %s28
    %s30 = ssub.s32 %s17, %s24
    %s31 = sor.u32 %s29, %s30
    %p32 = scmp.eq.s32.totalorder %s31, 0
    %s34 = sadd.s32 %s33, 1
    %s35 = scalar_select %p32, %s33, %s34
    %p38 = pneg %p32
    %p39 = scmp.eq.s32.totalorder %s9, 2
    %p40 = por %p38, %p39
    %p41 = scmp.ne.s32.totalorder %s33, %s36
    %p42 = scmp.eq.s32.totalorder %s9, 0
    %p43 = por %p41, %p42
    %p44 = scmp.ne.s32.totalorder %s33, %s36
    %p45 = scmp.eq.s32.totalorder %s14, 2
    %p46 = por %p44, %p45
    %p47 = scmp.ne.s32.totalorder %s36, %s37
    %p48 = scmp.eq.s32.totalorder %s14, 0
    %p49 = por %p47, %p48
    %p50 = scmp.ne.s32.totalorder %s36, %s37
    %p51 = scmp.eq.s32.totalorder %s15, 2
    %p52 = por %p50, %p51
    %p54 = scmp.ne.s32.totalorder %s37, %s53
    %p55 = scmp.eq.s32.totalorder %s15, 0
    %p56 = por %p54, %p55
    %s57 = ssub.s32 %s17, %s24
    %p58 = scmp.eq.s32.totalorder %s57, 0
    %s60 = sadd.s32 %s59, 1
    %s61 = scalar_select %p58, %s59, %s60
    %p64 = pneg %p58
    %p65 = scmp.eq.s32.totalorder %s9, 2
    %p66 = por %p64, %p65
    %p67 = scmp.ne.s32.totalorder %s59, %s62
    %p68 = scmp.eq.s32.totalorder %s9, 0
    %p69 = por %p67, %p68
    %p70 = scmp.ne.s32.totalorder %s59, %s62
    %p71 = scmp.eq.s32.totalorder %s14, 2
    %p72 = por %p70, %p71
    %p73 = scmp.ne.s32.totalorder %s62, %s63
    %p74 = scmp.eq.s32.totalorder %s14, 0
    %p75 = por %p73, %p74
    %p76 = scmp.ne.s32.totalorder %s62, %s63
    %p77 = scmp.eq.s32.totalorder %s15, 2
    %p78 = por %p76, %p77
    %p80 = scmp.ne.s32.totalorder %s63, %s79
    %p81 = scmp.eq.s32.totalorder %s15, 0
    %p82 = por %p80, %p81
    %s84 = sadd.s32 %s83, 1
    %p87 = scmp.eq.s32.totalorder %s9, 2
    %p88 = scmp.ne.s32.totalorder %s83, %s85
    %p89 = scmp.eq.s32.totalorder %s9, 0
    %p90 = por %p88, %p89
    %p91 = scmp.ne.s32.totalorder %s83, %s85
    %p92 = scmp.eq.s32.totalorder %s14, 2
    %p93 = por %p91, %p92
    %p94 = scmp.ne.s32.totalorder %s85, %s86
    %p95 = scmp.eq.s32.totalorder %s14, 0
    %p96 = por %p94, %p95
    %p97 = scmp.ne.s32.totalorder %s85, %s86
    %p98 = scmp.eq.s32.totalorder %s15, 2
    %p99 = por %p97, %p98
    %p101 = scmp.ne.s32.totalorder %s86, %s100
    %p102 = scmp.eq.s32.totalorder %s15, 0
    %p103 = por %p101, %p102
    %s104 = ssub.s32 %s16, %s28
    %p105 = scmp.eq.s32.totalorder %s104, 0
    %s107 = sadd.s32 %s106, 1
    %s108 = scalar_select %p105, %s106, %s107
    %p111 = pneg %p105
    %p112 = scmp.eq.s32.totalorder %s9, 2
    %p113 = por %p111, %p112
    %p114 = scmp.ne.s32.totalorder %s106, %s109
    %p115 = scmp.eq.s32.totalorder %s9, 0
    %p116 = por %p114, %p115
    %p117 = scmp.ne.s32.totalorder %s106, %s109
    %p118 = scmp.eq.s32.totalorder %s14, 2
    %p119 = por %p117, %p118
    %p120 = scmp.ne.s32.totalorder %s109, %s110
    %p121 = scmp.eq.s32.totalorder %s14, 0
    %p122 = por %p120, %p121
    %p123 = scmp.ne.s32.totalorder %s109, %s110
    %p124 = scmp.eq.s32.totalorder %s15, 2
    %p125 = por %p123, %p124
    %p127 = scmp.ne.s32.totalorder %s110, %s126
    %p128 = scmp.eq.s32.totalorder %s15, 0
    %p129 = por %p127, %p128
    %p130 = scmp.le.s32.totalorder 1, %s9
    %p131 = scmp.lt.s32.totalorder %s9, 4
    %p132 = pnand %p130, %p131
    %p133 = pneg %p132
    // Predicated region
    $region9: #{_forward_impl.7} parent=5 // pred_check
      _
    $region10: #{_forward_impl.7} parent=5 // pred_check_branch
      %135 = sbr.rel (%p132) target = $region12
    $region11: #{_forward_impl.7} parent=5 // pred_region
      %s136 = ssub.s32 %s9, 1
      // Predicated region
      $region13: #{_forward_impl.7} parent=11 // pred_check
        %p137 = pneg %p96
      $region14: #{_forward_impl.7} parent=11 // pred_check_branch
        %139 = sbr.rel (%p137) target = $region16
      $region15: #{_forward_impl.7} parent=11 // pred_region
        _
      $region16: #{_forward_impl.7} parent=11 // pred_fallthru
        _
    $region12: #{_forward_impl.7} parent=5 // pred_fallthru
      _
    %p140 = scmp.lt.s32.totalorder %s9, 3
    // Predicated region
    $region17: #{_forward_impl.7} parent=5 // pred_check
      %p141 = pneg %p140
    $region18: #{_forward_impl.7} parent=5 // pred_check_branch
      %143 = sbr.rel (%p141) target = $region20
    $region19: #{_forward_impl.7} parent=5 // pred_region
      // Predicated region
      $region21: #{_forward_impl.7} parent=19 // pred_check
        %p144 = pneg %p43
      $region22: #{_forward_impl.7} parent=19 // pred_check_branch
        %146 = sbr.rel (%p144) target = $region24
      $region23: #{_forward_impl.7} parent=19 // pred_region
        %s147 = smul.u32 8, %s17
        %p148 = scmp.lt.s32.totalorder %s16, 0
        %s149 = scalar_select %p148, %s16, 0
        %p150 = scmp.lt.s32.totalorder %s147, 23
        %s151 = scalar_select %p150, %s147, 23
        %s152 = smul.addr %s149, 24
        %s153 = sadd.s32 %s151, %s152
        %s154 = smul.addr %s153, 4
        %s155 = scalar_lea.vmem %s0, %s154
        %s156 = smul.u32 8, %s17
      $region24: #{_forward_impl.7} parent=19 // pred_fallthru
        _
      // Predicated region
      $region25: #{_forward_impl.7} parent=19 // pred_check
        %p157 = pneg %p69
      $region26: #{_forward_impl.7} parent=19 // pred_check_branch
        %159 = sbr.rel (%p157) target = $region28
      $region27: #{_forward_impl.7} parent=19 // pred_region
        %s160 = smul.u32 128, %s17
        %p161 = scmp.lt.s32.totalorder %s160, 383
        %s162 = scalar_select %p161, %s160, 383
        %s163 = smul.addr %s162, 8
        %s164 = smul.addr %s163, 4
        %s165 = scalar_lea.vmem %s1, %s164
        %s166 = smul.u32 128, %s17
      $region28: #{_forward_impl.7} parent=19 // pred_fallthru
        _
    $region20: #{_forward_impl.7} parent=5 // pred_fallthru
      _
    %p167 = scmp.le.s32.totalorder 1, %s9
    %p168 = scmp.lt.s32.totalorder %s9, 4
    %p169 = pnand %p167, %p168
    %p170 = pneg %p169
    // Predicated region
    $region29: #{_forward_impl.7} parent=5 // pred_check
      _
    $region30: #{_forward_impl.7} parent=5 // pred_check_branch
      %172 = sbr.rel (%p169) target = $region32
    $region31: #{_forward_impl.7} parent=5 // pred_region
      %s173 = ssub.s32 %s9, 1
      %s174 = smul.u32 8, %s19
      %p175 = scmp.lt.s32.totalorder %s18, 0
      %s176 = scalar_select %p175, %s18, 0
      %p177 = scmp.lt.s32.totalorder %s174, 23
      %s178 = scalar_select %p177, %s174, 23
      %s179 = smul.addr %s176, 24
      %s180 = sadd.s32 %s178, %s179
      %s181 = smul.addr %s180, 4
      %s182 = scalar_lea.vmem %s0, %s181
      %p183 = pneg %p49
      %p184 = pneg %p46
      %s185 = smul.u32 128, %s19
      %p186 = scmp.lt.s32.totalorder %s185, 383
      %s187 = scalar_select %p186, %s185, 383
      %s188 = smul.addr %s187, 8
      %s189 = smul.addr %s188, 4
      %s190 = scalar_lea.vmem %s1, %s189
      %p191 = pneg %p75
      %p192 = pneg %p72
      %p193 = pneg %p96
      %p194 = pneg %p93
      %p195 = pneg %p122
      %p196 = pneg %p119
      %p197 = scmp.lt.s32.totalorder %s18, 0
      %s198 = scalar_select %p197, %s18, 0
      %s199 = smul.addr %s198, 8
      %s200 = smul.addr %s199, 8
      %s201 = scalar_lea.vmem %s3, %s200
      %s202 = smul.u32 8, %s19
      %p203 = scmp.lt.s32.totalorder %s18, 0
      %s204 = scalar_select %p203, %s18, 0
      %p205 = scmp.lt.s32.totalorder %s202, 23
      %s206 = scalar_select %p205, %s202, 23
      %s207 = smul.addr %s204, 24
      %s208 = sadd.s32 %s206, %s207
      %s209 = smul.addr %s208, 4
      %s210 = scalar_lea.vmem %s0, %s209
      %s211 = smul.u32 8, %s19
      %s212 = smul.u32 128, %s19
      %p213 = scmp.lt.s32.totalorder %s212, 383
      %s214 = scalar_select %p213, %s212, 383
      %s215 = smul.addr %s214, 8
      %s216 = smul.addr %s215, 4
      %s217 = scalar_lea.vmem %s1, %s216
      %s218 = smul.u32 128, %s19
      %p219 = scmp.lt.s32.totalorder %s18, 0
      %s220 = scalar_select %p219, %s18, 0
      %s221 = smul.addr %s220, 8
      %s222 = smul.addr %s221, 8
      %s223 = scalar_lea.vmem %s3, %s222
      %p224 = scmp.eq.s32.totalorder %s19, 0
      // Predicated region
      $region33: #{_forward_impl.7} parent=31 // pred_check
        %p225 = pneg %p224
      $region34: #{_forward_impl.7} parent=31 // pred_check_branch
        %227 = sbr.rel (%p225) target = $region36
      $region35: #{_forward_impl.7} parent=31 // pred_region
        %228 = vst [vmem:[#allocation2] sm:$0xff] 0.0
        %229 = vst [vmem:[#allocation2 + $0x8] sm:$0xff] 0.0
        %230 = vst [vmem:[#allocation2 + $0x10] sm:$0xff] 0.0
        %231 = vst [vmem:[#allocation2 + $0x18] sm:$0xff] 0.0
        %232 = vst [vmem:[#allocation2 + $0x20] sm:$0xff] 0.0
        %233 = vst [vmem:[#allocation2 + $0x28] sm:$0xff] 0.0
        %234 = vst [vmem:[#allocation2 + $0x30] sm:$0xff] 0.0
        %235 = vst [vmem:[#allocation2 + $0x38] sm:$0xff] 0.0
      $region36: #{_forward_impl.7} parent=31 // pred_fallthru
        _
      %v236 = vld [vmem:[#allocation2] sm:$0xff]
      %v237 = vld [vmem:[#allocation2 + $0x8] sm:$0xff]
      %v238 = vld [vmem:[#allocation2 + $0x10] sm:$0xff]
      %v239 = vld [vmem:[#allocation2 + $0x18] sm:$0xff]
      %v240 = vld [vmem:[#allocation2 + $0x20] sm:$0xff]
      %v241 = vld [vmem:[#allocation2 + $0x28] sm:$0xff]
      %v242 = vld [vmem:[#allocation2 + $0x30] sm:$0xff]
      %v243 = vld [vmem:[#allocation2 + $0x38] sm:$0xff]
      %v244 = vld [vmem:[%s210] sm:$0xff]
      %v245 = vld [vmem:[%s210 + $0x8] sm:$0xff]
      %v246 = vld [vmem:[%s210 + $0x10] sm:$0xff]
      %v247 = vld [vmem:[%s210 + $0x18] sm:$0xff]
      %v248 = vld [vmem:[%s217] sm:$0xff]
      %v249 = vld [vmem:[%s217 + $0x8] sm:$0xff]
      %v250 = vld [vmem:[%s217 + $0x10] sm:$0xff]
      %v251 = vld [vmem:[%s217 + $0x18] sm:$0xff]
      %v252 = vld [vmem:[%s217 + $0x20] sm:$0xff]
      %v253 = vld [vmem:[%s217 + $0x28] sm:$0xff]
      %v254 = vld [vmem:[%s217 + $0x30] sm:$0xff]
      %v255 = vld [vmem:[%s217 + $0x38] sm:$0xff]
      %v256 = vld [vmem:[%s217 + $0x40] sm:$0xff]
      %v257 = vld [vmem:[%s217 + $0x48] sm:$0xff]
      %v258 = vld [vmem:[%s217 + $0x50] sm:$0xff]
      %v259 = vld [vmem:[%s217 + $0x58] sm:$0xff]
      %v260 = vld [vmem:[%s217 + $0x60] sm:$0xff]
      %v261 = vld [vmem:[%s217 + $0x68] sm:$0xff]
      %v262 = vld [vmem:[%s217 + $0x70] sm:$0xff]
      %v263 = vld [vmem:[%s217 + $0x78] sm:$0xff]
      %v264 = vld [vmem:[%s217 + $0x80] sm:$0xff]
      %v265 = vld [vmem:[%s217 + $0x88] sm:$0xff]
      %v266 = vld [vmem:[%s217 + $0x90] sm:$0xff]
      %v267 = vld [vmem:[%s217 + $0x98] sm:$0xff]
      %v268 = vld [vmem:[%s217 + $0xa0] sm:$0xff]
      %v269 = vld [vmem:[%s217 + $0xa8] sm:$0xff]
      %v270 = vld [vmem:[%s217 + $0xb0] sm:$0xff]
      %v271 = vld [vmem:[%s217 + $0xb8] sm:$0xff]
      %v272 = vld [vmem:[%s217 + $0xc0] sm:$0xff]
      %v273 = vld [vmem:[%s217 + $0xc8] sm:$0xff]
      %v274 = vld [vmem:[%s217 + $0xd0] sm:$0xff]
      %v275 = vld [vmem:[%s217 + $0xd8] sm:$0xff]
      %v276 = vld [vmem:[%s217 + $0xe0] sm:$0xff]
      %v277 = vld [vmem:[%s217 + $0xe8] sm:$0xff]
      %v278 = vld [vmem:[%s217 + $0xf0] sm:$0xff]
      %v279 = vld [vmem:[%s217 + $0xf8] sm:$0xff]
      %v280 = vld [vmem:[%s217 + $0x100] sm:$0xff]
      %v281 = vld [vmem:[%s217 + $0x108] sm:$0xff]
      %v282 = vld [vmem:[%s217 + $0x110] sm:$0xff]
      %v283 = vld [vmem:[%s217 + $0x118] sm:$0xff]
      %v284 = vld [vmem:[%s217 + $0x120] sm:$0xff]
      %v285 = vld [vmem:[%s217 + $0x128] sm:$0xff]
      %v286 = vld [vmem:[%s217 + $0x130] sm:$0xff]
      %v287 = vld [vmem:[%s217 + $0x138] sm:$0xff]
      %v288 = vld [vmem:[%s217 + $0x140] sm:$0xff]
      %v289 = vld [vmem:[%s217 + $0x148] sm:$0xff]
      %v290 = vld [vmem:[%s217 + $0x150] sm:$0xff]
      %v291 = vld [vmem:[%s217 + $0x158] sm:$0xff]
      %v292 = vld [vmem:[%s217 + $0x160] sm:$0xff]
      %v293 = vld [vmem:[%s217 + $0x168] sm:$0xff]
      %v294 = vld [vmem:[%s217 + $0x170] sm:$0xff]
      %v295 = vld [vmem:[%s217 + $0x178] sm:$0xff]
      %v296 = vld [vmem:[%s217 + $0x180] sm:$0xff]
      %v297 = vld [vmem:[%s217 + $0x188] sm:$0xff]
      %v298 = vld [vmem:[%s217 + $0x190] sm:$0xff]
      %v299 = vld [vmem:[%s217 + $0x198] sm:$0xff]
      %v300 = vld [vmem:[%s217 + $0x1a0] sm:$0xff]
      %v301 = vld [vmem:[%s217 + $0x1a8] sm:$0xff]
      %v302 = vld [vmem:[%s217 + $0x1b0] sm:$0xff]
      %v303 = vld [vmem:[%s217 + $0x1b8] sm:$0xff]
      %v304 = vld [vmem:[%s217 + $0x1c0] sm:$0xff]
      %v305 = vld [vmem:[%s217 + $0x1c8] sm:$0xff]
      %v306 = vld [vmem:[%s217 + $0x1d0] sm:$0xff]
      %v307 = vld [vmem:[%s217 + $0x1d8] sm:$0xff]
      %v308 = vld [vmem:[%s217 + $0x1e0] sm:$0xff]
      %v309 = vld [vmem:[%s217 + $0x1e8] sm:$0xff]
      %v310 = vld [vmem:[%s217 + $0x1f0] sm:$0xff]
      %v311 = vld [vmem:[%s217 + $0x1f8] sm:$0xff]
      %v312 = vld [vmem:[%s217 + $0x200] sm:$0xff]
      %v313 = vld [vmem:[%s217 + $0x208] sm:$0xff]
      %v314 = vld [vmem:[%s217 + $0x210] sm:$0xff]
      %v315 = vld [vmem:[%s217 + $0x218] sm:$0xff]
      %v316 = vld [vmem:[%s217 + $0x220] sm:$0xff]
      %v317 = vld [vmem:[%s217 + $0x228] sm:$0xff]
      %v318 = vld [vmem:[%s217 + $0x230] sm:$0xff]
      %v319 = vld [vmem:[%s217 + $0x238] sm:$0xff]
      %v320 = vld [vmem:[%s217 + $0x240] sm:$0xff]
      %v321 = vld [vmem:[%s217 + $0x248] sm:$0xff]
      %v322 = vld [vmem:[%s217 + $0x250] sm:$0xff]
      %v323 = vld [vmem:[%s217 + $0x258] sm:$0xff]
      %v324 = vld [vmem:[%s217 + $0x260] sm:$0xff]
      %v325 = vld [vmem:[%s217 + $0x268] sm:$0xff]
      %v326 = vld [vmem:[%s217 + $0x270] sm:$0xff]
      %v327 = vld [vmem:[%s217 + $0x278] sm:$0xff]
      %v328 = vld [vmem:[%s217 + $0x280] sm:$0xff]
      %v329 = vld [vmem:[%s217 + $0x288] sm:$0xff]
      %v330 = vld [vmem:[%s217 + $0x290] sm:$0xff]
      %v331 = vld [vmem:[%s217 + $0x298] sm:$0xff]
      %v332 = vld [vmem:[%s217 + $0x2a0] sm:$0xff]
      %v333 = vld [vmem:[%s217 + $0x2a8] sm:$0xff]
      %v334 = vld [vmem:[%s217 + $0x2b0] sm:$0xff]
      %v335 = vld [vmem:[%s217 + $0x2b8] sm:$0xff]
      %v336 = vld [vmem:[%s217 + $0x2c0] sm:$0xff]
      %v337 = vld [vmem:[%s217 + $0x2c8] sm:$0xff]
      %v338 = vld [vmem:[%s217 + $0x2d0] sm:$0xff]
      %v339 = vld [vmem:[%s217 + $0x2d8] sm:$0xff]
      %v340 = vld [vmem:[%s217 + $0x2e0] sm:$0xff]
      %v341 = vld [vmem:[%s217 + $0x2e8] sm:$0xff]
      %v342 = vld [vmem:[%s217 + $0x2f0] sm:$0xff]
      %v343 = vld [vmem:[%s217 + $0x2f8] sm:$0xff]
      %v344 = vld [vmem:[%s217 + $0x300] sm:$0xff]
      %v345 = vld [vmem:[%s217 + $0x308] sm:$0xff]
      %v346 = vld [vmem:[%s217 + $0x310] sm:$0xff]
      %v347 = vld [vmem:[%s217 + $0x318] sm:$0xff]
      %v348 = vld [vmem:[%s217 + $0x320] sm:$0xff]
      %v349 = vld [vmem:[%s217 + $0x328] sm:$0xff]
      %v350 = vld [vmem:[%s217 + $0x330] sm:$0xff]
      %v351 = vld [vmem:[%s217 + $0x338] sm:$0xff]
      %v352 = vld [vmem:[%s217 + $0x340] sm:$0xff]
      %v353 = vld [vmem:[%s217 + $0x348] sm:$0xff]
      %v354 = vld [vmem:[%s217 + $0x350] sm:$0xff]
      %v355 = vld [vmem:[%s217 + $0x358] sm:$0xff]
      %v356 = vld [vmem:[%s217 + $0x360] sm:$0xff]
      %v357 = vld [vmem:[%s217 + $0x368] sm:$0xff]
      %v358 = vld [vmem:[%s217 + $0x370] sm:$0xff]
      %v359 = vld [vmem:[%s217 + $0x378] sm:$0xff]
      %v360 = vld [vmem:[%s217 + $0x380] sm:$0xff]
      %v361 = vld [vmem:[%s217 + $0x388] sm:$0xff]
      %v362 = vld [vmem:[%s217 + $0x390] sm:$0xff]
      %v363 = vld [vmem:[%s217 + $0x398] sm:$0xff]
      %v364 = vld [vmem:[%s217 + $0x3a0] sm:$0xff]
      %v365 = vld [vmem:[%s217 + $0x3a8] sm:$0xff]
      %v366 = vld [vmem:[%s217 + $0x3b0] sm:$0xff]
      %v367 = vld [vmem:[%s217 + $0x3b8] sm:$0xff]
      %v368 = vld [vmem:[%s217 + $0x3c0] sm:$0xff]
      %v369 = vld [vmem:[%s217 + $0x3c8] sm:$0xff]
      %v370 = vld [vmem:[%s217 + $0x3d0] sm:$0xff]
      %v371 = vld [vmem:[%s217 + $0x3d8] sm:$0xff]
      %v372 = vld [vmem:[%s217 + $0x3e0] sm:$0xff]
      %v373 = vld [vmem:[%s217 + $0x3e8] sm:$0xff]
      %v374 = vld [vmem:[%s217 + $0x3f0] sm:$0xff]
      %v375 = vld [vmem:[%s217 + $0x3f8] sm:$0xff]
      %v376 = vld [vmem:[%s217 + $0x400] sm:$0xff]
      %v377 = vld [vmem:[%s217 + $0x408] sm:$0xff]
      %v378 = vld [vmem:[%s217 + $0x410] sm:$0xff]
      %v379 = vld [vmem:[%s217 + $0x418] sm:$0xff]
      %v380 = vld [vmem:[%s217 + $0x420] sm:$0xff]
      %v381 = vld [vmem:[%s217 + $0x428] sm:$0xff]
      %v382 = vld [vmem:[%s217 + $0x430] sm:$0xff]
      %v383 = vld [vmem:[%s217 + $0x438] sm:$0xff]
      %v384 = vld [vmem:[%s217 + $0x440] sm:$0xff]
      %v385 = vld [vmem:[%s217 + $0x448] sm:$0xff]
      %v386 = vld [vmem:[%s217 + $0x450] sm:$0xff]
      %v387 = vld [vmem:[%s217 + $0x458] sm:$0xff]
      %v388 = vld [vmem:[%s217 + $0x460] sm:$0xff]
      %v389 = vld [vmem:[%s217 + $0x468] sm:$0xff]
      %v390 = vld [vmem:[%s217 + $0x470] sm:$0xff]
      %v391 = vld [vmem:[%s217 + $0x478] sm:$0xff]
      %v392 = vld [vmem:[%s217 + $0x480] sm:$0xff]
      %v393 = vld [vmem:[%s217 + $0x488] sm:$0xff]
      %v394 = vld [vmem:[%s217 + $0x490] sm:$0xff]
      %v395 = vld [vmem:[%s217 + $0x498] sm:$0xff]
      %v396 = vld [vmem:[%s217 + $0x4a0] sm:$0xff]
      %v397 = vld [vmem:[%s217 + $0x4a8] sm:$0xff]
      %v398 = vld [vmem:[%s217 + $0x4b0] sm:$0xff]
      %v399 = vld [vmem:[%s217 + $0x4b8] sm:$0xff]
      %v400 = vld [vmem:[%s217 + $0x4c0] sm:$0xff]
      %v401 = vld [vmem:[%s217 + $0x4c8] sm:$0xff]
      %v402 = vld [vmem:[%s217 + $0x4d0] sm:$0xff]
      %v403 = vld [vmem:[%s217 + $0x4d8] sm:$0xff]
      %v404 = vld [vmem:[%s217 + $0x4e0] sm:$0xff]
      %v405 = vld [vmem:[%s217 + $0x4e8] sm:$0xff]
      %v406 = vld [vmem:[%s217 + $0x4f0] sm:$0xff]
      %v407 = vld [vmem:[%s217 + $0x4f8] sm:$0xff]
      %v408 = vld [vmem:[%s217 + $0x500] sm:$0xff]
      %v409 = vld [vmem:[%s217 + $0x508] sm:$0xff]
      %v410 = vld [vmem:[%s217 + $0x510] sm:$0xff]
      %v411 = vld [vmem:[%s217 + $0x518] sm:$0xff]
      %v412 = vld [vmem:[%s217 + $0x520] sm:$0xff]
      %v413 = vld [vmem:[%s217 + $0x528] sm:$0xff]
      %v414 = vld [vmem:[%s217 + $0x530] sm:$0xff]
      %v415 = vld [vmem:[%s217 + $0x538] sm:$0xff]
      %v416 = vld [vmem:[%s217 + $0x540] sm:$0xff]
      %v417 = vld [vmem:[%s217 + $0x548] sm:$0xff]
      %v418 = vld [vmem:[%s217 + $0x550] sm:$0xff]
      %v419 = vld [vmem:[%s217 + $0x558] sm:$0xff]
      %v420 = vld [vmem:[%s217 + $0x560] sm:$0xff]
      %v421 = vld [vmem:[%s217 + $0x568] sm:$0xff]
      %v422 = vld [vmem:[%s217 + $0x570] sm:$0xff]
      %v423 = vld [vmem:[%s217 + $0x578] sm:$0xff]
      %v424 = vld [vmem:[%s217 + $0x580] sm:$0xff]
      %v425 = vld [vmem:[%s217 + $0x588] sm:$0xff]
      %v426 = vld [vmem:[%s217 + $0x590] sm:$0xff]
      %v427 = vld [vmem:[%s217 + $0x598] sm:$0xff]
      %v428 = vld [vmem:[%s217 + $0x5a0] sm:$0xff]
      %v429 = vld [vmem:[%s217 + $0x5a8] sm:$0xff]
      %v430 = vld [vmem:[%s217 + $0x5b0] sm:$0xff]
      %v431 = vld [vmem:[%s217 + $0x5b8] sm:$0xff]
      %v432 = vld [vmem:[%s217 + $0x5c0] sm:$0xff]
      %v433 = vld [vmem:[%s217 + $0x5c8] sm:$0xff]
      %v434 = vld [vmem:[%s217 + $0x5d0] sm:$0xff]
      %v435 = vld [vmem:[%s217 + $0x5d8] sm:$0xff]
      %v436 = vld [vmem:[%s217 + $0x5e0] sm:$0xff]
      %v437 = vld [vmem:[%s217 + $0x5e8] sm:$0xff]
      %v438 = vld [vmem:[%s217 + $0x5f0] sm:$0xff]
      %v439 = vld [vmem:[%s217 + $0x5f8] sm:$0xff]
      %v440 = vld [vmem:[%s217 + $0x600] sm:$0xff]
      %v441 = vld [vmem:[%s217 + $0x608] sm:$0xff]
      %v442 = vld [vmem:[%s217 + $0x610] sm:$0xff]
      %v443 = vld [vmem:[%s217 + $0x618] sm:$0xff]
      %v444 = vld [vmem:[%s217 + $0x620] sm:$0xff]
      %v445 = vld [vmem:[%s217 + $0x628] sm:$0xff]
      %v446 = vld [vmem:[%s217 + $0x630] sm:$0xff]
      %v447 = vld [vmem:[%s217 + $0x638] sm:$0xff]
      %v448 = vld [vmem:[%s217 + $0x640] sm:$0xff]
      %v449 = vld [vmem:[%s217 + $0x648] sm:$0xff]
      %v450 = vld [vmem:[%s217 + $0x650] sm:$0xff]
      %v451 = vld [vmem:[%s217 + $0x658] sm:$0xff]
      %v452 = vld [vmem:[%s217 + $0x660] sm:$0xff]
      %v453 = vld [vmem:[%s217 + $0x668] sm:$0xff]
      %v454 = vld [vmem:[%s217 + $0x670] sm:$0xff]
      %v455 = vld [vmem:[%s217 + $0x678] sm:$0xff]
      %v456 = vld [vmem:[%s217 + $0x680] sm:$0xff]
      %v457 = vld [vmem:[%s217 + $0x688] sm:$0xff]
      %v458 = vld [vmem:[%s217 + $0x690] sm:$0xff]
      %v459 = vld [vmem:[%s217 + $0x698] sm:$0xff]
      %v460 = vld [vmem:[%s217 + $0x6a0] sm:$0xff]
      %v461 = vld [vmem:[%s217 + $0x6a8] sm:$0xff]
      %v462 = vld [vmem:[%s217 + $0x6b0] sm:$0xff]
      %v463 = vld [vmem:[%s217 + $0x6b8] sm:$0xff]
      %v464 = vld [vmem:[%s217 + $0x6c0] sm:$0xff]
      %v465 = vld [vmem:[%s217 + $0x6c8] sm:$0xff]
      %v466 = vld [vmem:[%s217 + $0x6d0] sm:$0xff]
      %v467 = vld [vmem:[%s217 + $0x6d8] sm:$0xff]
      %v468 = vld [vmem:[%s217 + $0x6e0] sm:$0xff]
      %v469 = vld [vmem:[%s217 + $0x6e8] sm:$0xff]
      %v470 = vld [vmem:[%s217 + $0x6f0] sm:$0xff]
      %v471 = vld [vmem:[%s217 + $0x6f8] sm:$0xff]
      %v472 = vld [vmem:[%s217 + $0x700] sm:$0xff]
      %v473 = vld [vmem:[%s217 + $0x708] sm:$0xff]
      %v474 = vld [vmem:[%s217 + $0x710] sm:$0xff]
      %v475 = vld [vmem:[%s217 + $0x718] sm:$0xff]
      %v476 = vld [vmem:[%s217 + $0x720] sm:$0xff]
      %v477 = vld [vmem:[%s217 + $0x728] sm:$0xff]
      %v478 = vld [vmem:[%s217 + $0x730] sm:$0xff]
      %v479 = vld [vmem:[%s217 + $0x738] sm:$0xff]
      %v480 = vld [vmem:[%s217 + $0x740] sm:$0xff]
      %v481 = vld [vmem:[%s217 + $0x748] sm:$0xff]
      %v482 = vld [vmem:[%s217 + $0x750] sm:$0xff]
      %v483 = vld [vmem:[%s217 + $0x758] sm:$0xff]
      %v484 = vld [vmem:[%s217 + $0x760] sm:$0xff]
      %v485 = vld [vmem:[%s217 + $0x768] sm:$0xff]
      %v486 = vld [vmem:[%s217 + $0x770] sm:$0xff]
      %v487 = vld [vmem:[%s217 + $0x778] sm:$0xff]
      %v488 = vld [vmem:[%s217 + $0x780] sm:$0xff]
      %v489 = vld [vmem:[%s217 + $0x788] sm:$0xff]
      %v490 = vld [vmem:[%s217 + $0x790] sm:$0xff]
      %v491 = vld [vmem:[%s217 + $0x798] sm:$0xff]
      %v492 = vld [vmem:[%s217 + $0x7a0] sm:$0xff]
      %v493 = vld [vmem:[%s217 + $0x7a8] sm:$0xff]
      %v494 = vld [vmem:[%s217 + $0x7b0] sm:$0xff]
      %v495 = vld [vmem:[%s217 + $0x7b8] sm:$0xff]
      %v496 = vld [vmem:[%s217 + $0x7c0] sm:$0xff]
      %v497 = vld [vmem:[%s217 + $0x7c8] sm:$0xff]
      %v498 = vld [vmem:[%s217 + $0x7d0] sm:$0xff]
      %v499 = vld [vmem:[%s217 + $0x7d8] sm:$0xff]
      %v500 = vld [vmem:[%s217 + $0x7e0] sm:$0xff]
      %v501 = vld [vmem:[%s217 + $0x7e8] sm:$0xff]
      %v502 = vld [vmem:[%s217 + $0x7f0] sm:$0xff]
      %v503 = vld [vmem:[%s217 + $0x7f8] sm:$0xff]
      %v504 = vld [vmem:[%s217 + $0x800] sm:$0xff]
      %v505 = vld [vmem:[%s217 + $0x808] sm:$0xff]
      %v506 = vld [vmem:[%s217 + $0x810] sm:$0xff]
      %v507 = vld [vmem:[%s217 + $0x818] sm:$0xff]
      %v508 = vld [vmem:[%s217 + $0x820] sm:$0xff]
      %v509 = vld [vmem:[%s217 + $0x828] sm:$0xff]
      %v510 = vld [vmem:[%s217 + $0x830] sm:$0xff]
      %v511 = vld [vmem:[%s217 + $0x838] sm:$0xff]
      %v512 = vld [vmem:[%s217 + $0x840] sm:$0xff]
      %v513 = vld [vmem:[%s217 + $0x848] sm:$0xff]
      %v514 = vld [vmem:[%s217 + $0x850] sm:$0xff]
      %v515 = vld [vmem:[%s217 + $0x858] sm:$0xff]
      %v516 = vld [vmem:[%s217 + $0x860] sm:$0xff]
      %v517 = vld [vmem:[%s217 + $0x868] sm:$0xff]
      %v518 = vld [vmem:[%s217 + $0x870] sm:$0xff]
      %v519 = vld [vmem:[%s217 + $0x878] sm:$0xff]
      %v520 = vld [vmem:[%s217 + $0x880] sm:$0xff]
      %v521 = vld [vmem:[%s217 + $0x888] sm:$0xff]
      %v522 = vld [vmem:[%s217 + $0x890] sm:$0xff]
      %v523 = vld [vmem:[%s217 + $0x898] sm:$0xff]
      %v524 = vld [vmem:[%s217 + $0x8a0] sm:$0xff]
      %v525 = vld [vmem:[%s217 + $0x8a8] sm:$0xff]
      %v526 = vld [vmem:[%s217 + $0x8b0] sm:$0xff]
      %v527 = vld [vmem:[%s217 + $0x8b8] sm:$0xff]
      %v528 = vld [vmem:[%s217 + $0x8c0] sm:$0xff]
      %v529 = vld [vmem:[%s217 + $0x8c8] sm:$0xff]
      %v530 = vld [vmem:[%s217 + $0x8d0] sm:$0xff]
      %v531 = vld [vmem:[%s217 + $0x8d8] sm:$0xff]
      %v532 = vld [vmem:[%s217 + $0x8e0] sm:$0xff]
      %v533 = vld [vmem:[%s217 + $0x8e8] sm:$0xff]
      %v534 = vld [vmem:[%s217 + $0x8f0] sm:$0xff]
      %v535 = vld [vmem:[%s217 + $0x8f8] sm:$0xff]
      %v536 = vld [vmem:[%s217 + $0x900] sm:$0xff]
      %v537 = vld [vmem:[%s217 + $0x908] sm:$0xff]
      %v538 = vld [vmem:[%s217 + $0x910] sm:$0xff]
      %v539 = vld [vmem:[%s217 + $0x918] sm:$0xff]
      %v540 = vld [vmem:[%s217 + $0x920] sm:$0xff]
      %v541 = vld [vmem:[%s217 + $0x928] sm:$0xff]
      %v542 = vld [vmem:[%s217 + $0x930] sm:$0xff]
      %v543 = vld [vmem:[%s217 + $0x938] sm:$0xff]
      %v544 = vld [vmem:[%s217 + $0x940] sm:$0xff]
      %v545 = vld [vmem:[%s217 + $0x948] sm:$0xff]
      %v546 = vld [vmem:[%s217 + $0x950] sm:$0xff]
      %v547 = vld [vmem:[%s217 + $0x958] sm:$0xff]
      %v548 = vld [vmem:[%s217 + $0x960] sm:$0xff]
      %v549 = vld [vmem:[%s217 + $0x968] sm:$0xff]
      %v550 = vld [vmem:[%s217 + $0x970] sm:$0xff]
      %v551 = vld [vmem:[%s217 + $0x978] sm:$0xff]
      %v552 = vld [vmem:[%s217 + $0x980] sm:$0xff]
      %v553 = vld [vmem:[%s217 + $0x988] sm:$0xff]
      %v554 = vld [vmem:[%s217 + $0x990] sm:$0xff]
      %v555 = vld [vmem:[%s217 + $0x998] sm:$0xff]
      %v556 = vld [vmem:[%s217 + $0x9a0] sm:$0xff]
      %v557 = vld [vmem:[%s217 + $0x9a8] sm:$0xff]
      %v558 = vld [vmem:[%s217 + $0x9b0] sm:$0xff]
      %v559 = vld [vmem:[%s217 + $0x9b8] sm:$0xff]
      %v560 = vld [vmem:[%s217 + $0x9c0] sm:$0xff]
      %v561 = vld [vmem:[%s217 + $0x9c8] sm:$0xff]
      %v562 = vld [vmem:[%s217 + $0x9d0] sm:$0xff]
      %v563 = vld [vmem:[%s217 + $0x9d8] sm:$0xff]
      %v564 = vld [vmem:[%s217 + $0x9e0] sm:$0xff]
      %v565 = vld [vmem:[%s217 + $0x9e8] sm:$0xff]
      %v566 = vld [vmem:[%s217 + $0x9f0] sm:$0xff]
      %v567 = vld [vmem:[%s217 + $0x9f8] sm:$0xff]
      %v568 = vld [vmem:[%s217 + $0xa00] sm:$0xff]
      %v569 = vld [vmem:[%s217 + $0xa08] sm:$0xff]
      %v570 = vld [vmem:[%s217 + $0xa10] sm:$0xff]
      %v571 = vld [vmem:[%s217 + $0xa18] sm:$0xff]
      %v572 = vld [vmem:[%s217 + $0xa20] sm:$0xff]
      %v573 = vld [vmem:[%s217 + $0xa28] sm:$0xff]
      %v574 = vld [vmem:[%s217 + $0xa30] sm:$0xff]
      %v575 = vld [vmem:[%s217 + $0xa38] sm:$0xff]
      %v576 = vld [vmem:[%s217 + $0xa40] sm:$0xff]
      %v577 = vld [vmem:[%s217 + $0xa48] sm:$0xff]
      %v578 = vld [vmem:[%s217 + $0xa50] sm:$0xff]
      %v579 = vld [vmem:[%s217 + $0xa58] sm:$0xff]
      %v580 = vld [vmem:[%s217 + $0xa60] sm:$0xff]
      %v581 = vld [vmem:[%s217 + $0xa68] sm:$0xff]
      %v582 = vld [vmem:[%s217 + $0xa70] sm:$0xff]
      %v583 = vld [vmem:[%s217 + $0xa78] sm:$0xff]
      %v584 = vld [vmem:[%s217 + $0xa80] sm:$0xff]
      %v585 = vld [vmem:[%s217 + $0xa88] sm:$0xff]
      %v586 = vld [vmem:[%s217 + $0xa90] sm:$0xff]
      %v587 = vld [vmem:[%s217 + $0xa98] sm:$0xff]
      %v588 = vld [vmem:[%s217 + $0xaa0] sm:$0xff]
      %v589 = vld [vmem:[%s217 + $0xaa8] sm:$0xff]
      %v590 = vld [vmem:[%s217 + $0xab0] sm:$0xff]
      %v591 = vld [vmem:[%s217 + $0xab8] sm:$0xff]
      %v592 = vld [vmem:[%s217 + $0xac0] sm:$0xff]
      %v593 = vld [vmem:[%s217 + $0xac8] sm:$0xff]
      %v594 = vld [vmem:[%s217 + $0xad0] sm:$0xff]
      %v595 = vld [vmem:[%s217 + $0xad8] sm:$0xff]
      %v596 = vld [vmem:[%s217 + $0xae0] sm:$0xff]
      %v597 = vld [vmem:[%s217 + $0xae8] sm:$0xff]
      %v598 = vld [vmem:[%s217 + $0xaf0] sm:$0xff]
      %v599 = vld [vmem:[%s217 + $0xaf8] sm:$0xff]
      %v600 = vld [vmem:[%s217 + $0xb00] sm:$0xff]
      %v601 = vld [vmem:[%s217 + $0xb08] sm:$0xff]
      %v602 = vld [vmem:[%s217 + $0xb10] sm:$0xff]
      %v603 = vld [vmem:[%s217 + $0xb18] sm:$0xff]
      %v604 = vld [vmem:[%s217 + $0xb20] sm:$0xff]
      %v605 = vld [vmem:[%s217 + $0xb28] sm:$0xff]
      %v606 = vld [vmem:[%s217 + $0xb30] sm:$0xff]
      %v607 = vld [vmem:[%s217 + $0xb38] sm:$0xff]
      %v608 = vld [vmem:[%s217 + $0xb40] sm:$0xff]
      %v609 = vld [vmem:[%s217 + $0xb48] sm:$0xff]
      %v610 = vld [vmem:[%s217 + $0xb50] sm:$0xff]
      %v611 = vld [vmem:[%s217 + $0xb58] sm:$0xff]
      %v612 = vld [vmem:[%s217 + $0xb60] sm:$0xff]
      %v613 = vld [vmem:[%s217 + $0xb68] sm:$0xff]
      %v614 = vld [vmem:[%s217 + $0xb70] sm:$0xff]
      %v615 = vld [vmem:[%s217 + $0xb78] sm:$0xff]
      %v616 = vld [vmem:[%s217 + $0xb80] sm:$0xff]
      %v617 = vld [vmem:[%s217 + $0xb88] sm:$0xff]
      %v618 = vld [vmem:[%s217 + $0xb90] sm:$0xff]
      %v619 = vld [vmem:[%s217 + $0xb98] sm:$0xff]
      %v620 = vld [vmem:[%s217 + $0xba0] sm:$0xff]
      %v621 = vld [vmem:[%s217 + $0xba8] sm:$0xff]
      %v622 = vld [vmem:[%s217 + $0xbb0] sm:$0xff]
      %v623 = vld [vmem:[%s217 + $0xbb8] sm:$0xff]
      %v624 = vld [vmem:[%s217 + $0xbc0] sm:$0xff]
      %v625 = vld [vmem:[%s217 + $0xbc8] sm:$0xff]
      %v626 = vld [vmem:[%s217 + $0xbd0] sm:$0xff]
      %v627 = vld [vmem:[%s217 + $0xbd8] sm:$0xff]
      %v628 = vld [vmem:[%s217 + $0xbe0] sm:$0xff]
      %v629 = vld [vmem:[%s217 + $0xbe8] sm:$0xff]
      %v630 = vld [vmem:[%s217 + $0xbf0] sm:$0xff]
      %v631 = vld [vmem:[%s217 + $0xbf8] sm:$0xff]
      %v632 = vld [vmem:[%s217 + $0xc00] sm:$0xff]
      %v633 = vld [vmem:[%s217 + $0xc08] sm:$0xff]
      %v634 = vld [vmem:[%s217 + $0xc10] sm:$0xff]
      %v635 = vld [vmem:[%s217 + $0xc18] sm:$0xff]
      %v636 = vld [vmem:[%s217 + $0xc20] sm:$0xff]
      %v637 = vld [vmem:[%s217 + $0xc28] sm:$0xff]
      %v638 = vld [vmem:[%s217 + $0xc30] sm:$0xff]
      %v639 = vld [vmem:[%s217 + $0xc38] sm:$0xff]
      %v640 = vld [vmem:[%s217 + $0xc40] sm:$0xff]
      %v641 = vld [vmem:[%s217 + $0xc48] sm:$0xff]
      %v642 = vld [vmem:[%s217 + $0xc50] sm:$0xff]
      %v643 = vld [vmem:[%s217 + $0xc58] sm:$0xff]
      %v644 = vld [vmem:[%s217 + $0xc60] sm:$0xff]
      %v645 = vld [vmem:[%s217 + $0xc68] sm:$0xff]
      %v646 = vld [vmem:[%s217 + $0xc70] sm:$0xff]
      %v647 = vld [vmem:[%s217 + $0xc78] sm:$0xff]
      %v648 = vld [vmem:[%s217 + $0xc80] sm:$0xff]
      %v649 = vld [vmem:[%s217 + $0xc88] sm:$0xff]
      %v650 = vld [vmem:[%s217 + $0xc90] sm:$0xff]
      %v651 = vld [vmem:[%s217 + $0xc98] sm:$0xff]
      %v652 = vld [vmem:[%s217 + $0xca0] sm:$0xff]
      %v653 = vld [vmem:[%s217 + $0xca8] sm:$0xff]
      %v654 = vld [vmem:[%s217 + $0xcb0] sm:$0xff]
      %v655 = vld [vmem:[%s217 + $0xcb8] sm:$0xff]
      %v656 = vld [vmem:[%s217 + $0xcc0] sm:$0xff]
      %v657 = vld [vmem:[%s217 + $0xcc8] sm:$0xff]
      %v658 = vld [vmem:[%s217 + $0xcd0] sm:$0xff]
      %v659 = vld [vmem:[%s217 + $0xcd8] sm:$0xff]
      %v660 = vld [vmem:[%s217 + $0xce0] sm:$0xff]
      %v661 = vld [vmem:[%s217 + $0xce8] sm:$0xff]
      %v662 = vld [vmem:[%s217 + $0xcf0] sm:$0xff]
      %v663 = vld [vmem:[%s217 + $0xcf8] sm:$0xff]
      %v664 = vld [vmem:[%s217 + $0xd00] sm:$0xff]
      %v665 = vld [vmem:[%s217 + $0xd08] sm:$0xff]
      %v666 = vld [vmem:[%s217 + $0xd10] sm:$0xff]
      %v667 = vld [vmem:[%s217 + $0xd18] sm:$0xff]
      %v668 = vld [vmem:[%s217 + $0xd20] sm:$0xff]
      %v669 = vld [vmem:[%s217 + $0xd28] sm:$0xff]
      %v670 = vld [vmem:[%s217 + $0xd30] sm:$0xff]
      %v671 = vld [vmem:[%s217 + $0xd38] sm:$0xff]
      %v672 = vld [vmem:[%s217 + $0xd40] sm:$0xff]
      %v673 = vld [vmem:[%s217 + $0xd48] sm:$0xff]
      %v674 = vld [vmem:[%s217 + $0xd50] sm:$0xff]
      %v675 = vld [vmem:[%s217 + $0xd58] sm:$0xff]
      %v676 = vld [vmem:[%s217 + $0xd60] sm:$0xff]
      %v677 = vld [vmem:[%s217 + $0xd68] sm:$0xff]
      %v678 = vld [vmem:[%s217 + $0xd70] sm:$0xff]
      %v679 = vld [vmem:[%s217 + $0xd78] sm:$0xff]
      %v680 = vld [vmem:[%s217 + $0xd80] sm:$0xff]
      %v681 = vld [vmem:[%s217 + $0xd88] sm:$0xff]
      %v682 = vld [vmem:[%s217 + $0xd90] sm:$0xff]
      %v683 = vld [vmem:[%s217 + $0xd98] sm:$0xff]
      %v684 = vld [vmem:[%s217 + $0xda0] sm:$0xff]
      %v685 = vld [vmem:[%s217 + $0xda8] sm:$0xff]
      %v686 = vld [vmem:[%s217 + $0xdb0] sm:$0xff]
      %v687 = vld [vmem:[%s217 + $0xdb8] sm:$0xff]
      %v688 = vld [vmem:[%s217 + $0xdc0] sm:$0xff]
      %v689 = vld [vmem:[%s217 + $0xdc8] sm:$0xff]
      %v690 = vld [vmem:[%s217 + $0xdd0] sm:$0xff]
      %v691 = vld [vmem:[%s217 + $0xdd8] sm:$0xff]
      %v692 = vld [vmem:[%s217 + $0xde0] sm:$0xff]
      %v693 = vld [vmem:[%s217 + $0xde8] sm:$0xff]
      %v694 = vld [vmem:[%s217 + $0xdf0] sm:$0xff]
      %v695 = vld [vmem:[%s217 + $0xdf8] sm:$0xff]
      %v696 = vld [vmem:[%s217 + $0xe00] sm:$0xff]
      %v697 = vld [vmem:[%s217 + $0xe08] sm:$0xff]
      %v698 = vld [vmem:[%s217 + $0xe10] sm:$0xff]
      %v699 = vld [vmem:[%s217 + $0xe18] sm:$0xff]
      %v700 = vld [vmem:[%s217 + $0xe20] sm:$0xff]
      %v701 = vld [vmem:[%s217 + $0xe28] sm:$0xff]
      %v702 = vld [vmem:[%s217 + $0xe30] sm:$0xff]
      %v703 = vld [vmem:[%s217 + $0xe38] sm:$0xff]
      %v704 = vld [vmem:[%s217 + $0xe40] sm:$0xff]
      %v705 = vld [vmem:[%s217 + $0xe48] sm:$0xff]
      %v706 = vld [vmem:[%s217 + $0xe50] sm:$0xff]
      %v707 = vld [vmem:[%s217 + $0xe58] sm:$0xff]
      %v708 = vld [vmem:[%s217 + $0xe60] sm:$0xff]
      %v709 = vld [vmem:[%s217 + $0xe68] sm:$0xff]
      %v710 = vld [vmem:[%s217 + $0xe70] sm:$0xff]
      %v711 = vld [vmem:[%s217 + $0xe78] sm:$0xff]
      %v712 = vld [vmem:[%s217 + $0xe80] sm:$0xff]
      %v713 = vld [vmem:[%s217 + $0xe88] sm:$0xff]
      %v714 = vld [vmem:[%s217 + $0xe90] sm:$0xff]
      %v715 = vld [vmem:[%s217 + $0xe98] sm:$0xff]
      %v716 = vld [vmem:[%s217 + $0xea0] sm:$0xff]
      %v717 = vld [vmem:[%s217 + $0xea8] sm:$0xff]
      %v718 = vld [vmem:[%s217 + $0xeb0] sm:$0xff]
      %v719 = vld [vmem:[%s217 + $0xeb8] sm:$0xff]
      %v720 = vld [vmem:[%s217 + $0xec0] sm:$0xff]
      %v721 = vld [vmem:[%s217 + $0xec8] sm:$0xff]
      %v722 = vld [vmem:[%s217 + $0xed0] sm:$0xff]
      %v723 = vld [vmem:[%s217 + $0xed8] sm:$0xff]
      %v724 = vld [vmem:[%s217 + $0xee0] sm:$0xff]
      %v725 = vld [vmem:[%s217 + $0xee8] sm:$0xff]
      %v726 = vld [vmem:[%s217 + $0xef0] sm:$0xff]
      %v727 = vld [vmem:[%s217 + $0xef8] sm:$0xff]
      %v728 = vld [vmem:[%s217 + $0xf00] sm:$0xff]
      %v729 = vld [vmem:[%s217 + $0xf08] sm:$0xff]
      %v730 = vld [vmem:[%s217 + $0xf10] sm:$0xff]
      %v731 = vld [vmem:[%s217 + $0xf18] sm:$0xff]
      %v732 = vld [vmem:[%s217 + $0xf20] sm:$0xff]
      %v733 = vld [vmem:[%s217 + $0xf28] sm:$0xff]
      %v734 = vld [vmem:[%s217 + $0xf30] sm:$0xff]
      %v735 = vld [vmem:[%s217 + $0xf38] sm:$0xff]
      %v736 = vld [vmem:[%s217 + $0xf40] sm:$0xff]
      %v737 = vld [vmem:[%s217 + $0xf48] sm:$0xff]
      %v738 = vld [vmem:[%s217 + $0xf50] sm:$0xff]
      %v739 = vld [vmem:[%s217 + $0xf58] sm:$0xff]
      %v740 = vld [vmem:[%s217 + $0xf60] sm:$0xff]
      %v741 = vld [vmem:[%s217 + $0xf68] sm:$0xff]
      %v742 = vld [vmem:[%s217 + $0xf70] sm:$0xff]
      %v743 = vld [vmem:[%s217 + $0xf78] sm:$0xff]
      %v744 = vld [vmem:[%s217 + $0xf80] sm:$0xff]
      %v745 = vld [vmem:[%s217 + $0xf88] sm:$0xff]
      %v746 = vld [vmem:[%s217 + $0xf90] sm:$0xff]
      %v747 = vld [vmem:[%s217 + $0xf98] sm:$0xff]
      %v748 = vld [vmem:[%s217 + $0xfa0] sm:$0xff]
      %v749 = vld [vmem:[%s217 + $0xfa8] sm:$0xff]
      %v750 = vld [vmem:[%s217 + $0xfb0] sm:$0xff]
      %v751 = vld [vmem:[%s217 + $0xfb8] sm:$0xff]
      %v752 = vld [vmem:[%s217 + $0xfc0] sm:$0xff]
      %v753 = vld [vmem:[%s217 + $0xfc8] sm:$0xff]
      %v754 = vld [vmem:[%s217 + $0xfd0] sm:$0xff]
      %v755 = vld [vmem:[%s217 + $0xfd8] sm:$0xff]
      %v756 = vld [vmem:[%s217 + $0xfe0] sm:$0xff]
      %v757 = vld [vmem:[%s217 + $0xfe8] sm:$0xff]
      %v758 = vld [vmem:[%s217 + $0xff0] sm:$0xff]
      %v759 = vld [vmem:[%s217 + $0xff8] sm:$0xff]
      %v764 = vunpack.c.l.b16 %v244
      %v765 = vunpack.c.h.b16 %v244
      %v766 = vunpack.c.l.b16 %v245
      %v767 = vunpack.c.h.b16 %v245
      %v768 = vunpack.c.l.b16 %v246
      %v769 = vunpack.c.h.b16 %v246
      %v770 = vunpack.c.l.b16 %v247
      %v771 = vunpack.c.h.b16 %v247
      %v772 = vpack.c.b16 %v764, %v764
      %v773 = vpack.c.b16 %v765, %v765
      %v774 = vpack.c.b16 %v766, %v766
      %v775 = vpack.c.b16 %v767, %v767
      %v776 = vpack.c.b16 %v768, %v768
      %v777 = vpack.c.b16 %v769, %v769
      %v778 = vpack.c.b16 %v770, %v770
      %v779 = vpack.c.b16 %v771, %v771
      %v1300 = vunpack.c.l.b16 %v248
      %v1301 = vunpack.c.h.b16 %v248
      %v1302 = vunpack.c.l.b16 %v249
      %v1303 = vunpack.c.h.b16 %v249
      %v1304 = vunpack.c.l.b16 %v250
      %v1305 = vunpack.c.h.b16 %v250
      %v1306 = vunpack.c.l.b16 %v251
      %v1307 = vunpack.c.h.b16 %v251
      %v1308 = vunpack.c.l.b16 %v252
      %v1309 = vunpack.c.h.b16 %v252
      %v1310 = vunpack.c.l.b16 %v253
      %v1311 = vunpack.c.h.b16 %v253
      %v1312 = vunpack.c.l.b16 %v254
      %v1313 = vunpack.c.h.b16 %v254
      %v1314 = vunpack.c.l.b16 %v255
      %v1315 = vunpack.c.h.b16 %v255
      %v1316 = vunpack.c.l.b16 %v256
      %v1317 = vunpack.c.h.b16 %v256
      %v1318 = vunpack.c.l.b16 %v257
      %v1319 = vunpack.c.h.b16 %v257
      %v1320 = vunpack.c.l.b16 %v258
      %v1321 = vunpack.c.h.b16 %v258
      %v1322 = vunpack.c.l.b16 %v259
      %v1323 = vunpack.c.h.b16 %v259
      %v1324 = vunpack.c.l.b16 %v260
      %v1325 = vunpack.c.h.b16 %v260
      %v1326 = vunpack.c.l.b16 %v261
      %v1327 = vunpack.c.h.b16 %v261
      %v1328 = vunpack.c.l.b16 %v262
      %v1329 = vunpack.c.h.b16 %v262
      %v1330 = vunpack.c.l.b16 %v263
      %v1331 = vunpack.c.h.b16 %v263
      %v1332 = vunpack.c.l.b16 %v264
      %v1333 = vunpack.c.h.b16 %v264
      %v1334 = vunpack.c.l.b16 %v265
      %v1335 = vunpack.c.h.b16 %v265
      %v1336 = vunpack.c.l.b16 %v266
      %v1337 = vunpack.c.h.b16 %v266
      %v1338 = vunpack.c.l.b16 %v267
      %v1339 = vunpack.c.h.b16 %v267
      %v1340 = vunpack.c.l.b16 %v268
      %v1341 = vunpack.c.h.b16 %v268
      %v1342 = vunpack.c.l.b16 %v269
      %v1343 = vunpack.c.h.b16 %v269
      %v1344 = vunpack.c.l.b16 %v270
      %v1345 = vunpack.c.h.b16 %v270
      %v1346 = vunpack.c.l.b16 %v271
      %v1347 = vunpack.c.h.b16 %v271
      %v1348 = vunpack.c.l.b16 %v272
      %v1349 = vunpack.c.h.b16 %v272
      %v1350 = vunpack.c.l.b16 %v273
      %v1351 = vunpack.c.h.b16 %v273
      %v1352 = vunpack.c.l.b16 %v274
      %v1353 = vunpack.c.h.b16 %v274
      %v1354 = vunpack.c.l.b16 %v275
      %v1355 = vunpack.c.h.b16 %v275
      %v1356 = vunpack.c.l.b16 %v276
      %v1357 = vunpack.c.h.b16 %v276
      %v1358 = vunpack.c.l.b16 %v277
      %v1359 = vunpack.c.h.b16 %v277
      %v1360 = vunpack.c.l.b16 %v278
      %v1361 = vunpack.c.h.b16 %v278
      %v1362 = vunpack.c.l.b16 %v279
      %v1363 = vunpack.c.h.b16 %v279
      %v1364 = vunpack.c.l.b16 %v280
      %v1365 = vunpack.c.h.b16 %v280
      %v1366 = vunpack.c.l.b16 %v281
      %v1367 = vunpack.c.h.b16 %v281
      %v1368 = vunpack.c.l.b16 %v282
      %v1369 = vunpack.c.h.b16 %v282
      %v1370 = vunpack.c.l.b16 %v283
      %v1371 = vunpack.c.h.b16 %v283
      %v1372 = vunpack.c.l.b16 %v284
      %v1373 = vunpack.c.h.b16 %v284
      %v1374 = vunpack.c.l.b16 %v285
      %v1375 = vunpack.c.h.b16 %v285
      %v1376 = vunpack.c.l.b16 %v286
      %v1377 = vunpack.c.h.b16 %v286
      %v1378 = vunpack.c.l.b16 %v287
      %v1379 = vunpack.c.h.b16 %v287
      %v1380 = vunpack.c.l.b16 %v288
      %v1381 = vunpack.c.h.b16 %v288
      %v1382 = vunpack.c.l.b16 %v289
      %v1383 = vunpack.c.h.b16 %v289
      %v1384 = vunpack.c.l.b16 %v290
      %v1385 = vunpack.c.h.b16 %v290
      %v1386 = vunpack.c.l.b16 %v291
      %v1387 = vunpack.c.h.b16 %v291
      %v1388 = vunpack.c.l.b16 %v292
      %v1389 = vunpack.c.h.b16 %v292
      %v1390 = vunpack.c.l.b16 %v293
      %v1391 = vunpack.c.h.b16 %v293
      %v1392 = vunpack.c.l.b16 %v294
      %v1393 = vunpack.c.h.b16 %v294
      %v1394 = vunpack.c.l.b16 %v295
      %v1395 = vunpack.c.h.b16 %v295
      %v1396 = vunpack.c.l.b16 %v296
      %v1397 = vunpack.c.h.b16 %v296
      %v1398 = vunpack.c.l.b16 %v297
      %v1399 = vunpack.c.h.b16 %v297
      %v1400 = vunpack.c.l.b16 %v298
      %v1401 = vunpack.c.h.b16 %v298
      %v1402 = vunpack.c.l.b16 %v299
      %v1403 = vunpack.c.h.b16 %v299
      %v1404 = vunpack.c.l.b16 %v300
      %v1405 = vunpack.c.h.b16 %v300
      %v1406 = vunpack.c.l.b16 %v301
      %v1407 = vunpack.c.h.b16 %v301
      %v1408 = vunpack.c.l.b16 %v302
      %v1409 = vunpack.c.h.b16 %v302
      %v1410 = vunpack.c.l.b16 %v303
      %v1411 = vunpack.c.h.b16 %v303
      %v1412 = vunpack.c.l.b16 %v304
      %v1413 = vunpack.c.h.b16 %v304
      %v1414 = vunpack.c.l.b16 %v305
      %v1415 = vunpack.c.h.b16 %v305
      %v1416 = vunpack.c.l.b16 %v306
      %v1417 = vunpack.c.h.b16 %v306
      %v1418 = vunpack.c.l.b16 %v307
      %v1419 = vunpack.c.h.b16 %v307
      %v1420 = vunpack.c.l.b16 %v308
      %v1421 = vunpack.c.h.b16 %v308
      %v1422 = vunpack.c.l.b16 %v309
      %v1423 = vunpack.c.h.b16 %v309
      %v1424 = vunpack.c.l.b16 %v310
      %v1425 = vunpack.c.h.b16 %v310
      %v1426 = vunpack.c.l.b16 %v311
      %v1427 = vunpack.c.h.b16 %v311
      %v1428 = vunpack.c.l.b16 %v312
      %v1429 = vunpack.c.h.b16 %v312
      %v1430 = vunpack.c.l.b16 %v313
      %v1431 = vunpack.c.h.b16 %v313
      %v1432 = vunpack.c.l.b16 %v314
      %v1433 = vunpack.c.h.b16 %v314
      %v1434 = vunpack.c.l.b16 %v315
      %v1435 = vunpack.c.h.b16 %v315
      %v1436 = vunpack.c.l.b16 %v316
      %v1437 = vunpack.c.h.b16 %v316
      %v1438 = vunpack.c.l.b16 %v317
      %v1439 = vunpack.c.h.b16 %v317
      %v1440 = vunpack.c.l.b16 %v318
      %v1441 = vunpack.c.h.b16 %v318
      %v1442 = vunpack.c.l.b16 %v319
      %v1443 = vunpack.c.h.b16 %v319
      %v1444 = vunpack.c.l.b16 %v320
      %v1445 = vunpack.c.h.b16 %v320
      %v1446 = vunpack.c.l.b16 %v321
      %v1447 = vunpack.c.h.b16 %v321
      %v1448 = vunpack.c.l.b16 %v322
      %v1449 = vunpack.c.h.b16 %v322
      %v1450 = vunpack.c.l.b16 %v323
      %v1451 = vunpack.c.h.b16 %v323
      %v1452 = vunpack.c.l.b16 %v324
      %v1453 = vunpack.c.h.b16 %v324
      %v1454 = vunpack.c.l.b16 %v325
      %v1455 = vunpack.c.h.b16 %v325
      %v1456 = vunpack.c.l.b16 %v326
      %v1457 = vunpack.c.h.b16 %v326
      %v1458 = vunpack.c.l.b16 %v327
      %v1459 = vunpack.c.h.b16 %v327
      %v1460 = vunpack.c.l.b16 %v328
      %v1461 = vunpack.c.h.b16 %v328
      %v1462 = vunpack.c.l.b16 %v329
      %v1463 = vunpack.c.h.b16 %v329
      %v1464 = vunpack.c.l.b16 %v330
      %v1465 = vunpack.c.h.b16 %v330
      %v1466 = vunpack.c.l.b16 %v331
      %v1467 = vunpack.c.h.b16 %v331
      %v1468 = vunpack.c.l.b16 %v332
      %v1469 = vunpack.c.h.b16 %v332
      %v1470 = vunpack.c.l.b16 %v333
      %v1471 = vunpack.c.h.b16 %v333
      %v1472 = vunpack.c.l.b16 %v334
      %v1473 = vunpack.c.h.b16 %v334
      %v1474 = vunpack.c.l.b16 %v335
      %v1475 = vunpack.c.h.b16 %v335
      %v1476 = vunpack.c.l.b16 %v336
      %v1477 = vunpack.c.h.b16 %v336
      %v1478 = vunpack.c.l.b16 %v337
      %v1479 = vunpack.c.h.b16 %v337
      %v1480 = vunpack.c.l.b16 %v338
      %v1481 = vunpack.c.h.b16 %v338
      %v1482 = vunpack.c.l.b16 %v339
      %v1483 = vunpack.c.h.b16 %v339
      %v1484 = vunpack.c.l.b16 %v340
      %v1485 = vunpack.c.h.b16 %v340
      %v1486 = vunpack.c.l.b16 %v341
      %v1487 = vunpack.c.h.b16 %v341
      %v1488 = vunpack.c.l.b16 %v342
      %v1489 = vunpack.c.h.b16 %v342
      %v1490 = vunpack.c.l.b16 %v343
      %v1491 = vunpack.c.h.b16 %v343
      %v1492 = vunpack.c.l.b16 %v344
      %v1493 = vunpack.c.h.b16 %v344
      %v1494 = vunpack.c.l.b16 %v345
      %v1495 = vunpack.c.h.b16 %v345
      %v1496 = vunpack.c.l.b16 %v346
      %v1497 = vunpack.c.h.b16 %v346
      %v1498 = vunpack.c.l.b16 %v347
      %v1499 = vunpack.c.h.b16 %v347
      %v1500 = vunpack.c.l.b16 %v348
      %v1501 = vunpack.c.h.b16 %v348
      %v1502 = vunpack.c.l.b16 %v349
      %v1503 = vunpack.c.h.b16 %v349
      %v1504 = vunpack.c.l.b16 %v350
      %v1505 = vunpack.c.h.b16 %v350
      %v1506 = vunpack.c.l.b16 %v351
      %v1507 = vunpack.c.h.b16 %v351
      %v1508 = vunpack.c.l.b16 %v352
      %v1509 = vunpack.c.h.b16 %v352
      %v1510 = vunpack.c.l.b16 %v353
      %v1511 = vunpack.c.h.b16 %v353
      %v1512 = vunpack.c.l.b16 %v354
      %v1513 = vunpack.c.h.b16 %v354
      %v1514 = vunpack.c.l.b16 %v355
      %v1515 = vunpack.c.h.b16 %v355
      %v1516 = vunpack.c.l.b16 %v356
      %v1517 = vunpack.c.h.b16 %v356
      %v1518 = vunpack.c.l.b16 %v357
      %v1519 = vunpack.c.h.b16 %v357
      %v1520 = vunpack.c.l.b16 %v358
      %v1521 = vunpack.c.h.b16 %v358
      %v1522 = vunpack.c.l.b16 %v359
      %v1523 = vunpack.c.h.b16 %v359
      %v1524 = vunpack.c.l.b16 %v360
      %v1525 = vunpack.c.h.b16 %v360
      %v1526 = vunpack.c.l.b16 %v361
      %v1527 = vunpack.c.h.b16 %v361
      %v1528 = vunpack.c.l.b16 %v362
      %v1529 = vunpack.c.h.b16 %v362
      %v1530 = vunpack.c.l.b16 %v363
      %v1531 = vunpack.c.h.b16 %v363
      %v1532 = vunpack.c.l.b16 %v364
      %v1533 = vunpack.c.h.b16 %v364
      %v1534 = vunpack.c.l.b16 %v365
      %v1535 = vunpack.c.h.b16 %v365
      %v1536 = vunpack.c.l.b16 %v366
      %v1537 = vunpack.c.h.b16 %v366
      %v1538 = vunpack.c.l.b16 %v367
      %v1539 = vunpack.c.h.b16 %v367
      %v1540 = vunpack.c.l.b16 %v368
      %v1541 = vunpack.c.h.b16 %v368
      %v1542 = vunpack.c.l.b16 %v369
      %v1543 = vunpack.c.h.b16 %v369
      %v1544 = vunpack.c.l.b16 %v370
      %v1545 = vunpack.c.h.b16 %v370
      %v1546 = vunpack.c.l.b16 %v371
      %v1547 = vunpack.c.h.b16 %v371
      %v1548 = vunpack.c.l.b16 %v372
      %v1549 = vunpack.c.h.b16 %v372
      %v1550 = vunpack.c.l.b16 %v373
      %v1551 = vunpack.c.h.b16 %v373
      %v1552 = vunpack.c.l.b16 %v374
      %v1553 = vunpack.c.h.b16 %v374
      %v1554 = vunpack.c.l.b16 %v375
      %v1555 = vunpack.c.h.b16 %v375
      %v1556 = vunpack.c.l.b16 %v376
      %v1557 = vunpack.c.h.b16 %v376
      %v1558 = vunpack.c.l.b16 %v377
      %v1559 = vunpack.c.h.b16 %v377
      %v1560 = vunpack.c.l.b16 %v378
      %v1561 = vunpack.c.h.b16 %v378
      %v1562 = vunpack.c.l.b16 %v379
      %v1563 = vunpack.c.h.b16 %v379
      %v1564 = vunpack.c.l.b16 %v380
      %v1565 = vunpack.c.h.b16 %v380
      %v1566 = vunpack.c.l.b16 %v381
      %v1567 = vunpack.c.h.b16 %v381
      %v1568 = vunpack.c.l.b16 %v382
      %v1569 = vunpack.c.h.b16 %v382
      %v1570 = vunpack.c.l.b16 %v383
      %v1571 = vunpack.c.h.b16 %v383
      %v1572 = vunpack.c.l.b16 %v384
      %v1573 = vunpack.c.h.b16 %v384
      %v1574 = vunpack.c.l.b16 %v385
      %v1575 = vunpack.c.h.b16 %v385
      %v1576 = vunpack.c.l.b16 %v386
      %v1577 = vunpack.c.h.b16 %v386
      %v1578 = vunpack.c.l.b16 %v387
      %v1579 = vunpack.c.h.b16 %v387
      %v1580 = vunpack.c.l.b16 %v388
      %v1581 = vunpack.c.h.b16 %v388
      %v1582 = vunpack.c.l.b16 %v389
      %v1583 = vunpack.c.h.b16 %v389
      %v1584 = vunpack.c.l.b16 %v390
      %v1585 = vunpack.c.h.b16 %v390
      %v1586 = vunpack.c.l.b16 %v391
      %v1587 = vunpack.c.h.b16 %v391
      %v1588 = vunpack.c.l.b16 %v392
      %v1589 = vunpack.c.h.b16 %v392
      %v1590 = vunpack.c.l.b16 %v393
      %v1591 = vunpack.c.h.b16 %v393
      %v1592 = vunpack.c.l.b16 %v394
      %v1593 = vunpack.c.h.b16 %v394
      %v1594 = vunpack.c.l.b16 %v395
      %v1595 = vunpack.c.h.b16 %v395
      %v1596 = vunpack.c.l.b16 %v396
      %v1597 = vunpack.c.h.b16 %v396
      %v1598 = vunpack.c.l.b16 %v397
      %v1599 = vunpack.c.h.b16 %v397
      %v1600 = vunpack.c.l.b16 %v398
      %v1601 = vunpack.c.h.b16 %v398
      %v1602 = vunpack.c.l.b16 %v399
      %v1603 = vunpack.c.h.b16 %v399
      %v1604 = vunpack.c.l.b16 %v400
      %v1605 = vunpack.c.h.b16 %v400
      %v1606 = vunpack.c.l.b16 %v401
      %v1607 = vunpack.c.h.b16 %v401
      %v1608 = vunpack.c.l.b16 %v402
      %v1609 = vunpack.c.h.b16 %v402
      %v1610 = vunpack.c.l.b16 %v403
      %v1611 = vunpack.c.h.b16 %v403
      %v1612 = vunpack.c.l.b16 %v404
      %v1613 = vunpack.c.h.b16 %v404
      %v1614 = vunpack.c.l.b16 %v405
      %v1615 = vunpack.c.h.b16 %v405
      %v1616 = vunpack.c.l.b16 %v406
      %v1617 = vunpack.c.h.b16 %v406
      %v1618 = vunpack.c.l.b16 %v407
      %v1619 = vunpack.c.h.b16 %v407
      %v1620 = vunpack.c.l.b16 %v408
      %v1621 = vunpack.c.h.b16 %v408
      %v1622 = vunpack.c.l.b16 %v409
      %v1623 = vunpack.c.h.b16 %v409
      %v1624 = vunpack.c.l.b16 %v410
      %v1625 = vunpack.c.h.b16 %v410
      %v1626 = vunpack.c.l.b16 %v411
      %v1627 = vunpack.c.h.b16 %v411
      %v1628 = vunpack.c.l.b16 %v412
      %v1629 = vunpack.c.h.b16 %v412
      %v1630 = vunpack.c.l.b16 %v413
      %v1631 = vunpack.c.h.b16 %v413
      %v1632 = vunpack.c.l.b16 %v414
      %v1633 = vunpack.c.h.b16 %v414
      %v1634 = vunpack.c.l.b16 %v415
      %v1635 = vunpack.c.h.b16 %v415
      %v1636 = vunpack.c.l.b16 %v416
      %v1637 = vunpack.c.h.b16 %v416
      %v1638 = vunpack.c.l.b16 %v417
      %v1639 = vunpack.c.h.b16 %v417
      %v1640 = vunpack.c.l.b16 %v418
      %v1641 = vunpack.c.h.b16 %v418
      %v1642 = vunpack.c.l.b16 %v419
      %v1643 = vunpack.c.h.b16 %v419
      %v1644 = vunpack.c.l.b16 %v420
      %v1645 = vunpack.c.h.b16 %v420
      %v1646 = vunpack.c.l.b16 %v421
      %v1647 = vunpack.c.h.b16 %v421
      %v1648 = vunpack.c.l.b16 %v422
      %v1649 = vunpack.c.h.b16 %v422
      %v1650 = vunpack.c.l.b16 %v423
      %v1651 = vunpack.c.h.b16 %v423
      %v1652 = vunpack.c.l.b16 %v424
      %v1653 = vunpack.c.h.b16 %v424
      %v1654 = vunpack.c.l.b16 %v425
      %v1655 = vunpack.c.h.b16 %v425
      %v1656 = vunpack.c.l.b16 %v426
      %v1657 = vunpack.c.h.b16 %v426
      %v1658 = vunpack.c.l.b16 %v427
      %v1659 = vunpack.c.h.b16 %v427
      %v1660 = vunpack.c.l.b16 %v428
      %v1661 = vunpack.c.h.b16 %v428
      %v1662 = vunpack.c.l.b16 %v429
      %v1663 = vunpack.c.h.b16 %v429
      %v1664 = vunpack.c.l.b16 %v430
      %v1665 = vunpack.c.h.b16 %v430
      %v1666 = vunpack.c.l.b16 %v431
      %v1667 = vunpack.c.h.b16 %v431
      %v1668 = vunpack.c.l.b16 %v432
      %v1669 = vunpack.c.h.b16 %v432
      %v1670 = vunpack.c.l.b16 %v433
      %v1671 = vunpack.c.h.b16 %v433
      %v1672 = vunpack.c.l.b16 %v434
      %v1673 = vunpack.c.h.b16 %v434
      %v1674 = vunpack.c.l.b16 %v435
      %v1675 = vunpack.c.h.b16 %v435
      %v1676 = vunpack.c.l.b16 %v436
      %v1677 = vunpack.c.h.b16 %v436
      %v1678 = vunpack.c.l.b16 %v437
      %v1679 = vunpack.c.h.b16 %v437
      %v1680 = vunpack.c.l.b16 %v438
      %v1681 = vunpack.c.h.b16 %v438
      %v1682 = vunpack.c.l.b16 %v439
      %v1683 = vunpack.c.h.b16 %v439
      %v1684 = vunpack.c.l.b16 %v440
      %v1685 = vunpack.c.h.b16 %v440
      %v1686 = vunpack.c.l.b16 %v441
      %v1687 = vunpack.c.h.b16 %v441
      %v1688 = vunpack.c.l.b16 %v442
      %v1689 = vunpack.c.h.b16 %v442
      %v1690 = vunpack.c.l.b16 %v443
      %v1691 = vunpack.c.h.b16 %v443
      %v1692 = vunpack.c.l.b16 %v444
      %v1693 = vunpack.c.h.b16 %v444
      %v1694 = vunpack.c.l.b16 %v445
      %v1695 = vunpack.c.h.b16 %v445
      %v1696 = vunpack.c.l.b16 %v446
      %v1697 = vunpack.c.h.b16 %v446
      %v1698 = vunpack.c.l.b16 %v447
      %v1699 = vunpack.c.h.b16 %v447
      %v1700 = vunpack.c.l.b16 %v448
      %v1701 = vunpack.c.h.b16 %v448
      %v1702 = vunpack.c.l.b16 %v449
      %v1703 = vunpack.c.h.b16 %v449
      %v1704 = vunpack.c.l.b16 %v450
      %v1705 = vunpack.c.h.b16 %v450
      %v1706 = vunpack.c.l.b16 %v451
      %v1707 = vunpack.c.h.b16 %v451
      %v1708 = vunpack.c.l.b16 %v452
      %v1709 = vunpack.c.h.b16 %v452
      %v1710 = vunpack.c.l.b16 %v453
      %v1711 = vunpack.c.h.b16 %v453
      %v1712 = vunpack.c.l.b16 %v454
      %v1713 = vunpack.c.h.b16 %v454
      %v1714 = vunpack.c.l.b16 %v455
      %v1715 = vunpack.c.h.b16 %v455
      %v1716 = vunpack.c.l.b16 %v456
      %v1717 = vunpack.c.h.b16 %v456
      %v1718 = vunpack.c.l.b16 %v457
      %v1719 = vunpack.c.h.b16 %v457
      %v1720 = vunpack.c.l.b16 %v458
      %v1721 = vunpack.c.h.b16 %v458
      %v1722 = vunpack.c.l.b16 %v459
      %v1723 = vunpack.c.h.b16 %v459
      %v1724 = vunpack.c.l.b16 %v460
      %v1725 = vunpack.c.h.b16 %v460
      %v1726 = vunpack.c.l.b16 %v461
      %v1727 = vunpack.c.h.b16 %v461
      %v1728 = vunpack.c.l.b16 %v462
      %v1729 = vunpack.c.h.b16 %v462
      %v1730 = vunpack.c.l.b16 %v463
      %v1731 = vunpack.c.h.b16 %v463
      %v1732 = vunpack.c.l.b16 %v464
      %v1733 = vunpack.c.h.b16 %v464
      %v1734 = vunpack.c.l.b16 %v465
      %v1735 = vunpack.c.h.b16 %v465
      %v1736 = vunpack.c.l.b16 %v466
      %v1737 = vunpack.c.h.b16 %v466
      %v1738 = vunpack.c.l.b16 %v467
      %v1739 = vunpack.c.h.b16 %v467
      %v1740 = vunpack.c.l.b16 %v468
      %v1741 = vunpack.c.h.b16 %v468
      %v1742 = vunpack.c.l.b16 %v469
      %v1743 = vunpack.c.h.b16 %v469
      %v1744 = vunpack.c.l.b16 %v470
      %v1745 = vunpack.c.h.b16 %v470
      %v1746 = vunpack.c.l.b16 %v471
      %v1747 = vunpack.c.h.b16 %v471
      %v1748 = vunpack.c.l.b16 %v472
      %v1749 = vunpack.c.h.b16 %v472
      %v1750 = vunpack.c.l.b16 %v473
      %v1751 = vunpack.c.h.b16 %v473
      %v1752 = vunpack.c.l.b16 %v474
      %v1753 = vunpack.c.h.b16 %v474
      %v1754 = vunpack.c.l.b16 %v475
      %v1755 = vunpack.c.h.b16 %v475
      %v1756 = vunpack.c.l.b16 %v476
      %v1757 = vunpack.c.h.b16 %v476
      %v1758 = vunpack.c.l.b16 %v477
      %v1759 = vunpack.c.h.b16 %v477
      %v1760 = vunpack.c.l.b16 %v478
      %v1761 = vunpack.c.h.b16 %v478
      %v1762 = vunpack.c.l.b16 %v479
      %v1763 = vunpack.c.h.b16 %v479
      %v1764 = vunpack.c.l.b16 %v480
      %v1765 = vunpack.c.h.b16 %v480
      %v1766 = vunpack.c.l.b16 %v481
      %v1767 = vunpack.c.h.b16 %v481
      %v1768 = vunpack.c.l.b16 %v482
      %v1769 = vunpack.c.h.b16 %v482
      %v1770 = vunpack.c.l.b16 %v483
      %v1771 = vunpack.c.h.b16 %v483
      %v1772 = vunpack.c.l.b16 %v484
      %v1773 = vunpack.c.h.b16 %v484
      %v1774 = vunpack.c.l.b16 %v485
      %v1775 = vunpack.c.h.b16 %v485
      %v1776 = vunpack.c.l.b16 %v486
      %v1777 = vunpack.c.h.b16 %v486
      %v1778 = vunpack.c.l.b16 %v487
      %v1779 = vunpack.c.h.b16 %v487
      %v1780 = vunpack.c.l.b16 %v488
      %v1781 = vunpack.c.h.b16 %v488
      %v1782 = vunpack.c.l.b16 %v489
      %v1783 = vunpack.c.h.b16 %v489
      %v1784 = vunpack.c.l.b16 %v490
      %v1785 = vunpack.c.h.b16 %v490
      %v1786 = vunpack.c.l.b16 %v491
      %v1787 = vunpack.c.h.b16 %v491
      %v1788 = vunpack.c.l.b16 %v492
      %v1789 = vunpack.c.h.b16 %v492
      %v1790 = vunpack.c.l.b16 %v493
      %v1791 = vunpack.c.h.b16 %v493
      %v1792 = vunpack.c.l.b16 %v494
      %v1793 = vunpack.c.h.b16 %v494
      %v1794 = vunpack.c.l.b16 %v495
      %v1795 = vunpack.c.h.b16 %v495
      %v1796 = vunpack.c.l.b16 %v496
      %v1797 = vunpack.c.h.b16 %v496
      %v1798 = vunpack.c.l.b16 %v497
      %v1799 = vunpack.c.h.b16 %v497
      %v1800 = vunpack.c.l.b16 %v498
      %v1801 = vunpack.c.h.b16 %v498
      %v1802 = vunpack.c.l.b16 %v499
      %v1803 = vunpack.c.h.b16 %v499
      %v1804 = vunpack.c.l.b16 %v500
      %v1805 = vunpack.c.h.b16 %v500
      %v1806 = vunpack.c.l.b16 %v501
      %v1807 = vunpack.c.h.b16 %v501
      %v1808 = vunpack.c.l.b16 %v502
      %v1809 = vunpack.c.h.b16 %v502
      %v1810 = vunpack.c.l.b16 %v503
      %v1811 = vunpack.c.h.b16 %v503
      %v1812 = vunpack.c.l.b16 %v504
      %v1813 = vunpack.c.h.b16 %v504
      %v1814 = vunpack.c.l.b16 %v505
      %v1815 = vunpack.c.h.b16 %v505
      %v1816 = vunpack.c.l.b16 %v506
      %v1817 = vunpack.c.h.b16 %v506
      %v1818 = vunpack.c.l.b16 %v507
      %v1819 = vunpack.c.h.b16 %v507
      %v1820 = vunpack.c.l.b16 %v508
      %v1821 = vunpack.c.h.b16 %v508
      %v1822 = vunpack.c.l.b16 %v509
      %v1823 = vunpack.c.h.b16 %v509
      %v1824 = vunpack.c.l.b16 %v510
      %v1825 = vunpack.c.h.b16 %v510
      %v1826 = vunpack.c.l.b16 %v511
      %v1827 = vunpack.c.h.b16 %v511
      %v1828 = vunpack.c.l.b16 %v512
      %v1829 = vunpack.c.h.b16 %v512
      %v1830 = vunpack.c.l.b16 %v513
      %v1831 = vunpack.c.h.b16 %v513
      %v1832 = vunpack.c.l.b16 %v514
      %v1833 = vunpack.c.h.b16 %v514
      %v1834 = vunpack.c.l.b16 %v515
      %v1835 = vunpack.c.h.b16 %v515
      %v1836 = vunpack.c.l.b16 %v516
      %v1837 = vunpack.c.h.b16 %v516
      %v1838 = vunpack.c.l.b16 %v517
      %v1839 = vunpack.c.h.b16 %v517
      %v1840 = vunpack.c.l.b16 %v518
      %v1841 = vunpack.c.h.b16 %v518
      %v1842 = vunpack.c.l.b16 %v519
      %v1843 = vunpack.c.h.b16 %v519
      %v1844 = vunpack.c.l.b16 %v520
      %v1845 = vunpack.c.h.b16 %v520
      %v1846 = vunpack.c.l.b16 %v521
      %v1847 = vunpack.c.h.b16 %v521
      %v1848 = vunpack.c.l.b16 %v522
      %v1849 = vunpack.c.h.b16 %v522
      %v1850 = vunpack.c.l.b16 %v523
      %v1851 = vunpack.c.h.b16 %v523
      %v1852 = vunpack.c.l.b16 %v524
      %v1853 = vunpack.c.h.b16 %v524
      %v1854 = vunpack.c.l.b16 %v525
      %v1855 = vunpack.c.h.b16 %v525
      %v1856 = vunpack.c.l.b16 %v526
      %v1857 = vunpack.c.h.b16 %v526
      %v1858 = vunpack.c.l.b16 %v527
      %v1859 = vunpack.c.h.b16 %v527
      %v1860 = vunpack.c.l.b16 %v528
      %v1861 = vunpack.c.h.b16 %v528
      %v1862 = vunpack.c.l.b16 %v529
      %v1863 = vunpack.c.h.b16 %v529
      %v1864 = vunpack.c.l.b16 %v530
      %v1865 = vunpack.c.h.b16 %v530
      %v1866 = vunpack.c.l.b16 %v531
      %v1867 = vunpack.c.h.b16 %v531
      %v1868 = vunpack.c.l.b16 %v532
      %v1869 = vunpack.c.h.b16 %v532
      %v1870 = vunpack.c.l.b16 %v533
      %v1871 = vunpack.c.h.b16 %v533
      %v1872 = vunpack.c.l.b16 %v534
      %v1873 = vunpack.c.h.b16 %v534
      %v1874 = vunpack.c.l.b16 %v535
      %v1875 = vunpack.c.h.b16 %v535
      %v1876 = vunpack.c.l.b16 %v536
      %v1877 = vunpack.c.h.b16 %v536
      %v1878 = vunpack.c.l.b16 %v537
      %v1879 = vunpack.c.h.b16 %v537
      %v1880 = vunpack.c.l.b16 %v538
      %v1881 = vunpack.c.h.b16 %v538
      %v1882 = vunpack.c.l.b16 %v539
      %v1883 = vunpack.c.h.b16 %v539
      %v1884 = vunpack.c.l.b16 %v540
      %v1885 = vunpack.c.h.b16 %v540
      %v1886 = vunpack.c.l.b16 %v541
      %v1887 = vunpack.c.h.b16 %v541
      %v1888 = vunpack.c.l.b16 %v542
      %v1889 = vunpack.c.h.b16 %v542
      %v1890 = vunpack.c.l.b16 %v543
      %v1891 = vunpack.c.h.b16 %v543
      %v1892 = vunpack.c.l.b16 %v544
      %v1893 = vunpack.c.h.b16 %v544
      %v1894 = vunpack.c.l.b16 %v545
      %v1895 = vunpack.c.h.b16 %v545
      %v1896 = vunpack.c.l.b16 %v546
      %v1897 = vunpack.c.h.b16 %v546
      %v1898 = vunpack.c.l.b16 %v547
      %v1899 = vunpack.c.h.b16 %v547
      %v1900 = vunpack.c.l.b16 %v548
      %v1901 = vunpack.c.h.b16 %v548
      %v1902 = vunpack.c.l.b16 %v549
      %v1903 = vunpack.c.h.b16 %v549
      %v1904 = vunpack.c.l.b16 %v550
      %v1905 = vunpack.c.h.b16 %v550
      %v1906 = vunpack.c.l.b16 %v551
      %v1907 = vunpack.c.h.b16 %v551
      %v1908 = vunpack.c.l.b16 %v552
      %v1909 = vunpack.c.h.b16 %v552
      %v1910 = vunpack.c.l.b16 %v553
      %v1911 = vunpack.c.h.b16 %v553
      %v1912 = vunpack.c.l.b16 %v554
      %v1913 = vunpack.c.h.b16 %v554
      %v1914 = vunpack.c.l.b16 %v555
      %v1915 = vunpack.c.h.b16 %v555
      %v1916 = vunpack.c.l.b16 %v556
      %v1917 = vunpack.c.h.b16 %v556
      %v1918 = vunpack.c.l.b16 %v557
      %v1919 = vunpack.c.h.b16 %v557
      %v1920 = vunpack.c.l.b16 %v558
      %v1921 = vunpack.c.h.b16 %v558
      %v1922 = vunpack.c.l.b16 %v559
      %v1923 = vunpack.c.h.b16 %v559
      %v1924 = vunpack.c.l.b16 %v560
      %v1925 = vunpack.c.h.b16 %v560
      %v1926 = vunpack.c.l.b16 %v561
      %v1927 = vunpack.c.h.b16 %v561
      %v1928 = vunpack.c.l.b16 %v562
      %v1929 = vunpack.c.h.b16 %v562
      %v1930 = vunpack.c.l.b16 %v563
      %v1931 = vunpack.c.h.b16 %v563
      %v1932 = vunpack.c.l.b16 %v564
      %v1933 = vunpack.c.h.b16 %v564
      %v1934 = vunpack.c.l.b16 %v565
      %v1935 = vunpack.c.h.b16 %v565
      %v1936 = vunpack.c.l.b16 %v566
      %v1937 = vunpack.c.h.b16 %v566
      %v1938 = vunpack.c.l.b16 %v567
      %v1939 = vunpack.c.h.b16 %v567
      %v1940 = vunpack.c.l.b16 %v568
      %v1941 = vunpack.c.h.b16 %v568
      %v1942 = vunpack.c.l.b16 %v569
      %v1943 = vunpack.c.h.b16 %v569
      %v1944 = vunpack.c.l.b16 %v570
      %v1945 = vunpack.c.h.b16 %v570
      %v1946 = vunpack.c.l.b16 %v571
      %v1947 = vunpack.c.h.b16 %v571
      %v1948 = vunpack.c.l.b16 %v572
      %v1949 = vunpack.c.h.b16 %v572
      %v1950 = vunpack.c.l.b16 %v573
      %v1951 = vunpack.c.h.b16 %v573
      %v1952 = vunpack.c.l.b16 %v574
      %v1953 = vunpack.c.h.b16 %v574
      %v1954 = vunpack.c.l.b16 %v575
      %v1955 = vunpack.c.h.b16 %v575
      %v1956 = vunpack.c.l.b16 %v576
      %v1957 = vunpack.c.h.b16 %v576
      %v1958 = vunpack.c.l.b16 %v577
      %v1959 = vunpack.c.h.b16 %v577
      %v1960 = vunpack.c.l.b16 %v578
      %v1961 = vunpack.c.h.b16 %v578
      %v1962 = vunpack.c.l.b16 %v579
      %v1963 = vunpack.c.h.b16 %v579
      %v1964 = vunpack.c.l.b16 %v580
      %v1965 = vunpack.c.h.b16 %v580
      %v1966 = vunpack.c.l.b16 %v581
      %v1967 = vunpack.c.h.b16 %v581
      %v1968 = vunpack.c.l.b16 %v582
      %v1969 = vunpack.c.h.b16 %v582
      %v1970 = vunpack.c.l.b16 %v583
      %v1971 = vunpack.c.h.b16 %v583
      %v1972 = vunpack.c.l.b16 %v584
      %v1973 = vunpack.c.h.b16 %v584
      %v1974 = vunpack.c.l.b16 %v585
      %v1975 = vunpack.c.h.b16 %v585
      %v1976 = vunpack.c.l.b16 %v586
      %v1977 = vunpack.c.h.b16 %v586
      %v1978 = vunpack.c.l.b16 %v587
      %v1979 = vunpack.c.h.b16 %v587
      %v1980 = vunpack.c.l.b16 %v588
      %v1981 = vunpack.c.h.b16 %v588
      %v1982 = vunpack.c.l.b16 %v589
      %v1983 = vunpack.c.h.b16 %v589
      %v1984 = vunpack.c.l.b16 %v590
      %v1985 = vunpack.c.h.b16 %v590
      %v1986 = vunpack.c.l.b16 %v591
      %v1987 = vunpack.c.h.b16 %v591
      %v1988 = vunpack.c.l.b16 %v592
      %v1989 = vunpack.c.h.b16 %v592
      %v1990 = vunpack.c.l.b16 %v593
      %v1991 = vunpack.c.h.b16 %v593
      %v1992 = vunpack.c.l.b16 %v594
      %v1993 = vunpack.c.h.b16 %v594
      %v1994 = vunpack.c.l.b16 %v595
      %v1995 = vunpack.c.h.b16 %v595
      %v1996 = vunpack.c.l.b16 %v596
      %v1997 = vunpack.c.h.b16 %v596
      %v1998 = vunpack.c.l.b16 %v597
      %v1999 = vunpack.c.h.b16 %v597
      %v2000 = vunpack.c.l.b16 %v598
      %v2001 = vunpack.c.h.b16 %v598
      %v2002 = vunpack.c.l.b16 %v599
      %v2003 = vunpack.c.h.b16 %v599
      %v2004 = vunpack.c.l.b16 %v600
      %v2005 = vunpack.c.h.b16 %v600
      %v2006 = vunpack.c.l.b16 %v601
      %v2007 = vunpack.c.h.b16 %v601
      %v2008 = vunpack.c.l.b16 %v602
      %v2009 = vunpack.c.h.b16 %v602
      %v2010 = vunpack.c.l.b16 %v603
      %v2011 = vunpack.c.h.b16 %v603
      %v2012 = vunpack.c.l.b16 %v604
      %v2013 = vunpack.c.h.b16 %v604
      %v2014 = vunpack.c.l.b16 %v605
      %v2015 = vunpack.c.h.b16 %v605
      %v2016 = vunpack.c.l.b16 %v606
      %v2017 = vunpack.c.h.b16 %v606
      %v2018 = vunpack.c.l.b16 %v607
      %v2019 = vunpack.c.h.b16 %v607
      %v2020 = vunpack.c.l.b16 %v608
      %v2021 = vunpack.c.h.b16 %v608
      %v2022 = vunpack.c.l.b16 %v609
      %v2023 = vunpack.c.h.b16 %v609
      %v2024 = vunpack.c.l.b16 %v610
      %v2025 = vunpack.c.h.b16 %v610
      %v2026 = vunpack.c.l.b16 %v611
      %v2027 = vunpack.c.h.b16 %v611
      %v2028 = vunpack.c.l.b16 %v612
      %v2029 = vunpack.c.h.b16 %v612
      %v2030 = vunpack.c.l.b16 %v613
      %v2031 = vunpack.c.h.b16 %v613
      %v2032 = vunpack.c.l.b16 %v614
      %v2033 = vunpack.c.h.b16 %v614
      %v2034 = vunpack.c.l.b16 %v615
      %v2035 = vunpack.c.h.b16 %v615
      %v2036 = vunpack.c.l.b16 %v616
      %v2037 = vunpack.c.h.b16 %v616
      %v2038 = vunpack.c.l.b16 %v617
      %v2039 = vunpack.c.h.b16 %v617
      %v2040 = vunpack.c.l.b16 %v618
      %v2041 = vunpack.c.h.b16 %v618
      %v2042 = vunpack.c.l.b16 %v619
      %v2043 = vunpack.c.h.b16 %v619
      %v2044 = vunpack.c.l.b16 %v620
      %v2045 = vunpack.c.h.b16 %v620
      %v2046 = vunpack.c.l.b16 %v621
      %v2047 = vunpack.c.h.b16 %v621
      %v2048 = vunpack.c.l.b16 %v622
      %v2049 = vunpack.c.h.b16 %v622
      %v2050 = vunpack.c.l.b16 %v623
      %v2051 = vunpack.c.h.b16 %v623
      %v2052 = vunpack.c.l.b16 %v624
      %v2053 = vunpack.c.h.b16 %v624
      %v2054 = vunpack.c.l.b16 %v625
      %v2055 = vunpack.c.h.b16 %v625
      %v2056 = vunpack.c.l.b16 %v626
      %v2057 = vunpack.c.h.b16 %v626
      %v2058 = vunpack.c.l.b16 %v627
      %v2059 = vunpack.c.h.b16 %v627
      %v2060 = vunpack.c.l.b16 %v628
      %v2061 = vunpack.c.h.b16 %v628
      %v2062 = vunpack.c.l.b16 %v629
      %v2063 = vunpack.c.h.b16 %v629
      %v2064 = vunpack.c.l.b16 %v630
      %v2065 = vunpack.c.h.b16 %v630
      %v2066 = vunpack.c.l.b16 %v631
      %v2067 = vunpack.c.h.b16 %v631
      %v2068 = vunpack.c.l.b16 %v632
      %v2069 = vunpack.c.h.b16 %v632
      %v2070 = vunpack.c.l.b16 %v633
      %v2071 = vunpack.c.h.b16 %v633
      %v2072 = vunpack.c.l.b16 %v634
      %v2073 = vunpack.c.h.b16 %v634
      %v2074 = vunpack.c.l.b16 %v635
      %v2075 = vunpack.c.h.b16 %v635
      %v2076 = vunpack.c.l.b16 %v636
      %v2077 = vunpack.c.h.b16 %v636
      %v2078 = vunpack.c.l.b16 %v637
      %v2079 = vunpack.c.h.b16 %v637
      %v2080 = vunpack.c.l.b16 %v638
      %v2081 = vunpack.c.h.b16 %v638
      %v2082 = vunpack.c.l.b16 %v639
      %v2083 = vunpack.c.h.b16 %v639
      %v2084 = vunpack.c.l.b16 %v640
      %v2085 = vunpack.c.h.b16 %v640
      %v2086 = vunpack.c.l.b16 %v641
      %v2087 = vunpack.c.h.b16 %v641
      %v2088 = vunpack.c.l.b16 %v642
      %v2089 = vunpack.c.h.b16 %v642
      %v2090 = vunpack.c.l.b16 %v643
      %v2091 = vunpack.c.h.b16 %v643
      %v2092 = vunpack.c.l.b16 %v644
      %v2093 = vunpack.c.h.b16 %v644
      %v2094 = vunpack.c.l.b16 %v645
      %v2095 = vunpack.c.h.b16 %v645
      %v2096 = vunpack.c.l.b16 %v646
      %v2097 = vunpack.c.h.b16 %v646
      %v2098 = vunpack.c.l.b16 %v647
      %v2099 = vunpack.c.h.b16 %v647
      %v2100 = vunpack.c.l.b16 %v648
      %v2101 = vunpack.c.h.b16 %v648
      %v2102 = vunpack.c.l.b16 %v649
      %v2103 = vunpack.c.h.b16 %v649
      %v2104 = vunpack.c.l.b16 %v650
      %v2105 = vunpack.c.h.b16 %v650
      %v2106 = vunpack.c.l.b16 %v651
      %v2107 = vunpack.c.h.b16 %v651
      %v2108 = vunpack.c.l.b16 %v652
      %v2109 = vunpack.c.h.b16 %v652
      %v2110 = vunpack.c.l.b16 %v653
      %v2111 = vunpack.c.h.b16 %v653
      %v2112 = vunpack.c.l.b16 %v654
      %v2113 = vunpack.c.h.b16 %v654
      %v2114 = vunpack.c.l.b16 %v655
      %v2115 = vunpack.c.h.b16 %v655
      %v2116 = vunpack.c.l.b16 %v656
      %v2117 = vunpack.c.h.b16 %v656
      %v2118 = vunpack.c.l.b16 %v657
      %v2119 = vunpack.c.h.b16 %v657
      %v2120 = vunpack.c.l.b16 %v658
      %v2121 = vunpack.c.h.b16 %v658
      %v2122 = vunpack.c.l.b16 %v659
      %v2123 = vunpack.c.h.b16 %v659
      %v2124 = vunpack.c.l.b16 %v660
      %v2125 = vunpack.c.h.b16 %v660
      %v2126 = vunpack.c.l.b16 %v661
      %v2127 = vunpack.c.h.b16 %v661
      %v2128 = vunpack.c.l.b16 %v662
      %v2129 = vunpack.c.h.b16 %v662
      %v2130 = vunpack.c.l.b16 %v663
      %v2131 = vunpack.c.h.b16 %v663
      %v2132 = vunpack.c.l.b16 %v664
      %v2133 = vunpack.c.h.b16 %v664
      %v2134 = vunpack.c.l.b16 %v665
      %v2135 = vunpack.c.h.b16 %v665
      %v2136 = vunpack.c.l.b16 %v666
      %v2137 = vunpack.c.h.b16 %v666
      %v2138 = vunpack.c.l.b16 %v667
      %v2139 = vunpack.c.h.b16 %v667
      %v2140 = vunpack.c.l.b16 %v668
      %v2141 = vunpack.c.h.b16 %v668
      %v2142 = vunpack.c.l.b16 %v669
      %v2143 = vunpack.c.h.b16 %v669
      %v2144 = vunpack.c.l.b16 %v670
      %v2145 = vunpack.c.h.b16 %v670
      %v2146 = vunpack.c.l.b16 %v671
      %v2147 = vunpack.c.h.b16 %v671
      %v2148 = vunpack.c.l.b16 %v672
      %v2149 = vunpack.c.h.b16 %v672
      %v2150 = vunpack.c.l.b16 %v673
      %v2151 = vunpack.c.h.b16 %v673
      %v2152 = vunpack.c.l.b16 %v674
      %v2153 = vunpack.c.h.b16 %v674
      %v2154 = vunpack.c.l.b16 %v675
      %v2155 = vunpack.c.h.b16 %v675
      %v2156 = vunpack.c.l.b16 %v676
      %v2157 = vunpack.c.h.b16 %v676
      %v2158 = vunpack.c.l.b16 %v677
      %v2159 = vunpack.c.h.b16 %v677
      %v2160 = vunpack.c.l.b16 %v678
      %v2161 = vunpack.c.h.b16 %v678
      %v2162 = vunpack.c.l.b16 %v679
      %v2163 = vunpack.c.h.b16 %v679
      %v2164 = vunpack.c.l.b16 %v680
      %v2165 = vunpack.c.h.b16 %v680
      %v2166 = vunpack.c.l.b16 %v681
      %v2167 = vunpack.c.h.b16 %v681
      %v2168 = vunpack.c.l.b16 %v682
      %v2169 = vunpack.c.h.b16 %v682
      %v2170 = vunpack.c.l.b16 %v683
      %v2171 = vunpack.c.h.b16 %v683
      %v2172 = vunpack.c.l.b16 %v684
      %v2173 = vunpack.c.h.b16 %v684
      %v2174 = vunpack.c.l.b16 %v685
      %v2175 = vunpack.c.h.b16 %v685
      %v2176 = vunpack.c.l.b16 %v686
      %v2177 = vunpack.c.h.b16 %v686
      %v2178 = vunpack.c.l.b16 %v687
      %v2179 = vunpack.c.h.b16 %v687
      %v2180 = vunpack.c.l.b16 %v688
      %v2181 = vunpack.c.h.b16 %v688
      %v2182 = vunpack.c.l.b16 %v689
      %v2183 = vunpack.c.h.b16 %v689
      %v2184 = vunpack.c.l.b16 %v690
      %v2185 = vunpack.c.h.b16 %v690
      %v2186 = vunpack.c.l.b16 %v691
      %v2187 = vunpack.c.h.b16 %v691
      %v2188 = vunpack.c.l.b16 %v692
      %v2189 = vunpack.c.h.b16 %v692
      %v2190 = vunpack.c.l.b16 %v693
      %v2191 = vunpack.c.h.b16 %v693
      %v2192 = vunpack.c.l.b16 %v694
      %v2193 = vunpack.c.h.b16 %v694
      %v2194 = vunpack.c.l.b16 %v695
      %v2195 = vunpack.c.h.b16 %v695
      %v2196 = vunpack.c.l.b16 %v696
      %v2197 = vunpack.c.h.b16 %v696
      %v2198 = vunpack.c.l.b16 %v697
      %v2199 = vunpack.c.h.b16 %v697
      %v2200 = vunpack.c.l.b16 %v698
      %v2201 = vunpack.c.h.b16 %v698
      %v2202 = vunpack.c.l.b16 %v699
      %v2203 = vunpack.c.h.b16 %v699
      %v2204 = vunpack.c.l.b16 %v700
      %v2205 = vunpack.c.h.b16 %v700
      %v2206 = vunpack.c.l.b16 %v701
      %v2207 = vunpack.c.h.b16 %v701
      %v2208 = vunpack.c.l.b16 %v702
      %v2209 = vunpack.c.h.b16 %v702
      %v2210 = vunpack.c.l.b16 %v703
      %v2211 = vunpack.c.h.b16 %v703
      %v2212 = vunpack.c.l.b16 %v704
      %v2213 = vunpack.c.h.b16 %v704
      %v2214 = vunpack.c.l.b16 %v705
      %v2215 = vunpack.c.h.b16 %v705
      %v2216 = vunpack.c.l.b16 %v706
      %v2217 = vunpack.c.h.b16 %v706
      %v2218 = vunpack.c.l.b16 %v707
      %v2219 = vunpack.c.h.b16 %v707
      %v2220 = vunpack.c.l.b16 %v708
      %v2221 = vunpack.c.h.b16 %v708
      %v2222 = vunpack.c.l.b16 %v709
      %v2223 = vunpack.c.h.b16 %v709
      %v2224 = vunpack.c.l.b16 %v710
      %v2225 = vunpack.c.h.b16 %v710
      %v2226 = vunpack.c.l.b16 %v711
      %v2227 = vunpack.c.h.b16 %v711
      %v2228 = vunpack.c.l.b16 %v712
      %v2229 = vunpack.c.h.b16 %v712
      %v2230 = vunpack.c.l.b16 %v713
      %v2231 = vunpack.c.h.b16 %v713
      %v2232 = vunpack.c.l.b16 %v714
      %v2233 = vunpack.c.h.b16 %v714
      %v2234 = vunpack.c.l.b16 %v715
      %v2235 = vunpack.c.h.b16 %v715
      %v2236 = vunpack.c.l.b16 %v716
      %v2237 = vunpack.c.h.b16 %v716
      %v2238 = vunpack.c.l.b16 %v717
      %v2239 = vunpack.c.h.b16 %v717
      %v2240 = vunpack.c.l.b16 %v718
      %v2241 = vunpack.c.h.b16 %v718
      %v2242 = vunpack.c.l.b16 %v719
      %v2243 = vunpack.c.h.b16 %v719
      %v2244 = vunpack.c.l.b16 %v720
      %v2245 = vunpack.c.h.b16 %v720
      %v2246 = vunpack.c.l.b16 %v721
      %v2247 = vunpack.c.h.b16 %v721
      %v2248 = vunpack.c.l.b16 %v722
      %v2249 = vunpack.c.h.b16 %v722
      %v2250 = vunpack.c.l.b16 %v723
      %v2251 = vunpack.c.h.b16 %v723
      %v2252 = vunpack.c.l.b16 %v724
      %v2253 = vunpack.c.h.b16 %v724
      %v2254 = vunpack.c.l.b16 %v725
      %v2255 = vunpack.c.h.b16 %v725
      %v2256 = vunpack.c.l.b16 %v726
      %v2257 = vunpack.c.h.b16 %v726
      %v2258 = vunpack.c.l.b16 %v727
      %v2259 = vunpack.c.h.b16 %v727
      %v2260 = vunpack.c.l.b16 %v728
      %v2261 = vunpack.c.h.b16 %v728
      %v2262 = vunpack.c.l.b16 %v729
      %v2263 = vunpack.c.h.b16 %v729
      %v2264 = vunpack.c.l.b16 %v730
      %v2265 = vunpack.c.h.b16 %v730
      %v2266 = vunpack.c.l.b16 %v731
      %v2267 = vunpack.c.h.b16 %v731
      %v2268 = vunpack.c.l.b16 %v732
      %v2269 = vunpack.c.h.b16 %v732
      %v2270 = vunpack.c.l.b16 %v733
      %v2271 = vunpack.c.h.b16 %v733
      %v2272 = vunpack.c.l.b16 %v734
      %v2273 = vunpack.c.h.b16 %v734
      %v2274 = vunpack.c.l.b16 %v735
      %v2275 = vunpack.c.h.b16 %v735
      %v2276 = vunpack.c.l.b16 %v736
      %v2277 = vunpack.c.h.b16 %v736
      %v2278 = vunpack.c.l.b16 %v737
      %v2279 = vunpack.c.h.b16 %v737
      %v2280 = vunpack.c.l.b16 %v738
      %v2281 = vunpack.c.h.b16 %v738
      %v2282 = vunpack.c.l.b16 %v739
      %v2283 = vunpack.c.h.b16 %v739
      %v2284 = vunpack.c.l.b16 %v740
      %v2285 = vunpack.c.h.b16 %v740
      %v2286 = vunpack.c.l.b16 %v741
      %v2287 = vunpack.c.h.b16 %v741
      %v2288 = vunpack.c.l.b16 %v742
      %v2289 = vunpack.c.h.b16 %v742
      %v2290 = vunpack.c.l.b16 %v743
      %v2291 = vunpack.c.h.b16 %v743
      %v2292 = vunpack.c.l.b16 %v744
      %v2293 = vunpack.c.h.b16 %v744
      %v2294 = vunpack.c.l.b16 %v745
      %v2295 = vunpack.c.h.b16 %v745
      %v2296 = vunpack.c.l.b16 %v746
      %v2297 = vunpack.c.h.b16 %v746
      %v2298 = vunpack.c.l.b16 %v747
      %v2299 = vunpack.c.h.b16 %v747
      %v2300 = vunpack.c.l.b16 %v748
      %v2301 = vunpack.c.h.b16 %v748
      %v2302 = vunpack.c.l.b16 %v749
      %v2303 = vunpack.c.h.b16 %v749
      %v2304 = vunpack.c.l.b16 %v750
      %v2305 = vunpack.c.h.b16 %v750
      %v2306 = vunpack.c.l.b16 %v751
      %v2307 = vunpack.c.h.b16 %v751
      %v2308 = vunpack.c.l.b16 %v752
      %v2309 = vunpack.c.h.b16 %v752
      %v2310 = vunpack.c.l.b16 %v753
      %v2311 = vunpack.c.h.b16 %v753
      %v2312 = vunpack.c.l.b16 %v754
      %v2313 = vunpack.c.h.b16 %v754
      %v2314 = vunpack.c.l.b16 %v755
      %v2315 = vunpack.c.h.b16 %v755
      %v2316 = vunpack.c.l.b16 %v756
      %v2317 = vunpack.c.h.b16 %v756
      %v2318 = vunpack.c.l.b16 %v757
      %v2319 = vunpack.c.h.b16 %v757
      %v2320 = vunpack.c.l.b16 %v758
      %v2321 = vunpack.c.h.b16 %v758
      %v2322 = vunpack.c.l.b16 %v759
      %v2323 = vunpack.c.h.b16 %v759
      %v2324 = vpack.c.b16 %v1308, %v1300
      %v2325 = vpack.c.b16 %v1309, %v1301
      %v2326 = vpack.c.b16 %v1310, %v1302
      %v2327 = vpack.c.b16 %v1311, %v1303
      %v2328 = vpack.c.b16 %v1312, %v1304
      %v2329 = vpack.c.b16 %v1313, %v1305
      %v2330 = vpack.c.b16 %v1314, %v1306
      %v2331 = vpack.c.b16 %v1315, %v1307
      %v2332 = vpack.c.b16 %v1324, %v1316
      %v2333 = vpack.c.b16 %v1325, %v1317
      %v2334 = vpack.c.b16 %v1326, %v1318
      %v2335 = vpack.c.b16 %v1327, %v1319
      %v2336 = vpack.c.b16 %v1328, %v1320
      %v2337 = vpack.c.b16 %v1329, %v1321
      %v2338 = vpack.c.b16 %v1330, %v1322
      %v2339 = vpack.c.b16 %v1331, %v1323
      %v2340 = vpack.c.b16 %v1340, %v1332
      %v2341 = vpack.c.b16 %v1341, %v1333
      %v2342 = vpack.c.b16 %v1342, %v1334
      %v2343 = vpack.c.b16 %v1343, %v1335
      %v2344 = vpack.c.b16 %v1344, %v1336
      %v2345 = vpack.c.b16 %v1345, %v1337
      %v2346 = vpack.c.b16 %v1346, %v1338
      %v2347 = vpack.c.b16 %v1347, %v1339
      %v2348 = vpack.c.b16 %v1356, %v1348
      %v2349 = vpack.c.b16 %v1357, %v1349
      %v2350 = vpack.c.b16 %v1358, %v1350
      %v2351 = vpack.c.b16 %v1359, %v1351
      %v2352 = vpack.c.b16 %v1360, %v1352
      %v2353 = vpack.c.b16 %v1361, %v1353
      %v2354 = vpack.c.b16 %v1362, %v1354
      %v2355 = vpack.c.b16 %v1363, %v1355
      %v2356 = vpack.c.b16 %v1372, %v1364
      %v2357 = vpack.c.b16 %v1373, %v1365
      %v2358 = vpack.c.b16 %v1374, %v1366
      %v2359 = vpack.c.b16 %v1375, %v1367
      %v2360 = vpack.c.b16 %v1376, %v1368
      %v2361 = vpack.c.b16 %v1377, %v1369
      %v2362 = vpack.c.b16 %v1378, %v1370
      %v2363 = vpack.c.b16 %v1379, %v1371
      %v2364 = vpack.c.b16 %v1388, %v1380
      %v2365 = vpack.c.b16 %v1389, %v1381
      %v2366 = vpack.c.b16 %v1390, %v1382
      %v2367 = vpack.c.b16 %v1391, %v1383
      %v2368 = vpack.c.b16 %v1392, %v1384
      %v2369 = vpack.c.b16 %v1393, %v1385
      %v2370 = vpack.c.b16 %v1394, %v1386
      %v2371 = vpack.c.b16 %v1395, %v1387
      %v2372 = vpack.c.b16 %v1404, %v1396
      %v2373 = vpack.c.b16 %v1405, %v1397
      %v2374 = vpack.c.b16 %v1406, %v1398
      %v2375 = vpack.c.b16 %v1407, %v1399
      %v2376 = vpack.c.b16 %v1408, %v1400
      %v2377 = vpack.c.b16 %v1409, %v1401
      %v2378 = vpack.c.b16 %v1410, %v1402
      %v2379 = vpack.c.b16 %v1411, %v1403
      %v2380 = vpack.c.b16 %v1420, %v1412
      %v2381 = vpack.c.b16 %v1421, %v1413
      %v2382 = vpack.c.b16 %v1422, %v1414
      %v2383 = vpack.c.b16 %v1423, %v1415
      %v2384 = vpack.c.b16 %v1424, %v1416
      %v2385 = vpack.c.b16 %v1425, %v1417
      %v2386 = vpack.c.b16 %v1426, %v1418
      %v2387 = vpack.c.b16 %v1427, %v1419
      %v2388 = vpack.c.b16 %v1436, %v1428
      %v2389 = vpack.c.b16 %v1437, %v1429
      %v2390 = vpack.c.b16 %v1438, %v1430
      %v2391 = vpack.c.b16 %v1439, %v1431
      %v2392 = vpack.c.b16 %v1440, %v1432
      %v2393 = vpack.c.b16 %v1441, %v1433
      %v2394 = vpack.c.b16 %v1442, %v1434
      %v2395 = vpack.c.b16 %v1443, %v1435
      %v2396 = vpack.c.b16 %v1452, %v1444
      %v2397 = vpack.c.b16 %v1453, %v1445
      %v2398 = vpack.c.b16 %v1454, %v1446
      %v2399 = vpack.c.b16 %v1455, %v1447
      %v2400 = vpack.c.b16 %v1456, %v1448
      %v2401 = vpack.c.b16 %v1457, %v1449
      %v2402 = vpack.c.b16 %v1458, %v1450
      %v2403 = vpack.c.b16 %v1459, %v1451
      %v2404 = vpack.c.b16 %v1468, %v1460
      %v2405 = vpack.c.b16 %v1469, %v1461
      %v2406 = vpack.c.b16 %v1470, %v1462
      %v2407 = vpack.c.b16 %v1471, %v1463
      %v2408 = vpack.c.b16 %v1472, %v1464
      %v2409 = vpack.c.b16 %v1473, %v1465
      %v2410 = vpack.c.b16 %v1474, %v1466
      %v2411 = vpack.c.b16 %v1475, %v1467
      %v2412 = vpack.c.b16 %v1484, %v1476
      %v2413 = vpack.c.b16 %v1485, %v1477
      %v2414 = vpack.c.b16 %v1486, %v1478
      %v2415 = vpack.c.b16 %v1487, %v1479
      %v2416 = vpack.c.b16 %v1488, %v1480
      %v2417 = vpack.c.b16 %v1489, %v1481
      %v2418 = vpack.c.b16 %v1490, %v1482
      %v2419 = vpack.c.b16 %v1491, %v1483
      %v2420 = vpack.c.b16 %v1500, %v1492
      %v2421 = vpack.c.b16 %v1501, %v1493
      %v2422 = vpack.c.b16 %v1502, %v1494
      %v2423 = vpack.c.b16 %v1503, %v1495
      %v2424 = vpack.c.b16 %v1504, %v1496
      %v2425 = vpack.c.b16 %v1505, %v1497
      %v2426 = vpack.c.b16 %v1506, %v1498
      %v2427 = vpack.c.b16 %v1507, %v1499
      %v2428 = vpack.c.b16 %v1516, %v1508
      %v2429 = vpack.c.b16 %v1517, %v1509
      %v2430 = vpack.c.b16 %v1518, %v1510
      %v2431 = vpack.c.b16 %v1519, %v1511
      %v2432 = vpack.c.b16 %v1520, %v1512
      %v2433 = vpack.c.b16 %v1521, %v1513
      %v2434 = vpack.c.b16 %v1522, %v1514
      %v2435 = vpack.c.b16 %v1523, %v1515
      %v2436 = vpack.c.b16 %v1532, %v1524
      %v2437 = vpack.c.b16 %v1533, %v1525
      %v2438 = vpack.c.b16 %v1534, %v1526
      %v2439 = vpack.c.b16 %v1535, %v1527
      %v2440 = vpack.c.b16 %v1536, %v1528
      %v2441 = vpack.c.b16 %v1537, %v1529
      %v2442 = vpack.c.b16 %v1538, %v1530
      %v2443 = vpack.c.b16 %v1539, %v1531
      %v2444 = vpack.c.b16 %v1548, %v1540
      %v2445 = vpack.c.b16 %v1549, %v1541
      %v2446 = vpack.c.b16 %v1550, %v1542
      %v2447 = vpack.c.b16 %v1551, %v1543
      %v2448 = vpack.c.b16 %v1552, %v1544
      %v2449 = vpack.c.b16 %v1553, %v1545
      %v2450 = vpack.c.b16 %v1554, %v1546
      %v2451 = vpack.c.b16 %v1555, %v1547
      %v2452 = vpack.c.b16 %v1564, %v1556
      %v2453 = vpack.c.b16 %v1565, %v1557
      %v2454 = vpack.c.b16 %v1566, %v1558
      %v2455 = vpack.c.b16 %v1567, %v1559
      %v2456 = vpack.c.b16 %v1568, %v1560
      %v2457 = vpack.c.b16 %v1569, %v1561
      %v2458 = vpack.c.b16 %v1570, %v1562
      %v2459 = vpack.c.b16 %v1571, %v1563
      %v2460 = vpack.c.b16 %v1580, %v1572
      %v2461 = vpack.c.b16 %v1581, %v1573
      %v2462 = vpack.c.b16 %v1582, %v1574
      %v2463 = vpack.c.b16 %v1583, %v1575
      %v2464 = vpack.c.b16 %v1584, %v1576
      %v2465 = vpack.c.b16 %v1585, %v1577
      %v2466 = vpack.c.b16 %v1586, %v1578
      %v2467 = vpack.c.b16 %v1587, %v1579
      %v2468 = vpack.c.b16 %v1596, %v1588
      %v2469 = vpack.c.b16 %v1597, %v1589
      %v2470 = vpack.c.b16 %v1598, %v1590
      %v2471 = vpack.c.b16 %v1599, %v1591
      %v2472 = vpack.c.b16 %v1600, %v1592
      %v2473 = vpack.c.b16 %v1601, %v1593
      %v2474 = vpack.c.b16 %v1602, %v1594
      %v2475 = vpack.c.b16 %v1603, %v1595
      %v2476 = vpack.c.b16 %v1612, %v1604
      %v2477 = vpack.c.b16 %v1613, %v1605
      %v2478 = vpack.c.b16 %v1614, %v1606
      %v2479 = vpack.c.b16 %v1615, %v1607
      %v2480 = vpack.c.b16 %v1616, %v1608
      %v2481 = vpack.c.b16 %v1617, %v1609
      %v2482 = vpack.c.b16 %v1618, %v1610
      %v2483 = vpack.c.b16 %v1619, %v1611
      %v2484 = vpack.c.b16 %v1628, %v1620
      %v2485 = vpack.c.b16 %v1629, %v1621
      %v2486 = vpack.c.b16 %v1630, %v1622
      %v2487 = vpack.c.b16 %v1631, %v1623
      %v2488 = vpack.c.b16 %v1632, %v1624
      %v2489 = vpack.c.b16 %v1633, %v1625
      %v2490 = vpack.c.b16 %v1634, %v1626
      %v2491 = vpack.c.b16 %v1635, %v1627
      %v2492 = vpack.c.b16 %v1644, %v1636
      %v2493 = vpack.c.b16 %v1645, %v1637
      %v2494 = vpack.c.b16 %v1646, %v1638
      %v2495 = vpack.c.b16 %v1647, %v1639
      %v2496 = vpack.c.b16 %v1648, %v1640
      %v2497 = vpack.c.b16 %v1649, %v1641
      %v2498 = vpack.c.b16 %v1650, %v1642
      %v2499 = vpack.c.b16 %v1651, %v1643
      %v2500 = vpack.c.b16 %v1660, %v1652
      %v2501 = vpack.c.b16 %v1661, %v1653
      %v2502 = vpack.c.b16 %v1662, %v1654
      %v2503 = vpack.c.b16 %v1663, %v1655
      %v2504 = vpack.c.b16 %v1664, %v1656
      %v2505 = vpack.c.b16 %v1665, %v1657
      %v2506 = vpack.c.b16 %v1666, %v1658
      %v2507 = vpack.c.b16 %v1667, %v1659
      %v2508 = vpack.c.b16 %v1676, %v1668
      %v2509 = vpack.c.b16 %v1677, %v1669
      %v2510 = vpack.c.b16 %v1678, %v1670
      %v2511 = vpack.c.b16 %v1679, %v1671
      %v2512 = vpack.c.b16 %v1680, %v1672
      %v2513 = vpack.c.b16 %v1681, %v1673
      %v2514 = vpack.c.b16 %v1682, %v1674
      %v2515 = vpack.c.b16 %v1683, %v1675
      %v2516 = vpack.c.b16 %v1692, %v1684
      %v2517 = vpack.c.b16 %v1693, %v1685
      %v2518 = vpack.c.b16 %v1694, %v1686
      %v2519 = vpack.c.b16 %v1695, %v1687
      %v2520 = vpack.c.b16 %v1696, %v1688
      %v2521 = vpack.c.b16 %v1697, %v1689
      %v2522 = vpack.c.b16 %v1698, %v1690
      %v2523 = vpack.c.b16 %v1699, %v1691
      %v2524 = vpack.c.b16 %v1708, %v1700
      %v2525 = vpack.c.b16 %v1709, %v1701
      %v2526 = vpack.c.b16 %v1710, %v1702
      %v2527 = vpack.c.b16 %v1711, %v1703
      %v2528 = vpack.c.b16 %v1712, %v1704
      %v2529 = vpack.c.b16 %v1713, %v1705
      %v2530 = vpack.c.b16 %v1714, %v1706
      %v2531 = vpack.c.b16 %v1715, %v1707
      %v2532 = vpack.c.b16 %v1724, %v1716
      %v2533 = vpack.c.b16 %v1725, %v1717
      %v2534 = vpack.c.b16 %v1726, %v1718
      %v2535 = vpack.c.b16 %v1727, %v1719
      %v2536 = vpack.c.b16 %v1728, %v1720
      %v2537 = vpack.c.b16 %v1729, %v1721
      %v2538 = vpack.c.b16 %v1730, %v1722
      %v2539 = vpack.c.b16 %v1731, %v1723
      %v2540 = vpack.c.b16 %v1740, %v1732
      %v2541 = vpack.c.b16 %v1741, %v1733
      %v2542 = vpack.c.b16 %v1742, %v1734
      %v2543 = vpack.c.b16 %v1743, %v1735
      %v2544 = vpack.c.b16 %v1744, %v1736
      %v2545 = vpack.c.b16 %v1745, %v1737
      %v2546 = vpack.c.b16 %v1746, %v1738
      %v2547 = vpack.c.b16 %v1747, %v1739
      %v2548 = vpack.c.b16 %v1756, %v1748
      %v2549 = vpack.c.b16 %v1757, %v1749
      %v2550 = vpack.c.b16 %v1758, %v1750
      %v2551 = vpack.c.b16 %v1759, %v1751
      %v2552 = vpack.c.b16 %v1760, %v1752
      %v2553 = vpack.c.b16 %v1761, %v1753
      %v2554 = vpack.c.b16 %v1762, %v1754
      %v2555 = vpack.c.b16 %v1763, %v1755
      %v2556 = vpack.c.b16 %v1772, %v1764
      %v2557 = vpack.c.b16 %v1773, %v1765
      %v2558 = vpack.c.b16 %v1774, %v1766
      %v2559 = vpack.c.b16 %v1775, %v1767
      %v2560 = vpack.c.b16 %v1776, %v1768
      %v2561 = vpack.c.b16 %v1777, %v1769
      %v2562 = vpack.c.b16 %v1778, %v1770
      %v2563 = vpack.c.b16 %v1779, %v1771
      %v2564 = vpack.c.b16 %v1788, %v1780
      %v2565 = vpack.c.b16 %v1789, %v1781
      %v2566 = vpack.c.b16 %v1790, %v1782
      %v2567 = vpack.c.b16 %v1791, %v1783
      %v2568 = vpack.c.b16 %v1792, %v1784
      %v2569 = vpack.c.b16 %v1793, %v1785
      %v2570 = vpack.c.b16 %v1794, %v1786
      %v2571 = vpack.c.b16 %v1795, %v1787
      %v2572 = vpack.c.b16 %v1804, %v1796
      %v2573 = vpack.c.b16 %v1805, %v1797
      %v2574 = vpack.c.b16 %v1806, %v1798
      %v2575 = vpack.c.b16 %v1807, %v1799
      %v2576 = vpack.c.b16 %v1808, %v1800
      %v2577 = vpack.c.b16 %v1809, %v1801
      %v2578 = vpack.c.b16 %v1810, %v1802
      %v2579 = vpack.c.b16 %v1811, %v1803
      %v2580 = vpack.c.b16 %v1820, %v1812
      %v2581 = vpack.c.b16 %v1821, %v1813
      %v2582 = vpack.c.b16 %v1822, %v1814
      %v2583 = vpack.c.b16 %v1823, %v1815
      %v2584 = vpack.c.b16 %v1824, %v1816
      %v2585 = vpack.c.b16 %v1825, %v1817
      %v2586 = vpack.c.b16 %v1826, %v1818
      %v2587 = vpack.c.b16 %v1827, %v1819
      %v2588 = vpack.c.b16 %v1836, %v1828
      %v2589 = vpack.c.b16 %v1837, %v1829
      %v2590 = vpack.c.b16 %v1838, %v1830
      %v2591 = vpack.c.b16 %v1839, %v1831
      %v2592 = vpack.c.b16 %v1840, %v1832
      %v2593 = vpack.c.b16 %v1841, %v1833
      %v2594 = vpack.c.b16 %v1842, %v1834
      %v2595 = vpack.c.b16 %v1843, %v1835
      %v2596 = vpack.c.b16 %v1852, %v1844
      %v2597 = vpack.c.b16 %v1853, %v1845
      %v2598 = vpack.c.b16 %v1854, %v1846
      %v2599 = vpack.c.b16 %v1855, %v1847
      %v2600 = vpack.c.b16 %v1856, %v1848
      %v2601 = vpack.c.b16 %v1857, %v1849
      %v2602 = vpack.c.b16 %v1858, %v1850
      %v2603 = vpack.c.b16 %v1859, %v1851
      %v2604 = vpack.c.b16 %v1868, %v1860
      %v2605 = vpack.c.b16 %v1869, %v1861
      %v2606 = vpack.c.b16 %v1870, %v1862
      %v2607 = vpack.c.b16 %v1871, %v1863
      %v2608 = vpack.c.b16 %v1872, %v1864
      %v2609 = vpack.c.b16 %v1873, %v1865
      %v2610 = vpack.c.b16 %v1874, %v1866
      %v2611 = vpack.c.b16 %v1875, %v1867
      %v2612 = vpack.c.b16 %v1884, %v1876
      %v2613 = vpack.c.b16 %v1885, %v1877
      %v2614 = vpack.c.b16 %v1886, %v1878
      %v2615 = vpack.c.b16 %v1887, %v1879
      %v2616 = vpack.c.b16 %v1888, %v1880
      %v2617 = vpack.c.b16 %v1889, %v1881
      %v2618 = vpack.c.b16 %v1890, %v1882
      %v2619 = vpack.c.b16 %v1891, %v1883
      %v2620 = vpack.c.b16 %v1900, %v1892
      %v2621 = vpack.c.b16 %v1901, %v1893
      %v2622 = vpack.c.b16 %v1902, %v1894
      %v2623 = vpack.c.b16 %v1903, %v1895
      %v2624 = vpack.c.b16 %v1904, %v1896
      %v2625 = vpack.c.b16 %v1905, %v1897
      %v2626 = vpack.c.b16 %v1906, %v1898
      %v2627 = vpack.c.b16 %v1907, %v1899
      %v2628 = vpack.c.b16 %v1916, %v1908
      %v2629 = vpack.c.b16 %v1917, %v1909
      %v2630 = vpack.c.b16 %v1918, %v1910
      %v2631 = vpack.c.b16 %v1919, %v1911
      %v2632 = vpack.c.b16 %v1920, %v1912
      %v2633 = vpack.c.b16 %v1921, %v1913
      %v2634 = vpack.c.b16 %v1922, %v1914
      %v2635 = vpack.c.b16 %v1923, %v1915
      %v2636 = vpack.c.b16 %v1932, %v1924
      %v2637 = vpack.c.b16 %v1933, %v1925
      %v2638 = vpack.c.b16 %v1934, %v1926
      %v2639 = vpack.c.b16 %v1935, %v1927
      %v2640 = vpack.c.b16 %v1936, %v1928
      %v2641 = vpack.c.b16 %v1937, %v1929
      %v2642 = vpack.c.b16 %v1938, %v1930
      %v2643 = vpack.c.b16 %v1939, %v1931
      %v2644 = vpack.c.b16 %v1948, %v1940
      %v2645 = vpack.c.b16 %v1949, %v1941
      %v2646 = vpack.c.b16 %v1950, %v1942
      %v2647 = vpack.c.b16 %v1951, %v1943
      %v2648 = vpack.c.b16 %v1952, %v1944
      %v2649 = vpack.c.b16 %v1953, %v1945
      %v2650 = vpack.c.b16 %v1954, %v1946
      %v2651 = vpack.c.b16 %v1955, %v1947
      %v2652 = vpack.c.b16 %v1964, %v1956
      %v2653 = vpack.c.b16 %v1965, %v1957
      %v2654 = vpack.c.b16 %v1966, %v1958
      %v2655 = vpack.c.b16 %v1967, %v1959
      %v2656 = vpack.c.b16 %v1968, %v1960
      %v2657 = vpack.c.b16 %v1969, %v1961
      %v2658 = vpack.c.b16 %v1970, %v1962
      %v2659 = vpack.c.b16 %v1971, %v1963
      %v2660 = vpack.c.b16 %v1980, %v1972
      %v2661 = vpack.c.b16 %v1981, %v1973
      %v2662 = vpack.c.b16 %v1982, %v1974
      %v2663 = vpack.c.b16 %v1983, %v1975
      %v2664 = vpack.c.b16 %v1984, %v1976
      %v2665 = vpack.c.b16 %v1985, %v1977
      %v2666 = vpack.c.b16 %v1986, %v1978
      %v2667 = vpack.c.b16 %v1987, %v1979
      %v2668 = vpack.c.b16 %v1996, %v1988
      %v2669 = vpack.c.b16 %v1997, %v1989
      %v2670 = vpack.c.b16 %v1998, %v1990
      %v2671 = vpack.c.b16 %v1999, %v1991
      %v2672 = vpack.c.b16 %v2000, %v1992
      %v2673 = vpack.c.b16 %v2001, %v1993
      %v2674 = vpack.c.b16 %v2002, %v1994
      %v2675 = vpack.c.b16 %v2003, %v1995
      %v2676 = vpack.c.b16 %v2012, %v2004
      %v2677 = vpack.c.b16 %v2013, %v2005
      %v2678 = vpack.c.b16 %v2014, %v2006
      %v2679 = vpack.c.b16 %v2015, %v2007
      %v2680 = vpack.c.b16 %v2016, %v2008
      %v2681 = vpack.c.b16 %v2017, %v2009
      %v2682 = vpack.c.b16 %v2018, %v2010
      %v2683 = vpack.c.b16 %v2019, %v2011
      %v2684 = vpack.c.b16 %v2028, %v2020
      %v2685 = vpack.c.b16 %v2029, %v2021
      %v2686 = vpack.c.b16 %v2030, %v2022
      %v2687 = vpack.c.b16 %v2031, %v2023
      %v2688 = vpack.c.b16 %v2032, %v2024
      %v2689 = vpack.c.b16 %v2033, %v2025
      %v2690 = vpack.c.b16 %v2034, %v2026
      %v2691 = vpack.c.b16 %v2035, %v2027
      %v2692 = vpack.c.b16 %v2044, %v2036
      %v2693 = vpack.c.b16 %v2045, %v2037
      %v2694 = vpack.c.b16 %v2046, %v2038
      %v2695 = vpack.c.b16 %v2047, %v2039
      %v2696 = vpack.c.b16 %v2048, %v2040
      %v2697 = vpack.c.b16 %v2049, %v2041
      %v2698 = vpack.c.b16 %v2050, %v2042
      %v2699 = vpack.c.b16 %v2051, %v2043
      %v2700 = vpack.c.b16 %v2060, %v2052
      %v2701 = vpack.c.b16 %v2061, %v2053
      %v2702 = vpack.c.b16 %v2062, %v2054
      %v2703 = vpack.c.b16 %v2063, %v2055
      %v2704 = vpack.c.b16 %v2064, %v2056
      %v2705 = vpack.c.b16 %v2065, %v2057
      %v2706 = vpack.c.b16 %v2066, %v2058
      %v2707 = vpack.c.b16 %v2067, %v2059
      %v2708 = vpack.c.b16 %v2076, %v2068
      %v2709 = vpack.c.b16 %v2077, %v2069
      %v2710 = vpack.c.b16 %v2078, %v2070
      %v2711 = vpack.c.b16 %v2079, %v2071
      %v2712 = vpack.c.b16 %v2080, %v2072
      %v2713 = vpack.c.b16 %v2081, %v2073
      %v2714 = vpack.c.b16 %v2082, %v2074
      %v2715 = vpack.c.b16 %v2083, %v2075
      %v2716 = vpack.c.b16 %v2092, %v2084
      %v2717 = vpack.c.b16 %v2093, %v2085
      %v2718 = vpack.c.b16 %v2094, %v2086
      %v2719 = vpack.c.b16 %v2095, %v2087
      %v2720 = vpack.c.b16 %v2096, %v2088
      %v2721 = vpack.c.b16 %v2097, %v2089
      %v2722 = vpack.c.b16 %v2098, %v2090
      %v2723 = vpack.c.b16 %v2099, %v2091
      %v2724 = vpack.c.b16 %v2108, %v2100
      %v2725 = vpack.c.b16 %v2109, %v2101
      %v2726 = vpack.c.b16 %v2110, %v2102
      %v2727 = vpack.c.b16 %v2111, %v2103
      %v2728 = vpack.c.b16 %v2112, %v2104
      %v2729 = vpack.c.b16 %v2113, %v2105
      %v2730 = vpack.c.b16 %v2114, %v2106
      %v2731 = vpack.c.b16 %v2115, %v2107
      %v2732 = vpack.c.b16 %v2124, %v2116
      %v2733 = vpack.c.b16 %v2125, %v2117
      %v2734 = vpack.c.b16 %v2126, %v2118
      %v2735 = vpack.c.b16 %v2127, %v2119
      %v2736 = vpack.c.b16 %v2128, %v2120
      %v2737 = vpack.c.b16 %v2129, %v2121
      %v2738 = vpack.c.b16 %v2130, %v2122
      %v2739 = vpack.c.b16 %v2131, %v2123
      %v2740 = vpack.c.b16 %v2140, %v2132
      %v2741 = vpack.c.b16 %v2141, %v2133
      %v2742 = vpack.c.b16 %v2142, %v2134
      %v2743 = vpack.c.b16 %v2143, %v2135
      %v2744 = vpack.c.b16 %v2144, %v2136
      %v2745 = vpack.c.b16 %v2145, %v2137
      %v2746 = vpack.c.b16 %v2146, %v2138
      %v2747 = vpack.c.b16 %v2147, %v2139
      %v2748 = vpack.c.b16 %v2156, %v2148
      %v2749 = vpack.c.b16 %v2157, %v2149
      %v2750 = vpack.c.b16 %v2158, %v2150
      %v2751 = vpack.c.b16 %v2159, %v2151
      %v2752 = vpack.c.b16 %v2160, %v2152
      %v2753 = vpack.c.b16 %v2161, %v2153
      %v2754 = vpack.c.b16 %v2162, %v2154
      %v2755 = vpack.c.b16 %v2163, %v2155
      %v2756 = vpack.c.b16 %v2172, %v2164
      %v2757 = vpack.c.b16 %v2173, %v2165
      %v2758 = vpack.c.b16 %v2174, %v2166
      %v2759 = vpack.c.b16 %v2175, %v2167
      %v2760 = vpack.c.b16 %v2176, %v2168
      %v2761 = vpack.c.b16 %v2177, %v2169
      %v2762 = vpack.c.b16 %v2178, %v2170
      %v2763 = vpack.c.b16 %v2179, %v2171
      %v2764 = vpack.c.b16 %v2188, %v2180
      %v2765 = vpack.c.b16 %v2189, %v2181
      %v2766 = vpack.c.b16 %v2190, %v2182
      %v2767 = vpack.c.b16 %v2191, %v2183
      %v2768 = vpack.c.b16 %v2192, %v2184
      %v2769 = vpack.c.b16 %v2193, %v2185
      %v2770 = vpack.c.b16 %v2194, %v2186
      %v2771 = vpack.c.b16 %v2195, %v2187
      %v2772 = vpack.c.b16 %v2204, %v2196
      %v2773 = vpack.c.b16 %v2205, %v2197
      %v2774 = vpack.c.b16 %v2206, %v2198
      %v2775 = vpack.c.b16 %v2207, %v2199
      %v2776 = vpack.c.b16 %v2208, %v2200
      %v2777 = vpack.c.b16 %v2209, %v2201
      %v2778 = vpack.c.b16 %v2210, %v2202
      %v2779 = vpack.c.b16 %v2211, %v2203
      %v2780 = vpack.c.b16 %v2220, %v2212
      %v2781 = vpack.c.b16 %v2221, %v2213
      %v2782 = vpack.c.b16 %v2222, %v2214
      %v2783 = vpack.c.b16 %v2223, %v2215
      %v2784 = vpack.c.b16 %v2224, %v2216
      %v2785 = vpack.c.b16 %v2225, %v2217
      %v2786 = vpack.c.b16 %v2226, %v2218
      %v2787 = vpack.c.b16 %v2227, %v2219
      %v2788 = vpack.c.b16 %v2236, %v2228
      %v2789 = vpack.c.b16 %v2237, %v2229
      %v2790 = vpack.c.b16 %v2238, %v2230
      %v2791 = vpack.c.b16 %v2239, %v2231
      %v2792 = vpack.c.b16 %v2240, %v2232
      %v2793 = vpack.c.b16 %v2241, %v2233
      %v2794 = vpack.c.b16 %v2242, %v2234
      %v2795 = vpack.c.b16 %v2243, %v2235
      %v2796 = vpack.c.b16 %v2252, %v2244
      %v2797 = vpack.c.b16 %v2253, %v2245
      %v2798 = vpack.c.b16 %v2254, %v2246
      %v2799 = vpack.c.b16 %v2255, %v2247
      %v2800 = vpack.c.b16 %v2256, %v2248
      %v2801 = vpack.c.b16 %v2257, %v2249
      %v2802 = vpack.c.b16 %v2258, %v2250
      %v2803 = vpack.c.b16 %v2259, %v2251
      %v2804 = vpack.c.b16 %v2268, %v2260
      %v2805 = vpack.c.b16 %v2269, %v2261
      %v2806 = vpack.c.b16 %v2270, %v2262
      %v2807 = vpack.c.b16 %v2271, %v2263
      %v2808 = vpack.c.b16 %v2272, %v2264
      %v2809 = vpack.c.b16 %v2273, %v2265
      %v2810 = vpack.c.b16 %v2274, %v2266
      %v2811 = vpack.c.b16 %v2275, %v2267
      %v2812 = vpack.c.b16 %v2284, %v2276
      %v2813 = vpack.c.b16 %v2285, %v2277
      %v2814 = vpack.c.b16 %v2286, %v2278
      %v2815 = vpack.c.b16 %v2287, %v2279
      %v2816 = vpack.c.b16 %v2288, %v2280
      %v2817 = vpack.c.b16 %v2289, %v2281
      %v2818 = vpack.c.b16 %v2290, %v2282
      %v2819 = vpack.c.b16 %v2291, %v2283
      %v2820 = vpack.c.b16 %v2300, %v2292
      %v2821 = vpack.c.b16 %v2301, %v2293
      %v2822 = vpack.c.b16 %v2302, %v2294
      %v2823 = vpack.c.b16 %v2303, %v2295
      %v2824 = vpack.c.b16 %v2304, %v2296
      %v2825 = vpack.c.b16 %v2305, %v2297
      %v2826 = vpack.c.b16 %v2306, %v2298
      %v2827 = vpack.c.b16 %v2307, %v2299
      %v2828 = vpack.c.b16 %v2316, %v2308
      %v2829 = vpack.c.b16 %v2317, %v2309
      %v2830 = vpack.c.b16 %v2318, %v2310
      %v2831 = vpack.c.b16 %v2319, %v2311
      %v2832 = vpack.c.b16 %v2320, %v2312
      %v2833 = vpack.c.b16 %v2321, %v2313
      %v2834 = vpack.c.b16 %v2322, %v2314
      %v2835 = vpack.c.b16 %v2323, %v2315
      %3348 = vmatprep.subr.bf16.mxu0 %v2381
      %3349 = vmatpush1.bf16.msra.mxu0 %v2380
      %3350 = vmatprep.subr.bf16.mxu0 %v2373
      %3351 = vmatpush1.bf16.msra.mxu0 %v2372
      %3352 = vmatprep.subr.bf16.mxu0 %v2365
      %3353 = vmatpush1.bf16.msra.mxu0 %v2364
      %3354 = vmatprep.subr.bf16.mxu0 %v2357
      %3355 = vmatpush1.bf16.msra.mxu0 %v2356
      %3356 = vmatprep.subr.bf16.mxu0 %v2349
      %3357 = vmatpush1.bf16.msra.mxu0 %v2348
      %3358 = vmatprep.subr.bf16.mxu0 %v2341
      %3359 = vmatpush1.bf16.msra.mxu0 %v2340
      %3360 = vmatprep.subr.bf16.mxu0 %v2333
      %3361 = vmatpush1.bf16.msra.mxu0 %v2332
      %3362 = vmatprep.subr.bf16.mxu0 %v2325
      %3363 = vmatpush1.bf16.msra.mxu0 %v2324
      %3364 = vmatprep.subr.bf16.mxu0 %v2445
      %3365 = vmatpush2.bf16.msra.mxu0 %v2444
      %3366 = vmatprep.subr.bf16.mxu0 %v2437
      %3367 = vmatpush2.bf16.msra.mxu0 %v2436
      %3368 = vmatprep.subr.bf16.mxu0 %v2429
      %3369 = vmatpush2.bf16.msra.mxu0 %v2428
      %3370 = vmatprep.subr.bf16.mxu0 %v2421
      %3371 = vmatpush2.bf16.msra.mxu0 %v2420
      %3372 = vmatprep.subr.bf16.mxu0 %v2413
      %3373 = vmatpush2.bf16.msra.mxu0 %v2412
      %3374 = vmatprep.subr.bf16.mxu0 %v2405
      %3375 = vmatpush2.bf16.msra.mxu0 %v2404
      %3376 = vmatprep.subr.bf16.mxu0 %v2397
      %3377 = vmatpush2.bf16.msra.mxu0 %v2396
      %3378 = vmatprep.subr.bf16.mxu0 %v2389
      %3379 = vmatpush2.bf16.msra.mxu0 %v2388
      %3380 = vmatprep.mubr.bf16.mxu0 %v773
      %3381 = vmatmul.mubr.bf16.gmra.mxu0 %v772
      %v3382 = vpop.f32.mrf.mxu0
      %v3383 = vadd.f32 0.0, %v3382
      %v3384 = vpop.f32.mrf.mxu0
      %v3385 = vadd.f32 0.0, %v3384
      %v3386 = vpop.f32.mrf.mxu0
      %v3387 = vpop.f32.mrf.mxu0
      %3388 = vdwg.mxu0
      %3389 = vmatprep.subr.bf16.mxu0 %v2509
      %3390 = vmatpush1.bf16.msra.mxu0 %v2508
      %3391 = vmatprep.subr.bf16.mxu0 %v2501
      %3392 = vmatpush1.bf16.msra.mxu0 %v2500
      %3393 = vmatprep.subr.bf16.mxu0 %v2493
      %3394 = vmatpush1.bf16.msra.mxu0 %v2492
      %3395 = vmatprep.subr.bf16.mxu0 %v2485
      %3396 = vmatpush1.bf16.msra.mxu0 %v2484
      %3397 = vmatprep.subr.bf16.mxu0 %v2477
      %3398 = vmatpush1.bf16.msra.mxu0 %v2476
      %3399 = vmatprep.subr.bf16.mxu0 %v2469
      %3400 = vmatpush1.bf16.msra.mxu0 %v2468
      %3401 = vmatprep.subr.bf16.mxu0 %v2461
      %3402 = vmatpush1.bf16.msra.mxu0 %v2460
      %3403 = vmatprep.subr.bf16.mxu0 %v2453
      %3404 = vmatpush1.bf16.msra.mxu0 %v2452
      %3405 = vmatprep.subr.bf16.mxu0 %v2573
      %3406 = vmatpush2.bf16.msra.mxu0 %v2572
      %3407 = vmatprep.subr.bf16.mxu0 %v2565
      %3408 = vmatpush2.bf16.msra.mxu0 %v2564
      %3409 = vmatprep.subr.bf16.mxu0 %v2557
      %3410 = vmatpush2.bf16.msra.mxu0 %v2556
      %3411 = vmatprep.subr.bf16.mxu0 %v2549
      %3412 = vmatpush2.bf16.msra.mxu0 %v2548
      %3413 = vmatprep.subr.bf16.mxu0 %v2541
      %3414 = vmatpush2.bf16.msra.mxu0 %v2540
      %3415 = vmatprep.subr.bf16.mxu0 %v2533
      %3416 = vmatpush2.bf16.msra.mxu0 %v2532
      %3417 = vmatprep.subr.bf16.mxu0 %v2525
      %3418 = vmatpush2.bf16.msra.mxu0 %v2524
      %3419 = vmatprep.subr.bf16.mxu0 %v2517
      %3420 = vmatpush2.bf16.msra.mxu0 %v2516
      %3421 = vmatprep.mubr.bf16.mxu0 %v775
      %3422 = vmatmul.mubr.bf16.gmra.mxu0 %v774
      %v3423 = vpop.f32.mrf.mxu0
      %v3424 = vadd.f32 %v3383, %v3423
      %v3425 = vpop.f32.mrf.mxu0
      %v3426 = vadd.f32 %v3385, %v3425
      %v3427 = vpop.f32.mrf.mxu0
      %v3428 = vpop.f32.mrf.mxu0
      %3429 = vdwg.mxu0
      %3430 = vmatprep.subr.bf16.mxu0 %v2637
      %3431 = vmatpush1.bf16.msra.mxu0 %v2636
      %3432 = vmatprep.subr.bf16.mxu0 %v2629
      %3433 = vmatpush1.bf16.msra.mxu0 %v2628
      %3434 = vmatprep.subr.bf16.mxu0 %v2621
      %3435 = vmatpush1.bf16.msra.mxu0 %v2620
      %3436 = vmatprep.subr.bf16.mxu0 %v2613
      %3437 = vmatpush1.bf16.msra.mxu0 %v2612
      %3438 = vmatprep.subr.bf16.mxu0 %v2605
      %3439 = vmatpush1.bf16.msra.mxu0 %v2604
      %3440 = vmatprep.subr.bf16.mxu0 %v2597
      %3441 = vmatpush1.bf16.msra.mxu0 %v2596
      %3442 = vmatprep.subr.bf16.mxu0 %v2589
      %3443 = vmatpush1.bf16.msra.mxu0 %v2588
      %3444 = vmatprep.subr.bf16.mxu0 %v2581
      %3445 = vmatpush1.bf16.msra.mxu0 %v2580
      %3446 = vmatprep.subr.bf16.mxu0 %v2701
      %3447 = vmatpush2.bf16.msra.mxu0 %v2700
      %3448 = vmatprep.subr.bf16.mxu0 %v2693
      %3449 = vmatpush2.bf16.msra.mxu0 %v2692
      %3450 = vmatprep.subr.bf16.mxu0 %v2685
      %3451 = vmatpush2.bf16.msra.mxu0 %v2684
      %3452 = vmatprep.subr.bf16.mxu0 %v2677
      %3453 = vmatpush2.bf16.msra.mxu0 %v2676
      %3454 = vmatprep.subr.bf16.mxu0 %v2669
      %3455 = vmatpush2.bf16.msra.mxu0 %v2668
      %3456 = vmatprep.subr.bf16.mxu0 %v2661
      %3457 = vmatpush2.bf16.msra.mxu0 %v2660
      %3458 = vmatprep.subr.bf16.mxu0 %v2653
      %3459 = vmatpush2.bf16.msra.mxu0 %v2652
      %3460 = vmatprep.subr.bf16.mxu0 %v2645
      %3461 = vmatpush2.bf16.msra.mxu0 %v2644
      %3462 = vmatprep.mubr.bf16.mxu0 %v777
      %3463 = vmatmul.mubr.bf16.gmra.mxu0 %v776
      %v3464 = vpop.f32.mrf.mxu0
      %v3465 = vadd.f32 %v3424, %v3464
      %v3466 = vpop.f32.mrf.mxu0
      %v3467 = vadd.f32 %v3426, %v3466
      %v3468 = vpop.f32.mrf.mxu0
      %v3469 = vpop.f32.mrf.mxu0
      %3470 = vdwg.mxu0
      %3471 = vmatprep.subr.bf16.mxu0 %v2765
      %3472 = vmatpush1.bf16.msra.mxu0 %v2764
      %3473 = vmatprep.subr.bf16.mxu0 %v2757
      %3474 = vmatpush1.bf16.msra.mxu0 %v2756
      %3475 = vmatprep.subr.bf16.mxu0 %v2749
      %3476 = vmatpush1.bf16.msra.mxu0 %v2748
      %3477 = vmatprep.subr.bf16.mxu0 %v2741
      %3478 = vmatpush1.bf16.msra.mxu0 %v2740
      %3479 = vmatprep.subr.bf16.mxu0 %v2733
      %3480 = vmatpush1.bf16.msra.mxu0 %v2732
      %3481 = vmatprep.subr.bf16.mxu0 %v2725
      %3482 = vmatpush1.bf16.msra.mxu0 %v2724
      %3483 = vmatprep.subr.bf16.mxu0 %v2717
      %3484 = vmatpush1.bf16.msra.mxu0 %v2716
      %3485 = vmatprep.subr.bf16.mxu0 %v2709
      %3486 = vmatpush1.bf16.msra.mxu0 %v2708
      %3487 = vmatprep.subr.bf16.mxu0 %v2829
      %3488 = vmatpush2.bf16.msra.mxu0 %v2828
      %3489 = vmatprep.subr.bf16.mxu0 %v2821
      %3490 = vmatpush2.bf16.msra.mxu0 %v2820
      %3491 = vmatprep.subr.bf16.mxu0 %v2813
      %3492 = vmatpush2.bf16.msra.mxu0 %v2812
      %3493 = vmatprep.subr.bf16.mxu0 %v2805
      %3494 = vmatpush2.bf16.msra.mxu0 %v2804
      %3495 = vmatprep.subr.bf16.mxu0 %v2797
      %3496 = vmatpush2.bf16.msra.mxu0 %v2796
      %3497 = vmatprep.subr.bf16.mxu0 %v2789
      %3498 = vmatpush2.bf16.msra.mxu0 %v2788
      %3499 = vmatprep.subr.bf16.mxu0 %v2781
      %3500 = vmatpush2.bf16.msra.mxu0 %v2780
      %3501 = vmatprep.subr.bf16.mxu0 %v2773
      %3502 = vmatpush2.bf16.msra.mxu0 %v2772
      %3503 = vmatprep.mubr.bf16.mxu0 %v779
      %3504 = vmatmul.mubr.bf16.gmra.mxu0 %v778
      %v3505 = vpop.f32.mrf.mxu0
      %v3506 = vadd.f32 %v3465, %v3505
      %v3507 = vpop.f32.mrf.mxu0
      %v3508 = vadd.f32 %v3467, %v3507
      %v3509 = vpop.f32.mrf.mxu0
      %v3510 = vpop.f32.mrf.mxu0
      %3511 = vdwg.mxu0
      %3512 = vmatprep.subr.bf16.mxu0 %v2383
      %3513 = vmatpush1.bf16.msra.mxu0 %v2382
      %3514 = vmatprep.subr.bf16.mxu0 %v2375
      %3515 = vmatpush1.bf16.msra.mxu0 %v2374
      %3516 = vmatprep.subr.bf16.mxu0 %v2367
      %3517 = vmatpush1.bf16.msra.mxu0 %v2366
      %3518 = vmatprep.subr.bf16.mxu0 %v2359
      %3519 = vmatpush1.bf16.msra.mxu0 %v2358
      %3520 = vmatprep.subr.bf16.mxu0 %v2351
      %3521 = vmatpush1.bf16.msra.mxu0 %v2350
      %3522 = vmatprep.subr.bf16.mxu0 %v2343
      %3523 = vmatpush1.bf16.msra.mxu0 %v2342
      %3524 = vmatprep.subr.bf16.mxu0 %v2335
      %3525 = vmatpush1.bf16.msra.mxu0 %v2334
      %3526 = vmatprep.subr.bf16.mxu0 %v2327
      %3527 = vmatpush1.bf16.msra.mxu0 %v2326
      %3528 = vmatprep.subr.bf16.mxu0 %v2447
      %3529 = vmatpush2.bf16.msra.mxu0 %v2446
      %3530 = vmatprep.subr.bf16.mxu0 %v2439
      %3531 = vmatpush2.bf16.msra.mxu0 %v2438
      %3532 = vmatprep.subr.bf16.mxu0 %v2431
      %3533 = vmatpush2.bf16.msra.mxu0 %v2430
      %3534 = vmatprep.subr.bf16.mxu0 %v2423
      %3535 = vmatpush2.bf16.msra.mxu0 %v2422
      %3536 = vmatprep.subr.bf16.mxu0 %v2415
      %3537 = vmatpush2.bf16.msra.mxu0 %v2414
      %3538 = vmatprep.subr.bf16.mxu0 %v2407
      %3539 = vmatpush2.bf16.msra.mxu0 %v2406
      %3540 = vmatprep.subr.bf16.mxu0 %v2399
      %3541 = vmatpush2.bf16.msra.mxu0 %v2398
      %3542 = vmatprep.subr.bf16.mxu0 %v2391
      %3543 = vmatpush2.bf16.msra.mxu0 %v2390
      %3544 = vmatprep.mubr.bf16.mxu0 %v773
      %3545 = vmatmul.mubr.bf16.gmra.mxu0 %v772
      %v3546 = vpop.f32.mrf.mxu0
      %v3547 = vadd.f32 0.0, %v3546
      %v3548 = vpop.f32.mrf.mxu0
      %v3549 = vadd.f32 0.0, %v3548
      %v3550 = vpop.f32.mrf.mxu0
      %v3551 = vpop.f32.mrf.mxu0
      %3552 = vdwg.mxu0
      %3553 = vmatprep.subr.bf16.mxu0 %v2511
      %3554 = vmatpush1.bf16.msra.mxu0 %v2510
      %3555 = vmatprep.subr.bf16.mxu0 %v2503
      %3556 = vmatpush1.bf16.msra.mxu0 %v2502
      %3557 = vmatprep.subr.bf16.mxu0 %v2495
      %3558 = vmatpush1.bf16.msra.mxu0 %v2494
      %3559 = vmatprep.subr.bf16.mxu0 %v2487
      %3560 = vmatpush1.bf16.msra.mxu0 %v2486
      %3561 = vmatprep.subr.bf16.mxu0 %v2479
      %3562 = vmatpush1.bf16.msra.mxu0 %v2478
      %3563 = vmatprep.subr.bf16.mxu0 %v2471
      %3564 = vmatpush1.bf16.msra.mxu0 %v2470
      %3565 = vmatprep.subr.bf16.mxu0 %v2463
      %3566 = vmatpush1.bf16.msra.mxu0 %v2462
      %3567 = vmatprep.subr.bf16.mxu0 %v2455
      %3568 = vmatpush1.bf16.msra.mxu0 %v2454
      %3569 = vmatprep.subr.bf16.mxu0 %v2575
      %3570 = vmatpush2.bf16.msra.mxu0 %v2574
      %3571 = vmatprep.subr.bf16.mxu0 %v2567
      %3572 = vmatpush2.bf16.msra.mxu0 %v2566
      %3573 = vmatprep.subr.bf16.mxu0 %v2559
      %3574 = vmatpush2.bf16.msra.mxu0 %v2558
      %3575 = vmatprep.subr.bf16.mxu0 %v2551
      %3576 = vmatpush2.bf16.msra.mxu0 %v2550
      %3577 = vmatprep.subr.bf16.mxu0 %v2543
      %3578 = vmatpush2.bf16.msra.mxu0 %v2542
      %3579 = vmatprep.subr.bf16.mxu0 %v2535
      %3580 = vmatpush2.bf16.msra.mxu0 %v2534
      %3581 = vmatprep.subr.bf16.mxu0 %v2527
      %3582 = vmatpush2.bf16.msra.mxu0 %v2526
      %3583 = vmatprep.subr.bf16.mxu0 %v2519
      %3584 = vmatpush2.bf16.msra.mxu0 %v2518
      %3585 = vmatprep.mubr.bf16.mxu0 %v775
      %3586 = vmatmul.mubr.bf16.gmra.mxu0 %v774
      %v3587 = vpop.f32.mrf.mxu0
      %v3588 = vadd.f32 %v3547, %v3587
      %v3589 = vpop.f32.mrf.mxu0
      %v3590 = vadd.f32 %v3549, %v3589
      %v3591 = vpop.f32.mrf.mxu0
      %v3592 = vpop.f32.mrf.mxu0
      %3593 = vdwg.mxu0
      %3594 = vmatprep.subr.bf16.mxu0 %v2639
      %3595 = vmatpush1.bf16.msra.mxu0 %v2638
      %3596 = vmatprep.subr.bf16.mxu0 %v2631
      %3597 = vmatpush1.bf16.msra.mxu0 %v2630
      %3598 = vmatprep.subr.bf16.mxu0 %v2623
      %3599 = vmatpush1.bf16.msra.mxu0 %v2622
      %3600 = vmatprep.subr.bf16.mxu0 %v2615
      %3601 = vmatpush1.bf16.msra.mxu0 %v2614
      %3602 = vmatprep.subr.bf16.mxu0 %v2607
      %3603 = vmatpush1.bf16.msra.mxu0 %v2606
      %3604 = vmatprep.subr.bf16.mxu0 %v2599
      %3605 = vmatpush1.bf16.msra.mxu0 %v2598
      %3606 = vmatprep.subr.bf16.mxu0 %v2591
      %3607 = vmatpush1.bf16.msra.mxu0 %v2590
      %3608 = vmatprep.subr.bf16.mxu0 %v2583
      %3609 = vmatpush1.bf16.msra.mxu0 %v2582
      %3610 = vmatprep.subr.bf16.mxu0 %v2703
      %3611 = vmatpush2.bf16.msra.mxu0 %v2702
      %3612 = vmatprep.subr.bf16.mxu0 %v2695
      %3613 = vmatpush2.bf16.msra.mxu0 %v2694
      %3614 = vmatprep.subr.bf16.mxu0 %v2687
      %3615 = vmatpush2.bf16.msra.mxu0 %v2686
      %3616 = vmatprep.subr.bf16.mxu0 %v2679
      %3617 = vmatpush2.bf16.msra.mxu0 %v2678
      %3618 = vmatprep.subr.bf16.mxu0 %v2671
      %3619 = vmatpush2.bf16.msra.mxu0 %v2670
      %3620 = vmatprep.subr.bf16.mxu0 %v2663
      %3621 = vmatpush2.bf16.msra.mxu0 %v2662
      %3622 = vmatprep.subr.bf16.mxu0 %v2655
      %3623 = vmatpush2.bf16.msra.mxu0 %v2654
      %3624 = vmatprep.subr.bf16.mxu0 %v2647
      %3625 = vmatpush2.bf16.msra.mxu0 %v2646
      %3626 = vmatprep.mubr.bf16.mxu0 %v777
      %3627 = vmatmul.mubr.bf16.gmra.mxu0 %v776
      %v3628 = vpop.f32.mrf.mxu0
      %v3629 = vadd.f32 %v3588, %v3628
      %v3630 = vpop.f32.mrf.mxu0
      %v3631 = vadd.f32 %v3590, %v3630
      %v3632 = vpop.f32.mrf.mxu0
      %v3633 = vpop.f32.mrf.mxu0
      %3634 = vdwg.mxu0
      %3635 = vmatprep.subr.bf16.mxu0 %v2767
      %3636 = vmatpush1.bf16.msra.mxu0 %v2766
      %3637 = vmatprep.subr.bf16.mxu0 %v2759
      %3638 = vmatpush1.bf16.msra.mxu0 %v2758
      %3639 = vmatprep.subr.bf16.mxu0 %v2751
      %3640 = vmatpush1.bf16.msra.mxu0 %v2750
      %3641 = vmatprep.subr.bf16.mxu0 %v2743
      %3642 = vmatpush1.bf16.msra.mxu0 %v2742
      %3643 = vmatprep.subr.bf16.mxu0 %v2735
      %3644 = vmatpush1.bf16.msra.mxu0 %v2734
      %3645 = vmatprep.subr.bf16.mxu0 %v2727
      %3646 = vmatpush1.bf16.msra.mxu0 %v2726
      %3647 = vmatprep.subr.bf16.mxu0 %v2719
      %3648 = vmatpush1.bf16.msra.mxu0 %v2718
      %3649 = vmatprep.subr.bf16.mxu0 %v2711
      %3650 = vmatpush1.bf16.msra.mxu0 %v2710
      %3651 = vmatprep.subr.bf16.mxu0 %v2831
      %3652 = vmatpush2.bf16.msra.mxu0 %v2830
      %3653 = vmatprep.subr.bf16.mxu0 %v2823
      %3654 = vmatpush2.bf16.msra.mxu0 %v2822
      %3655 = vmatprep.subr.bf16.mxu0 %v2815
      %3656 = vmatpush2.bf16.msra.mxu0 %v2814
      %3657 = vmatprep.subr.bf16.mxu0 %v2807
      %3658 = vmatpush2.bf16.msra.mxu0 %v2806
      %3659 = vmatprep.subr.bf16.mxu0 %v2799
      %3660 = vmatpush2.bf16.msra.mxu0 %v2798
      %3661 = vmatprep.subr.bf16.mxu0 %v2791
      %3662 = vmatpush2.bf16.msra.mxu0 %v2790
      %3663 = vmatprep.subr.bf16.mxu0 %v2783
      %3664 = vmatpush2.bf16.msra.mxu0 %v2782
      %3665 = vmatprep.subr.bf16.mxu0 %v2775
      %3666 = vmatpush2.bf16.msra.mxu0 %v2774
      %3667 = vmatprep.mubr.bf16.mxu0 %v779
      %3668 = vmatmul.mubr.bf16.gmra.mxu0 %v778
      %v3669 = vpop.f32.mrf.mxu0
      %v3670 = vadd.f32 %v3629, %v3669
      %v3671 = vpop.f32.mrf.mxu0
      %v3672 = vadd.f32 %v3631, %v3671
      %v3673 = vpop.f32.mrf.mxu0
      %v3674 = vpop.f32.mrf.mxu0
      %3675 = vdwg.mxu0
      %3676 = vmatprep.subr.bf16.mxu0 %v2385
      %3677 = vmatpush1.bf16.msra.mxu0 %v2384
      %3678 = vmatprep.subr.bf16.mxu0 %v2377
      %3679 = vmatpush1.bf16.msra.mxu0 %v2376
      %3680 = vmatprep.subr.bf16.mxu0 %v2369
      %3681 = vmatpush1.bf16.msra.mxu0 %v2368
      %3682 = vmatprep.subr.bf16.mxu0 %v2361
      %3683 = vmatpush1.bf16.msra.mxu0 %v2360
      %3684 = vmatprep.subr.bf16.mxu0 %v2353
      %3685 = vmatpush1.bf16.msra.mxu0 %v2352
      %3686 = vmatprep.subr.bf16.mxu0 %v2345
      %3687 = vmatpush1.bf16.msra.mxu0 %v2344
      %3688 = vmatprep.subr.bf16.mxu0 %v2337
      %3689 = vmatpush1.bf16.msra.mxu0 %v2336
      %3690 = vmatprep.subr.bf16.mxu0 %v2329
      %3691 = vmatpush1.bf16.msra.mxu0 %v2328
      %3692 = vmatprep.subr.bf16.mxu0 %v2449
      %3693 = vmatpush2.bf16.msra.mxu0 %v2448
      %3694 = vmatprep.subr.bf16.mxu0 %v2441
      %3695 = vmatpush2.bf16.msra.mxu0 %v2440
      %3696 = vmatprep.subr.bf16.mxu0 %v2433
      %3697 = vmatpush2.bf16.msra.mxu0 %v2432
      %3698 = vmatprep.subr.bf16.mxu0 %v2425
      %3699 = vmatpush2.bf16.msra.mxu0 %v2424
      %3700 = vmatprep.subr.bf16.mxu0 %v2417
      %3701 = vmatpush2.bf16.msra.mxu0 %v2416
      %3702 = vmatprep.subr.bf16.mxu0 %v2409
      %3703 = vmatpush2.bf16.msra.mxu0 %v2408
      %3704 = vmatprep.subr.bf16.mxu0 %v2401
      %3705 = vmatpush2.bf16.msra.mxu0 %v2400
      %3706 = vmatprep.subr.bf16.mxu0 %v2393
      %3707 = vmatpush2.bf16.msra.mxu0 %v2392
      %3708 = vmatprep.mubr.bf16.mxu0 %v773
      %3709 = vmatmul.mubr.bf16.gmra.mxu0 %v772
      %v3710 = vpop.f32.mrf.mxu0
      %v3711 = vadd.f32 0.0, %v3710
      %v3712 = vpop.f32.mrf.mxu0
      %v3713 = vadd.f32 0.0, %v3712
      %v3714 = vpop.f32.mrf.mxu0
      %v3715 = vpop.f32.mrf.mxu0
      %3716 = vdwg.mxu0
      %3717 = vmatprep.subr.bf16.mxu0 %v2513
      %3718 = vmatpush1.bf16.msra.mxu0 %v2512
      %3719 = vmatprep.subr.bf16.mxu0 %v2505
      %3720 = vmatpush1.bf16.msra.mxu0 %v2504
      %3721 = vmatprep.subr.bf16.mxu0 %v2497
      %3722 = vmatpush1.bf16.msra.mxu0 %v2496
      %3723 = vmatprep.subr.bf16.mxu0 %v2489
      %3724 = vmatpush1.bf16.msra.mxu0 %v2488
      %3725 = vmatprep.subr.bf16.mxu0 %v2481
      %3726 = vmatpush1.bf16.msra.mxu0 %v2480
      %3727 = vmatprep.subr.bf16.mxu0 %v2473
      %3728 = vmatpush1.bf16.msra.mxu0 %v2472
      %3729 = vmatprep.subr.bf16.mxu0 %v2465
      %3730 = vmatpush1.bf16.msra.mxu0 %v2464
      %3731 = vmatprep.subr.bf16.mxu0 %v2457
      %3732 = vmatpush1.bf16.msra.mxu0 %v2456
      %3733 = vmatprep.subr.bf16.mxu0 %v2577
      %3734 = vmatpush2.bf16.msra.mxu0 %v2576
      %3735 = vmatprep.subr.bf16.mxu0 %v2569
      %3736 = vmatpush2.bf16.msra.mxu0 %v2568
      %3737 = vmatprep.subr.bf16.mxu0 %v2561
      %3738 = vmatpush2.bf16.msra.mxu0 %v2560
      %3739 = vmatprep.subr.bf16.mxu0 %v2553
      %3740 = vmatpush2.bf16.msra.mxu0 %v2552
      %3741 = vmatprep.subr.bf16.mxu0 %v2545
      %3742 = vmatpush2.bf16.msra.mxu0 %v2544
      %3743 = vmatprep.subr.bf16.mxu0 %v2537
      %3744 = vmatpush2.bf16.msra.mxu0 %v2536
      %3745 = vmatprep.subr.bf16.mxu0 %v2529
      %3746 = vmatpush2.bf16.msra.mxu0 %v2528
      %3747 = vmatprep.subr.bf16.mxu0 %v2521
      %3748 = vmatpush2.bf16.msra.mxu0 %v2520
      %3749 = vmatprep.mubr.bf16.mxu0 %v775
      %3750 = vmatmul.mubr.bf16.gmra.mxu0 %v774
      %v3751 = vpop.f32.mrf.mxu0
      %v3752 = vadd.f32 %v3711, %v3751
      %v3753 = vpop.f32.mrf.mxu0
      %v3754 = vadd.f32 %v3713, %v3753
      %v3755 = vpop.f32.mrf.mxu0
      %v3756 = vpop.f32.mrf.mxu0
      %3757 = vdwg.mxu0
      %3758 = vmatprep.subr.bf16.mxu0 %v2641
      %3759 = vmatpush1.bf16.msra.mxu0 %v2640
      %3760 = vmatprep.subr.bf16.mxu0 %v2633
      %3761 = vmatpush1.bf16.msra.mxu0 %v2632
      %3762 = vmatprep.subr.bf16.mxu0 %v2625
      %3763 = vmatpush1.bf16.msra.mxu0 %v2624
      %3764 = vmatprep.subr.bf16.mxu0 %v2617
      %3765 = vmatpush1.bf16.msra.mxu0 %v2616
      %3766 = vmatprep.subr.bf16.mxu0 %v2609
      %3767 = vmatpush1.bf16.msra.mxu0 %v2608
      %3768 = vmatprep.subr.bf16.mxu0 %v2601
      %3769 = vmatpush1.bf16.msra.mxu0 %v2600
      %3770 = vmatprep.subr.bf16.mxu0 %v2593
      %3771 = vmatpush1.bf16.msra.mxu0 %v2592
      %3772 = vmatprep.subr.bf16.mxu0 %v2585
      %3773 = vmatpush1.bf16.msra.mxu0 %v2584
      %3774 = vmatprep.subr.bf16.mxu0 %v2705
      %3775 = vmatpush2.bf16.msra.mxu0 %v2704
      %3776 = vmatprep.subr.bf16.mxu0 %v2697
      %3777 = vmatpush2.bf16.msra.mxu0 %v2696
      %3778 = vmatprep.subr.bf16.mxu0 %v2689
      %3779 = vmatpush2.bf16.msra.mxu0 %v2688
      %3780 = vmatprep.subr.bf16.mxu0 %v2681
      %3781 = vmatpush2.bf16.msra.mxu0 %v2680
      %3782 = vmatprep.subr.bf16.mxu0 %v2673
      %3783 = vmatpush2.bf16.msra.mxu0 %v2672
      %3784 = vmatprep.subr.bf16.mxu0 %v2665
      %3785 = vmatpush2.bf16.msra.mxu0 %v2664
      %3786 = vmatprep.subr.bf16.mxu0 %v2657
      %3787 = vmatpush2.bf16.msra.mxu0 %v2656
      %3788 = vmatprep.subr.bf16.mxu0 %v2649
      %3789 = vmatpush2.bf16.msra.mxu0 %v2648
      %3790 = vmatprep.mubr.bf16.mxu0 %v777
      %3791 = vmatmul.mubr.bf16.gmra.mxu0 %v776
      %v3792 = vpop.f32.mrf.mxu0
      %v3793 = vadd.f32 %v3752, %v3792
      %v3794 = vpop.f32.mrf.mxu0
      %v3795 = vadd.f32 %v3754, %v3794
      %v3796 = vpop.f32.mrf.mxu0
      %v3797 = vpop.f32.mrf.mxu0
      %3798 = vdwg.mxu0
      %3799 = vmatprep.subr.bf16.mxu0 %v2769
      %3800 = vmatpush1.bf16.msra.mxu0 %v2768
      %3801 = vmatprep.subr.bf16.mxu0 %v2761
      %3802 = vmatpush1.bf16.msra.mxu0 %v2760
      %3803 = vmatprep.subr.bf16.mxu0 %v2753
      %3804 = vmatpush1.bf16.msra.mxu0 %v2752
      %3805 = vmatprep.subr.bf16.mxu0 %v2745
      %3806 = vmatpush1.bf16.msra.mxu0 %v2744
      %3807 = vmatprep.subr.bf16.mxu0 %v2737
      %3808 = vmatpush1.bf16.msra.mxu0 %v2736
      %3809 = vmatprep.subr.bf16.mxu0 %v2729
      %3810 = vmatpush1.bf16.msra.mxu0 %v2728
      %3811 = vmatprep.subr.bf16.mxu0 %v2721
      %3812 = vmatpush1.bf16.msra.mxu0 %v2720
      %3813 = vmatprep.subr.bf16.mxu0 %v2713
      %3814 = vmatpush1.bf16.msra.mxu0 %v2712
      %3815 = vmatprep.subr.bf16.mxu0 %v2833
      %3816 = vmatpush2.bf16.msra.mxu0 %v2832
      %3817 = vmatprep.subr.bf16.mxu0 %v2825
      %3818 = vmatpush2.bf16.msra.mxu0 %v2824
      %3819 = vmatprep.subr.bf16.mxu0 %v2817
      %3820 = vmatpush2.bf16.msra.mxu0 %v2816
      %3821 = vmatprep.subr.bf16.mxu0 %v2809
      %3822 = vmatpush2.bf16.msra.mxu0 %v2808
      %3823 = vmatprep.subr.bf16.mxu0 %v2801
      %3824 = vmatpush2.bf16.msra.mxu0 %v2800
      %3825 = vmatprep.subr.bf16.mxu0 %v2793
      %3826 = vmatpush2.bf16.msra.mxu0 %v2792
      %3827 = vmatprep.subr.bf16.mxu0 %v2785
      %3828 = vmatpush2.bf16.msra.mxu0 %v2784
      %3829 = vmatprep.subr.bf16.mxu0 %v2777
      %3830 = vmatpush2.bf16.msra.mxu0 %v2776
      %3831 = vmatprep.mubr.bf16.mxu0 %v779
      %3832 = vmatmul.mubr.bf16.gmra.mxu0 %v778
      %v3833 = vpop.f32.mrf.mxu0
      %v3834 = vadd.f32 %v3793, %v3833
      %v3835 = vpop.f32.mrf.mxu0
      %v3836 = vadd.f32 %v3795, %v3835
      %v3837 = vpop.f32.mrf.mxu0
      %v3838 = vpop.f32.mrf.mxu0
      %3839 = vdwg.mxu0
      %3840 = vmatprep.subr.bf16.mxu0 %v2387
      %3841 = vmatpush1.bf16.msra.mxu0 %v2386
      %3842 = vmatprep.subr.bf16.mxu0 %v2379
      %3843 = vmatpush1.bf16.msra.mxu0 %v2378
      %3844 = vmatprep.subr.bf16.mxu0 %v2371
      %3845 = vmatpush1.bf16.msra.mxu0 %v2370
      %3846 = vmatprep.subr.bf16.mxu0 %v2363
      %3847 = vmatpush1.bf16.msra.mxu0 %v2362
      %3848 = vmatprep.subr.bf16.mxu0 %v2355
      %3849 = vmatpush1.bf16.msra.mxu0 %v2354
      %3850 = vmatprep.subr.bf16.mxu0 %v2347
      %3851 = vmatpush1.bf16.msra.mxu0 %v2346
      %3852 = vmatprep.subr.bf16.mxu0 %v2339
      %3853 = vmatpush1.bf16.msra.mxu0 %v2338
      %3854 = vmatprep.subr.bf16.mxu0 %v2331
      %3855 = vmatpush1.bf16.msra.mxu0 %v2330
      %3856 = vmatprep.subr.bf16.mxu0 %v2451
      %3857 = vmatpush2.bf16.msra.mxu0 %v2450
      %3858 = vmatprep.subr.bf16.mxu0 %v2443
      %3859 = vmatpush2.bf16.msra.mxu0 %v2442
      %3860 = vmatprep.subr.bf16.mxu0 %v2435
      %3861 = vmatpush2.bf16.msra.mxu0 %v2434
      %3862 = vmatprep.subr.bf16.mxu0 %v2427
      %3863 = vmatpush2.bf16.msra.mxu0 %v2426
      %3864 = vmatprep.subr.bf16.mxu0 %v2419
      %3865 = vmatpush2.bf16.msra.mxu0 %v2418
      %3866 = vmatprep.subr.bf16.mxu0 %v2411
      %3867 = vmatpush2.bf16.msra.mxu0 %v2410
      %3868 = vmatprep.subr.bf16.mxu0 %v2403
      %3869 = vmatpush2.bf16.msra.mxu0 %v2402
      %3870 = vmatprep.subr.bf16.mxu0 %v2395
      %3871 = vmatpush2.bf16.msra.mxu0 %v2394
      %3872 = vmatprep.mubr.bf16.mxu0 %v773
      %3873 = vmatmul.mubr.bf16.gmra.mxu0 %v772
      %v3874 = vpop.f32.mrf.mxu0
      %v3875 = vadd.f32 0.0, %v3874
      %v3876 = vpop.f32.mrf.mxu0
      %v3877 = vadd.f32 0.0, %v3876
      %v3878 = vpop.f32.mrf.mxu0
      %v3879 = vpop.f32.mrf.mxu0
      %3880 = vdwg.mxu0
      %3881 = vmatprep.subr.bf16.mxu0 %v2515
      %3882 = vmatpush1.bf16.msra.mxu0 %v2514
      %3883 = vmatprep.subr.bf16.mxu0 %v2507
      %3884 = vmatpush1.bf16.msra.mxu0 %v2506
      %3885 = vmatprep.subr.bf16.mxu0 %v2499
      %3886 = vmatpush1.bf16.msra.mxu0 %v2498
      %3887 = vmatprep.subr.bf16.mxu0 %v2491
      %3888 = vmatpush1.bf16.msra.mxu0 %v2490
      %3889 = vmatprep.subr.bf16.mxu0 %v2483
      %3890 = vmatpush1.bf16.msra.mxu0 %v2482
      %3891 = vmatprep.subr.bf16.mxu0 %v2475
      %3892 = vmatpush1.bf16.msra.mxu0 %v2474
      %3893 = vmatprep.subr.bf16.mxu0 %v2467
      %3894 = vmatpush1.bf16.msra.mxu0 %v2466
      %3895 = vmatprep.subr.bf16.mxu0 %v2459
      %3896 = vmatpush1.bf16.msra.mxu0 %v2458
      %3897 = vmatprep.subr.bf16.mxu0 %v2579
      %3898 = vmatpush2.bf16.msra.mxu0 %v2578
      %3899 = vmatprep.subr.bf16.mxu0 %v2571
      %3900 = vmatpush2.bf16.msra.mxu0 %v2570
      %3901 = vmatprep.subr.bf16.mxu0 %v2563
      %3902 = vmatpush2.bf16.msra.mxu0 %v2562
      %3903 = vmatprep.subr.bf16.mxu0 %v2555
      %3904 = vmatpush2.bf16.msra.mxu0 %v2554
      %3905 = vmatprep.subr.bf16.mxu0 %v2547
      %3906 = vmatpush2.bf16.msra.mxu0 %v2546
      %3907 = vmatprep.subr.bf16.mxu0 %v2539
      %3908 = vmatpush2.bf16.msra.mxu0 %v2538
      %3909 = vmatprep.subr.bf16.mxu0 %v2531
      %3910 = vmatpush2.bf16.msra.mxu0 %v2530
      %3911 = vmatprep.subr.bf16.mxu0 %v2523
      %3912 = vmatpush2.bf16.msra.mxu0 %v2522
      %3913 = vmatprep.mubr.bf16.mxu0 %v775
      %3914 = vmatmul.mubr.bf16.gmra.mxu0 %v774
      %v3915 = vpop.f32.mrf.mxu0
      %v3916 = vadd.f32 %v3875, %v3915
      %v3917 = vpop.f32.mrf.mxu0
      %v3918 = vadd.f32 %v3877, %v3917
      %v3919 = vpop.f32.mrf.mxu0
      %v3920 = vpop.f32.mrf.mxu0
      %3921 = vdwg.mxu0
      %3922 = vmatprep.subr.bf16.mxu0 %v2643
      %3923 = vmatpush1.bf16.msra.mxu0 %v2642
      %3924 = vmatprep.subr.bf16.mxu0 %v2635
      %3925 = vmatpush1.bf16.msra.mxu0 %v2634
      %3926 = vmatprep.subr.bf16.mxu0 %v2627
      %3927 = vmatpush1.bf16.msra.mxu0 %v2626
      %3928 = vmatprep.subr.bf16.mxu0 %v2619
      %3929 = vmatpush1.bf16.msra.mxu0 %v2618
      %3930 = vmatprep.subr.bf16.mxu0 %v2611
      %3931 = vmatpush1.bf16.msra.mxu0 %v2610
      %3932 = vmatprep.subr.bf16.mxu0 %v2603
      %3933 = vmatpush1.bf16.msra.mxu0 %v2602
      %3934 = vmatprep.subr.bf16.mxu0 %v2595
      %3935 = vmatpush1.bf16.msra.mxu0 %v2594
      %3936 = vmatprep.subr.bf16.mxu0 %v2587
      %3937 = vmatpush1.bf16.msra.mxu0 %v2586
      %3938 = vmatprep.subr.bf16.mxu0 %v2707
      %3939 = vmatpush2.bf16.msra.mxu0 %v2706
      %3940 = vmatprep.subr.bf16.mxu0 %v2699
      %3941 = vmatpush2.bf16.msra.mxu0 %v2698
      %3942 = vmatprep.subr.bf16.mxu0 %v2691
      %3943 = vmatpush2.bf16.msra.mxu0 %v2690
      %3944 = vmatprep.subr.bf16.mxu0 %v2683
      %3945 = vmatpush2.bf16.msra.mxu0 %v2682
      %3946 = vmatprep.subr.bf16.mxu0 %v2675
      %3947 = vmatpush2.bf16.msra.mxu0 %v2674
      %3948 = vmatprep.subr.bf16.mxu0 %v2667
      %3949 = vmatpush2.bf16.msra.mxu0 %v2666
      %3950 = vmatprep.subr.bf16.mxu0 %v2659
      %3951 = vmatpush2.bf16.msra.mxu0 %v2658
      %3952 = vmatprep.subr.bf16.mxu0 %v2651
      %3953 = vmatpush2.bf16.msra.mxu0 %v2650
      %3954 = vmatprep.mubr.bf16.mxu0 %v777
      %3955 = vmatmul.mubr.bf16.gmra.mxu0 %v776
      %v3956 = vpop.f32.mrf.mxu0
      %v3957 = vadd.f32 %v3916, %v3956
      %v3958 = vpop.f32.mrf.mxu0
      %v3959 = vadd.f32 %v3918, %v3958
      %v3960 = vpop.f32.mrf.mxu0
      %v3961 = vpop.f32.mrf.mxu0
      %3962 = vdwg.mxu0
      %3963 = vmatprep.subr.bf16.mxu0 %v2771
      %3964 = vmatpush1.bf16.msra.mxu0 %v2770
      %3965 = vmatprep.subr.bf16.mxu0 %v2763
      %3966 = vmatpush1.bf16.msra.mxu0 %v2762
      %3967 = vmatprep.subr.bf16.mxu0 %v2755
      %3968 = vmatpush1.bf16.msra.mxu0 %v2754
      %3969 = vmatprep.subr.bf16.mxu0 %v2747
      %3970 = vmatpush1.bf16.msra.mxu0 %v2746
      %3971 = vmatprep.subr.bf16.mxu0 %v2739
      %3972 = vmatpush1.bf16.msra.mxu0 %v2738
      %3973 = vmatprep.subr.bf16.mxu0 %v2731
      %3974 = vmatpush1.bf16.msra.mxu0 %v2730
      %3975 = vmatprep.subr.bf16.mxu0 %v2723
      %3976 = vmatpush1.bf16.msra.mxu0 %v2722
      %3977 = vmatprep.subr.bf16.mxu0 %v2715
      %3978 = vmatpush1.bf16.msra.mxu0 %v2714
      %3979 = vmatprep.subr.bf16.mxu0 %v2835
      %3980 = vmatpush2.bf16.msra.mxu0 %v2834
      %3981 = vmatprep.subr.bf16.mxu0 %v2827
      %3982 = vmatpush2.bf16.msra.mxu0 %v2826
      %3983 = vmatprep.subr.bf16.mxu0 %v2819
      %3984 = vmatpush2.bf16.msra.mxu0 %v2818
      %3985 = vmatprep.subr.bf16.mxu0 %v2811
      %3986 = vmatpush2.bf16.msra.mxu0 %v2810
      %3987 = vmatprep.subr.bf16.mxu0 %v2803
      %3988 = vmatpush2.bf16.msra.mxu0 %v2802
      %3989 = vmatprep.subr.bf16.mxu0 %v2795
      %3990 = vmatpush2.bf16.msra.mxu0 %v2794
      %3991 = vmatprep.subr.bf16.mxu0 %v2787
      %3992 = vmatpush2.bf16.msra.mxu0 %v2786
      %3993 = vmatprep.subr.bf16.mxu0 %v2779
      %3994 = vmatpush2.bf16.msra.mxu0 %v2778
      %3995 = vmatprep.mubr.bf16.mxu0 %v779
      %3996 = vmatmul.mubr.bf16.gmra.mxu0 %v778
      %v3997 = vpop.f32.mrf.mxu0
      %v3998 = vadd.f32 %v3957, %v3997
      %v3999 = vpop.f32.mrf.mxu0
      %v4000 = vadd.f32 %v3959, %v3999
      %v4001 = vpop.f32.mrf.mxu0
      %v4002 = vpop.f32.mrf.mxu0
      %4003 = vdwg.mxu0
      %v4004 = vadd.f32 %v236, %v3506
      %v4005 = vadd.f32 %v237, %v3508
      %v4006 = vadd.f32 %v238, %v3670
      %v4007 = vadd.f32 %v239, %v3672
      %v4008 = vadd.f32 %v240, %v3834
      %v4009 = vadd.f32 %v241, %v3836
      %v4010 = vadd.f32 %v242, %v3998
      %v4011 = vadd.f32 %v243, %v4000
      %4012 = vst [vmem:[#allocation2] sm:$0xff] %v4004
      %4013 = vst [vmem:[#allocation2 + $0x8] sm:$0xff] %v4005
      %4014 = vst [vmem:[#allocation2 + $0x10] sm:$0xff] %v4006
      %4015 = vst [vmem:[#allocation2 + $0x18] sm:$0xff] %v4007
      %4016 = vst [vmem:[#allocation2 + $0x20] sm:$0xff] %v4008
      %4017 = vst [vmem:[#allocation2 + $0x28] sm:$0xff] %v4009
      %4018 = vst [vmem:[#allocation2 + $0x30] sm:$0xff] %v4010
      %4019 = vst [vmem:[#allocation2 + $0x38] sm:$0xff] %v4011
      %p4020 = scmp.eq.s32.totalorder %s19, 2
      // Predicated region
      $region37: #{_forward_impl.7} parent=31 // pred_check
        %p4021 = pneg %p4020
      $region38: #{_forward_impl.7} parent=31 // pred_check_branch
        %4023 = sbr.rel (%p4021) target = $region40
      $region39: #{_forward_impl.7} parent=31 // pred_region
        %v4024 = vld [vmem:[#allocation2] sm:$0xff]
        %v4025 = vld [vmem:[#allocation2 + $0x8] sm:$0xff]
        %v4026 = vld [vmem:[#allocation2 + $0x10] sm:$0xff]
        %v4027 = vld [vmem:[#allocation2 + $0x18] sm:$0xff]
        %v4028 = vld [vmem:[#allocation2 + $0x20] sm:$0xff]
        %v4029 = vld [vmem:[#allocation2 + $0x28] sm:$0xff]
        %v4030 = vld [vmem:[#allocation2 + $0x30] sm:$0xff]
        %v4031 = vld [vmem:[#allocation2 + $0x38] sm:$0xff]
        %v4032 = vld [vmem:[%s2] sm:$0xff]
        %v4034 = vlaneseq
        %v4035 = vshrl.u32 %v4034, 7
        %v4036 = vsub.s32 0, %v4035
        %v4037 = vrot.slane %v4032, %v4036
        %v4038 = vlaneseq
        %v4039 = vshrl.u32 %v4038, 7
        %v4040 = vsub.s32 1, %v4039
        %v4041 = vrot.slane %v4032, %v4040
        %v4042 = vlaneseq
        %v4043 = vshrl.u32 %v4042, 7
        %v4044 = vsub.s32 2, %v4043
        %v4045 = vrot.slane %v4032, %v4044
        %v4046 = vlaneseq
        %v4047 = vshrl.u32 %v4046, 7
        %v4048 = vsub.s32 3, %v4047
        %v4049 = vrot.slane %v4032, %v4048
        %v4050 = vlaneseq
        %v4051 = vshrl.u32 %v4050, 7
        %v4052 = vsub.s32 4, %v4051
        %v4053 = vrot.slane %v4032, %v4052
        %v4054 = vlaneseq
        %v4055 = vshrl.u32 %v4054, 7
        %v4056 = vsub.s32 5, %v4055
        %v4057 = vrot.slane %v4032, %v4056
        %v4058 = vlaneseq
        %v4059 = vshrl.u32 %v4058, 7
        %v4060 = vsub.s32 6, %v4059
        %v4061 = vrot.slane %v4032, %v4060
        %v4062 = vlaneseq
        %v4063 = vshrl.u32 %v4062, 7
        %v4064 = vsub.s32 7, %v4063
        %v4065 = vrot.slane %v4032, %v4064
        %v4074 = vadd.f32 %v4024, %v4037
        %v4075 = vadd.f32 %v4025, %v4041
        %v4076 = vadd.f32 %v4026, %v4045
        %v4077 = vadd.f32 %v4027, %v4049
        %v4078 = vadd.f32 %v4028, %v4053
        %v4079 = vadd.f32 %v4029, %v4057
        %v4080 = vadd.f32 %v4030, %v4061
        %v4081 = vadd.f32 %v4031, %v4065
        %v4082 = vmax.f32 %v4074, 0.0
        %v4083 = vmax.f32 %v4075, 0.0
        %v4084 = vmax.f32 %v4076, 0.0
        %v4085 = vmax.f32 %v4077, 0.0
        %v4086 = vmax.f32 %v4078, 0.0
        %v4087 = vmax.f32 %v4079, 0.0
        %v4088 = vmax.f32 %v4080, 0.0
        %v4089 = vmax.f32 %v4081, 0.0
        %4090 = vst [vmem:[%s223] sm:$0xff] %v4082
        %4091 = vst [vmem:[%s223 + $0x8] sm:$0xff] %v4083
        %4092 = vst [vmem:[%s223 + $0x10] sm:$0xff] %v4084
        %4093 = vst [vmem:[%s223 + $0x18] sm:$0xff] %v4085
        %4094 = vst [vmem:[%s223 + $0x20] sm:$0xff] %v4086
        %4095 = vst [vmem:[%s223 + $0x28] sm:$0xff] %v4087
        %4096 = vst [vmem:[%s223 + $0x30] sm:$0xff] %v4088
        %4097 = vst [vmem:[%s223 + $0x38] sm:$0xff] %v4089
      $region40: #{_forward_impl.7} parent=31 // pred_fallthru
        _
      %p4098 = scmp.lt.s32.totalorder %s18, 0
      %s4099 = scalar_select %p4098, %s18, 0
      %s4100 = smul.addr %s4099, 8
      %s4101 = smul.addr %s4100, 8
      %s4102 = scalar_lea.vmem %s3, %s4101
      // Predicated region
      $region41: #{_forward_impl.7} parent=31 // pred_check
        %p4103 = pneg %p119
      $region42: #{_forward_impl.7} parent=31 // pred_check_branch
        %4105 = sbr.rel (%p4103) target = $region44
      $region43: #{_forward_impl.7} parent=31 // pred_region
        _
      $region44: #{_forward_impl.7} parent=31 // pred_fallthru
        _
      // Predicated region
      $region45: #{_forward_impl.7} parent=31 // pred_check
        %p4106 = pneg %p119
      $region46: #{_forward_impl.7} parent=31 // pred_check_branch
        %4108 = sbr.rel (%p4106) target = $region48
      $region47: #{_forward_impl.7} parent=31 // pred_region
        %p4109 = scmp.lt.s32.totalorder %s18, 0
        %s4110 = scalar_select %p4109, %s18, 0
        %s4111 = smul.addr %s4110, 8
        %s4112 = smul.addr %s4111, 8
        %s4113 = scalar_lea.vmem %s3, %s4112
      $region48: #{_forward_impl.7} parent=31 // pred_fallthru
        _
    $region32: #{_forward_impl.7} parent=5 // pred_fallthru
      _
    %p4114 = scmp.le.s32.totalorder 2, %s9
    // Predicated region
    $region49: #{_forward_impl.7} parent=5 // pred_check
      %p4115 = pneg %p4114
    $region50: #{_forward_impl.7} parent=5 // pred_check_branch
      %4117 = sbr.rel (%p4115) target = $region52
    $region51: #{_forward_impl.7} parent=5 // pred_region
      %s4118 = ssub.s32 %s9, 2
    $region52: #{_forward_impl.7} parent=5 // pred_fallthru
      _
  $region6: #{_forward_impl.7} parent=0 // loop_footer
    %s13 = sadd.s32 1, %s9
  $region7: #{_forward_impl.7} parent=0 // loop_footer_branch
    %8 = sbr.rel target = $region3
  $region8: #{_forward_impl.7} parent=0 // loop_exit
    _

// kernel: _forward_impl.8
$region0: #{_forward_impl.8}
  #allocation0 [shape = 'u32[]', space=smem, size = 0x4, offset = 0x4, fixed_abs, tag = 'smem constant byte address 0x4 - core index']
  #allocation1 [shape = 'u32[144,128]{1,0:T(1,128)}', space=vmem, size = 0x12000, scoped, tag = 'internal scratch']
  #allocation2 [shape = 'f32[16,512]{1,0:T(8,128)}', space=vmem, size = 0x8000, scoped, tag = 'scratch operand']
  %s0 = inlined_call_operand.vmem [shape: bf16[32,2304], index: 0, kind: input, shape index: {}]
  %s1 = inlined_call_operand.vmem [shape: bf16[2304,512], index: 1, kind: input, shape index: {}]
  %s2 = inlined_call_operand.vmem [shape: f32[1,512], index: 2, kind: input, shape index: {}]
  %s3 = inlined_call_operand.vmem [shape: f32[32,512], index: 3, kind: output, shape index: {}]
  %s4 = sld [smem:[#allocation0]]
  $region76: #{_forward_impl.8} parent=0
    _
  %s6 = ssub.s32 1, %s4
  %s7 = scalar_select 0, %s6, %s4
  $region1: #{_forward_impl.8} parent=0
    #allocation3 [shape = 'u8[49152]{0}', space=vmem, size = 0xc000, scoped, tag = 'input window, operand 0']
    loop: start=0, step=1, limit=8
    $region2: #{_forward_impl.8} parent=1 // loop_pre_header
      _
    $region3: #{_forward_impl.8} parent=1 // loop_header
      %s9 = sphi 0, %s13
      %p10 = scmp.ge.s32.totalorder %s9, 8
      %s16 = sphi 0, %s28
      %s17 = sphi 0, %s24
      %s18 = sphi 0, %s16
      %s19 = sphi 0, %s17
      %s20 = sphi 0, %s18
      %s21 = sphi 0, %s19
      %s33 = sphi 0, %s35
      %s36 = sphi 0, %s33
      %s37 = sphi 0, %s36
      %s53 = sphi 0, %s37
      %s59 = sphi 0, %s61
      %s62 = sphi 0, %s59
      %s63 = sphi 0, %s62
      %s79 = sphi 0, %s63
      %s83 = sphi 0, %s83
      %s85 = sphi 0, %s83
      %s86 = sphi 0, %s85
      %s100 = sphi 0, %s86
      %s106 = sphi 0, %s108
      %s109 = sphi 0, %s106
      %s110 = sphi 0, %s109
      %s126 = sphi 0, %s110
    $region4: #{_forward_impl.8} parent=1 // loop_header_branch
      %12 = sbr.rel (%p10) target = $region8
    $region5: #{_forward_impl.8} parent=1 // loop_body
      %s14 = ssub.s32 %s9, 1
      %s15 = ssub.s32 %s9, 2
      %s22 = sadd.s32 1, %s17
      %p23 = scmp.ge.s32.totalorder %s22, 3
      %s24 = scalar_select %p23, 0, %s22
      %s25 = sadd.s32 1, %s16
      %s26 = scalar_select %p23, %s25, %s16
      %p27 = scmp.ge.s32.totalorder %s26, 2
      %s28 = scalar_select %p27, 0, %s26
      %s29 = ssub.s32 %s16, %s28
      %s30 = ssub.s32 %s17, %s24
      %s31 = sor.u32 %s29, %s30
      %p32 = scmp.eq.s32.totalorder %s31, 0
      %s34 = sadd.s32 %s33, 1
      %s35 = scalar_select %p32, %s33, %s34
      %p38 = pneg %p32
      %p39 = scmp.eq.s32.totalorder %s9, 5
      %p40 = por %p38, %p39
      %p41 = scmp.ne.s32.totalorder %s33, %s36
      %p42 = scmp.eq.s32.totalorder %s9, 0
      %p43 = por %p41, %p42
      %p44 = scmp.ne.s32.totalorder %s33, %s36
      %p45 = scmp.eq.s32.totalorder %s14, 5
      %p46 = por %p44, %p45
      %p47 = scmp.ne.s32.totalorder %s36, %s37
      %p48 = scmp.eq.s32.totalorder %s14, 0
      %p49 = por %p47, %p48
      %p50 = scmp.ne.s32.totalorder %s36, %s37
      %p51 = scmp.eq.s32.totalorder %s15, 5
      %p52 = por %p50, %p51
      %p54 = scmp.ne.s32.totalorder %s37, %s53
      %p55 = scmp.eq.s32.totalorder %s15, 0
      %p56 = por %p54, %p55
      %s57 = ssub.s32 %s17, %s24
      %p58 = scmp.eq.s32.totalorder %s57, 0
      %s60 = sadd.s32 %s59, 1
      %s61 = scalar_select %p58, %s59, %s60
      %p64 = pneg %p58
      %p65 = scmp.eq.s32.totalorder %s9, 5
      %p66 = por %p64, %p65
      %p67 = scmp.ne.s32.totalorder %s59, %s62
      %p68 = scmp.eq.s32.totalorder %s9, 0
      %p69 = por %p67, %p68
      %p70 = scmp.ne.s32.totalorder %s59, %s62
      %p71 = scmp.eq.s32.totalorder %s14, 5
      %p72 = por %p70, %p71
      %p73 = scmp.ne.s32.totalorder %s62, %s63
      %p74 = scmp.eq.s32.totalorder %s14, 0
      %p75 = por %p73, %p74
      %p76 = scmp.ne.s32.totalorder %s62, %s63
      %p77 = scmp.eq.s32.totalorder %s15, 5
      %p78 = por %p76, %p77
      %p80 = scmp.ne.s32.totalorder %s63, %s79
      %p81 = scmp.eq.s32.totalorder %s15, 0
      %p82 = por %p80, %p81
      %s84 = sadd.s32 %s83, 1
      %p87 = scmp.eq.s32.totalorder %s9, 5
      %p88 = scmp.ne.s32.totalorder %s83, %s85
      %p89 = scmp.eq.s32.totalorder %s9, 0
      %p90 = por %p88, %p89
      %p91 = scmp.ne.s32.totalorder %s83, %s85
      %p92 = scmp.eq.s32.totalorder %s14, 5
      %p93 = por %p91, %p92
      %p94 = scmp.ne.s32.totalorder %s85, %s86
      %p95 = scmp.eq.s32.totalorder %s14, 0
      %p96 = por %p94, %p95
      %p97 = scmp.ne.s32.totalorder %s85, %s86
      %p98 = scmp.eq.s32.totalorder %s15, 5
      %p99 = por %p97, %p98
      %p101 = scmp.ne.s32.totalorder %s86, %s100
      %p102 = scmp.eq.s32.totalorder %s15, 0
      %p103 = por %p101, %p102
      %s104 = ssub.s32 %s16, %s28
      %p105 = scmp.eq.s32.totalorder %s104, 0
      %s107 = sadd.s32 %s106, 1
      %s108 = scalar_select %p105, %s106, %s107
      %p111 = pneg %p105
      %p112 = scmp.eq.s32.totalorder %s9, 5
      %p113 = por %p111, %p112
      %p114 = scmp.ne.s32.totalorder %s106, %s109
      %p115 = scmp.eq.s32.totalorder %s9, 0
      %p116 = por %p114, %p115
      %p117 = scmp.ne.s32.totalorder %s106, %s109
      %p118 = scmp.eq.s32.totalorder %s14, 5
      %p119 = por %p117, %p118
      %p120 = scmp.ne.s32.totalorder %s109, %s110
      %p121 = scmp.eq.s32.totalorder %s14, 0
      %p122 = por %p120, %p121
      %p123 = scmp.ne.s32.totalorder %s109, %s110
      %p124 = scmp.eq.s32.totalorder %s15, 5
      %p125 = por %p123, %p124
      %p127 = scmp.ne.s32.totalorder %s110, %s126
      %p128 = scmp.eq.s32.totalorder %s15, 0
      %p129 = por %p127, %p128
      %p130 = scmp.le.s32.totalorder 1, %s9
      %p131 = scmp.lt.s32.totalorder %s9, 7
      %p132 = pnand %p130, %p131
      %p133 = pneg %p132
      // Predicated region
      $region9: #{_forward_impl.8} parent=5 // pred_check
        _
      $region10: #{_forward_impl.8} parent=5 // pred_check_branch
        %135 = sbr.rel (%p132) target = $region12
      $region11: #{_forward_impl.8} parent=5 // pred_region
        %s136 = ssub.s32 %s9, 1
        // Predicated region
        $region13: #{_forward_impl.8} parent=11 // pred_check
          %p137 = pneg %p96
        $region14: #{_forward_impl.8} parent=11 // pred_check_branch
          %139 = sbr.rel (%p137) target = $region16
        $region15: #{_forward_impl.8} parent=11 // pred_region
          _
        $region16: #{_forward_impl.8} parent=11 // pred_fallthru
          _
      $region12: #{_forward_impl.8} parent=5 // pred_fallthru
        _
      %p140 = scmp.lt.s32.totalorder %s9, 6
      // Predicated region
      $region17: #{_forward_impl.8} parent=5 // pred_check
        %p141 = pneg %p140
      $region18: #{_forward_impl.8} parent=5 // pred_check_branch
        %143 = sbr.rel (%p141) target = $region20
      $region19: #{_forward_impl.8} parent=5 // pred_region
        // Predicated region
        $region21: #{_forward_impl.8} parent=19 // pred_check
          %p144 = pneg %p43
        $region22: #{_forward_impl.8} parent=19 // pred_check_branch
          %146 = sbr.rel (%p144) target = $region24
        $region23: #{_forward_impl.8} parent=19 // pred_region
          %s147 = sand.u32 %s33, 1
          %s148 = sand.u32 %s33, 1
          %s149 = smul.addr %s148, 48
          %s150 = scalar_lea.vmem [#allocation3], %s149
          %s151 = smul.u32 2, %s16
          %s152 = smul.u32 6, %s17
          %s153 = smul.addr %s151, 18
          %s154 = sadd.s32 %s152, %s153
          %s155 = smul.addr %s154, 4
          %s156 = scalar_lea.vmem %s0, %s155
          // Predicated region
          $region25: #{_forward_impl.8} parent=23 // pred_check
            _
          $region26: #{_forward_impl.8} parent=23 // pred_check_branch
            %158 = sbr.rel (0) target = $region28
          $region27: #{_forward_impl.8} parent=23 // pred_region
            // Predicated region
            $region29: #{_forward_impl.8} parent=27 // pred_check
              _
            $region30: #{_forward_impl.8} parent=27 // pred_check_branch
              %160 = sbr.rel (0) target = $region32
            $region31: #{_forward_impl.8} parent=27 // pred_region
              loop: start=0, step=1, limit=1
              $region33: #{_forward_impl.8} parent=31 // loop_pre_header
                _
              $region34: #{_forward_impl.8} parent=31 // loop_header
                %s162 = sphi 0, %s166
                %p163 = scmp.ge.s32.totalorder %s162, 1
                %s167 = sphi %s156, %s156
                %s168 = sphi %s150, %s150
              $region35: #{_forward_impl.8} parent=31 // loop_header_branch
                %165 = sbr.rel (%p163) target = $region39
              $region36: #{_forward_impl.8} parent=31 // loop_body
                %v169 = vld [vmem:[%s167] sm:$0xff]
                %170 = vst [vmem:[%s168] sm:$0xff] %v169
                %v171 = vld [vmem:[%s167 + $0x8] sm:$0xff]
                %172 = vst [vmem:[%s168 + $0x8] sm:$0xff] %v171
                %v173 = vld [vmem:[%s167 + $0x10] sm:$0xff]
                %174 = vst [vmem:[%s168 + $0x10] sm:$0xff] %v173
                %v175 = vld [vmem:[%s167 + $0x48] sm:$0xff]
                %176 = vst [vmem:[%s168 + $0x18] sm:$0xff] %v175
                %v177 = vld [vmem:[%s167 + $0x50] sm:$0xff]
                %178 = vst [vmem:[%s168 + $0x20] sm:$0xff] %v177
                %v179 = vld [vmem:[%s167 + $0x58] sm:$0xff]
                %180 = vst [vmem:[%s168 + $0x28] sm:$0xff] %v179
              $region37: #{_forward_impl.8} parent=31 // loop_footer
                %s166 = sadd.s32 1, %s162
              $region38: #{_forward_impl.8} parent=31 // loop_footer_branch
                %161 = sbr.rel target = $region34
              $region39: #{_forward_impl.8} parent=31 // loop_exit
                _
            $region32: #{_forward_impl.8} parent=27 // pred_fallthru
              _
            // Predicated region
            $region40: #{_forward_impl.8} parent=27 // pred_check
              _
            $region41: #{_forward_impl.8} parent=27 // pred_check_branch
              %182 = sbr.rel target = $region43
            $region42: #{_forward_impl.8} parent=27 // pred_region
              _
            $region43: #{_forward_impl.8} parent=27 // pred_fallthru
              _
          $region28: #{_forward_impl.8} parent=23 // pred_fallthru
            _
          %183 = vnop
        $region24: #{_forward_impl.8} parent=19 // pred_fallthru
          _
        // Predicated region
        $region44: #{_forward_impl.8} parent=19 // pred_check
          %p184 = pneg %p69
        $region45: #{_forward_impl.8} parent=19 // pred_check_branch
          %186 = sbr.rel (%p184) target = $region47
        $region46: #{_forward_impl.8} parent=19 // pred_region
          %s187 = smul.u32 96, %s17
          %p188 = scmp.lt.s32.totalorder %s187, 287
          %s189 = scalar_select %p188, %s187, 287
          %s190 = smul.addr %s189, 4
          %s191 = smul.addr %s190, 4
          %s192 = scalar_lea.vmem %s1, %s191
          %s193 = smul.u32 96, %s17
        $region47: #{_forward_impl.8} parent=19 // pred_fallthru
          _
      $region20: #{_forward_impl.8} parent=5 // pred_fallthru
        _
      %p194 = scmp.le.s32.totalorder 1, %s9
      %p195 = scmp.lt.s32.totalorder %s9, 7
      %p196 = pnand %p194, %p195
      %p197 = pneg %p196
      // Predicated region
      $region48: #{_forward_impl.8} parent=5 // pred_check
        _
      $region49: #{_forward_impl.8} parent=5 // pred_check_branch
        %199 = sbr.rel (%p196) target = $region51
      $region50: #{_forward_impl.8} parent=5 // pred_region
        %s200 = ssub.s32 %s9, 1
        %s201 = sand.u32 %s36, 1
        %s202 = sand.u32 %s36, 1
        %s203 = smul.addr %s202, 48
        %s204 = scalar_lea.vmem [#allocation3], %s203
        // Predicated region
        $region52: #{_forward_impl.8} parent=50 // pred_check
          %p205 = pneg %p49
        $region53: #{_forward_impl.8} parent=50 // pred_check_branch
          %207 = sbr.rel (%p205) target = $region55
        $region54: #{_forward_impl.8} parent=50 // pred_region
          _
        $region55: #{_forward_impl.8} parent=50 // pred_fallthru
          _
        %s208 = sand.u32 %s36, 1
        %s209 = sand.u32 %s36, 1
        %s210 = smul.addr %s209, 48
        %s211 = scalar_lea.vmem [#allocation3], %s210
        %p212 = pneg %p49
        %p213 = pneg %p46
        %s214 = smul.u32 96, %s19
        %p215 = scmp.lt.s32.totalorder %s214, 287
        %s216 = scalar_select %p215, %s214, 287
        %s217 = smul.addr %s216, 4
        %s218 = smul.addr %s217, 4
        %s219 = scalar_lea.vmem %s1, %s218
        %p220 = pneg %p75
        %p221 = pneg %p72
        %p222 = pneg %p96
        %p223 = pneg %p93
        %p224 = pneg %p122
        %p225 = pneg %p119
        %s226 = smul.u32 2, %s18
        %p227 = scmp.lt.s32.totalorder %s226, 3
        %s228 = scalar_select %p227, %s226, 3
        %s229 = smul.addr %s228, 4
        %s230 = smul.addr %s229, 8
        %s231 = scalar_lea.vmem %s3, %s230
        %s232 = smul.u32 2, %s18
        %s233 = smul.u32 6, %s19
        %s234 = smul.u32 96, %s19
        %p235 = scmp.lt.s32.totalorder %s234, 287
        %s236 = scalar_select %p235, %s234, 287
        %s237 = smul.addr %s236, 4
        %s238 = smul.addr %s237, 4
        %s239 = scalar_lea.vmem %s1, %s238
        %s240 = smul.u32 96, %s19
        %s241 = smul.u32 2, %s18
        %p242 = scmp.lt.s32.totalorder %s241, 3
        %s243 = scalar_select %p242, %s241, 3
        %s244 = smul.addr %s243, 4
        %s245 = smul.addr %s244, 8
        %s246 = scalar_lea.vmem %s3, %s245
        %s247 = smul.u32 2, %s18
        %p248 = scmp.eq.s32.totalorder %s19, 0
        // Predicated region
        $region56: #{_forward_impl.8} parent=50 // pred_check
          %p249 = pneg %p248
        $region57: #{_forward_impl.8} parent=50 // pred_check_branch
          %251 = sbr.rel (%p249) target = $region59
        $region58: #{_forward_impl.8} parent=50 // pred_region
          %252 = vst [vmem:[#allocation2] sm:$0xff] 0.0
          %253 = vst [vmem:[#allocation2 + $0x8] sm:$0xff] 0.0
          %254 = vst [vmem:[#allocation2 + $0x10] sm:$0xff] 0.0
          %255 = vst [vmem:[#allocation2 + $0x18] sm:$0xff] 0.0
          %256 = vst [vmem:[#allocation2 + $0x20] sm:$0xff] 0.0
          %257 = vst [vmem:[#allocation2 + $0x28] sm:$0xff] 0.0
          %258 = vst [vmem:[#allocation2 + $0x30] sm:$0xff] 0.0
          %259 = vst [vmem:[#allocation2 + $0x38] sm:$0xff] 0.0
        $region59: #{_forward_impl.8} parent=50 // pred_fallthru
          _
        %v260 = vld [vmem:[#allocation2] sm:$0xff]
        %v261 = vld [vmem:[#allocation2 + $0x8] sm:$0xff]
        %v262 = vld [vmem:[#allocation2 + $0x10] sm:$0xff]
        %v263 = vld [vmem:[#allocation2 + $0x18] sm:$0xff]
        %v264 = vld [vmem:[#allocation2 + $0x20] sm:$0xff]
        %v265 = vld [vmem:[#allocation2 + $0x28] sm:$0xff]
        %v266 = vld [vmem:[#allocation2 + $0x30] sm:$0xff]
        %v267 = vld [vmem:[#allocation2 + $0x38] sm:$0xff]
        %v268 = vld [vmem:[%s204] sm:$0xff]
        %v269 = vld [vmem:[%s204 + $0x8] sm:$0xff]
        %v270 = vld [vmem:[%s204 + $0x10] sm:$0xff]
        %v271 = vld [vmem:[%s204 + $0x18] sm:$0xff]
        %v272 = vld [vmem:[%s204 + $0x20] sm:$0xff]
        %v273 = vld [vmem:[%s204 + $0x28] sm:$0xff]
        %v274 = vld [vmem:[%s239] sm:$0xff]
        %v275 = vld [vmem:[%s239 + $0x8] sm:$0xff]
        %v276 = vld [vmem:[%s239 + $0x10] sm:$0xff]
        %v277 = vld [vmem:[%s239 + $0x18] sm:$0xff]
        %v278 = vld [vmem:[%s239 + $0x20] sm:$0xff]
        %v279 = vld [vmem:[%s239 + $0x28] sm:$0xff]
        %v280 = vld [vmem:[%s239 + $0x30] sm:$0xff]
        %v281 = vld [vmem:[%s239 + $0x38] sm:$0xff]
        %v282 = vld [vmem:[%s239 + $0x40] sm:$0xff]
        %v283 = vld [vmem:[%s239 + $0x48] sm:$0xff]
        %v284 = vld [vmem:[%s239 + $0x50] sm:$0xff]
        %v285 = vld [vmem:[%s239 + $0x58] sm:$0xff]
        %v286 = vld [vmem:[%s239 + $0x60] sm:$0xff]
        %v287 = vld [vmem:[%s239 + $0x68] sm:$0xff]
        %v288 = vld [vmem:[%s239 + $0x70] sm:$0xff]
        %v289 = vld [vmem:[%s239 + $0x78] sm:$0xff]
        %v290 = vld [vmem:[%s239 + $0x80] sm:$0xff]
        %v291 = vld [vmem:[%s239 + $0x88] sm:$0xff]
        %v292 = vld [vmem:[%s239 + $0x90] sm:$0xff]
        %v293 = vld [vmem:[%s239 + $0x98] sm:$0xff]
        %v294 = vld [vmem:[%s239 + $0xa0] sm:$0xff]
        %v295 = vld [vmem:[%s239 + $0xa8] sm:$0xff]
        %v296 = vld [vmem:[%s239 + $0xb0] sm:$0xff]
        %v297 = vld [vmem:[%s239 + $0xb8] sm:$0xff]
        %v298 = vld [vmem:[%s239 + $0xc0] sm:$0xff]
        %v299 = vld [vmem:[%s239 + $0xc8] sm:$0xff]
        %v300 = vld [vmem:[%s239 + $0xd0] sm:$0xff]
        %v301 = vld [vmem:[%s239 + $0xd8] sm:$0xff]
        %v302 = vld [vmem:[%s239 + $0xe0] sm:$0xff]
        %v303 = vld [vmem:[%s239 + $0xe8] sm:$0xff]
        %v304 = vld [vmem:[%s239 + $0xf0] sm:$0xff]
        %v305 = vld [vmem:[%s239 + $0xf8] sm:$0xff]
        %v306 = vld [vmem:[%s239 + $0x100] sm:$0xff]
        %v307 = vld [vmem:[%s239 + $0x108] sm:$0xff]
        %v308 = vld [vmem:[%s239 + $0x110] sm:$0xff]
        %v309 = vld [vmem:[%s239 + $0x118] sm:$0xff]
        %v310 = vld [vmem:[%s239 + $0x120] sm:$0xff]
        %v311 = vld [vmem:[%s239 + $0x128] sm:$0xff]
        %v312 = vld [vmem:[%s239 + $0x130] sm:$0xff]
        %v313 = vld [vmem:[%s239 + $0x138] sm:$0xff]
        %v314 = vld [vmem:[%s239 + $0x140] sm:$0xff]
        %v315 = vld [vmem:[%s239 + $0x148] sm:$0xff]
        %v316 = vld [vmem:[%s239 + $0x150] sm:$0xff]
        %v317 = vld [vmem:[%s239 + $0x158] sm:$0xff]
        %v318 = vld [vmem:[%s239 + $0x160] sm:$0xff]
        %v319 = vld [vmem:[%s239 + $0x168] sm:$0xff]
        %v320 = vld [vmem:[%s239 + $0x170] sm:$0xff]
        %v321 = vld [vmem:[%s239 + $0x178] sm:$0xff]
        %v322 = vld [vmem:[%s239 + $0x180] sm:$0xff]
        %v323 = vld [vmem:[%s239 + $0x188] sm:$0xff]
        %v324 = vld [vmem:[%s239 + $0x190] sm:$0xff]
        %v325 = vld [vmem:[%s239 + $0x198] sm:$0xff]
        %v326 = vld [vmem:[%s239 + $0x1a0] sm:$0xff]
        %v327 = vld [vmem:[%s239 + $0x1a8] sm:$0xff]
        %v328 = vld [vmem:[%s239 + $0x1b0] sm:$0xff]
        %v329 = vld [vmem:[%s239 + $0x1b8] sm:$0xff]
        %v330 = vld [vmem:[%s239 + $0x1c0] sm:$0xff]
        %v331 = vld [vmem:[%s239 + $0x1c8] sm:$0xff]
        %v332 = vld [vmem:[%s239 + $0x1d0] sm:$0xff]
        %v333 = vld [vmem:[%s239 + $0x1d8] sm:$0xff]
        %v334 = vld [vmem:[%s239 + $0x1e0] sm:$0xff]
        %v335 = vld [vmem:[%s239 + $0x1e8] sm:$0xff]
        %v336 = vld [vmem:[%s239 + $0x1f0] sm:$0xff]
        %v337 = vld [vmem:[%s239 + $0x1f8] sm:$0xff]
        %v338 = vld [vmem:[%s239 + $0x200] sm:$0xff]
        %v339 = vld [vmem:[%s239 + $0x208] sm:$0xff]
        %v340 = vld [vmem:[%s239 + $0x210] sm:$0xff]
        %v341 = vld [vmem:[%s239 + $0x218] sm:$0xff]
        %v342 = vld [vmem:[%s239 + $0x220] sm:$0xff]
        %v343 = vld [vmem:[%s239 + $0x228] sm:$0xff]
        %v344 = vld [vmem:[%s239 + $0x230] sm:$0xff]
        %v345 = vld [vmem:[%s239 + $0x238] sm:$0xff]
        %v346 = vld [vmem:[%s239 + $0x240] sm:$0xff]
        %v347 = vld [vmem:[%s239 + $0x248] sm:$0xff]
        %v348 = vld [vmem:[%s239 + $0x250] sm:$0xff]
        %v349 = vld [vmem:[%s239 + $0x258] sm:$0xff]
        %v350 = vld [vmem:[%s239 + $0x260] sm:$0xff]
        %v351 = vld [vmem:[%s239 + $0x268] sm:$0xff]
        %v352 = vld [vmem:[%s239 + $0x270] sm:$0xff]
        %v353 = vld [vmem:[%s239 + $0x278] sm:$0xff]
        %v354 = vld [vmem:[%s239 + $0x280] sm:$0xff]
        %v355 = vld [vmem:[%s239 + $0x288] sm:$0xff]
        %v356 = vld [vmem:[%s239 + $0x290] sm:$0xff]
        %v357 = vld [vmem:[%s239 + $0x298] sm:$0xff]
        %v358 = vld [vmem:[%s239 + $0x2a0] sm:$0xff]
        %v359 = vld [vmem:[%s239 + $0x2a8] sm:$0xff]
        %v360 = vld [vmem:[%s239 + $0x2b0] sm:$0xff]
        %v361 = vld [vmem:[%s239 + $0x2b8] sm:$0xff]
        %v362 = vld [vmem:[%s239 + $0x2c0] sm:$0xff]
        %v363 = vld [vmem:[%s239 + $0x2c8] sm:$0xff]
        %v364 = vld [vmem:[%s239 + $0x2d0] sm:$0xff]
        %v365 = vld [vmem:[%s239 + $0x2d8] sm:$0xff]
        %v366 = vld [vmem:[%s239 + $0x2e0] sm:$0xff]
        %v367 = vld [vmem:[%s239 + $0x2e8] sm:$0xff]
        %v368 = vld [vmem:[%s239 + $0x2f0] sm:$0xff]
        %v369 = vld [vmem:[%s239 + $0x2f8] sm:$0xff]
        %v370 = vld [vmem:[%s239 + $0x300] sm:$0xff]
        %v371 = vld [vmem:[%s239 + $0x308] sm:$0xff]
        %v372 = vld [vmem:[%s239 + $0x310] sm:$0xff]
        %v373 = vld [vmem:[%s239 + $0x318] sm:$0xff]
        %v374 = vld [vmem:[%s239 + $0x320] sm:$0xff]
        %v375 = vld [vmem:[%s239 + $0x328] sm:$0xff]
        %v376 = vld [vmem:[%s239 + $0x330] sm:$0xff]
        %v377 = vld [vmem:[%s239 + $0x338] sm:$0xff]
        %v378 = vld [vmem:[%s239 + $0x340] sm:$0xff]
        %v379 = vld [vmem:[%s239 + $0x348] sm:$0xff]
        %v380 = vld [vmem:[%s239 + $0x350] sm:$0xff]
        %v381 = vld [vmem:[%s239 + $0x358] sm:$0xff]
        %v382 = vld [vmem:[%s239 + $0x360] sm:$0xff]
        %v383 = vld [vmem:[%s239 + $0x368] sm:$0xff]
        %v384 = vld [vmem:[%s239 + $0x370] sm:$0xff]
        %v385 = vld [vmem:[%s239 + $0x378] sm:$0xff]
        %v386 = vld [vmem:[%s239 + $0x380] sm:$0xff]
        %v387 = vld [vmem:[%s239 + $0x388] sm:$0xff]
        %v388 = vld [vmem:[%s239 + $0x390] sm:$0xff]
        %v389 = vld [vmem:[%s239 + $0x398] sm:$0xff]
        %v390 = vld [vmem:[%s239 + $0x3a0] sm:$0xff]
        %v391 = vld [vmem:[%s239 + $0x3a8] sm:$0xff]
        %v392 = vld [vmem:[%s239 + $0x3b0] sm:$0xff]
        %v393 = vld [vmem:[%s239 + $0x3b8] sm:$0xff]
        %v394 = vld [vmem:[%s239 + $0x3c0] sm:$0xff]
        %v395 = vld [vmem:[%s239 + $0x3c8] sm:$0xff]
        %v396 = vld [vmem:[%s239 + $0x3d0] sm:$0xff]
        %v397 = vld [vmem:[%s239 + $0x3d8] sm:$0xff]
        %v398 = vld [vmem:[%s239 + $0x3e0] sm:$0xff]
        %v399 = vld [vmem:[%s239 + $0x3e8] sm:$0xff]
        %v400 = vld [vmem:[%s239 + $0x3f0] sm:$0xff]
        %v401 = vld [vmem:[%s239 + $0x3f8] sm:$0xff]
        %v402 = vld [vmem:[%s239 + $0x400] sm:$0xff]
        %v403 = vld [vmem:[%s239 + $0x408] sm:$0xff]
        %v404 = vld [vmem:[%s239 + $0x410] sm:$0xff]
        %v405 = vld [vmem:[%s239 + $0x418] sm:$0xff]
        %v406 = vld [vmem:[%s239 + $0x420] sm:$0xff]
        %v407 = vld [vmem:[%s239 + $0x428] sm:$0xff]
        %v408 = vld [vmem:[%s239 + $0x430] sm:$0xff]
        %v409 = vld [vmem:[%s239 + $0x438] sm:$0xff]
        %v410 = vld [vmem:[%s239 + $0x440] sm:$0xff]
        %v411 = vld [vmem:[%s239 + $0x448] sm:$0xff]
        %v412 = vld [vmem:[%s239 + $0x450] sm:$0xff]
        %v413 = vld [vmem:[%s239 + $0x458] sm:$0xff]
        %v414 = vld [vmem:[%s239 + $0x460] sm:$0xff]
        %v415 = vld [vmem:[%s239 + $0x468] sm:$0xff]
        %v416 = vld [vmem:[%s239 + $0x470] sm:$0xff]
        %v417 = vld [vmem:[%s239 + $0x478] sm:$0xff]
        %v418 = vld [vmem:[%s239 + $0x480] sm:$0xff]
        %v419 = vld [vmem:[%s239 + $0x488] sm:$0xff]
        %v420 = vld [vmem:[%s239 + $0x490] sm:$0xff]
        %v421 = vld [vmem:[%s239 + $0x498] sm:$0xff]
        %v422 = vld [vmem:[%s239 + $0x4a0] sm:$0xff]
        %v423 = vld [vmem:[%s239 + $0x4a8] sm:$0xff]
        %v424 = vld [vmem:[%s239 + $0x4b0] sm:$0xff]
        %v425 = vld [vmem:[%s239 + $0x4b8] sm:$0xff]
        %v426 = vld [vmem:[%s239 + $0x4c0] sm:$0xff]
        %v427 = vld [vmem:[%s239 + $0x4c8] sm:$0xff]
        %v428 = vld [vmem:[%s239 + $0x4d0] sm:$0xff]
        %v429 = vld [vmem:[%s239 + $0x4d8] sm:$0xff]
        %v430 = vld [vmem:[%s239 + $0x4e0] sm:$0xff]
        %v431 = vld [vmem:[%s239 + $0x4e8] sm:$0xff]
        %v432 = vld [vmem:[%s239 + $0x4f0] sm:$0xff]
        %v433 = vld [vmem:[%s239 + $0x4f8] sm:$0xff]
        %v434 = vld [vmem:[%s239 + $0x500] sm:$0xff]
        %v435 = vld [vmem:[%s239 + $0x508] sm:$0xff]
        %v436 = vld [vmem:[%s239 + $0x510] sm:$0xff]
        %v437 = vld [vmem:[%s239 + $0x518] sm:$0xff]
        %v438 = vld [vmem:[%s239 + $0x520] sm:$0xff]
        %v439 = vld [vmem:[%s239 + $0x528] sm:$0xff]
        %v440 = vld [vmem:[%s239 + $0x530] sm:$0xff]
        %v441 = vld [vmem:[%s239 + $0x538] sm:$0xff]
        %v442 = vld [vmem:[%s239 + $0x540] sm:$0xff]
        %v443 = vld [vmem:[%s239 + $0x548] sm:$0xff]
        %v444 = vld [vmem:[%s239 + $0x550] sm:$0xff]
        %v445 = vld [vmem:[%s239 + $0x558] sm:$0xff]
        %v446 = vld [vmem:[%s239 + $0x560] sm:$0xff]
        %v447 = vld [vmem:[%s239 + $0x568] sm:$0xff]
        %v448 = vld [vmem:[%s239 + $0x570] sm:$0xff]
        %v449 = vld [vmem:[%s239 + $0x578] sm:$0xff]
        %v450 = vld [vmem:[%s239 + $0x580] sm:$0xff]
        %v451 = vld [vmem:[%s239 + $0x588] sm:$0xff]
        %v452 = vld [vmem:[%s239 + $0x590] sm:$0xff]
        %v453 = vld [vmem:[%s239 + $0x598] sm:$0xff]
        %v454 = vld [vmem:[%s239 + $0x5a0] sm:$0xff]
        %v455 = vld [vmem:[%s239 + $0x5a8] sm:$0xff]
        %v456 = vld [vmem:[%s239 + $0x5b0] sm:$0xff]
        %v457 = vld [vmem:[%s239 + $0x5b8] sm:$0xff]
        %v458 = vld [vmem:[%s239 + $0x5c0] sm:$0xff]
        %v459 = vld [vmem:[%s239 + $0x5c8] sm:$0xff]
        %v460 = vld [vmem:[%s239 + $0x5d0] sm:$0xff]
        %v461 = vld [vmem:[%s239 + $0x5d8] sm:$0xff]
        %v462 = vld [vmem:[%s239 + $0x5e0] sm:$0xff]
        %v463 = vld [vmem:[%s239 + $0x5e8] sm:$0xff]
        %v464 = vld [vmem:[%s239 + $0x5f0] sm:$0xff]
        %v465 = vld [vmem:[%s239 + $0x5f8] sm:$0xff]
        %v472 = vunpack.c.l.b16 %v268
        %v473 = vunpack.c.h.b16 %v268
        %v474 = vunpack.c.l.b16 %v269
        %v475 = vunpack.c.h.b16 %v269
        %v476 = vunpack.c.l.b16 %v270
        %v477 = vunpack.c.h.b16 %v270
        %v478 = vunpack.c.l.b16 %v271
        %v479 = vunpack.c.h.b16 %v271
        %v480 = vunpack.c.l.b16 %v272
        %v481 = vunpack.c.h.b16 %v272
        %v482 = vunpack.c.l.b16 %v273
        %v483 = vunpack.c.h.b16 %v273
        %v484 = vpack.c.b16 %v478, %v472
        %v485 = vpack.c.b16 %v479, %v473
        %v486 = vpack.c.b16 %v480, %v474
        %v487 = vpack.c.b16 %v481, %v475
        %v488 = vpack.c.b16 %v482, %v476
        %v489 = vpack.c.b16 %v483, %v477
        %v688 = vunpack.c.l.b16 %v274
        %v689 = vunpack.c.h.b16 %v274
        %v690 = vunpack.c.l.b16 %v275
        %v691 = vunpack.c.h.b16 %v275
        %v692 = vunpack.c.l.b16 %v276
        %v693 = vunpack.c.h.b16 %v276
        %v694 = vunpack.c.l.b16 %v277
        %v695 = vunpack.c.h.b16 %v277
        %v696 = vunpack.c.l.b16 %v278
        %v697 = vunpack.c.h.b16 %v278
        %v698 = vunpack.c.l.b16 %v279
        %v699 = vunpack.c.h.b16 %v279
        %v700 = vunpack.c.l.b16 %v280
        %v701 = vunpack.c.h.b16 %v280
        %v702 = vunpack.c.l.b16 %v281
        %v703 = vunpack.c.h.b16 %v281
        %v704 = vunpack.c.l.b16 %v282
        %v705 = vunpack.c.h.b16 %v282
        %v706 = vunpack.c.l.b16 %v283
        %v707 = vunpack.c.h.b16 %v283
        %v708 = vunpack.c.l.b16 %v284
        %v709 = vunpack.c.h.b16 %v284
        %v710 = vunpack.c.l.b16 %v285
        %v711 = vunpack.c.h.b16 %v285
        %v712 = vunpack.c.l.b16 %v286
        %v713 = vunpack.c.h.b16 %v286
        %v714 = vunpack.c.l.b16 %v287
        %v715 = vunpack.c.h.b16 %v287
        %v716 = vunpack.c.l.b16 %v288
        %v717 = vunpack.c.h.b16 %v288
        %v718 = vunpack.c.l.b16 %v289
        %v719 = vunpack.c.h.b16 %v289
        %v720 = vunpack.c.l.b16 %v290
        %v721 = vunpack.c.h.b16 %v290
        %v722 = vunpack.c.l.b16 %v291
        %v723 = vunpack.c.h.b16 %v291
        %v724 = vunpack.c.l.b16 %v292
        %v725 = vunpack.c.h.b16 %v292
        %v726 = vunpack.c.l.b16 %v293
        %v727 = vunpack.c.h.b16 %v293
        %v728 = vunpack.c.l.b16 %v294
        %v729 = vunpack.c.h.b16 %v294
        %v730 = vunpack.c.l.b16 %v295
        %v731 = vunpack.c.h.b16 %v295
        %v732 = vunpack.c.l.b16 %v296
        %v733 = vunpack.c.h.b16 %v296
        %v734 = vunpack.c.l.b16 %v297
        %v735 = vunpack.c.h.b16 %v297
        %v736 = vunpack.c.l.b16 %v298
        %v737 = vunpack.c.h.b16 %v298
        %v738 = vunpack.c.l.b16 %v299
        %v739 = vunpack.c.h.b16 %v299
        %v740 = vunpack.c.l.b16 %v300
        %v741 = vunpack.c.h.b16 %v300
        %v742 = vunpack.c.l.b16 %v301
        %v743 = vunpack.c.h.b16 %v301
        %v744 = vunpack.c.l.b16 %v302
        %v745 = vunpack.c.h.b16 %v302
        %v746 = vunpack.c.l.b16 %v303
        %v747 = vunpack.c.h.b16 %v303
        %v748 = vunpack.c.l.b16 %v304
        %v749 = vunpack.c.h.b16 %v304
        %v750 = vunpack.c.l.b16 %v305
        %v751 = vunpack.c.h.b16 %v305
        %v752 = vunpack.c.l.b16 %v306
        %v753 = vunpack.c.h.b16 %v306
        %v754 = vunpack.c.l.b16 %v307
        %v755 = vunpack.c.h.b16 %v307
        %v756 = vunpack.c.l.b16 %v308
        %v757 = vunpack.c.h.b16 %v308
        %v758 = vunpack.c.l.b16 %v309
        %v759 = vunpack.c.h.b16 %v309
        %v760 = vunpack.c.l.b16 %v310
        %v761 = vunpack.c.h.b16 %v310
        %v762 = vunpack.c.l.b16 %v311
        %v763 = vunpack.c.h.b16 %v311
        %v764 = vunpack.c.l.b16 %v312
        %v765 = vunpack.c.h.b16 %v312
        %v766 = vunpack.c.l.b16 %v313
        %v767 = vunpack.c.h.b16 %v313
        %v768 = vunpack.c.l.b16 %v314
        %v769 = vunpack.c.h.b16 %v314
        %v770 = vunpack.c.l.b16 %v315
        %v771 = vunpack.c.h.b16 %v315
        %v772 = vunpack.c.l.b16 %v316
        %v773 = vunpack.c.h.b16 %v316
        %v774 = vunpack.c.l.b16 %v317
        %v775 = vunpack.c.h.b16 %v317
        %v776 = vunpack.c.l.b16 %v318
        %v777 = vunpack.c.h.b16 %v318
        %v778 = vunpack.c.l.b16 %v319
        %v779 = vunpack.c.h.b16 %v319
        %v780 = vunpack.c.l.b16 %v320
        %v781 = vunpack.c.h.b16 %v320
        %v782 = vunpack.c.l.b16 %v321
        %v783 = vunpack.c.h.b16 %v321
        %v784 = vunpack.c.l.b16 %v322
        %v785 = vunpack.c.h.b16 %v322
        %v786 = vunpack.c.l.b16 %v323
        %v787 = vunpack.c.h.b16 %v323
        %v788 = vunpack.c.l.b16 %v324
        %v789 = vunpack.c.h.b16 %v324
        %v790 = vunpack.c.l.b16 %v325
        %v791 = vunpack.c.h.b16 %v325
        %v792 = vunpack.c.l.b16 %v326
        %v793 = vunpack.c.h.b16 %v326
        %v794 = vunpack.c.l.b16 %v327
        %v795 = vunpack.c.h.b16 %v327
        %v796 = vunpack.c.l.b16 %v328
        %v797 = vunpack.c.h.b16 %v328
        %v798 = vunpack.c.l.b16 %v329
        %v799 = vunpack.c.h.b16 %v329
        %v800 = vunpack.c.l.b16 %v330
        %v801 = vunpack.c.h.b16 %v330
        %v802 = vunpack.c.l.b16 %v331
        %v803 = vunpack.c.h.b16 %v331
        %v804 = vunpack.c.l.b16 %v332
        %v805 = vunpack.c.h.b16 %v332
        %v806 = vunpack.c.l.b16 %v333
        %v807 = vunpack.c.h.b16 %v333
        %v808 = vunpack.c.l.b16 %v334
        %v809 = vunpack.c.h.b16 %v334
        %v810 = vunpack.c.l.b16 %v335
        %v811 = vunpack.c.h.b16 %v335
        %v812 = vunpack.c.l.b16 %v336
        %v813 = vunpack.c.h.b16 %v336
        %v814 = vunpack.c.l.b16 %v337
        %v815 = vunpack.c.h.b16 %v337
        %v816 = vunpack.c.l.b16 %v338
        %v817 = vunpack.c.h.b16 %v338
        %v818 = vunpack.c.l.b16 %v339
        %v819 = vunpack.c.h.b16 %v339
        %v820 = vunpack.c.l.b16 %v340
        %v821 = vunpack.c.h.b16 %v340
        %v822 = vunpack.c.l.b16 %v341
        %v823 = vunpack.c.h.b16 %v341
        %v824 = vunpack.c.l.b16 %v342
        %v825 = vunpack.c.h.b16 %v342
        %v826 = vunpack.c.l.b16 %v343
        %v827 = vunpack.c.h.b16 %v343
        %v828 = vunpack.c.l.b16 %v344
        %v829 = vunpack.c.h.b16 %v344
        %v830 = vunpack.c.l.b16 %v345
        %v831 = vunpack.c.h.b16 %v345
        %v832 = vunpack.c.l.b16 %v346
        %v833 = vunpack.c.h.b16 %v346
        %v834 = vunpack.c.l.b16 %v347
        %v835 = vunpack.c.h.b16 %v347
        %v836 = vunpack.c.l.b16 %v348
        %v837 = vunpack.c.h.b16 %v348
        %v838 = vunpack.c.l.b16 %v349
        %v839 = vunpack.c.h.b16 %v349
        %v840 = vunpack.c.l.b16 %v350
        %v841 = vunpack.c.h.b16 %v350
        %v842 = vunpack.c.l.b16 %v351
        %v843 = vunpack.c.h.b16 %v351
        %v844 = vunpack.c.l.b16 %v352
        %v845 = vunpack.c.h.b16 %v352
        %v846 = vunpack.c.l.b16 %v353
        %v847 = vunpack.c.h.b16 %v353
        %v848 = vunpack.c.l.b16 %v354
        %v849 = vunpack.c.h.b16 %v354
        %v850 = vunpack.c.l.b16 %v355
        %v851 = vunpack.c.h.b16 %v355
        %v852 = vunpack.c.l.b16 %v356
        %v853 = vunpack.c.h.b16 %v356
        %v854 = vunpack.c.l.b16 %v357
        %v855 = vunpack.c.h.b16 %v357
        %v856 = vunpack.c.l.b16 %v358
        %v857 = vunpack.c.h.b16 %v358
        %v858 = vunpack.c.l.b16 %v359
        %v859 = vunpack.c.h.b16 %v359
        %v860 = vunpack.c.l.b16 %v360
        %v861 = vunpack.c.h.b16 %v360
        %v862 = vunpack.c.l.b16 %v361
        %v863 = vunpack.c.h.b16 %v361
        %v864 = vunpack.c.l.b16 %v362
        %v865 = vunpack.c.h.b16 %v362
        %v866 = vunpack.c.l.b16 %v363
        %v867 = vunpack.c.h.b16 %v363
        %v868 = vunpack.c.l.b16 %v364
        %v869 = vunpack.c.h.b16 %v364
        %v870 = vunpack.c.l.b16 %v365
        %v871 = vunpack.c.h.b16 %v365
        %v872 = vunpack.c.l.b16 %v366
        %v873 = vunpack.c.h.b16 %v366
        %v874 = vunpack.c.l.b16 %v367
        %v875 = vunpack.c.h.b16 %v367
        %v876 = vunpack.c.l.b16 %v368
        %v877 = vunpack.c.h.b16 %v368
        %v878 = vunpack.c.l.b16 %v369
        %v879 = vunpack.c.h.b16 %v369
        %v880 = vunpack.c.l.b16 %v370
        %v881 = vunpack.c.h.b16 %v370
        %v882 = vunpack.c.l.b16 %v371
        %v883 = vunpack.c.h.b16 %v371
        %v884 = vunpack.c.l.b16 %v372
        %v885 = vunpack.c.h.b16 %v372
        %v886 = vunpack.c.l.b16 %v373
        %v887 = vunpack.c.h.b16 %v373
        %v888 = vunpack.c.l.b16 %v374
        %v889 = vunpack.c.h.b16 %v374
        %v890 = vunpack.c.l.b16 %v375
        %v891 = vunpack.c.h.b16 %v375
        %v892 = vunpack.c.l.b16 %v376
        %v893 = vunpack.c.h.b16 %v376
        %v894 = vunpack.c.l.b16 %v377
        %v895 = vunpack.c.h.b16 %v377
        %v896 = vunpack.c.l.b16 %v378
        %v897 = vunpack.c.h.b16 %v378
        %v898 = vunpack.c.l.b16 %v379
        %v899 = vunpack.c.h.b16 %v379
        %v900 = vunpack.c.l.b16 %v380
        %v901 = vunpack.c.h.b16 %v380
        %v902 = vunpack.c.l.b16 %v381
        %v903 = vunpack.c.h.b16 %v381
        %v904 = vunpack.c.l.b16 %v382
        %v905 = vunpack.c.h.b16 %v382
        %v906 = vunpack.c.l.b16 %v383
        %v907 = vunpack.c.h.b16 %v383
        %v908 = vunpack.c.l.b16 %v384
        %v909 = vunpack.c.h.b16 %v384
        %v910 = vunpack.c.l.b16 %v385
        %v911 = vunpack.c.h.b16 %v385
        %v912 = vunpack.c.l.b16 %v386
        %v913 = vunpack.c.h.b16 %v386
        %v914 = vunpack.c.l.b16 %v387
        %v915 = vunpack.c.h.b16 %v387
        %v916 = vunpack.c.l.b16 %v388
        %v917 = vunpack.c.h.b16 %v388
        %v918 = vunpack.c.l.b16 %v389
        %v919 = vunpack.c.h.b16 %v389
        %v920 = vunpack.c.l.b16 %v390
        %v921 = vunpack.c.h.b16 %v390
        %v922 = vunpack.c.l.b16 %v391
        %v923 = vunpack.c.h.b16 %v391
        %v924 = vunpack.c.l.b16 %v392
        %v925 = vunpack.c.h.b16 %v392
        %v926 = vunpack.c.l.b16 %v393
        %v927 = vunpack.c.h.b16 %v393
        %v928 = vunpack.c.l.b16 %v394
        %v929 = vunpack.c.h.b16 %v394
        %v930 = vunpack.c.l.b16 %v395
        %v931 = vunpack.c.h.b16 %v395
        %v932 = vunpack.c.l.b16 %v396
        %v933 = vunpack.c.h.b16 %v396
        %v934 = vunpack.c.l.b16 %v397
        %v935 = vunpack.c.h.b16 %v397
        %v936 = vunpack.c.l.b16 %v398
        %v937 = vunpack.c.h.b16 %v398
        %v938 = vunpack.c.l.b16 %v399
        %v939 = vunpack.c.h.b16 %v399
        %v940 = vunpack.c.l.b16 %v400
        %v941 = vunpack.c.h.b16 %v400
        %v942 = vunpack.c.l.b16 %v401
        %v943 = vunpack.c.h.b16 %v401
        %v944 = vunpack.c.l.b16 %v402
        %v945 = vunpack.c.h.b16 %v402
        %v946 = vunpack.c.l.b16 %v403
        %v947 = vunpack.c.h.b16 %v403
        %v948 = vunpack.c.l.b16 %v404
        %v949 = vunpack.c.h.b16 %v404
        %v950 = vunpack.c.l.b16 %v405
        %v951 = vunpack.c.h.b16 %v405
        %v952 = vunpack.c.l.b16 %v406
        %v953 = vunpack.c.h.b16 %v406
        %v954 = vunpack.c.l.b16 %v407
        %v955 = vunpack.c.h.b16 %v407
        %v956 = vunpack.c.l.b16 %v408
        %v957 = vunpack.c.h.b16 %v408
        %v958 = vunpack.c.l.b16 %v409
        %v959 = vunpack.c.h.b16 %v409
        %v960 = vunpack.c.l.b16 %v410
        %v961 = vunpack.c.h.b16 %v410
        %v962 = vunpack.c.l.b16 %v411
        %v963 = vunpack.c.h.b16 %v411
        %v964 = vunpack.c.l.b16 %v412
        %v965 = vunpack.c.h.b16 %v412
        %v966 = vunpack.c.l.b16 %v413
        %v967 = vunpack.c.h.b16 %v413
        %v968 = vunpack.c.l.b16 %v414
        %v969 = vunpack.c.h.b16 %v414
        %v970 = vunpack.c.l.b16 %v415
        %v971 = vunpack.c.h.b16 %v415
        %v972 = vunpack.c.l.b16 %v416
        %v973 = vunpack.c.h.b16 %v416
        %v974 = vunpack.c.l.b16 %v417
        %v975 = vunpack.c.h.b16 %v417
        %v976 = vunpack.c.l.b16 %v418
        %v977 = vunpack.c.h.b16 %v418
        %v978 = vunpack.c.l.b16 %v419
        %v979 = vunpack.c.h.b16 %v419
        %v980 = vunpack.c.l.b16 %v420
        %v981 = vunpack.c.h.b16 %v420
        %v982 = vunpack.c.l.b16 %v421
        %v983 = vunpack.c.h.b16 %v421
        %v984 = vunpack.c.l.b16 %v422
        %v985 = vunpack.c.h.b16 %v422
        %v986 = vunpack.c.l.b16 %v423
        %v987 = vunpack.c.h.b16 %v423
        %v988 = vunpack.c.l.b16 %v424
        %v989 = vunpack.c.h.b16 %v424
        %v990 = vunpack.c.l.b16 %v425
        %v991 = vunpack.c.h.b16 %v425
        %v992 = vunpack.c.l.b16 %v426
        %v993 = vunpack.c.h.b16 %v426
        %v994 = vunpack.c.l.b16 %v427
        %v995 = vunpack.c.h.b16 %v427
        %v996 = vunpack.c.l.b16 %v428
        %v997 = vunpack.c.h.b16 %v428
        %v998 = vunpack.c.l.b16 %v429
        %v999 = vunpack.c.h.b16 %v429
        %v1000 = vunpack.c.l.b16 %v430
        %v1001 = vunpack.c.h.b16 %v430
        %v1002 = vunpack.c.l.b16 %v431
        %v1003 = vunpack.c.h.b16 %v431
        %v1004 = vunpack.c.l.b16 %v432
        %v1005 = vunpack.c.h.b16 %v432
        %v1006 = vunpack.c.l.b16 %v433
        %v1007 = vunpack.c.h.b16 %v433
        %v1008 = vunpack.c.l.b16 %v434
        %v1009 = vunpack.c.h.b16 %v434
        %v1010 = vunpack.c.l.b16 %v435
        %v1011 = vunpack.c.h.b16 %v435
        %v1012 = vunpack.c.l.b16 %v436
        %v1013 = vunpack.c.h.b16 %v436
        %v1014 = vunpack.c.l.b16 %v437
        %v1015 = vunpack.c.h.b16 %v437
        %v1016 = vunpack.c.l.b16 %v438
        %v1017 = vunpack.c.h.b16 %v438
        %v1018 = vunpack.c.l.b16 %v439
        %v1019 = vunpack.c.h.b16 %v439
        %v1020 = vunpack.c.l.b16 %v440
        %v1021 = vunpack.c.h.b16 %v440
        %v1022 = vunpack.c.l.b16 %v441
        %v1023 = vunpack.c.h.b16 %v441
        %v1024 = vunpack.c.l.b16 %v442
        %v1025 = vunpack.c.h.b16 %v442
        %v1026 = vunpack.c.l.b16 %v443
        %v1027 = vunpack.c.h.b16 %v443
        %v1028 = vunpack.c.l.b16 %v444
        %v1029 = vunpack.c.h.b16 %v444
        %v1030 = vunpack.c.l.b16 %v445
        %v1031 = vunpack.c.h.b16 %v445
        %v1032 = vunpack.c.l.b16 %v446
        %v1033 = vunpack.c.h.b16 %v446
        %v1034 = vunpack.c.l.b16 %v447
        %v1035 = vunpack.c.h.b16 %v447
        %v1036 = vunpack.c.l.b16 %v448
        %v1037 = vunpack.c.h.b16 %v448
        %v1038 = vunpack.c.l.b16 %v449
        %v1039 = vunpack.c.h.b16 %v449
        %v1040 = vunpack.c.l.b16 %v450
        %v1041 = vunpack.c.h.b16 %v450
        %v1042 = vunpack.c.l.b16 %v451
        %v1043 = vunpack.c.h.b16 %v451
        %v1044 = vunpack.c.l.b16 %v452
        %v1045 = vunpack.c.h.b16 %v452
        %v1046 = vunpack.c.l.b16 %v453
        %v1047 = vunpack.c.h.b16 %v453
        %v1048 = vunpack.c.l.b16 %v454
        %v1049 = vunpack.c.h.b16 %v454
        %v1050 = vunpack.c.l.b16 %v455
        %v1051 = vunpack.c.h.b16 %v455
        %v1052 = vunpack.c.l.b16 %v456
        %v1053 = vunpack.c.h.b16 %v456
        %v1054 = vunpack.c.l.b16 %v457
        %v1055 = vunpack.c.h.b16 %v457
        %v1056 = vunpack.c.l.b16 %v458
        %v1057 = vunpack.c.h.b16 %v458
        %v1058 = vunpack.c.l.b16 %v459
        %v1059 = vunpack.c.h.b16 %v459
        %v1060 = vunpack.c.l.b16 %v460
        %v1061 = vunpack.c.h.b16 %v460
        %v1062 = vunpack.c.l.b16 %v461
        %v1063 = vunpack.c.h.b16 %v461
        %v1064 = vunpack.c.l.b16 %v462
        %v1065 = vunpack.c.h.b16 %v462
        %v1066 = vunpack.c.l.b16 %v463
        %v1067 = vunpack.c.h.b16 %v463
        %v1068 = vunpack.c.l.b16 %v464
        %v1069 = vunpack.c.h.b16 %v464
        %v1070 = vunpack.c.l.b16 %v465
        %v1071 = vunpack.c.h.b16 %v465
        %v1072 = vpack.c.b16 %v692, %v688
        %v1073 = vpack.c.b16 %v693, %v689
        %v1074 = vpack.c.b16 %v694, %v690
        %v1075 = vpack.c.b16 %v695, %v691
        %v1076 = vpack.c.b16 %v700, %v696
        %v1077 = vpack.c.b16 %v701, %v697
        %v1078 = vpack.c.b16 %v702, %v698
        %v1079 = vpack.c.b16 %v703, %v699
        %v1080 = vpack.c.b16 %v708, %v704
        %v1081 = vpack.c.b16 %v709, %v705
        %v1082 = vpack.c.b16 %v710, %v706
        %v1083 = vpack.c.b16 %v711, %v707
        %v1084 = vpack.c.b16 %v716, %v712
        %v1085 = vpack.c.b16 %v717, %v713
        %v1086 = vpack.c.b16 %v718, %v714
        %v1087 = vpack.c.b16 %v719, %v715
        %v1088 = vpack.c.b16 %v724, %v720
        %v1089 = vpack.c.b16 %v725, %v721
        %v1090 = vpack.c.b16 %v726, %v722
        %v1091 = vpack.c.b16 %v727, %v723
        %v1092 = vpack.c.b16 %v732, %v728
        %v1093 = vpack.c.b16 %v733, %v729
        %v1094 = vpack.c.b16 %v734, %v730
        %v1095 = vpack.c.b16 %v735, %v731
        %v1096 = vpack.c.b16 %v740, %v736
        %v1097 = vpack.c.b16 %v741, %v737
        %v1098 = vpack.c.b16 %v742, %v738
        %v1099 = vpack.c.b16 %v743, %v739
        %v1100 = vpack.c.b16 %v748, %v744
        %v1101 = vpack.c.b16 %v749, %v745
        %v1102 = vpack.c.b16 %v750, %v746
        %v1103 = vpack.c.b16 %v751, %v747
        %v1104 = vpack.c.b16 %v756, %v752
        %v1105 = vpack.c.b16 %v757, %v753
        %v1106 = vpack.c.b16 %v758, %v754
        %v1107 = vpack.c.b16 %v759, %v755
        %v1108 = vpack.c.b16 %v764, %v760
        %v1109 = vpack.c.b16 %v765, %v761
        %v1110 = vpack.c.b16 %v766, %v762
        %v1111 = vpack.c.b16 %v767, %v763
        %v1112 = vpack.c.b16 %v772, %v768
        %v1113 = vpack.c.b16 %v773, %v769
        %v1114 = vpack.c.b16 %v774, %v770
        %v1115 = vpack.c.b16 %v775, %v771
        %v1116 = vpack.c.b16 %v780, %v776
        %v1117 = vpack.c.b16 %v781, %v777
        %v1118 = vpack.c.b16 %v782, %v778
        %v1119 = vpack.c.b16 %v783, %v779
        %v1120 = vpack.c.b16 %v788, %v784
        %v1121 = vpack.c.b16 %v789, %v785
        %v1122 = vpack.c.b16 %v790, %v786
        %v1123 = vpack.c.b16 %v791, %v787
        %v1124 = vpack.c.b16 %v796, %v792
        %v1125 = vpack.c.b16 %v797, %v793
        %v1126 = vpack.c.b16 %v798, %v794
        %v1127 = vpack.c.b16 %v799, %v795
        %v1128 = vpack.c.b16 %v804, %v800
        %v1129 = vpack.c.b16 %v805, %v801
        %v1130 = vpack.c.b16 %v806, %v802
        %v1131 = vpack.c.b16 %v807, %v803
        %v1132 = vpack.c.b16 %v812, %v808
        %v1133 = vpack.c.b16 %v813, %v809
        %v1134 = vpack.c.b16 %v814, %v810
        %v1135 = vpack.c.b16 %v815, %v811
        %v1136 = vpack.c.b16 %v820, %v816
        %v1137 = vpack.c.b16 %v821, %v817
        %v1138 = vpack.c.b16 %v822, %v818
        %v1139 = vpack.c.b16 %v823, %v819
        %v1140 = vpack.c.b16 %v828, %v824
        %v1141 = vpack.c.b16 %v829, %v825
        %v1142 = vpack.c.b16 %v830, %v826
        %v1143 = vpack.c.b16 %v831, %v827
        %v1144 = vpack.c.b16 %v836, %v832
        %v1145 = vpack.c.b16 %v837, %v833
        %v1146 = vpack.c.b16 %v838, %v834
        %v1147 = vpack.c.b16 %v839, %v835
        %v1148 = vpack.c.b16 %v844, %v840
        %v1149 = vpack.c.b16 %v845, %v841
        %v1150 = vpack.c.b16 %v846, %v842
        %v1151 = vpack.c.b16 %v847, %v843
        %v1152 = vpack.c.b16 %v852, %v848
        %v1153 = vpack.c.b16 %v853, %v849
        %v1154 = vpack.c.b16 %v854, %v850
        %v1155 = vpack.c.b16 %v855, %v851
        %v1156 = vpack.c.b16 %v860, %v856
        %v1157 = vpack.c.b16 %v861, %v857
        %v1158 = vpack.c.b16 %v862, %v858
        %v1159 = vpack.c.b16 %v863, %v859
        %v1160 = vpack.c.b16 %v868, %v864
        %v1161 = vpack.c.b16 %v869, %v865
        %v1162 = vpack.c.b16 %v870, %v866
        %v1163 = vpack.c.b16 %v871, %v867
        %v1164 = vpack.c.b16 %v876, %v872
        %v1165 = vpack.c.b16 %v877, %v873
        %v1166 = vpack.c.b16 %v878, %v874
        %v1167 = vpack.c.b16 %v879, %v875
        %v1168 = vpack.c.b16 %v884, %v880
        %v1169 = vpack.c.b16 %v885, %v881
        %v1170 = vpack.c.b16 %v886, %v882
        %v1171 = vpack.c.b16 %v887, %v883
        %v1172 = vpack.c.b16 %v892, %v888
        %v1173 = vpack.c.b16 %v893, %v889
        %v1174 = vpack.c.b16 %v894, %v890
        %v1175 = vpack.c.b16 %v895, %v891
        %v1176 = vpack.c.b16 %v900, %v896
        %v1177 = vpack.c.b16 %v901, %v897
        %v1178 = vpack.c.b16 %v902, %v898
        %v1179 = vpack.c.b16 %v903, %v899
        %v1180 = vpack.c.b16 %v908, %v904
        %v1181 = vpack.c.b16 %v909, %v905
        %v1182 = vpack.c.b16 %v910, %v906
        %v1183 = vpack.c.b16 %v911, %v907
        %v1184 = vpack.c.b16 %v916, %v912
        %v1185 = vpack.c.b16 %v917, %v913
        %v1186 = vpack.c.b16 %v918, %v914
        %v1187 = vpack.c.b16 %v919, %v915
        %v1188 = vpack.c.b16 %v924, %v920
        %v1189 = vpack.c.b16 %v925, %v921
        %v1190 = vpack.c.b16 %v926, %v922
        %v1191 = vpack.c.b16 %v927, %v923
        %v1192 = vpack.c.b16 %v932, %v928
        %v1193 = vpack.c.b16 %v933, %v929
        %v1194 = vpack.c.b16 %v934, %v930
        %v1195 = vpack.c.b16 %v935, %v931
        %v1196 = vpack.c.b16 %v940, %v936
        %v1197 = vpack.c.b16 %v941, %v937
        %v1198 = vpack.c.b16 %v942, %v938
        %v1199 = vpack.c.b16 %v943, %v939
        %v1200 = vpack.c.b16 %v948, %v944
        %v1201 = vpack.c.b16 %v949, %v945
        %v1202 = vpack.c.b16 %v950, %v946
        %v1203 = vpack.c.b16 %v951, %v947
        %v1204 = vpack.c.b16 %v956, %v952
        %v1205 = vpack.c.b16 %v957, %v953
        %v1206 = vpack.c.b16 %v958, %v954
        %v1207 = vpack.c.b16 %v959, %v955
        %v1208 = vpack.c.b16 %v964, %v960
        %v1209 = vpack.c.b16 %v965, %v961
        %v1210 = vpack.c.b16 %v966, %v962
        %v1211 = vpack.c.b16 %v967, %v963
        %v1212 = vpack.c.b16 %v972, %v968
        %v1213 = vpack.c.b16 %v973, %v969
        %v1214 = vpack.c.b16 %v974, %v970
        %v1215 = vpack.c.b16 %v975, %v971
        %v1216 = vpack.c.b16 %v980, %v976
        %v1217 = vpack.c.b16 %v981, %v977
        %v1218 = vpack.c.b16 %v982, %v978
        %v1219 = vpack.c.b16 %v983, %v979
        %v1220 = vpack.c.b16 %v988, %v984
        %v1221 = vpack.c.b16 %v989, %v985
        %v1222 = vpack.c.b16 %v990, %v986
        %v1223 = vpack.c.b16 %v991, %v987
        %v1224 = vpack.c.b16 %v996, %v992
        %v1225 = vpack.c.b16 %v997, %v993
        %v1226 = vpack.c.b16 %v998, %v994
        %v1227 = vpack.c.b16 %v999, %v995
        %v1228 = vpack.c.b16 %v1004, %v1000
        %v1229 = vpack.c.b16 %v1005, %v1001
        %v1230 = vpack.c.b16 %v1006, %v1002
        %v1231 = vpack.c.b16 %v1007, %v1003
        %v1232 = vpack.c.b16 %v1012, %v1008
        %v1233 = vpack.c.b16 %v1013, %v1009
        %v1234 = vpack.c.b16 %v1014, %v1010
        %v1235 = vpack.c.b16 %v1015, %v1011
        %v1236 = vpack.c.b16 %v1020, %v1016
        %v1237 = vpack.c.b16 %v1021, %v1017
        %v1238 = vpack.c.b16 %v1022, %v1018
        %v1239 = vpack.c.b16 %v1023, %v1019
        %v1240 = vpack.c.b16 %v1028, %v1024
        %v1241 = vpack.c.b16 %v1029, %v1025
        %v1242 = vpack.c.b16 %v1030, %v1026
        %v1243 = vpack.c.b16 %v1031, %v1027
        %v1244 = vpack.c.b16 %v1036, %v1032
        %v1245 = vpack.c.b16 %v1037, %v1033
        %v1246 = vpack.c.b16 %v1038, %v1034
        %v1247 = vpack.c.b16 %v1039, %v1035
        %v1248 = vpack.c.b16 %v1044, %v1040
        %v1249 = vpack.c.b16 %v1045, %v1041
        %v1250 = vpack.c.b16 %v1046, %v1042
        %v1251 = vpack.c.b16 %v1047, %v1043
        %v1252 = vpack.c.b16 %v1052, %v1048
        %v1253 = vpack.c.b16 %v1053, %v1049
        %v1254 = vpack.c.b16 %v1054, %v1050
        %v1255 = vpack.c.b16 %v1055, %v1051
        %v1256 = vpack.c.b16 %v1060, %v1056
        %v1257 = vpack.c.b16 %v1061, %v1057
        %v1258 = vpack.c.b16 %v1062, %v1058
        %v1259 = vpack.c.b16 %v1063, %v1059
        %v1260 = vpack.c.b16 %v1068, %v1064
        %v1261 = vpack.c.b16 %v1069, %v1065
        %v1262 = vpack.c.b16 %v1070, %v1066
        %v1263 = vpack.c.b16 %v1071, %v1067
        %1456 = vmatprep.subr.bf16.mxu0 %v1101
        %1457 = vmatpush1.bf16.msra.mxu0 %v1100
        %1458 = vmatprep.subr.bf16.mxu0 %v1097
        %1459 = vmatpush1.bf16.msra.mxu0 %v1096
        %1460 = vmatprep.subr.bf16.mxu0 %v1093
        %1461 = vmatpush1.bf16.msra.mxu0 %v1092
        %1462 = vmatprep.subr.bf16.mxu0 %v1089
        %1463 = vmatpush1.bf16.msra.mxu0 %v1088
        %1464 = vmatprep.subr.bf16.mxu0 %v1085
        %1465 = vmatpush1.bf16.msra.mxu0 %v1084
        %1466 = vmatprep.subr.bf16.mxu0 %v1081
        %1467 = vmatpush1.bf16.msra.mxu0 %v1080
        %1468 = vmatprep.subr.bf16.mxu0 %v1077
        %1469 = vmatpush1.bf16.msra.mxu0 %v1076
        %1470 = vmatprep.subr.bf16.mxu0 %v1073
        %1471 = vmatpush1.bf16.msra.mxu0 %v1072
        %1472 = vmatprep.subr.bf16.mxu0 %v1133
        %1473 = vmatpush2.bf16.msra.mxu0 %v1132
        %1474 = vmatprep.subr.bf16.mxu0 %v1129
        %1475 = vmatpush2.bf16.msra.mxu0 %v1128
        %1476 = vmatprep.subr.bf16.mxu0 %v1125
        %1477 = vmatpush2.bf16.msra.mxu0 %v1124
        %1478 = vmatprep.subr.bf16.mxu0 %v1121
        %1479 = vmatpush2.bf16.msra.mxu0 %v1120
        %1480 = vmatprep.subr.bf16.mxu0 %v1117
        %1481 = vmatpush2.bf16.msra.mxu0 %v1116
        %1482 = vmatprep.subr.bf16.mxu0 %v1113
        %1483 = vmatpush2.bf16.msra.mxu0 %v1112
        %1484 = vmatprep.subr.bf16.mxu0 %v1109
        %1485 = vmatpush2.bf16.msra.mxu0 %v1108
        %1486 = vmatprep.subr.bf16.mxu0 %v1105
        %1487 = vmatpush2.bf16.msra.mxu0 %v1104
        %1488 = vmatprep.mubr.bf16.mxu0 %v485
        %1489 = vmatmul.mubr.bf16.gmra.mxu0 %v484
        %v1490 = vpop.f32.mrf.mxu0
        %v1491 = vadd.f32 0.0, %v1490
        %v1492 = vpop.f32.mrf.mxu0
        %v1493 = vadd.f32 0.0, %v1492
        %v1494 = vpop.f32.mrf.mxu0
        %v1495 = vadd.f32 0.0, %v1494
        %v1496 = vpop.f32.mrf.mxu0
        %v1497 = vadd.f32 0.0, %v1496
        %1498 = vdwg.mxu0
        %1499 = vmatprep.subr.bf16.mxu0 %v1165
        %1500 = vmatpush1.bf16.msra.mxu0 %v1164
        %1501 = vmatprep.subr.bf16.mxu0 %v1161
        %1502 = vmatpush1.bf16.msra.mxu0 %v1160
        %1503 = vmatprep.subr.bf16.mxu0 %v1157
        %1504 = vmatpush1.bf16.msra.mxu0 %v1156
        %1505 = vmatprep.subr.bf16.mxu0 %v1153
        %1506 = vmatpush1.bf16.msra.mxu0 %v1152
        %1507 = vmatprep.subr.bf16.mxu0 %v1149
        %1508 = vmatpush1.bf16.msra.mxu0 %v1148
        %1509 = vmatprep.subr.bf16.mxu0 %v1145
        %1510 = vmatpush1.bf16.msra.mxu0 %v1144
        %1511 = vmatprep.subr.bf16.mxu0 %v1141
        %1512 = vmatpush1.bf16.msra.mxu0 %v1140
        %1513 = vmatprep.subr.bf16.mxu0 %v1137
        %1514 = vmatpush1.bf16.msra.mxu0 %v1136
        %1515 = vmatprep.subr.bf16.mxu0 %v1197
        %1516 = vmatpush2.bf16.msra.mxu0 %v1196
        %1517 = vmatprep.subr.bf16.mxu0 %v1193
        %1518 = vmatpush2.bf16.msra.mxu0 %v1192
        %1519 = vmatprep.subr.bf16.mxu0 %v1189
        %1520 = vmatpush2.bf16.msra.mxu0 %v1188
        %1521 = vmatprep.subr.bf16.mxu0 %v1185
        %1522 = vmatpush2.bf16.msra.mxu0 %v1184
        %1523 = vmatprep.subr.bf16.mxu0 %v1181
        %1524 = vmatpush2.bf16.msra.mxu0 %v1180
        %1525 = vmatprep.subr.bf16.mxu0 %v1177
        %1526 = vmatpush2.bf16.msra.mxu0 %v1176
        %1527 = vmatprep.subr.bf16.mxu0 %v1173
        %1528 = vmatpush2.bf16.msra.mxu0 %v1172
        %1529 = vmatprep.subr.bf16.mxu0 %v1169
        %1530 = vmatpush2.bf16.msra.mxu0 %v1168
        %1531 = vmatprep.mubr.bf16.mxu0 %v487
        %1532 = vmatmul.mubr.bf16.gmra.mxu0 %v486
        %v1533 = vpop.f32.mrf.mxu0
        %v1534 = vadd.f32 %v1491, %v1533
        %v1535 = vpop.f32.mrf.mxu0
        %v1536 = vadd.f32 %v1493, %v1535
        %v1537 = vpop.f32.mrf.mxu0
        %v1538 = vadd.f32 %v1495, %v1537
        %v1539 = vpop.f32.mrf.mxu0
        %v1540 = vadd.f32 %v1497, %v1539
        %1541 = vdwg.mxu0
        %1542 = vmatprep.subr.bf16.mxu0 %v1229
        %1543 = vmatpush1.bf16.msra.mxu0 %v1228
        %1544 = vmatprep.subr.bf16.mxu0 %v1225
        %1545 = vmatpush1.bf16.msra.mxu0 %v1224
        %1546 = vmatprep.subr.bf16.mxu0 %v1221
        %1547 = vmatpush1.bf16.msra.mxu0 %v1220
        %1548 = vmatprep.subr.bf16.mxu0 %v1217
        %1549 = vmatpush1.bf16.msra.mxu0 %v1216
        %1550 = vmatprep.subr.bf16.mxu0 %v1213
        %1551 = vmatpush1.bf16.msra.mxu0 %v1212
        %1552 = vmatprep.subr.bf16.mxu0 %v1209
        %1553 = vmatpush1.bf16.msra.mxu0 %v1208
        %1554 = vmatprep.subr.bf16.mxu0 %v1205
        %1555 = vmatpush1.bf16.msra.mxu0 %v1204
        %1556 = vmatprep.subr.bf16.mxu0 %v1201
        %1557 = vmatpush1.bf16.msra.mxu0 %v1200
        %1558 = vmatprep.subr.bf16.mxu0 %v1261
        %1559 = vmatpush2.bf16.msra.mxu0 %v1260
        %1560 = vmatprep.subr.bf16.mxu0 %v1257
        %1561 = vmatpush2.bf16.msra.mxu0 %v1256
        %1562 = vmatprep.subr.bf16.mxu0 %v1253
        %1563 = vmatpush2.bf16.msra.mxu0 %v1252
        %1564 = vmatprep.subr.bf16.mxu0 %v1249
        %1565 = vmatpush2.bf16.msra.mxu0 %v1248
        %1566 = vmatprep.subr.bf16.mxu0 %v1245
        %1567 = vmatpush2.bf16.msra.mxu0 %v1244
        %1568 = vmatprep.subr.bf16.mxu0 %v1241
        %1569 = vmatpush2.bf16.msra.mxu0 %v1240
        %1570 = vmatprep.subr.bf16.mxu0 %v1237
        %1571 = vmatpush2.bf16.msra.mxu0 %v1236
        %1572 = vmatprep.subr.bf16.mxu0 %v1233
        %1573 = vmatpush2.bf16.msra.mxu0 %v1232
        %1574 = vmatprep.mubr.bf16.mxu0 %v489
        %1575 = vmatmul.mubr.bf16.gmra.mxu0 %v488
        %v1576 = vpop.f32.mrf.mxu0
        %v1577 = vadd.f32 %v1534, %v1576
        %v1578 = vpop.f32.mrf.mxu0
        %v1579 = vadd.f32 %v1536, %v1578
        %v1580 = vpop.f32.mrf.mxu0
        %v1581 = vadd.f32 %v1538, %v1580
        %v1582 = vpop.f32.mrf.mxu0
        %v1583 = vadd.f32 %v1540, %v1582
        %1584 = vdwg.mxu0
        %1585 = vmatprep.subr.bf16.mxu0 %v1103
        %1586 = vmatpush1.bf16.msra.mxu0 %v1102
        %1587 = vmatprep.subr.bf16.mxu0 %v1099
        %1588 = vmatpush1.bf16.msra.mxu0 %v1098
        %1589 = vmatprep.subr.bf16.mxu0 %v1095
        %1590 = vmatpush1.bf16.msra.mxu0 %v1094
        %1591 = vmatprep.subr.bf16.mxu0 %v1091
        %1592 = vmatpush1.bf16.msra.mxu0 %v1090
        %1593 = vmatprep.subr.bf16.mxu0 %v1087
        %1594 = vmatpush1.bf16.msra.mxu0 %v1086
        %1595 = vmatprep.subr.bf16.mxu0 %v1083
        %1596 = vmatpush1.bf16.msra.mxu0 %v1082
        %1597 = vmatprep.subr.bf16.mxu0 %v1079
        %1598 = vmatpush1.bf16.msra.mxu0 %v1078
        %1599 = vmatprep.subr.bf16.mxu0 %v1075
        %1600 = vmatpush1.bf16.msra.mxu0 %v1074
        %1601 = vmatprep.subr.bf16.mxu0 %v1135
        %1602 = vmatpush2.bf16.msra.mxu0 %v1134
        %1603 = vmatprep.subr.bf16.mxu0 %v1131
        %1604 = vmatpush2.bf16.msra.mxu0 %v1130
        %1605 = vmatprep.subr.bf16.mxu0 %v1127
        %1606 = vmatpush2.bf16.msra.mxu0 %v1126
        %1607 = vmatprep.subr.bf16.mxu0 %v1123
        %1608 = vmatpush2.bf16.msra.mxu0 %v1122
        %1609 = vmatprep.subr.bf16.mxu0 %v1119
        %1610 = vmatpush2.bf16.msra.mxu0 %v1118
        %1611 = vmatprep.subr.bf16.mxu0 %v1115
        %1612 = vmatpush2.bf16.msra.mxu0 %v1114
        %1613 = vmatprep.subr.bf16.mxu0 %v1111
        %1614 = vmatpush2.bf16.msra.mxu0 %v1110
        %1615 = vmatprep.subr.bf16.mxu0 %v1107
        %1616 = vmatpush2.bf16.msra.mxu0 %v1106
        %1617 = vmatprep.mubr.bf16.mxu0 %v485
        %1618 = vmatmul.mubr.bf16.gmra.mxu0 %v484
        %v1619 = vpop.f32.mrf.mxu0
        %v1620 = vadd.f32 0.0, %v1619
        %v1621 = vpop.f32.mrf.mxu0
        %v1622 = vadd.f32 0.0, %v1621
        %v1623 = vpop.f32.mrf.mxu0
        %v1624 = vadd.f32 0.0, %v1623
        %v1625 = vpop.f32.mrf.mxu0
        %v1626 = vadd.f32 0.0, %v1625
        %1627 = vdwg.mxu0
        %1628 = vmatprep.subr.bf16.mxu0 %v1167
        %1629 = vmatpush1.bf16.msra.mxu0 %v1166
        %1630 = vmatprep.subr.bf16.mxu0 %v1163
        %1631 = vmatpush1.bf16.msra.mxu0 %v1162
        %1632 = vmatprep.subr.bf16.mxu0 %v1159
        %1633 = vmatpush1.bf16.msra.mxu0 %v1158
        %1634 = vmatprep.subr.bf16.mxu0 %v1155
        %1635 = vmatpush1.bf16.msra.mxu0 %v1154
        %1636 = vmatprep.subr.bf16.mxu0 %v1151
        %1637 = vmatpush1.bf16.msra.mxu0 %v1150
        %1638 = vmatprep.subr.bf16.mxu0 %v1147
        %1639 = vmatpush1.bf16.msra.mxu0 %v1146
        %1640 = vmatprep.subr.bf16.mxu0 %v1143
        %1641 = vmatpush1.bf16.msra.mxu0 %v1142
        %1642 = vmatprep.subr.bf16.mxu0 %v1139
        %1643 = vmatpush1.bf16.msra.mxu0 %v1138
        %1644 = vmatprep.subr.bf16.mxu0 %v1199
        %1645 = vmatpush2.bf16.msra.mxu0 %v1198
        %1646 = vmatprep.subr.bf16.mxu0 %v1195
        %1647 = vmatpush2.bf16.msra.mxu0 %v1194
        %1648 = vmatprep.subr.bf16.mxu0 %v1191
        %1649 = vmatpush2.bf16.msra.mxu0 %v1190
        %1650 = vmatprep.subr.bf16.mxu0 %v1187
        %1651 = vmatpush2.bf16.msra.mxu0 %v1186
        %1652 = vmatprep.subr.bf16.mxu0 %v1183
        %1653 = vmatpush2.bf16.msra.mxu0 %v1182
        %1654 = vmatprep.subr.bf16.mxu0 %v1179
        %1655 = vmatpush2.bf16.msra.mxu0 %v1178
        %1656 = vmatprep.subr.bf16.mxu0 %v1175
        %1657 = vmatpush2.bf16.msra.mxu0 %v1174
        %1658 = vmatprep.subr.bf16.mxu0 %v1171
        %1659 = vmatpush2.bf16.msra.mxu0 %v1170
        %1660 = vmatprep.mubr.bf16.mxu0 %v487
        %1661 = vmatmul.mubr.bf16.gmra.mxu0 %v486
        %v1662 = vpop.f32.mrf.mxu0
        %v1663 = vadd.f32 %v1620, %v1662
        %v1664 = vpop.f32.mrf.mxu0
        %v1665 = vadd.f32 %v1622, %v1664
        %v1666 = vpop.f32.mrf.mxu0
        %v1667 = vadd.f32 %v1624, %v1666
        %v1668 = vpop.f32.mrf.mxu0
        %v1669 = vadd.f32 %v1626, %v1668
        %1670 = vdwg.mxu0
        %1671 = vmatprep.subr.bf16.mxu0 %v1231
        %1672 = vmatpush1.bf16.msra.mxu0 %v1230
        %1673 = vmatprep.subr.bf16.mxu0 %v1227
        %1674 = vmatpush1.bf16.msra.mxu0 %v1226
        %1675 = vmatprep.subr.bf16.mxu0 %v1223
        %1676 = vmatpush1.bf16.msra.mxu0 %v1222
        %1677 = vmatprep.subr.bf16.mxu0 %v1219
        %1678 = vmatpush1.bf16.msra.mxu0 %v1218
        %1679 = vmatprep.subr.bf16.mxu0 %v1215
        %1680 = vmatpush1.bf16.msra.mxu0 %v1214
        %1681 = vmatprep.subr.bf16.mxu0 %v1211
        %1682 = vmatpush1.bf16.msra.mxu0 %v1210
        %1683 = vmatprep.subr.bf16.mxu0 %v1207
        %1684 = vmatpush1.bf16.msra.mxu0 %v1206
        %1685 = vmatprep.subr.bf16.mxu0 %v1203
        %1686 = vmatpush1.bf16.msra.mxu0 %v1202
        %1687 = vmatprep.subr.bf16.mxu0 %v1263
        %1688 = vmatpush2.bf16.msra.mxu0 %v1262
        %1689 = vmatprep.subr.bf16.mxu0 %v1259
        %1690 = vmatpush2.bf16.msra.mxu0 %v1258
        %1691 = vmatprep.subr.bf16.mxu0 %v1255
        %1692 = vmatpush2.bf16.msra.mxu0 %v1254
        %1693 = vmatprep.subr.bf16.mxu0 %v1251
        %1694 = vmatpush2.bf16.msra.mxu0 %v1250
        %1695 = vmatprep.subr.bf16.mxu0 %v1247
        %1696 = vmatpush2.bf16.msra.mxu0 %v1246
        %1697 = vmatprep.subr.bf16.mxu0 %v1243
        %1698 = vmatpush2.bf16.msra.mxu0 %v1242
        %1699 = vmatprep.subr.bf16.mxu0 %v1239
        %1700 = vmatpush2.bf16.msra.mxu0 %v1238
        %1701 = vmatprep.subr.bf16.mxu0 %v1235
        %1702 = vmatpush2.bf16.msra.mxu0 %v1234
        %1703 = vmatprep.mubr.bf16.mxu0 %v489
        %1704 = vmatmul.mubr.bf16.gmra.mxu0 %v488
        %v1705 = vpop.f32.mrf.mxu0
        %v1706 = vadd.f32 %v1663, %v1705
        %v1707 = vpop.f32.mrf.mxu0
        %v1708 = vadd.f32 %v1665, %v1707
        %v1709 = vpop.f32.mrf.mxu0
        %v1710 = vadd.f32 %v1667, %v1709
        %v1711 = vpop.f32.mrf.mxu0
        %v1712 = vadd.f32 %v1669, %v1711
        %1713 = vdwg.mxu0
        %v1714 = vadd.f32 %v260, %v1577
        %v1715 = vadd.f32 %v261, %v1579
        %v1716 = vadd.f32 %v262, %v1706
        %v1717 = vadd.f32 %v263, %v1708
        %v1718 = vadd.f32 %v264, %v1581
        %v1719 = vadd.f32 %v265, %v1583
        %v1720 = vadd.f32 %v266, %v1710
        %v1721 = vadd.f32 %v267, %v1712
        %1722 = vst [vmem:[#allocation2] sm:$0xff] %v1714
        %1723 = vst [vmem:[#allocation2 + $0x8] sm:$0xff] %v1715
        %1724 = vst [vmem:[#allocation2 + $0x10] sm:$0xff] %v1716
        %1725 = vst [vmem:[#allocation2 + $0x18] sm:$0xff] %v1717
        %1726 = vst [vmem:[#allocation2 + $0x20] sm:$0xff] %v1718
        %1727 = vst [vmem:[#allocation2 + $0x28] sm:$0xff] %v1719
        %1728 = vst [vmem:[#allocation2 + $0x30] sm:$0xff] %v1720
        %1729 = vst [vmem:[#allocation2 + $0x38] sm:$0xff] %v1721
        %p1730 = scmp.eq.s32.totalorder %s19, 2
        // Predicated region
        $region60: #{_forward_impl.8} parent=50 // pred_check
          %p1731 = pneg %p1730
        $region61: #{_forward_impl.8} parent=50 // pred_check_branch
          %1733 = sbr.rel (%p1731) target = $region63
        $region62: #{_forward_impl.8} parent=50 // pred_region
          %v1734 = vld [vmem:[#allocation2] sm:$0xff]
          %v1735 = vld [vmem:[#allocation2 + $0x8] sm:$0xff]
          %v1736 = vld [vmem:[#allocation2 + $0x10] sm:$0xff]
          %v1737 = vld [vmem:[#allocation2 + $0x18] sm:$0xff]
          %v1738 = vld [vmem:[#allocation2 + $0x20] sm:$0xff]
          %v1739 = vld [vmem:[#allocation2 + $0x28] sm:$0xff]
          %v1740 = vld [vmem:[#allocation2 + $0x30] sm:$0xff]
          %v1741 = vld [vmem:[#allocation2 + $0x38] sm:$0xff]
          %v1742 = vld [vmem:[%s2] sm:$0xf]
          %v1744 = vlaneseq
          %v1745 = vshrl.u32 %v1744, 7
          %v1746 = vsub.s32 0, %v1745
          %v1747 = vrot.slane %v1742, %v1746
          %v1748 = vlaneseq
          %v1749 = vshrl.u32 %v1748, 7
          %v1750 = vsub.s32 1, %v1749
          %v1751 = vrot.slane %v1742, %v1750
          %v1752 = vlaneseq
          %v1753 = vshrl.u32 %v1752, 7
          %v1754 = vsub.s32 2, %v1753
          %v1755 = vrot.slane %v1742, %v1754
          %v1756 = vlaneseq
          %v1757 = vshrl.u32 %v1756, 7
          %v1758 = vsub.s32 3, %v1757
          %v1759 = vrot.slane %v1742, %v1758
          %v1764 = vadd.f32 %v1734, %v1747
          %v1765 = vadd.f32 %v1735, %v1751
          %v1766 = vadd.f32 %v1736, %v1755
          %v1767 = vadd.f32 %v1737, %v1759
          %v1768 = vadd.f32 %v1738, %v1747
          %v1769 = vadd.f32 %v1739, %v1751
          %v1770 = vadd.f32 %v1740, %v1755
          %v1771 = vadd.f32 %v1741, %v1759
          %v1772 = vmax.f32 %v1764, 0.0
          %v1773 = vmax.f32 %v1765, 0.0
          %v1774 = vmax.f32 %v1766, 0.0
          %v1775 = vmax.f32 %v1767, 0.0
          %v1776 = vmax.f32 %v1768, 0.0
          %v1777 = vmax.f32 %v1769, 0.0
          %v1778 = vmax.f32 %v1770, 0.0
          %v1779 = vmax.f32 %v1771, 0.0
          %1780 = vst [vmem:[%s246] sm:$0xff] %v1772
          %1781 = vst [vmem:[%s246 + $0x8] sm:$0xff] %v1773
          %1782 = vst [vmem:[%s246 + $0x10] sm:$0xff] %v1774
          %1783 = vst [vmem:[%s246 + $0x18] sm:$0xff] %v1775
          %1784 = vst [vmem:[%s246 + $0x20] sm:$0xff] %v1776
          %1785 = vst [vmem:[%s246 + $0x28] sm:$0xff] %v1777
          %1786 = vst [vmem:[%s246 + $0x30] sm:$0xff] %v1778
          %1787 = vst [vmem:[%s246 + $0x38] sm:$0xff] %v1779
        $region63: #{_forward_impl.8} parent=50 // pred_fallthru
          _
        %s1788 = smul.u32 2, %s18
        %p1789 = scmp.lt.s32.totalorder %s1788, 3
        %s1790 = scalar_select %p1789, %s1788, 3
        %s1791 = smul.addr %s1790, 4
        %s1792 = smul.addr %s1791, 8
        %s1793 = scalar_lea.vmem %s3, %s1792
        // Predicated region
        $region64: #{_forward_impl.8} parent=50 // pred_check
          %p1794 = pneg %p119
        $region65: #{_forward_impl.8} parent=50 // pred_check_branch
          %1796 = sbr.rel (%p1794) target = $region67
        $region66: #{_forward_impl.8} parent=50 // pred_region
          %s1797 = smul.u32 2, %s18
        $region67: #{_forward_impl.8} parent=50 // pred_fallthru
          _
      $region51: #{_forward_impl.8} parent=5 // pred_fallthru
        _
      %p1798 = scmp.le.s32.totalorder 2, %s9
      // Predicated region
      $region68: #{_forward_impl.8} parent=5 // pred_check
        %p1799 = pneg %p1798
      $region69: #{_forward_impl.8} parent=5 // pred_check_branch
        %1801 = sbr.rel (%p1799) target = $region71
      $region70: #{_forward_impl.8} parent=5 // pred_region
        %s1802 = ssub.s32 %s9, 2
        // Predicated region
        $region72: #{_forward_impl.8} parent=70 // pred_check
          %p1803 = pneg %p125
        $region73: #{_forward_impl.8} parent=70 // pred_check_branch
          %1805 = sbr.rel (%p1803) target = $region75
        $region74: #{_forward_impl.8} parent=70 // pred_region
          %s1806 = smul.u32 2, %s20
          %p1807 = scmp.lt.s32.totalorder %s1806, 3
          %s1808 = scalar_select %p1807, %s1806, 3
          %s1809 = smul.addr %s1808, 4
          %s1810 = smul.addr %s1809, 8
          %s1811 = scalar_lea.vmem %s3, %s1810
        $region75: #{_forward_impl.8} parent=70 // pred_fallthru
          _
      $region71: #{_forward_impl.8} parent=5 // pred_fallthru
        _
    $region6: #{_forward_impl.8} parent=1 // loop_footer
      %s13 = sadd.s32 1, %s9
    $region7: #{_forward_impl.8} parent=1 // loop_footer_branch
      %8 = sbr.rel target = $region3
    $region8: #{_forward_impl.8} parent=1 // loop_exit
      _

// kernel: _forward_impl.9
$region0: #{_forward_impl.9}
  #allocation0 [shape = 'u32[]', space=smem, size = 0x4, offset = 0x4, fixed_abs, tag = 'smem constant byte address 0x4 - core index']
  #allocation1 [shape = 'u32[144,128]{1,0:T(1,128)}', space=vmem, size = 0x12000, scoped, tag = 'internal scratch']
  #allocation2 [shape = 'f32[64,256]{1,0:T(8,128)}', space=vmem, size = 0x10000, scoped, tag = 'scratch operand']
  %s0 = inlined_call_operand.vmem [shape: bf16[128,1280], index: 0, kind: input, shape index: {}]
  %s1 = inlined_call_operand.vmem [shape: bf16[1280,256], index: 1, kind: input, shape index: {}]
  %s2 = inlined_call_operand.vmem [shape: f32[1,256], index: 2, kind: input, shape index: {}]
  %s3 = inlined_call_operand.vmem [shape: f32[128,256], index: 3, kind: output, shape index: {}]
  %s4 = sld [smem:[#allocation0]]
  $region79: #{_forward_impl.9} parent=0
    _
  %s6 = ssub.s32 1, %s4
  %s7 = scalar_select 0, %s6, %s4
  $region1: #{_forward_impl.9} parent=0
    #allocation3 [shape = 'u8[163840]{0}', space=vmem, size = 0x28000, scoped, tag = 'input window, operand 0']
    loop: start=0, step=1, limit=6
    $region2: #{_forward_impl.9} parent=1 // loop_pre_header
      _
    $region3: #{_forward_impl.9} parent=1 // loop_header
      %s9 = sphi 0, %s13
      %p10 = scmp.ge.s32.totalorder %s9, 6
      %s16 = sphi 0, %s28
      %s17 = sphi 0, %s24
      %s18 = sphi 0, %s16
      %s19 = sphi 0, %s17
      %s20 = sphi 0, %s18
      %s21 = sphi 0, %s19
      %s33 = sphi 0, %s35
      %s36 = sphi 0, %s33
      %s37 = sphi 0, %s36
      %s53 = sphi 0, %s37
      %s59 = sphi 0, %s61
      %s62 = sphi 0, %s59
      %s63 = sphi 0, %s62
      %s79 = sphi 0, %s63
      %s83 = sphi 0, %s83
      %s85 = sphi 0, %s83
      %s86 = sphi 0, %s85
      %s100 = sphi 0, %s86
      %s106 = sphi 0, %s108
      %s109 = sphi 0, %s106
      %s110 = sphi 0, %s109
      %s126 = sphi 0, %s110
    $region4: #{_forward_impl.9} parent=1 // loop_header_branch
      %12 = sbr.rel (%p10) target = $region8
    $region5: #{_forward_impl.9} parent=1 // loop_body
      %s14 = ssub.s32 %s9, 1
      %s15 = ssub.s32 %s9, 2
      %s22 = sadd.s32 1, %s17
      %p23 = scmp.ge.s32.totalorder %s22, 2
      %s24 = scalar_select %p23, 0, %s22
      %s25 = sadd.s32 1, %s16
      %s26 = scalar_select %p23, %s25, %s16
      %p27 = scmp.ge.s32.totalorder %s26, 2
      %s28 = scalar_select %p27, 0, %s26
      %s29 = ssub.s32 %s16, %s28
      %s30 = ssub.s32 %s17, %s24
      %s31 = sor.u32 %s29, %s30
      %p32 = scmp.eq.s32.totalorder %s31, 0
      %s34 = sadd.s32 %s33, 1
      %s35 = scalar_select %p32, %s33, %s34
      %p38 = pneg %p32
      %p39 = scmp.eq.s32.totalorder %s9, 3
      %p40 = por %p38, %p39
      %p41 = scmp.ne.s32.totalorder %s33, %s36
      %p42 = scmp.eq.s32.totalorder %s9, 0
      %p43 = por %p41, %p42
      %p44 = scmp.ne.s32.totalorder %s33, %s36
      %p45 = scmp.eq.s32.totalorder %s14, 3
      %p46 = por %p44, %p45
      %p47 = scmp.ne.s32.totalorder %s36, %s37
      %p48 = scmp.eq.s32.totalorder %s14, 0
      %p49 = por %p47, %p48
      %p50 = scmp.ne.s32.totalorder %s36, %s37
      %p51 = scmp.eq.s32.totalorder %s15, 3
      %p52 = por %p50, %p51
      %p54 = scmp.ne.s32.totalorder %s37, %s53
      %p55 = scmp.eq.s32.totalorder %s15, 0
      %p56 = por %p54, %p55
      %s57 = ssub.s32 %s17, %s24
      %p58 = scmp.eq.s32.totalorder %s57, 0
      %s60 = sadd.s32 %s59, 1
      %s61 = scalar_select %p58, %s59, %s60
      %p64 = pneg %p58
      %p65 = scmp.eq.s32.totalorder %s9, 3
      %p66 = por %p64, %p65
      %p67 = scmp.ne.s32.totalorder %s59, %s62
      %p68 = scmp.eq.s32.totalorder %s9, 0
      %p69 = por %p67, %p68
      %p70 = scmp.ne.s32.totalorder %s59, %s62
      %p71 = scmp.eq.s32.totalorder %s14, 3
      %p72 = por %p70, %p71
      %p73 = scmp.ne.s32.totalorder %s62, %s63
      %p74 = scmp.eq.s32.totalorder %s14, 0
      %p75 = por %p73, %p74
      %p76 = scmp.ne.s32.totalorder %s62, %s63
      %p77 = scmp.eq.s32.totalorder %s15, 3
      %p78 = por %p76, %p77
      %p80 = scmp.ne.s32.totalorder %s63, %s79
      %p81 = scmp.eq.s32.totalorder %s15, 0
      %p82 = por %p80, %p81
      %s84 = sadd.s32 %s83, 1
      %p87 = scmp.eq.s32.totalorder %s9, 3
      %p88 = scmp.ne.s32.totalorder %s83, %s85
      %p89 = scmp.eq.s32.totalorder %s9, 0
      %p90 = por %p88, %p89
      %p91 = scmp.ne.s32.totalorder %s83, %s85
      %p92 = scmp.eq.s32.totalorder %s14, 3
      %p93 = por %p91, %p92
      %p94 = scmp.ne.s32.totalorder %s85, %s86
      %p95 = scmp.eq.s32.totalorder %s14, 0
      %p96 = por %p94, %p95
      %p97 = scmp.ne.s32.totalorder %s85, %s86
      %p98 = scmp.eq.s32.totalorder %s15, 3
      %p99 = por %p97, %p98
      %p101 = scmp.ne.s32.totalorder %s86, %s100
      %p102 = scmp.eq.s32.totalorder %s15, 0
      %p103 = por %p101, %p102
      %s104 = ssub.s32 %s16, %s28
      %p105 = scmp.eq.s32.totalorder %s104, 0
      %s107 = sadd.s32 %s106, 1
      %s108 = scalar_select %p105, %s106, %s107
      %p111 = pneg %p105
      %p112 = scmp.eq.s32.totalorder %s9, 3
      %p113 = por %p111, %p112
      %p114 = scmp.ne.s32.totalorder %s106, %s109
      %p115 = scmp.eq.s32.totalorder %s9, 0
      %p116 = por %p114, %p115
      %p117 = scmp.ne.s32.totalorder %s106, %s109
      %p118 = scmp.eq.s32.totalorder %s14, 3
      %p119 = por %p117, %p118
      %p120 = scmp.ne.s32.totalorder %s109, %s110
      %p121 = scmp.eq.s32.totalorder %s14, 0
      %p122 = por %p120, %p121
      %p123 = scmp.ne.s32.totalorder %s109, %s110
      %p124 = scmp.eq.s32.totalorder %s15, 3
      %p125 = por %p123, %p124
      %p127 = scmp.ne.s32.totalorder %s110, %s126
      %p128 = scmp.eq.s32.totalorder %s15, 0
      %p129 = por %p127, %p128
      %p130 = scmp.le.s32.totalorder 1, %s9
      %p131 = scmp.lt.s32.totalorder %s9, 5
      %p132 = pnand %p130, %p131
      %p133 = pneg %p132
      // Predicated region
      $region9: #{_forward_impl.9} parent=5 // pred_check
        _
      $region10: #{_forward_impl.9} parent=5 // pred_check_branch
        %135 = sbr.rel (%p132) target = $region12
      $region11: #{_forward_impl.9} parent=5 // pred_region
        %s136 = ssub.s32 %s9, 1
        // Predicated region
        $region13: #{_forward_impl.9} parent=11 // pred_check
          %p137 = pneg %p96
        $region14: #{_forward_impl.9} parent=11 // pred_check_branch
          %139 = sbr.rel (%p137) target = $region16
        $region15: #{_forward_impl.9} parent=11 // pred_region
          _
        $region16: #{_forward_impl.9} parent=11 // pred_fallthru
          _
      $region12: #{_forward_impl.9} parent=5 // pred_fallthru
        _
      %p140 = scmp.lt.s32.totalorder %s9, 4
      // Predicated region
      $region17: #{_forward_impl.9} parent=5 // pred_check
        %p141 = pneg %p140
      $region18: #{_forward_impl.9} parent=5 // pred_check_branch
        %143 = sbr.rel (%p141) target = $region20
      $region19: #{_forward_impl.9} parent=5 // pred_region
        // Predicated region
        $region21: #{_forward_impl.9} parent=19 // pred_check
          %p144 = pneg %p43
        $region22: #{_forward_impl.9} parent=19 // pred_check_branch
          %146 = sbr.rel (%p144) target = $region24
        $region23: #{_forward_impl.9} parent=19 // pred_region
          %s147 = sand.u32 %s33, 1
          %s148 = sand.u32 %s33, 1
          %s149 = smul.addr %s148, 160
          %s150 = scalar_lea.vmem [#allocation3], %s149
          %s151 = smul.u32 8, %s16
          %s152 = smul.u32 5, %s17
          %s153 = smul.addr %s151, 10
          %s154 = sadd.s32 %s152, %s153
          %s155 = smul.addr %s154, 4
          %s156 = scalar_lea.vmem %s0, %s155
          // Predicated region
          $region25: #{_forward_impl.9} parent=23 // pred_check
            _
          $region26: #{_forward_impl.9} parent=23 // pred_check_branch
            %158 = sbr.rel (0) target = $region28
          $region27: #{_forward_impl.9} parent=23 // pred_region
            // Predicated region
            $region29: #{_forward_impl.9} parent=27 // pred_check
              _
            $region30: #{_forward_impl.9} parent=27 // pred_check_branch
              %160 = sbr.rel (0) target = $region32
            $region31: #{_forward_impl.9} parent=27 // pred_region
              %s161 = scalar_lea.vmem %s156, 16
              %s162 = scalar_lea.vmem %s150, 16 [#allocation3]
              loop: start=0, step=1, limit=1
              $region33: #{_forward_impl.9} parent=31 // loop_pre_header
                _
              $region34: #{_forward_impl.9} parent=31 // loop_header
                %s164 = sphi 0, %s168
                %p165 = scmp.ge.s32.totalorder %s164, 1
                %s169 = sphi %s156, %s156
                %s170 = sphi %s150, %s150
              $region35: #{_forward_impl.9} parent=31 // loop_header_branch
                %167 = sbr.rel (%p165) target = $region39
              $region36: #{_forward_impl.9} parent=31 // loop_body
                %v171 = vld [vmem:[%s169] sm:$0xff]
                %172 = vst [vmem:[%s170] sm:$0xff] %v171
                %v173 = vld [vmem:[%s169 + $0x8] sm:$0xff]
                %174 = vst [vmem:[%s170 + $0x8] sm:$0xff] %v173
                %v175 = vld [vmem:[%s169 + $0x28] sm:$0xff]
                %176 = vst [vmem:[%s170 + $0x14] sm:$0xff] %v175
                %v177 = vld [vmem:[%s169 + $0x30] sm:$0xff]
                %178 = vst [vmem:[%s170 + $0x1c] sm:$0xff] %v177
                %v179 = vld [vmem:[%s169 + $0x50] sm:$0xff]
                %180 = vst [vmem:[%s170 + $0x28] sm:$0xff] %v179
                %v181 = vld [vmem:[%s169 + $0x58] sm:$0xff]
                %182 = vst [vmem:[%s170 + $0x30] sm:$0xff] %v181
                %v183 = vld [vmem:[%s169 + $0x78] sm:$0xff]
                %184 = vst [vmem:[%s170 + $0x3c] sm:$0xff] %v183
                %v185 = vld [vmem:[%s169 + $0x80] sm:$0xff]
                %186 = vst [vmem:[%s170 + $0x44] sm:$0xff] %v185
                %v187 = vld [vmem:[%s169 + $0xa0] sm:$0xff]
                %188 = vst [vmem:[%s170 + $0x50] sm:$0xff] %v187
                %v189 = vld [vmem:[%s169 + $0xa8] sm:$0xff]
                %190 = vst [vmem:[%s170 + $0x58] sm:$0xff] %v189
                %v191 = vld [vmem:[%s169 + $0xc8] sm:$0xff]
                %192 = vst [vmem:[%s170 + $0x64] sm:$0xff] %v191
                %v193 = vld [vmem:[%s169 + $0xd0] sm:$0xff]
                %194 = vst [vmem:[%s170 + $0x6c] sm:$0xff] %v193
                %v195 = vld [vmem:[%s169 + $0xf0] sm:$0xff]
                %196 = vst [vmem:[%s170 + $0x78] sm:$0xff] %v195
                %v197 = vld [vmem:[%s169 + $0xf8] sm:$0xff]
                %198 = vst [vmem:[%s170 + $0x80] sm:$0xff] %v197
                %v199 = vld [vmem:[%s169 + $0x118] sm:$0xff]
                %200 = vst [vmem:[%s170 + $0x8c] sm:$0xff] %v199
                %v201 = vld [vmem:[%s169 + $0x120] sm:$0xff]
                %202 = vst [vmem:[%s170 + $0x94] sm:$0xff] %v201
              $region37: #{_forward_impl.9} parent=31 // loop_footer
                %s168 = sadd.s32 1, %s164
              $region38: #{_forward_impl.9} parent=31 // loop_footer_branch
                %163 = sbr.rel target = $region34
              $region39: #{_forward_impl.9} parent=31 // loop_exit
                _
              %s204 = ssub.s32 16, 1
              loop: start=0, step=1, limit=1
              $region40: #{_forward_impl.9} parent=31 // loop_pre_header
                _
              $region41: #{_forward_impl.9} parent=31 // loop_header
                %s206 = sphi 0, %s210
                %p207 = scmp.ge.s32.totalorder %s206, 1
                %s211 = sphi %s161, %s161
                %s212 = sphi %s162, %s162
              $region42: #{_forward_impl.9} parent=31 // loop_header_branch
                %209 = sbr.rel (%p207) target = $region46
              $region43: #{_forward_impl.9} parent=31 // loop_body
                %v213 = vld [vmem:[%s211] sm:%s204]
                %214 = vst [vmem:[%s212] sm:%s204] %v213
                %v215 = vld [vmem:[%s211 + $0x28] sm:%s204]
                %216 = vst [vmem:[%s212 + $0x14] sm:%s204] %v215
                %v217 = vld [vmem:[%s211 + $0x50] sm:%s204]
                %218 = vst [vmem:[%s212 + $0x28] sm:%s204] %v217
                %v219 = vld [vmem:[%s211 + $0x78] sm:%s204]
                %220 = vst [vmem:[%s212 + $0x3c] sm:%s204] %v219
                %v221 = vld [vmem:[%s211 + $0xa0] sm:%s204]
                %222 = vst [vmem:[%s212 + $0x50] sm:%s204] %v221
                %v223 = vld [vmem:[%s211 + $0xc8] sm:%s204]
                %224 = vst [vmem:[%s212 + $0x64] sm:%s204] %v223
                %v225 = vld [vmem:[%s211 + $0xf0] sm:%s204]
                %226 = vst [vmem:[%s212 + $0x78] sm:%s204] %v225
                %v227 = vld [vmem:[%s211 + $0x118] sm:%s204]
                %228 = vst [vmem:[%s212 + $0x8c] sm:%s204] %v227
              $region44: #{_forward_impl.9} parent=31 // loop_footer
                %s210 = sadd.s32 1, %s206
              $region45: #{_forward_impl.9} parent=31 // loop_footer_branch
                %205 = sbr.rel target = $region41
              $region46: #{_forward_impl.9} parent=31 // loop_exit
                _
            $region32: #{_forward_impl.9} parent=27 // pred_fallthru
              _
          $region28: #{_forward_impl.9} parent=23 // pred_fallthru
            _
          %229 = vnop
        $region24: #{_forward_impl.9} parent=19 // pred_fallthru
          _
        // Predicated region
        $region47: #{_forward_impl.9} parent=19 // pred_check
          %p230 = pneg %p69
        $region48: #{_forward_impl.9} parent=19 // pred_check_branch
          %232 = sbr.rel (%p230) target = $region50
        $region49: #{_forward_impl.9} parent=19 // pred_region
          %s233 = smul.u32 80, %s17
          %p234 = scmp.lt.s32.totalorder %s233, 159
          %s235 = scalar_select %p234, %s233, 159
          %s236 = smul.addr %s235, 2
          %s237 = smul.addr %s236, 4
          %s238 = scalar_lea.vmem %s1, %s237
          %s239 = smul.u32 80, %s17
        $region50: #{_forward_impl.9} parent=19 // pred_fallthru
          _
      $region20: #{_forward_impl.9} parent=5 // pred_fallthru
        _
      %p240 = scmp.le.s32.totalorder 1, %s9
      %p241 = scmp.lt.s32.totalorder %s9, 5
      %p242 = pnand %p240, %p241
      %p243 = pneg %p242
      // Predicated region
      $region51: #{_forward_impl.9} parent=5 // pred_check
        _
      $region52: #{_forward_impl.9} parent=5 // pred_check_branch
        %245 = sbr.rel (%p242) target = $region54
      $region53: #{_forward_impl.9} parent=5 // pred_region
        %s246 = ssub.s32 %s9, 1
        %s247 = sand.u32 %s36, 1
        %s248 = sand.u32 %s36, 1
        %s249 = smul.addr %s248, 160
        %s250 = scalar_lea.vmem [#allocation3], %s249
        // Predicated region
        $region55: #{_forward_impl.9} parent=53 // pred_check
          %p251 = pneg %p49
        $region56: #{_forward_impl.9} parent=53 // pred_check_branch
          %253 = sbr.rel (%p251) target = $region58
        $region57: #{_forward_impl.9} parent=53 // pred_region
          _
        $region58: #{_forward_impl.9} parent=53 // pred_fallthru
          _
        %s254 = sand.u32 %s36, 1
        %s255 = sand.u32 %s36, 1
        %s256 = smul.addr %s255, 160
        %s257 = scalar_lea.vmem [#allocation3], %s256
        %p258 = pneg %p49
        %p259 = pneg %p46
        %s260 = smul.u32 80, %s19
        %p261 = scmp.lt.s32.totalorder %s260, 159
        %s262 = scalar_select %p261, %s260, 159
        %s263 = smul.addr %s262, 2
        %s264 = smul.addr %s263, 4
        %s265 = scalar_lea.vmem %s1, %s264
        %p266 = pneg %p75
        %p267 = pneg %p72
        %p268 = pneg %p96
        %p269 = pneg %p93
        %p270 = pneg %p122
        %p271 = pneg %p119
        %s272 = smul.u32 8, %s18
        %p273 = scmp.lt.s32.totalorder %s272, 15
        %s274 = scalar_select %p273, %s272, 15
        %s275 = smul.addr %s274, 2
        %s276 = smul.addr %s275, 8
        %s277 = scalar_lea.vmem %s3, %s276
        %s278 = smul.u32 8, %s18
        %s279 = smul.u32 5, %s19
        %s280 = smul.u32 80, %s19
        %p281 = scmp.lt.s32.totalorder %s280, 159
        %s282 = scalar_select %p281, %s280, 159
        %s283 = smul.addr %s282, 2
        %s284 = smul.addr %s283, 4
        %s285 = scalar_lea.vmem %s1, %s284
        %s286 = smul.u32 80, %s19
        %s287 = smul.u32 8, %s18
        %p288 = scmp.lt.s32.totalorder %s287, 15
        %s289 = scalar_select %p288, %s287, 15
        %s290 = smul.addr %s289, 2
        %s291 = smul.addr %s290, 8
        %s292 = scalar_lea.vmem %s3, %s291
        %s293 = smul.u32 8, %s18
        %p295 = scmp.eq.s32.totalorder %s19, 0
        // Predicated region
        $region59: #{_forward_impl.9} parent=53 // pred_check
          %p296 = pneg %p295
        $region60: #{_forward_impl.9} parent=53 // pred_check_branch
          %298 = sbr.rel (%p296) target = $region62
        $region61: #{_forward_impl.9} parent=53 // pred_region
          %299 = vst [vmem:[#allocation2] sm:$0xff] 0.0
          %300 = vst [vmem:[#allocation2 + $0x8] sm:$0xff] 0.0
          %301 = vst [vmem:[#allocation2 + $0x10] sm:$0xff] 0.0
          %302 = vst [vmem:[#allocation2 + $0x18] sm:$0xff] 0.0
          %303 = vst [vmem:[#allocation2 + $0x20] sm:$0xff] 0.0
          %304 = vst [vmem:[#allocation2 + $0x28] sm:$0xff] 0.0
          %305 = vst [vmem:[#allocation2 + $0x30] sm:$0xff] 0.0
          %306 = vst [vmem:[#allocation2 + $0x38] sm:$0xff] 0.0
          %307 = vst [vmem:[#allocation2 + $0x40] sm:$0xff] 0.0
          %308 = vst [vmem:[#allocation2 + $0x48] sm:$0xff] 0.0
          %309 = vst [vmem:[#allocation2 + $0x50] sm:$0xff] 0.0
          %310 = vst [vmem:[#allocation2 + $0x58] sm:$0xff] 0.0
          %311 = vst [vmem:[#allocation2 + $0x60] sm:$0xff] 0.0
          %312 = vst [vmem:[#allocation2 + $0x68] sm:$0xff] 0.0
          %313 = vst [vmem:[#allocation2 + $0x70] sm:$0xff] 0.0
          %314 = vst [vmem:[#allocation2 + $0x78] sm:$0xff] 0.0
        $region62: #{_forward_impl.9} parent=53 // pred_fallthru
          _
        %v315 = vld [vmem:[#allocation2] sm:$0xff]
        %v316 = vld [vmem:[#allocation2 + $0x8] sm:$0xff]
        %v317 = vld [vmem:[#allocation2 + $0x10] sm:$0xff]
        %v318 = vld [vmem:[#allocation2 + $0x18] sm:$0xff]
        %v319 = vld [vmem:[#allocation2 + $0x20] sm:$0xff]
        %v320 = vld [vmem:[#allocation2 + $0x28] sm:$0xff]
        %v321 = vld [vmem:[#allocation2 + $0x30] sm:$0xff]
        %v322 = vld [vmem:[#allocation2 + $0x38] sm:$0xff]
        %v323 = vld [vmem:[#allocation2 + $0x40] sm:$0xff]
        %v324 = vld [vmem:[#allocation2 + $0x48] sm:$0xff]
        %v325 = vld [vmem:[#allocation2 + $0x50] sm:$0xff]
        %v326 = vld [vmem:[#allocation2 + $0x58] sm:$0xff]
        %v327 = vld [vmem:[#allocation2 + $0x60] sm:$0xff]
        %v328 = vld [vmem:[#allocation2 + $0x68] sm:$0xff]
        %v329 = vld [vmem:[#allocation2 + $0x70] sm:$0xff]
        %v330 = vld [vmem:[#allocation2 + $0x78] sm:$0xff]
        %v331 = vld [vmem:[%s250] sm:$0xff]
        %v332 = vld [vmem:[%s250 + $0x8] sm:$0xff]
        %v333 = vld [vmem:[%s250 + $0x10] sm:$0xf]
        %v334 = vld [vmem:[%s250 + $0x14] sm:$0xff]
        %v335 = vld [vmem:[%s250 + $0x1c] sm:$0xff]
        %v336 = vld [vmem:[%s250 + $0x24] sm:$0xf]
        %v337 = vld [vmem:[%s250 + $0x28] sm:$0xff]
        %v338 = vld [vmem:[%s250 + $0x30] sm:$0xff]
        %v339 = vld [vmem:[%s250 + $0x38] sm:$0xf]
        %v340 = vld [vmem:[%s250 + $0x3c] sm:$0xff]
        %v341 = vld [vmem:[%s250 + $0x44] sm:$0xff]
        %v342 = vld [vmem:[%s250 + $0x4c] sm:$0xf]
        %v343 = vld [vmem:[%s250 + $0x50] sm:$0xff]
        %v344 = vld [vmem:[%s250 + $0x58] sm:$0xff]
        %v345 = vld [vmem:[%s250 + $0x60] sm:$0xf]
        %v346 = vld [vmem:[%s250 + $0x64] sm:$0xff]
        %v347 = vld [vmem:[%s250 + $0x6c] sm:$0xff]
        %v348 = vld [vmem:[%s250 + $0x74] sm:$0xf]
        %v349 = vld [vmem:[%s250 + $0x78] sm:$0xff]
        %v350 = vld [vmem:[%s250 + $0x80] sm:$0xff]
        %v351 = vld [vmem:[%s250 + $0x88] sm:$0xf]
        %v352 = vld [vmem:[%s250 + $0x8c] sm:$0xff]
        %v353 = vld [vmem:[%s250 + $0x94] sm:$0xff]
        %v354 = vld [vmem:[%s250 + $0x9c] sm:$0xf]
        %v355 = vld [vmem:[%s285] sm:$0xff]
        %v356 = vld [vmem:[%s285 + $0x8] sm:$0xff]
        %v357 = vld [vmem:[%s285 + $0x10] sm:$0xff]
        %v358 = vld [vmem:[%s285 + $0x18] sm:$0xff]
        %v359 = vld [vmem:[%s285 + $0x20] sm:$0xff]
        %v360 = vld [vmem:[%s285 + $0x28] sm:$0xff]
        %v361 = vld [vmem:[%s285 + $0x30] sm:$0xff]
        %v362 = vld [vmem:[%s285 + $0x38] sm:$0xff]
        %v363 = vld [vmem:[%s285 + $0x40] sm:$0xff]
        %v364 = vld [vmem:[%s285 + $0x48] sm:$0xff]
        %v365 = vld [vmem:[%s285 + $0x50] sm:$0xff]
        %v366 = vld [vmem:[%s285 + $0x58] sm:$0xff]
        %v367 = vld [vmem:[%s285 + $0x60] sm:$0xff]
        %v368 = vld [vmem:[%s285 + $0x68] sm:$0xff]
        %v369 = vld [vmem:[%s285 + $0x70] sm:$0xff]
        %v370 = vld [vmem:[%s285 + $0x78] sm:$0xff]
        %v371 = vld [vmem:[%s285 + $0x80] sm:$0xff]
        %v372 = vld [vmem:[%s285 + $0x88] sm:$0xff]
        %v373 = vld [vmem:[%s285 + $0x90] sm:$0xff]
        %v374 = vld [vmem:[%s285 + $0x98] sm:$0xff]
        %v375 = vld [vmem:[%s285 + $0xa0] sm:$0xff]
        %v376 = vld [vmem:[%s285 + $0xa8] sm:$0xff]
        %v377 = vld [vmem:[%s285 + $0xb0] sm:$0xff]
        %v378 = vld [vmem:[%s285 + $0xb8] sm:$0xff]
        %v379 = vld [vmem:[%s285 + $0xc0] sm:$0xff]
        %v380 = vld [vmem:[%s285 + $0xc8] sm:$0xff]
        %v381 = vld [vmem:[%s285 + $0xd0] sm:$0xff]
        %v382 = vld [vmem:[%s285 + $0xd8] sm:$0xff]
        %v383 = vld [vmem:[%s285 + $0xe0] sm:$0xff]
        %v384 = vld [vmem:[%s285 + $0xe8] sm:$0xff]
        %v385 = vld [vmem:[%s285 + $0xf0] sm:$0xff]
        %v386 = vld [vmem:[%s285 + $0xf8] sm:$0xff]
        %v387 = vld [vmem:[%s285 + $0x100] sm:$0xff]
        %v388 = vld [vmem:[%s285 + $0x108] sm:$0xff]
        %v389 = vld [vmem:[%s285 + $0x110] sm:$0xff]
        %v390 = vld [vmem:[%s285 + $0x118] sm:$0xff]
        %v391 = vld [vmem:[%s285 + $0x120] sm:$0xff]
        %v392 = vld [vmem:[%s285 + $0x128] sm:$0xff]
        %v393 = vld [vmem:[%s285 + $0x130] sm:$0xff]
        %v394 = vld [vmem:[%s285 + $0x138] sm:$0xff]
        %v395 = vld [vmem:[%s285 + $0x140] sm:$0xff]
        %v396 = vld [vmem:[%s285 + $0x148] sm:$0xff]
        %v397 = vld [vmem:[%s285 + $0x150] sm:$0xff]
        %v398 = vld [vmem:[%s285 + $0x158] sm:$0xff]
        %v399 = vld [vmem:[%s285 + $0x160] sm:$0xff]
        %v400 = vld [vmem:[%s285 + $0x168] sm:$0xff]
        %v401 = vld [vmem:[%s285 + $0x170] sm:$0xff]
        %v402 = vld [vmem:[%s285 + $0x178] sm:$0xff]
        %v403 = vld [vmem:[%s285 + $0x180] sm:$0xff]
        %v404 = vld [vmem:[%s285 + $0x188] sm:$0xff]
        %v405 = vld [vmem:[%s285 + $0x190] sm:$0xff]
        %v406 = vld [vmem:[%s285 + $0x198] sm:$0xff]
        %v407 = vld [vmem:[%s285 + $0x1a0] sm:$0xff]
        %v408 = vld [vmem:[%s285 + $0x1a8] sm:$0xff]
        %v409 = vld [vmem:[%s285 + $0x1b0] sm:$0xff]
        %v410 = vld [vmem:[%s285 + $0x1b8] sm:$0xff]
        %v411 = vld [vmem:[%s285 + $0x1c0] sm:$0xff]
        %v412 = vld [vmem:[%s285 + $0x1c8] sm:$0xff]
        %v413 = vld [vmem:[%s285 + $0x1d0] sm:$0xff]
        %v414 = vld [vmem:[%s285 + $0x1d8] sm:$0xff]
        %v415 = vld [vmem:[%s285 + $0x1e0] sm:$0xff]
        %v416 = vld [vmem:[%s285 + $0x1e8] sm:$0xff]
        %v417 = vld [vmem:[%s285 + $0x1f0] sm:$0xff]
        %v418 = vld [vmem:[%s285 + $0x1f8] sm:$0xff]
        %v419 = vld [vmem:[%s285 + $0x200] sm:$0xff]
        %v420 = vld [vmem:[%s285 + $0x208] sm:$0xff]
        %v421 = vld [vmem:[%s285 + $0x210] sm:$0xff]
        %v422 = vld [vmem:[%s285 + $0x218] sm:$0xff]
        %v423 = vld [vmem:[%s285 + $0x220] sm:$0xff]
        %v424 = vld [vmem:[%s285 + $0x228] sm:$0xff]
        %v425 = vld [vmem:[%s285 + $0x230] sm:$0xff]
        %v426 = vld [vmem:[%s285 + $0x238] sm:$0xff]
        %v427 = vld [vmem:[%s285 + $0x240] sm:$0xff]
        %v428 = vld [vmem:[%s285 + $0x248] sm:$0xff]
        %v429 = vld [vmem:[%s285 + $0x250] sm:$0xff]
        %v430 = vld [vmem:[%s285 + $0x258] sm:$0xff]
        %v431 = vld [vmem:[%s285 + $0x260] sm:$0xff]
        %v432 = vld [vmem:[%s285 + $0x268] sm:$0xff]
        %v433 = vld [vmem:[%s285 + $0x270] sm:$0xff]
        %v434 = vld [vmem:[%s285 + $0x278] sm:$0xff]
        %v459 = vunpack.c.l.b16 %v331
        %v460 = vunpack.c.h.b16 %v331
        %v461 = vunpack.c.l.b16 %v332
        %v462 = vunpack.c.h.b16 %v332
        %v463 = vunpack.c.l.b16 %v333
        %v464 = vunpack.c.l.b16 %v334
        %v465 = vunpack.c.h.b16 %v334
        %v466 = vunpack.c.l.b16 %v335
        %v467 = vunpack.c.h.b16 %v335
        %v468 = vunpack.c.l.b16 %v336
        %v469 = vunpack.c.l.b16 %v337
        %v470 = vunpack.c.h.b16 %v337
        %v471 = vunpack.c.l.b16 %v338
        %v472 = vunpack.c.h.b16 %v338
        %v473 = vunpack.c.l.b16 %v339
        %v474 = vunpack.c.l.b16 %v340
        %v475 = vunpack.c.h.b16 %v340
        %v476 = vunpack.c.l.b16 %v341
        %v477 = vunpack.c.h.b16 %v341
        %v478 = vunpack.c.l.b16 %v342
        %v479 = vunpack.c.l.b16 %v343
        %v480 = vunpack.c.h.b16 %v343
        %v481 = vunpack.c.l.b16 %v344
        %v482 = vunpack.c.h.b16 %v344
        %v483 = vunpack.c.l.b16 %v345
        %v484 = vunpack.c.l.b16 %v346
        %v485 = vunpack.c.h.b16 %v346
        %v486 = vunpack.c.l.b16 %v347
        %v487 = vunpack.c.h.b16 %v347
        %v488 = vunpack.c.l.b16 %v348
        %v489 = vunpack.c.l.b16 %v349
        %v490 = vunpack.c.h.b16 %v349
        %v491 = vunpack.c.l.b16 %v350
        %v492 = vunpack.c.h.b16 %v350
        %v493 = vunpack.c.l.b16 %v351
        %v494 = vunpack.c.l.b16 %v352
        %v495 = vunpack.c.h.b16 %v352
        %v496 = vunpack.c.l.b16 %v353
        %v497 = vunpack.c.h.b16 %v353
        %v498 = vunpack.c.l.b16 %v354
        %v499 = vpack.c.b16 %v464, %v459
        %v500 = vpack.c.b16 %v465, %v460
        %v501 = vpack.c.b16 %v466, %v461
        %v502 = vpack.c.b16 %v467, %v462
        %v503 = vpack.c.b16 %v468, %v463
        %v504 = vpack.c.b16 %v474, %v469
        %v505 = vpack.c.b16 %v475, %v470
        %v506 = vpack.c.b16 %v476, %v471
        %v507 = vpack.c.b16 %v477, %v472
        %v508 = vpack.c.b16 %v478, %v473
        %v509 = vpack.c.b16 %v484, %v479
        %v510 = vpack.c.b16 %v485, %v480
        %v511 = vpack.c.b16 %v486, %v481
        %v512 = vpack.c.b16 %v487, %v482
        %v513 = vpack.c.b16 %v488, %v483
        %v514 = vpack.c.b16 %v494, %v489
        %v515 = vpack.c.b16 %v495, %v490
        %v516 = vpack.c.b16 %v496, %v491
        %v517 = vpack.c.b16 %v497, %v492
        %v518 = vpack.c.b16 %v498, %v493
        %v619 = vunpack.c.l.b16 %v355
        %v620 = vunpack.c.h.b16 %v355
        %v621 = vunpack.c.l.b16 %v356
        %v622 = vunpack.c.h.b16 %v356
        %v623 = vunpack.c.l.b16 %v357
        %v624 = vunpack.c.h.b16 %v357
        %v625 = vunpack.c.l.b16 %v358
        %v626 = vunpack.c.h.b16 %v358
        %v627 = vunpack.c.l.b16 %v359
        %v628 = vunpack.c.h.b16 %v359
        %v629 = vunpack.c.l.b16 %v360
        %v630 = vunpack.c.h.b16 %v360
        %v631 = vunpack.c.l.b16 %v361
        %v632 = vunpack.c.h.b16 %v361
        %v633 = vunpack.c.l.b16 %v362
        %v634 = vunpack.c.h.b16 %v362
        %v635 = vunpack.c.l.b16 %v363
        %v636 = vunpack.c.h.b16 %v363
        %v637 = vunpack.c.l.b16 %v364
        %v638 = vunpack.c.h.b16 %v364
        %v639 = vunpack.c.l.b16 %v365
        %v640 = vunpack.c.h.b16 %v365
        %v641 = vunpack.c.l.b16 %v366
        %v642 = vunpack.c.h.b16 %v366
        %v643 = vunpack.c.l.b16 %v367
        %v644 = vunpack.c.h.b16 %v367
        %v645 = vunpack.c.l.b16 %v368
        %v646 = vunpack.c.h.b16 %v368
        %v647 = vunpack.c.l.b16 %v369
        %v648 = vunpack.c.h.b16 %v369
        %v649 = vunpack.c.l.b16 %v370
        %v650 = vunpack.c.h.b16 %v370
        %v651 = vunpack.c.l.b16 %v371
        %v652 = vunpack.c.h.b16 %v371
        %v653 = vunpack.c.l.b16 %v372
        %v654 = vunpack.c.h.b16 %v372
        %v655 = vunpack.c.l.b16 %v373
        %v656 = vunpack.c.h.b16 %v373
        %v657 = vunpack.c.l.b16 %v374
        %v658 = vunpack.c.h.b16 %v374
        %v659 = vunpack.c.l.b16 %v375
        %v660 = vunpack.c.h.b16 %v375
        %v661 = vunpack.c.l.b16 %v376
        %v662 = vunpack.c.h.b16 %v376
        %v663 = vunpack.c.l.b16 %v377
        %v664 = vunpack.c.h.b16 %v377
        %v665 = vunpack.c.l.b16 %v378
        %v666 = vunpack.c.h.b16 %v378
        %v667 = vunpack.c.l.b16 %v379
        %v668 = vunpack.c.h.b16 %v379
        %v669 = vunpack.c.l.b16 %v380
        %v670 = vunpack.c.h.b16 %v380
        %v671 = vunpack.c.l.b16 %v381
        %v672 = vunpack.c.h.b16 %v381
        %v673 = vunpack.c.l.b16 %v382
        %v674 = vunpack.c.h.b16 %v382
        %v675 = vunpack.c.l.b16 %v383
        %v676 = vunpack.c.h.b16 %v383
        %v677 = vunpack.c.l.b16 %v384
        %v678 = vunpack.c.h.b16 %v384
        %v679 = vunpack.c.l.b16 %v385
        %v680 = vunpack.c.h.b16 %v385
        %v681 = vunpack.c.l.b16 %v386
        %v682 = vunpack.c.h.b16 %v386
        %v683 = vunpack.c.l.b16 %v387
        %v684 = vunpack.c.h.b16 %v387
        %v685 = vunpack.c.l.b16 %v388
        %v686 = vunpack.c.h.b16 %v388
        %v687 = vunpack.c.l.b16 %v389
        %v688 = vunpack.c.h.b16 %v389
        %v689 = vunpack.c.l.b16 %v390
        %v690 = vunpack.c.h.b16 %v390
        %v691 = vunpack.c.l.b16 %v391
        %v692 = vunpack.c.h.b16 %v391
        %v693 = vunpack.c.l.b16 %v392
        %v694 = vunpack.c.h.b16 %v392
        %v695 = vunpack.c.l.b16 %v393
        %v696 = vunpack.c.h.b16 %v393
        %v697 = vunpack.c.l.b16 %v394
        %v698 = vunpack.c.h.b16 %v394
        %v699 = vunpack.c.l.b16 %v395
        %v700 = vunpack.c.h.b16 %v395
        %v701 = vunpack.c.l.b16 %v396
        %v702 = vunpack.c.h.b16 %v396
        %v703 = vunpack.c.l.b16 %v397
        %v704 = vunpack.c.h.b16 %v397
        %v705 = vunpack.c.l.b16 %v398
        %v706 = vunpack.c.h.b16 %v398
        %v707 = vunpack.c.l.b16 %v399
        %v708 = vunpack.c.h.b16 %v399
        %v709 = vunpack.c.l.b16 %v400
        %v710 = vunpack.c.h.b16 %v400
        %v711 = vunpack.c.l.b16 %v401
        %v712 = vunpack.c.h.b16 %v401
        %v713 = vunpack.c.l.b16 %v402
        %v714 = vunpack.c.h.b16 %v402
        %v715 = vunpack.c.l.b16 %v403
        %v716 = vunpack.c.h.b16 %v403
        %v717 = vunpack.c.l.b16 %v404
        %v718 = vunpack.c.h.b16 %v404
        %v719 = vunpack.c.l.b16 %v405
        %v720 = vunpack.c.h.b16 %v405
        %v721 = vunpack.c.l.b16 %v406
        %v722 = vunpack.c.h.b16 %v406
        %v723 = vunpack.c.l.b16 %v407
        %v724 = vunpack.c.h.b16 %v407
        %v725 = vunpack.c.l.b16 %v408
        %v726 = vunpack.c.h.b16 %v408
        %v727 = vunpack.c.l.b16 %v409
        %v728 = vunpack.c.h.b16 %v409
        %v729 = vunpack.c.l.b16 %v410
        %v730 = vunpack.c.h.b16 %v410
        %v731 = vunpack.c.l.b16 %v411
        %v732 = vunpack.c.h.b16 %v411
        %v733 = vunpack.c.l.b16 %v412
        %v734 = vunpack.c.h.b16 %v412
        %v735 = vunpack.c.l.b16 %v413
        %v736 = vunpack.c.h.b16 %v413
        %v737 = vunpack.c.l.b16 %v414
        %v738 = vunpack.c.h.b16 %v414
        %v739 = vunpack.c.l.b16 %v415
        %v740 = vunpack.c.h.b16 %v415
        %v741 = vunpack.c.l.b16 %v416
        %v742 = vunpack.c.h.b16 %v416
        %v743 = vunpack.c.l.b16 %v417
        %v744 = vunpack.c.h.b16 %v417
        %v745 = vunpack.c.l.b16 %v418
        %v746 = vunpack.c.h.b16 %v418
        %v747 = vunpack.c.l.b16 %v419
        %v748 = vunpack.c.h.b16 %v419
        %v749 = vunpack.c.l.b16 %v420
        %v750 = vunpack.c.h.b16 %v420
        %v751 = vunpack.c.l.b16 %v421
        %v752 = vunpack.c.h.b16 %v421
        %v753 = vunpack.c.l.b16 %v422
        %v754 = vunpack.c.h.b16 %v422
        %v755 = vunpack.c.l.b16 %v423
        %v756 = vunpack.c.h.b16 %v423
        %v757 = vunpack.c.l.b16 %v424
        %v758 = vunpack.c.h.b16 %v424
        %v759 = vunpack.c.l.b16 %v425
        %v760 = vunpack.c.h.b16 %v425
        %v761 = vunpack.c.l.b16 %v426
        %v762 = vunpack.c.h.b16 %v426
        %v763 = vunpack.c.l.b16 %v427
        %v764 = vunpack.c.h.b16 %v427
        %v765 = vunpack.c.l.b16 %v428
        %v766 = vunpack.c.h.b16 %v428
        %v767 = vunpack.c.l.b16 %v429
        %v768 = vunpack.c.h.b16 %v429
        %v769 = vunpack.c.l.b16 %v430
        %v770 = vunpack.c.h.b16 %v430
        %v771 = vunpack.c.l.b16 %v431
        %v772 = vunpack.c.h.b16 %v431
        %v773 = vunpack.c.l.b16 %v432
        %v774 = vunpack.c.h.b16 %v432
        %v775 = vunpack.c.l.b16 %v433
        %v776 = vunpack.c.h.b16 %v433
        %v777 = vunpack.c.l.b16 %v434
        %v778 = vunpack.c.h.b16 %v434
        %v779 = vpack.c.b16 %v621, %v619
        %v780 = vpack.c.b16 %v622, %v620
        %v781 = vpack.c.b16 %v625, %v623
        %v782 = vpack.c.b16 %v626, %v624
        %v783 = vpack.c.b16 %v629, %v627
        %v784 = vpack.c.b16 %v630, %v628
        %v785 = vpack.c.b16 %v633, %v631
        %v786 = vpack.c.b16 %v634, %v632
        %v787 = vpack.c.b16 %v637, %v635
        %v788 = vpack.c.b16 %v638, %v636
        %v789 = vpack.c.b16 %v641, %v639
        %v790 = vpack.c.b16 %v642, %v640
        %v791 = vpack.c.b16 %v645, %v643
        %v792 = vpack.c.b16 %v646, %v644
        %v793 = vpack.c.b16 %v649, %v647
        %v794 = vpack.c.b16 %v650, %v648
        %v795 = vpack.c.b16 %v653, %v651
        %v796 = vpack.c.b16 %v654, %v652
        %v797 = vpack.c.b16 %v657, %v655
        %v798 = vpack.c.b16 %v658, %v656
        %v799 = vpack.c.b16 %v661, %v659
        %v800 = vpack.c.b16 %v662, %v660
        %v801 = vpack.c.b16 %v665, %v663
        %v802 = vpack.c.b16 %v666, %v664
        %v803 = vpack.c.b16 %v669, %v667
        %v804 = vpack.c.b16 %v670, %v668
        %v805 = vpack.c.b16 %v673, %v671
        %v806 = vpack.c.b16 %v674, %v672
        %v807 = vpack.c.b16 %v677, %v675
        %v808 = vpack.c.b16 %v678, %v676
        %v809 = vpack.c.b16 %v681, %v679
        %v810 = vpack.c.b16 %v682, %v680
        %v811 = vpack.c.b16 %v685, %v683
        %v812 = vpack.c.b16 %v686, %v684
        %v813 = vpack.c.b16 %v689, %v687
        %v814 = vpack.c.b16 %v690, %v688
        %v815 = vpack.c.b16 %v693, %v691
        %v816 = vpack.c.b16 %v694, %v692
        %v817 = vpack.c.b16 %v697, %v695
        %v818 = vpack.c.b16 %v698, %v696
        %v819 = vpack.c.b16 %v701, %v699
        %v820 = vpack.c.b16 %v702, %v700
        %v821 = vpack.c.b16 %v705, %v703
        %v822 = vpack.c.b16 %v706, %v704
        %v823 = vpack.c.b16 %v709, %v707
        %v824 = vpack.c.b16 %v710, %v708
        %v825 = vpack.c.b16 %v713, %v711
        %v826 = vpack.c.b16 %v714, %v712
        %v827 = vpack.c.b16 %v717, %v715
        %v828 = vpack.c.b16 %v718, %v716
        %v829 = vpack.c.b16 %v721, %v719
        %v830 = vpack.c.b16 %v722, %v720
        %v831 = vpack.c.b16 %v725, %v723
        %v832 = vpack.c.b16 %v726, %v724
        %v833 = vpack.c.b16 %v729, %v727
        %v834 = vpack.c.b16 %v730, %v728
        %v835 = vpack.c.b16 %v733, %v731
        %v836 = vpack.c.b16 %v734, %v732
        %v837 = vpack.c.b16 %v737, %v735
        %v838 = vpack.c.b16 %v738, %v736
        %v839 = vpack.c.b16 %v741, %v739
        %v840 = vpack.c.b16 %v742, %v740
        %v841 = vpack.c.b16 %v745, %v743
        %v842 = vpack.c.b16 %v746, %v744
        %v843 = vpack.c.b16 %v749, %v747
        %v844 = vpack.c.b16 %v750, %v748
        %v845 = vpack.c.b16 %v753, %v751
        %v846 = vpack.c.b16 %v754, %v752
        %v847 = vpack.c.b16 %v757, %v755
        %v848 = vpack.c.b16 %v758, %v756
        %v849 = vpack.c.b16 %v761, %v759
        %v850 = vpack.c.b16 %v762, %v760
        %v851 = vpack.c.b16 %v765, %v763
        %v852 = vpack.c.b16 %v766, %v764
        %v853 = vpack.c.b16 %v769, %v767
        %v854 = vpack.c.b16 %v770, %v768
        %v855 = vpack.c.b16 %v773, %v771
        %v856 = vpack.c.b16 %v774, %v772
        %v857 = vpack.c.b16 %v777, %v775
        %v858 = vpack.c.b16 %v778, %v776
        %939 = vmatprep.subr.bf16.mxu0 %v794
        %940 = vmatpush1.bf16.msra.mxu0 %v793
        %941 = vmatprep.subr.bf16.mxu0 %v792
        %942 = vmatpush1.bf16.msra.mxu0 %v791
        %943 = vmatprep.subr.bf16.mxu0 %v790
        %944 = vmatpush1.bf16.msra.mxu0 %v789
        %945 = vmatprep.subr.bf16.mxu0 %v788
        %946 = vmatpush1.bf16.msra.mxu0 %v787
        %947 = vmatprep.subr.bf16.mxu0 %v786
        %948 = vmatpush1.bf16.msra.mxu0 %v785
        %949 = vmatprep.subr.bf16.mxu0 %v784
        %950 = vmatpush1.bf16.msra.mxu0 %v783
        %951 = vmatprep.subr.bf16.mxu0 %v782
        %952 = vmatpush1.bf16.msra.mxu0 %v781
        %953 = vmatprep.subr.bf16.mxu0 %v780
        %954 = vmatpush1.bf16.msra.mxu0 %v779
        %955 = vmatprep.subr.bf16.mxu0 %v810
        %956 = vmatpush2.bf16.msra.mxu0 %v809
        %957 = vmatprep.subr.bf16.mxu0 %v808
        %958 = vmatpush2.bf16.msra.mxu0 %v807
        %959 = vmatprep.subr.bf16.mxu0 %v806
        %960 = vmatpush2.bf16.msra.mxu0 %v805
        %961 = vmatprep.subr.bf16.mxu0 %v804
        %962 = vmatpush2.bf16.msra.mxu0 %v803
        %963 = vmatprep.subr.bf16.mxu0 %v802
        %964 = vmatpush2.bf16.msra.mxu0 %v801
        %965 = vmatprep.subr.bf16.mxu0 %v800
        %966 = vmatpush2.bf16.msra.mxu0 %v799
        %967 = vmatprep.subr.bf16.mxu0 %v798
        %968 = vmatpush2.bf16.msra.mxu0 %v797
        %969 = vmatprep.subr.bf16.mxu0 %v796
        %970 = vmatpush2.bf16.msra.mxu0 %v795
        %971 = vmatprep.mubr.bf16.mxu0 %v500
        %972 = vmatmul.mubr.bf16.gmra.mxu0 %v499
        %v973 = vpop.f32.mrf.mxu0
        %v974 = vadd.f32 0.0, %v973
        %v975 = vpop.f32.mrf.mxu0
        %v976 = vadd.f32 0.0, %v975
        %v977 = vpop.f32.mrf.mxu0
        %v978 = vadd.f32 0.0, %v977
        %v979 = vpop.f32.mrf.mxu0
        %v980 = vadd.f32 0.0, %v979
        %981 = vmatprep.mubr.bf16.mxu0 %v505
        %982 = vmatmul.mubr.bf16.gmra.mxu0 %v504
        %v983 = vpop.f32.mrf.mxu0
        %v984 = vadd.f32 0.0, %v983
        %v985 = vpop.f32.mrf.mxu0
        %v986 = vadd.f32 0.0, %v985
        %v987 = vpop.f32.mrf.mxu0
        %v988 = vadd.f32 0.0, %v987
        %v989 = vpop.f32.mrf.mxu0
        %v990 = vadd.f32 0.0, %v989
        %991 = vmatprep.mubr.bf16.mxu0 %v510
        %992 = vmatmul.mubr.bf16.gmra.mxu0 %v509
        %v993 = vpop.f32.mrf.mxu0
        %v994 = vadd.f32 0.0, %v993
        %v995 = vpop.f32.mrf.mxu0
        %v996 = vadd.f32 0.0, %v995
        %v997 = vpop.f32.mrf.mxu0
        %v998 = vadd.f32 0.0, %v997
        %v999 = vpop.f32.mrf.mxu0
        %v1000 = vadd.f32 0.0, %v999
        %1001 = vmatprep.mubr.bf16.mxu0 %v515
        %1002 = vmatmul.mubr.bf16.gmra.mxu0 %v514
        %v1003 = vpop.f32.mrf.mxu0
        %v1004 = vadd.f32 0.0, %v1003
        %v1005 = vpop.f32.mrf.mxu0
        %v1006 = vadd.f32 0.0, %v1005
        %v1007 = vpop.f32.mrf.mxu0
        %v1008 = vadd.f32 0.0, %v1007
        %v1009 = vpop.f32.mrf.mxu0
        %v1010 = vadd.f32 0.0, %v1009
        %1011 = vdwg.mxu0
        %1012 = vmatprep.subr.bf16.mxu0 %v826
        %1013 = vmatpush1.bf16.msra.mxu0 %v825
        %1014 = vmatprep.subr.bf16.mxu0 %v824
        %1015 = vmatpush1.bf16.msra.mxu0 %v823
        %1016 = vmatprep.subr.bf16.mxu0 %v822
        %1017 = vmatpush1.bf16.msra.mxu0 %v821
        %1018 = vmatprep.subr.bf16.mxu0 %v820
        %1019 = vmatpush1.bf16.msra.mxu0 %v819
        %1020 = vmatprep.subr.bf16.mxu0 %v818
        %1021 = vmatpush1.bf16.msra.mxu0 %v817
        %1022 = vmatprep.subr.bf16.mxu0 %v816
        %1023 = vmatpush1.bf16.msra.mxu0 %v815
        %1024 = vmatprep.subr.bf16.mxu0 %v814
        %1025 = vmatpush1.bf16.msra.mxu0 %v813
        %1026 = vmatprep.subr.bf16.mxu0 %v812
        %1027 = vmatpush1.bf16.msra.mxu0 %v811
        %1028 = vmatprep.subr.bf16.mxu0 %v842
        %1029 = vmatpush2.bf16.msra.mxu0 %v841
        %1030 = vmatprep.subr.bf16.mxu0 %v840
        %1031 = vmatpush2.bf16.msra.mxu0 %v839
        %1032 = vmatprep.subr.bf16.mxu0 %v838
        %1033 = vmatpush2.bf16.msra.mxu0 %v837
        %1034 = vmatprep.subr.bf16.mxu0 %v836
        %1035 = vmatpush2.bf16.msra.mxu0 %v835
        %1036 = vmatprep.subr.bf16.mxu0 %v834
        %1037 = vmatpush2.bf16.msra.mxu0 %v833
        %1038 = vmatprep.subr.bf16.mxu0 %v832
        %1039 = vmatpush2.bf16.msra.mxu0 %v831
        %1040 = vmatprep.subr.bf16.mxu0 %v830
        %1041 = vmatpush2.bf16.msra.mxu0 %v829
        %1042 = vmatprep.subr.bf16.mxu0 %v828
        %1043 = vmatpush2.bf16.msra.mxu0 %v827
        %1044 = vmatprep.mubr.bf16.mxu0 %v502
        %1045 = vmatmul.mubr.bf16.gmra.mxu0 %v501
        %v1046 = vpop.f32.mrf.mxu0
        %v1047 = vadd.f32 %v974, %v1046
        %v1048 = vpop.f32.mrf.mxu0
        %v1049 = vadd.f32 %v976, %v1048
        %v1050 = vpop.f32.mrf.mxu0
        %v1051 = vadd.f32 %v978, %v1050
        %v1052 = vpop.f32.mrf.mxu0
        %v1053 = vadd.f32 %v980, %v1052
        %1054 = vmatprep.mubr.bf16.mxu0 %v507
        %1055 = vmatmul.mubr.bf16.gmra.mxu0 %v506
        %v1056 = vpop.f32.mrf.mxu0
        %v1057 = vadd.f32 %v984, %v1056
        %v1058 = vpop.f32.mrf.mxu0
        %v1059 = vadd.f32 %v986, %v1058
        %v1060 = vpop.f32.mrf.mxu0
        %v1061 = vadd.f32 %v988, %v1060
        %v1062 = vpop.f32.mrf.mxu0
        %v1063 = vadd.f32 %v990, %v1062
        %1064 = vmatprep.mubr.bf16.mxu0 %v512
        %1065 = vmatmul.mubr.bf16.gmra.mxu0 %v511
        %v1066 = vpop.f32.mrf.mxu0
        %v1067 = vadd.f32 %v994, %v1066
        %v1068 = vpop.f32.mrf.mxu0
        %v1069 = vadd.f32 %v996, %v1068
        %v1070 = vpop.f32.mrf.mxu0
        %v1071 = vadd.f32 %v998, %v1070
        %v1072 = vpop.f32.mrf.mxu0
        %v1073 = vadd.f32 %v1000, %v1072
        %1074 = vmatprep.mubr.bf16.mxu0 %v517
        %1075 = vmatmul.mubr.bf16.gmra.mxu0 %v516
        %v1076 = vpop.f32.mrf.mxu0
        %v1077 = vadd.f32 %v1004, %v1076
        %v1078 = vpop.f32.mrf.mxu0
        %v1079 = vadd.f32 %v1006, %v1078
        %v1080 = vpop.f32.mrf.mxu0
        %v1081 = vadd.f32 %v1008, %v1080
        %v1082 = vpop.f32.mrf.mxu0
        %v1083 = vadd.f32 %v1010, %v1082
        %1084 = vdwg.mxu0
        %1085 = vmatprep.subr.bf16.mxu0 %v858
        %1086 = vmatpush1.bf16.msra.mxu0 %v857
        %1087 = vmatprep.subr.bf16.mxu0 %v856
        %1088 = vmatpush1.bf16.msra.mxu0 %v855
        %1089 = vmatprep.subr.bf16.mxu0 %v854
        %1090 = vmatpush1.bf16.msra.mxu0 %v853
        %1091 = vmatprep.subr.bf16.mxu0 %v852
        %1092 = vmatpush1.bf16.msra.mxu0 %v851
        %1093 = vmatprep.subr.bf16.mxu0 %v850
        %1094 = vmatpush1.bf16.msra.mxu0 %v849
        %1095 = vmatprep.subr.bf16.mxu0 %v848
        %1096 = vmatpush1.bf16.msra.mxu0 %v847
        %1097 = vmatprep.subr.bf16.mxu0 %v846
        %1098 = vmatpush1.bf16.msra.mxu0 %v845
        %1099 = vmatprep.subr.bf16.mxu0 %v844
        %1100 = vmatpush1.bf16.msra.mxu0 %v843
        %1101 = vmatprep.subr.bf16.mxu0 0
        %1102 = vmatpush2.bf16.msra.mxu0 0
        %1103 = vmatprep.subr.bf16.mxu0 0
        %1104 = vmatpush2.bf16.msra.mxu0 0
        %1105 = vmatprep.subr.bf16.mxu0 0
        %1106 = vmatpush2.bf16.msra.mxu0 0
        %1107 = vmatprep.subr.bf16.mxu0 0
        %1108 = vmatpush2.bf16.msra.mxu0 0
        %1109 = vmatprep.subr.bf16.mxu0 0
        %1110 = vmatpush2.bf16.msra.mxu0 0
        %1111 = vmatprep.subr.bf16.mxu0 0
        %1112 = vmatpush2.bf16.msra.mxu0 0
        %1113 = vmatprep.subr.bf16.mxu0 0
        %1114 = vmatpush2.bf16.msra.mxu0 0
        %1115 = vmatprep.subr.bf16.mxu0 0
        %1116 = vmatpush2.bf16.msra.mxu0 0
        %1117 = vmatprep.mubr.bf16.mxu0 0
        %1118 = vmatmul.mubr.bf16.gmra.mxu0 %v503
        %v1119 = vpop.f32.mrf.mxu0
        %v1120 = vadd.f32 %v1047, %v1119
        %v1121 = vpop.f32.mrf.mxu0
        %v1122 = vadd.f32 %v1049, %v1121
        %v1123 = vpop.f32.mrf.mxu0
        %v1124 = vadd.f32 %v1051, %v1123
        %v1125 = vpop.f32.mrf.mxu0
        %v1126 = vadd.f32 %v1053, %v1125
        %1127 = vmatprep.mubr.bf16.mxu0 0
        %1128 = vmatmul.mubr.bf16.gmra.mxu0 %v508
        %v1129 = vpop.f32.mrf.mxu0
        %v1130 = vadd.f32 %v1057, %v1129
        %v1131 = vpop.f32.mrf.mxu0
        %v1132 = vadd.f32 %v1059, %v1131
        %v1133 = vpop.f32.mrf.mxu0
        %v1134 = vadd.f32 %v1061, %v1133
        %v1135 = vpop.f32.mrf.mxu0
        %v1136 = vadd.f32 %v1063, %v1135
        %1137 = vmatprep.mubr.bf16.mxu0 0
        %1138 = vmatmul.mubr.bf16.gmra.mxu0 %v513
        %v1139 = vpop.f32.mrf.mxu0
        %v1140 = vadd.f32 %v1067, %v1139
        %v1141 = vpop.f32.mrf.mxu0
        %v1142 = vadd.f32 %v1069, %v1141
        %v1143 = vpop.f32.mrf.mxu0
        %v1144 = vadd.f32 %v1071, %v1143
        %v1145 = vpop.f32.mrf.mxu0
        %v1146 = vadd.f32 %v1073, %v1145
        %1147 = vmatprep.mubr.bf16.mxu0 0
        %1148 = vmatmul.mubr.bf16.gmra.mxu0 %v518
        %v1149 = vpop.f32.mrf.mxu0
        %v1150 = vadd.f32 %v1077, %v1149
        %v1151 = vpop.f32.mrf.mxu0
        %v1152 = vadd.f32 %v1079, %v1151
        %v1153 = vpop.f32.mrf.mxu0
        %v1154 = vadd.f32 %v1081, %v1153
        %v1155 = vpop.f32.mrf.mxu0
        %v1156 = vadd.f32 %v1083, %v1155
        %1157 = vdwg.mxu0
        %v1158 = vadd.f32 %v315, %v1120
        %v1159 = vadd.f32 %v316, %v1122
        %v1160 = vadd.f32 %v317, %v1124
        %v1161 = vadd.f32 %v318, %v1126
        %v1162 = vadd.f32 %v319, %v1130
        %v1163 = vadd.f32 %v320, %v1132
        %v1164 = vadd.f32 %v321, %v1134
        %v1165 = vadd.f32 %v322, %v1136
        %v1166 = vadd.f32 %v323, %v1140
        %v1167 = vadd.f32 %v324, %v1142
        %v1168 = vadd.f32 %v325, %v1144
        %v1169 = vadd.f32 %v326, %v1146
        %v1170 = vadd.f32 %v327, %v1150
        %v1171 = vadd.f32 %v328, %v1152
        %v1172 = vadd.f32 %v329, %v1154
        %v1173 = vadd.f32 %v330, %v1156
        %1174 = vst [vmem:[#allocation2] sm:$0xff] %v1158
        %1175 = vst [vmem:[#allocation2 + $0x8] sm:$0xff] %v1159
        %1176 = vst [vmem:[#allocation2 + $0x10] sm:$0xff] %v1160
        %1177 = vst [vmem:[#allocation2 + $0x18] sm:$0xff] %v1161
        %1178 = vst [vmem:[#allocation2 + $0x20] sm:$0xff] %v1162
        %1179 = vst [vmem:[#allocation2 + $0x28] sm:$0xff] %v1163
        %1180 = vst [vmem:[#allocation2 + $0x30] sm:$0xff] %v1164
        %1181 = vst [vmem:[#allocation2 + $0x38] sm:$0xff] %v1165
        %1182 = vst [vmem:[#allocation2 + $0x40] sm:$0xff] %v1166
        %1183 = vst [vmem:[#allocation2 + $0x48] sm:$0xff] %v1167
        %1184 = vst [vmem:[#allocation2 + $0x50] sm:$0xff] %v1168
        %1185 = vst [vmem:[#allocation2 + $0x58] sm:$0xff] %v1169
        %1186 = vst [vmem:[#allocation2 + $0x60] sm:$0xff] %v1170
        %1187 = vst [vmem:[#allocation2 + $0x68] sm:$0xff] %v1171
        %1188 = vst [vmem:[#allocation2 + $0x70] sm:$0xff] %v1172
        %1189 = vst [vmem:[#allocation2 + $0x78] sm:$0xff] %v1173
        %p1190 = scmp.eq.s32.totalorder %s19, 1
        // Predicated region
        $region63: #{_forward_impl.9} parent=53 // pred_check
          %p1191 = pneg %p1190
        $region64: #{_forward_impl.9} parent=53 // pred_check_branch
          %1193 = sbr.rel (%p1191) target = $region66
        $region65: #{_forward_impl.9} parent=53 // pred_region
          %v1194 = vld [vmem:[#allocation2] sm:$0xff]
          %v1195 = vld [vmem:[#allocation2 + $0x8] sm:$0xff]
          %v1196 = vld [vmem:[#allocation2 + $0x10] sm:$0xff]
          %v1197 = vld [vmem:[#allocation2 + $0x18] sm:$0xff]
          %v1198 = vld [vmem:[#allocation2 + $0x20] sm:$0xff]
          %v1199 = vld [vmem:[#allocation2 + $0x28] sm:$0xff]
          %v1200 = vld [vmem:[#allocation2 + $0x30] sm:$0xff]
          %v1201 = vld [vmem:[#allocation2 + $0x38] sm:$0xff]
          %v1202 = vld [vmem:[#allocation2 + $0x40] sm:$0xff]
          %v1203 = vld [vmem:[#allocation2 + $0x48] sm:$0xff]
          %v1204 = vld [vmem:[#allocation2 + $0x50] sm:$0xff]
          %v1205 = vld [vmem:[#allocation2 + $0x58] sm:$0xff]
          %v1206 = vld [vmem:[#allocation2 + $0x60] sm:$0xff]
          %v1207 = vld [vmem:[#allocation2 + $0x68] sm:$0xff]
          %v1208 = vld [vmem:[#allocation2 + $0x70] sm:$0xff]
          %v1209 = vld [vmem:[#allocation2 + $0x78] sm:$0xff]
          %v1210 = vld [vmem:[%s2] sm:$0x3]
          %v1212 = vlaneseq
          %v1213 = vshrl.u32 %v1212, 7
          %v1214 = vsub.s32 0, %v1213
          %v1215 = vrot.slane %v1210, %v1214
          %v1216 = vlaneseq
          %v1217 = vshrl.u32 %v1216, 7
          %v1218 = vsub.s32 1, %v1217
          %v1219 = vrot.slane %v1210, %v1218
          %v1222 = vadd.f32 %v1194, %v1215
          %v1223 = vadd.f32 %v1195, %v1219
          %v1224 = vadd.f32 %v1196, %v1215
          %v1225 = vadd.f32 %v1197, %v1219
          %v1226 = vadd.f32 %v1198, %v1215
          %v1227 = vadd.f32 %v1199, %v1219
          %v1228 = vadd.f32 %v1200, %v1215
          %v1229 = vadd.f32 %v1201, %v1219
          %v1230 = vadd.f32 %v1202, %v1215
          %v1231 = vadd.f32 %v1203, %v1219
          %v1232 = vadd.f32 %v1204, %v1215
          %v1233 = vadd.f32 %v1205, %v1219
          %v1234 = vadd.f32 %v1206, %v1215
          %v1235 = vadd.f32 %v1207, %v1219
          %v1236 = vadd.f32 %v1208, %v1215
          %v1237 = vadd.f32 %v1209, %v1219
          %v1238 = vmax.f32 %v1222, 0.0
          %v1239 = vmax.f32 %v1223, 0.0
          %v1240 = vmax.f32 %v1224, 0.0
          %v1241 = vmax.f32 %v1225, 0.0
          %v1242 = vmax.f32 %v1226, 0.0
          %v1243 = vmax.f32 %v1227, 0.0
          %v1244 = vmax.f32 %v1228, 0.0
          %v1245 = vmax.f32 %v1229, 0.0
          %v1246 = vmax.f32 %v1230, 0.0
          %v1247 = vmax.f32 %v1231, 0.0
          %v1248 = vmax.f32 %v1232, 0.0
          %v1249 = vmax.f32 %v1233, 0.0
          %v1250 = vmax.f32 %v1234, 0.0
          %v1251 = vmax.f32 %v1235, 0.0
          %v1252 = vmax.f32 %v1236, 0.0
          %v1253 = vmax.f32 %v1237, 0.0
          %1254 = vst [vmem:[%s292] sm:$0xff] %v1238
          %1255 = vst [vmem:[%s292 + $0x8] sm:$0xff] %v1239
          %1256 = vst [vmem:[%s292 + $0x10] sm:$0xff] %v1240
          %1257 = vst [vmem:[%s292 + $0x18] sm:$0xff] %v1241
          %1258 = vst [vmem:[%s292 + $0x20] sm:$0xff] %v1242
          %1259 = vst [vmem:[%s292 + $0x28] sm:$0xff] %v1243
          %1260 = vst [vmem:[%s292 + $0x30] sm:$0xff] %v1244
          %1261 = vst [vmem:[%s292 + $0x38] sm:$0xff] %v1245
          %1262 = vst [vmem:[%s292 + $0x40] sm:$0xff] %v1246
          %1263 = vst [vmem:[%s292 + $0x48] sm:$0xff] %v1247
          %1264 = vst [vmem:[%s292 + $0x50] sm:$0xff] %v1248
          %1265 = vst [vmem:[%s292 + $0x58] sm:$0xff] %v1249
          %1266 = vst [vmem:[%s292 + $0x60] sm:$0xff] %v1250
          %1267 = vst [vmem:[%s292 + $0x68] sm:$0xff] %v1251
          %1268 = vst [vmem:[%s292 + $0x70] sm:$0xff] %v1252
          %1269 = vst [vmem:[%s292 + $0x78] sm:$0xff] %v1253
        $region66: #{_forward_impl.9} parent=53 // pred_fallthru
          _
        %s1270 = smul.u32 8, %s18
        %p1271 = scmp.lt.s32.totalorder %s1270, 15
        %s1272 = scalar_select %p1271, %s1270, 15
        %s1273 = smul.addr %s1272, 2
        %s1274 = smul.addr %s1273, 8
        %s1275 = scalar_lea.vmem %s3, %s1274
        // Predicated region
        $region67: #{_forward_impl.9} parent=53 // pred_check
          %p1276 = pneg %p119
        $region68: #{_forward_impl.9} parent=53 // pred_check_branch
          %1278 = sbr.rel (%p1276) target = $region70
        $region69: #{_forward_impl.9} parent=53 // pred_region
          %s1279 = smul.u32 8, %s18
        $region70: #{_forward_impl.9} parent=53 // pred_fallthru
          _
      $region54: #{_forward_impl.9} parent=5 // pred_fallthru
        _
      %p1280 = scmp.le.s32.totalorder 2, %s9
      // Predicated region
      $region71: #{_forward_impl.9} parent=5 // pred_check
        %p1281 = pneg %p1280
      $region72: #{_forward_impl.9} parent=5 // pred_check_branch
        %1283 = sbr.rel (%p1281) target = $region74
      $region73: #{_forward_impl.9} parent=5 // pred_region
        %s1284 = ssub.s32 %s9, 2
        // Predicated region
        $region75: #{_forward_impl.9} parent=73 // pred_check
          %p1285 = pneg %p125
        $region76: #{_forward_impl.9} parent=73 // pred_check_branch
          %1287 = sbr.rel (%p1285) target = $region78
        $region77: #{_forward_impl.9} parent=73 // pred_region
          %s1288 = smul.u32 8, %s20
          %p1289 = scmp.lt.s32.totalorder %s1288, 15
          %s1290 = scalar_select %p1289, %s1288, 15
          %s1291 = smul.addr %s1290, 2
          %s1292 = smul.addr %s1291, 8
          %s1293 = scalar_lea.vmem %s3, %s1292
        $region78: #{_forward_impl.9} parent=73 // pred_fallthru
          _
      $region74: #{_forward_impl.9} parent=5 // pred_fallthru
        _
    $region6: #{_forward_impl.9} parent=1 // loop_footer
      %s13 = sadd.s32 1, %s9
    $region7: #{_forward_impl.9} parent=1 // loop_footer_branch
      %8 = sbr.rel target = $region3
    $region8: #{_forward_impl.9} parent=1 // loop_exit
      _

// kernel: _forward_impl.11
$region0: #{_forward_impl.11}
  #allocation0 [shape = 'u32[]', space=smem, size = 0x4, offset = 0x4, fixed_abs, tag = 'smem constant byte address 0x4 - core index']
  #allocation1 [shape = 'u32[144,128]{1,0:T(1,128)}', space=vmem, size = 0x12000, scoped, tag = 'internal scratch']
  #allocation2 [shape = 'f32[256,128]{1,0:T(8,128)}', space=vmem, size = 0x20000, scoped, tag = 'scratch operand']
  %s0 = inlined_call_operand.vmem [shape: bf16[512,256], index: 0, kind: input, shape index: {}]
  %s1 = inlined_call_operand.vmem [shape: bf16[256,128], index: 1, kind: input, shape index: {}]
  %s2 = inlined_call_operand.vmem [shape: f32[1,128], index: 2, kind: input, shape index: {}]
  %s3 = inlined_call_operand.vmem [shape: f32[512,128], index: 3, kind: output, shape index: {}]
  %s4 = sld [smem:[#allocation0]]
  $region53: #{_forward_impl.11} parent=0
    _
  %s6 = ssub.s32 1, %s4
  %s7 = scalar_select 0, %s6, %s4
  loop: start=0, step=1, limit=4
  $region2: #{_forward_impl.11} parent=0 // loop_pre_header
    _
  $region3: #{_forward_impl.11} parent=0 // loop_header
    %s9 = sphi 0, %s13
    %p10 = scmp.ge.s32.totalorder %s9, 4
    %s16 = sphi 0, %s28
    %s17 = sphi 0, %s24
    %s18 = sphi 0, %s16
    %s19 = sphi 0, %s17
    %s20 = sphi 0, %s18
    %s21 = sphi 0, %s19
    %s33 = sphi 0, %s35
    %s36 = sphi 0, %s33
    %s37 = sphi 0, %s36
    %s53 = sphi 0, %s37
    %s59 = sphi 0, %s61
    %s62 = sphi 0, %s59
    %s63 = sphi 0, %s62
    %s79 = sphi 0, %s63
    %s83 = sphi 0, %s83
    %s85 = sphi 0, %s83
    %s86 = sphi 0, %s85
    %s100 = sphi 0, %s86
    %s106 = sphi 0, %s108
    %s109 = sphi 0, %s106
    %s110 = sphi 0, %s109
    %s126 = sphi 0, %s110
  $region4: #{_forward_impl.11} parent=0 // loop_header_branch
    %12 = sbr.rel (%p10) target = $region8
  $region5: #{_forward_impl.11} parent=0 // loop_body
    %s14 = ssub.s32 %s9, 1
    %s15 = ssub.s32 %s9, 2
    %s22 = sadd.s32 1, %s17
    %p23 = scmp.ge.s32.totalorder %s22, 1
    %s24 = scalar_select %p23, 0, %s22
    %s25 = sadd.s32 1, %s16
    %s26 = scalar_select %p23, %s25, %s16
    %p27 = scmp.ge.s32.totalorder %s26, 2
    %s28 = scalar_select %p27, 0, %s26
    %s29 = ssub.s32 %s16, %s28
    %s30 = ssub.s32 %s17, %s24
    %s31 = sor.u32 %s29, %s30
    %p32 = scmp.eq.s32.totalorder %s31, 0
    %s34 = sadd.s32 %s33, 1
    %s35 = scalar_select %p32, %s33, %s34
    %p38 = pneg %p32
    %p39 = scmp.eq.s32.totalorder %s9, 1
    %p40 = por %p38, %p39
    %p41 = scmp.ne.s32.totalorder %s33, %s36
    %p42 = scmp.eq.s32.totalorder %s9, 0
    %p43 = por %p41, %p42
    %p44 = scmp.ne.s32.totalorder %s33, %s36
    %p45 = scmp.eq.s32.totalorder %s14, 1
    %p46 = por %p44, %p45
    %p47 = scmp.ne.s32.totalorder %s36, %s37
    %p48 = scmp.eq.s32.totalorder %s14, 0
    %p49 = por %p47, %p48
    %p50 = scmp.ne.s32.totalorder %s36, %s37
    %p51 = scmp.eq.s32.totalorder %s15, 1
    %p52 = por %p50, %p51
    %p54 = scmp.ne.s32.totalorder %s37, %s53
    %p55 = scmp.eq.s32.totalorder %s15, 0
    %p56 = por %p54, %p55
    %s57 = ssub.s32 %s17, %s24
    %p58 = scmp.eq.s32.totalorder %s57, 0
    %s60 = sadd.s32 %s59, 1
    %s61 = scalar_select %p58, %s59, %s60
    %p64 = pneg %p58
    %p65 = scmp.eq.s32.totalorder %s9, 1
    %p66 = por %p64, %p65
    %p67 = scmp.ne.s32.totalorder %s59, %s62
    %p68 = scmp.eq.s32.totalorder %s9, 0
    %p69 = por %p67, %p68
    %p70 = scmp.ne.s32.totalorder %s59, %s62
    %p71 = scmp.eq.s32.totalorder %s14, 1
    %p72 = por %p70, %p71
    %p73 = scmp.ne.s32.totalorder %s62, %s63
    %p74 = scmp.eq.s32.totalorder %s14, 0
    %p75 = por %p73, %p74
    %p76 = scmp.ne.s32.totalorder %s62, %s63
    %p77 = scmp.eq.s32.totalorder %s15, 1
    %p78 = por %p76, %p77
    %p80 = scmp.ne.s32.totalorder %s63, %s79
    %p81 = scmp.eq.s32.totalorder %s15, 0
    %p82 = por %p80, %p81
    %s84 = sadd.s32 %s83, 1
    %p87 = scmp.eq.s32.totalorder %s9, 1
    %p88 = scmp.ne.s32.totalorder %s83, %s85
    %p89 = scmp.eq.s32.totalorder %s9, 0
    %p90 = por %p88, %p89
    %p91 = scmp.ne.s32.totalorder %s83, %s85
    %p92 = scmp.eq.s32.totalorder %s14, 1
    %p93 = por %p91, %p92
    %p94 = scmp.ne.s32.totalorder %s85, %s86
    %p95 = scmp.eq.s32.totalorder %s14, 0
    %p96 = por %p94, %p95
    %p97 = scmp.ne.s32.totalorder %s85, %s86
    %p98 = scmp.eq.s32.totalorder %s15, 1
    %p99 = por %p97, %p98
    %p101 = scmp.ne.s32.totalorder %s86, %s100
    %p102 = scmp.eq.s32.totalorder %s15, 0
    %p103 = por %p101, %p102
    %s104 = ssub.s32 %s16, %s28
    %p105 = scmp.eq.s32.totalorder %s104, 0
    %s107 = sadd.s32 %s106, 1
    %s108 = scalar_select %p105, %s106, %s107
    %p111 = pneg %p105
    %p112 = scmp.eq.s32.totalorder %s9, 1
    %p113 = por %p111, %p112
    %p114 = scmp.ne.s32.totalorder %s106, %s109
    %p115 = scmp.eq.s32.totalorder %s9, 0
    %p116 = por %p114, %p115
    %p117 = scmp.ne.s32.totalorder %s106, %s109
    %p118 = scmp.eq.s32.totalorder %s14, 1
    %p119 = por %p117, %p118
    %p120 = scmp.ne.s32.totalorder %s109, %s110
    %p121 = scmp.eq.s32.totalorder %s14, 0
    %p122 = por %p120, %p121
    %p123 = scmp.ne.s32.totalorder %s109, %s110
    %p124 = scmp.eq.s32.totalorder %s15, 1
    %p125 = por %p123, %p124
    %p127 = scmp.ne.s32.totalorder %s110, %s126
    %p128 = scmp.eq.s32.totalorder %s15, 0
    %p129 = por %p127, %p128
    %p130 = scmp.le.s32.totalorder 1, %s9
    %p131 = scmp.lt.s32.totalorder %s9, 3
    %p132 = pnand %p130, %p131
    %p133 = pneg %p132
    // Predicated region
    $region9: #{_forward_impl.11} parent=5 // pred_check
      _
    $region10: #{_forward_impl.11} parent=5 // pred_check_branch
      %135 = sbr.rel (%p132) target = $region12
    $region11: #{_forward_impl.11} parent=5 // pred_region
      %s136 = ssub.s32 %s9, 1
      // Predicated region
      $region13: #{_forward_impl.11} parent=11 // pred_check
        %p137 = pneg %p75
      $region14: #{_forward_impl.11} parent=11 // pred_check_branch
        %139 = sbr.rel (%p137) target = $region16
      $region15: #{_forward_impl.11} parent=11 // pred_region
        %s140 = smul.u32 32, %s19
        %p141 = scmp.lt.s32.totalorder %s140, 31
        %s142 = scalar_select %p141, %s140, 31
        %s143 = smul.addr %s142, 4
        %s144 = scalar_lea.vmem %s1, %s143
        %s145 = smul.u32 32, %s19
      $region16: #{_forward_impl.11} parent=11 // pred_fallthru
        _
      // Predicated region
      $region17: #{_forward_impl.11} parent=11 // pred_check
        %p146 = pneg %p96
      $region18: #{_forward_impl.11} parent=11 // pred_check_branch
        %148 = sbr.rel (%p146) target = $region20
      $region19: #{_forward_impl.11} parent=11 // pred_region
        _
      $region20: #{_forward_impl.11} parent=11 // pred_fallthru
        _
    $region12: #{_forward_impl.11} parent=5 // pred_fallthru
      _
    %p149 = scmp.lt.s32.totalorder %s9, 2
    // Predicated region
    $region21: #{_forward_impl.11} parent=5 // pred_check
      %p150 = pneg %p149
    $region22: #{_forward_impl.11} parent=5 // pred_check_branch
      %152 = sbr.rel (%p150) target = $region24
    $region23: #{_forward_impl.11} parent=5 // pred_region
      // Predicated region
      $region25: #{_forward_impl.11} parent=23 // pred_check
        %p153 = pneg %p43
      $region26: #{_forward_impl.11} parent=23 // pred_check_branch
        %155 = sbr.rel (%p153) target = $region28
      $region27: #{_forward_impl.11} parent=23 // pred_region
        %s156 = smul.u32 32, %s16
        %s157 = smul.u32 2, %s17
        %p158 = scmp.lt.s32.totalorder %s156, 63
        %s159 = scalar_select %p158, %s156, 63
        %p160 = scmp.lt.s32.totalorder %s157, 1
        %s161 = scalar_select %p160, %s157, 1
        %s162 = smul.addr %s159, 2
        %s163 = sadd.s32 %s161, %s162
        %s164 = smul.addr %s163, 4
        %s165 = scalar_lea.vmem %s0, %s164
        %s166 = smul.u32 32, %s16
        %s167 = smul.u32 2, %s17
      $region28: #{_forward_impl.11} parent=23 // pred_fallthru
        _
    $region24: #{_forward_impl.11} parent=5 // pred_fallthru
      _
    %p168 = scmp.le.s32.totalorder 1, %s9
    %p169 = scmp.lt.s32.totalorder %s9, 3
    %p170 = pnand %p168, %p169
    %p171 = pneg %p170
    // Predicated region
    $region29: #{_forward_impl.11} parent=5 // pred_check
      _
    $region30: #{_forward_impl.11} parent=5 // pred_check_branch
      %173 = sbr.rel (%p170) target = $region32
    $region31: #{_forward_impl.11} parent=5 // pred_region
      %s174 = ssub.s32 %s9, 1
      %s175 = smul.u32 32, %s18
      %s176 = smul.u32 2, %s19
      %p177 = scmp.lt.s32.totalorder %s175, 63
      %s178 = scalar_select %p177, %s175, 63
      %p179 = scmp.lt.s32.totalorder %s176, 1
      %s180 = scalar_select %p179, %s176, 1
      %s181 = smul.addr %s178, 2
      %s182 = sadd.s32 %s180, %s181
      %s183 = smul.addr %s182, 4
      %s184 = scalar_lea.vmem %s0, %s183
      %p185 = pneg %p49
      %p186 = pneg %p46
      %s187 = smul.u32 32, %s19
      %p188 = scmp.lt.s32.totalorder %s187, 31
      %s189 = scalar_select %p188, %s187, 31
      %s190 = smul.addr %s189, 4
      %s191 = scalar_lea.vmem %s1, %s190
      %p192 = pneg %p75
      %p193 = pneg %p72
      %p194 = pneg %p96
      %p195 = pneg %p93
      %p196 = pneg %p122
      %p197 = pneg %p119
      %s198 = smul.u32 32, %s18
      %p199 = scmp.lt.s32.totalorder %s198, 63
      %s200 = scalar_select %p199, %s198, 63
      %s201 = smul.addr %s200, 8
      %s202 = scalar_lea.vmem %s3, %s201
      %s203 = smul.u32 32, %s18
      %s204 = smul.u32 2, %s19
      %p205 = scmp.lt.s32.totalorder %s203, 63
      %s206 = scalar_select %p205, %s203, 63
      %p207 = scmp.lt.s32.totalorder %s204, 1
      %s208 = scalar_select %p207, %s204, 1
      %s209 = smul.addr %s206, 2
      %s210 = sadd.s32 %s208, %s209
      %s211 = smul.addr %s210, 4
      %s212 = scalar_lea.vmem %s0, %s211
      %s213 = smul.u32 32, %s18
      %s214 = smul.u32 2, %s19
      %s215 = smul.u32 32, %s19
      %p216 = scmp.lt.s32.totalorder %s215, 31
      %s217 = scalar_select %p216, %s215, 31
      %s218 = smul.addr %s217, 4
      %s219 = scalar_lea.vmem %s1, %s218
      %s220 = smul.u32 32, %s19
      %s221 = smul.u32 32, %s18
      %p222 = scmp.lt.s32.totalorder %s221, 63
      %s223 = scalar_select %p222, %s221, 63
      %s224 = smul.addr %s223, 8
      %s225 = scalar_lea.vmem %s3, %s224
      %s226 = smul.u32 32, %s18
      %p228 = scmp.eq.s32.totalorder %s19, 0
      // Predicated region
      $region33: #{_forward_impl.11} parent=31 // pred_check
        %p229 = pneg %p228
      $region34: #{_forward_impl.11} parent=31 // pred_check_branch
        %231 = sbr.rel (%p229) target = $region36
      $region35: #{_forward_impl.11} parent=31 // pred_region
        %232 = vst [vmem:[#allocation2] sm:$0xff] 0.0
        %233 = vst [vmem:[#allocation2 + $0x8] sm:$0xff] 0.0
        %234 = vst [vmem:[#allocation2 + $0x10] sm:$0xff] 0.0
        %235 = vst [vmem:[#allocation2 + $0x18] sm:$0xff] 0.0
        %236 = vst [vmem:[#allocation2 + $0x20] sm:$0xff] 0.0
        %237 = vst [vmem:[#allocation2 + $0x28] sm:$0xff] 0.0
        %238 = vst [vmem:[#allocation2 + $0x30] sm:$0xff] 0.0
        %239 = vst [vmem:[#allocation2 + $0x38] sm:$0xff] 0.0
        %240 = vst [vmem:[#allocation2 + $0x40] sm:$0xff] 0.0
        %241 = vst [vmem:[#allocation2 + $0x48] sm:$0xff] 0.0
        %242 = vst [vmem:[#allocation2 + $0x50] sm:$0xff] 0.0
        %243 = vst [vmem:[#allocation2 + $0x58] sm:$0xff] 0.0
        %244 = vst [vmem:[#allocation2 + $0x60] sm:$0xff] 0.0
        %245 = vst [vmem:[#allocation2 + $0x68] sm:$0xff] 0.0
        %246 = vst [vmem:[#allocation2 + $0x70] sm:$0xff] 0.0
        %247 = vst [vmem:[#allocation2 + $0x78] sm:$0xff] 0.0
        %248 = vst [vmem:[#allocation2 + $0x80] sm:$0xff] 0.0
        %249 = vst [vmem:[#allocation2 + $0x88] sm:$0xff] 0.0
        %250 = vst [vmem:[#allocation2 + $0x90] sm:$0xff] 0.0
        %251 = vst [vmem:[#allocation2 + $0x98] sm:$0xff] 0.0
        %252 = vst [vmem:[#allocation2 + $0xa0] sm:$0xff] 0.0
        %253 = vst [vmem:[#allocation2 + $0xa8] sm:$0xff] 0.0
        %254 = vst [vmem:[#allocation2 + $0xb0] sm:$0xff] 0.0
        %255 = vst [vmem:[#allocation2 + $0xb8] sm:$0xff] 0.0
        %256 = vst [vmem:[#allocation2 + $0xc0] sm:$0xff] 0.0
        %257 = vst [vmem:[#allocation2 + $0xc8] sm:$0xff] 0.0
        %258 = vst [vmem:[#allocation2 + $0xd0] sm:$0xff] 0.0
        %259 = vst [vmem:[#allocation2 + $0xd8] sm:$0xff] 0.0
        %260 = vst [vmem:[#allocation2 + $0xe0] sm:$0xff] 0.0
        %261 = vst [vmem:[#allocation2 + $0xe8] sm:$0xff] 0.0
        %262 = vst [vmem:[#allocation2 + $0xf0] sm:$0xff] 0.0
        %263 = vst [vmem:[#allocation2 + $0xf8] sm:$0xff] 0.0
      $region36: #{_forward_impl.11} parent=31 // pred_fallthru
        _
      %v264 = vld [vmem:[#allocation2] sm:$0xff]
      %v265 = vld [vmem:[#allocation2 + $0x8] sm:$0xff]
      %v266 = vld [vmem:[#allocation2 + $0x10] sm:$0xff]
      %v267 = vld [vmem:[#allocation2 + $0x18] sm:$0xff]
      %v268 = vld [vmem:[#allocation2 + $0x20] sm:$0xff]
      %v269 = vld [vmem:[#allocation2 + $0x28] sm:$0xff]
      %v270 = vld [vmem:[#allocation2 + $0x30] sm:$0xff]
      %v271 = vld [vmem:[#allocation2 + $0x38] sm:$0xff]
      %v272 = vld [vmem:[#allocation2 + $0x40] sm:$0xff]
      %v273 = vld [vmem:[#allocation2 + $0x48] sm:$0xff]
      %v274 = vld [vmem:[#allocation2 + $0x50] sm:$0xff]
      %v275 = vld [vmem:[#allocation2 + $0x58] sm:$0xff]
      %v276 = vld [vmem:[#allocation2 + $0x60] sm:$0xff]
      %v277 = vld [vmem:[#allocation2 + $0x68] sm:$0xff]
      %v278 = vld [vmem:[#allocation2 + $0x70] sm:$0xff]
      %v279 = vld [vmem:[#allocation2 + $0x78] sm:$0xff]
      %v280 = vld [vmem:[#allocation2 + $0x80] sm:$0xff]
      %v281 = vld [vmem:[#allocation2 + $0x88] sm:$0xff]
      %v282 = vld [vmem:[#allocation2 + $0x90] sm:$0xff]
      %v283 = vld [vmem:[#allocation2 + $0x98] sm:$0xff]
      %v284 = vld [vmem:[#allocation2 + $0xa0] sm:$0xff]
      %v285 = vld [vmem:[#allocation2 + $0xa8] sm:$0xff]
      %v286 = vld [vmem:[#allocation2 + $0xb0] sm:$0xff]
      %v287 = vld [vmem:[#allocation2 + $0xb8] sm:$0xff]
      %v288 = vld [vmem:[#allocation2 + $0xc0] sm:$0xff]
      %v289 = vld [vmem:[#allocation2 + $0xc8] sm:$0xff]
      %v290 = vld [vmem:[#allocation2 + $0xd0] sm:$0xff]
      %v291 = vld [vmem:[#allocation2 + $0xd8] sm:$0xff]
      %v292 = vld [vmem:[#allocation2 + $0xe0] sm:$0xff]
      %v293 = vld [vmem:[#allocation2 + $0xe8] sm:$0xff]
      %v294 = vld [vmem:[#allocation2 + $0xf0] sm:$0xff]
      %v295 = vld [vmem:[#allocation2 + $0xf8] sm:$0xff]
      %v296 = vld [vmem:[%s212] sm:$0xff]
      %v297 = vld [vmem:[%s212 + $0x8] sm:$0xff]
      %v298 = vld [vmem:[%s212 + $0x10] sm:$0xff]
      %v299 = vld [vmem:[%s212 + $0x18] sm:$0xff]
      %v300 = vld [vmem:[%s212 + $0x20] sm:$0xff]
      %v301 = vld [vmem:[%s212 + $0x28] sm:$0xff]
      %v302 = vld [vmem:[%s212 + $0x30] sm:$0xff]
      %v303 = vld [vmem:[%s212 + $0x38] sm:$0xff]
      %v304 = vld [vmem:[%s212 + $0x40] sm:$0xff]
      %v305 = vld [vmem:[%s212 + $0x48] sm:$0xff]
      %v306 = vld [vmem:[%s212 + $0x50] sm:$0xff]
      %v307 = vld [vmem:[%s212 + $0x58] sm:$0xff]
      %v308 = vld [vmem:[%s212 + $0x60] sm:$0xff]
      %v309 = vld [vmem:[%s212 + $0x68] sm:$0xff]
      %v310 = vld [vmem:[%s212 + $0x70] sm:$0xff]
      %v311 = vld [vmem:[%s212 + $0x78] sm:$0xff]
      %v312 = vld [vmem:[%s212 + $0x80] sm:$0xff]
      %v313 = vld [vmem:[%s212 + $0x88] sm:$0xff]
      %v314 = vld [vmem:[%s212 + $0x90] sm:$0xff]
      %v315 = vld [vmem:[%s212 + $0x98] sm:$0xff]
      %v316 = vld [vmem:[%s212 + $0xa0] sm:$0xff]
      %v317 = vld [vmem:[%s212 + $0xa8] sm:$0xff]
      %v318 = vld [vmem:[%s212 + $0xb0] sm:$0xff]
      %v319 = vld [vmem:[%s212 + $0xb8] sm:$0xff]
      %v320 = vld [vmem:[%s212 + $0xc0] sm:$0xff]
      %v321 = vld [vmem:[%s212 + $0xc8] sm:$0xff]
      %v322 = vld [vmem:[%s212 + $0xd0] sm:$0xff]
      %v323 = vld [vmem:[%s212 + $0xd8] sm:$0xff]
      %v324 = vld [vmem:[%s212 + $0xe0] sm:$0xff]
      %v325 = vld [vmem:[%s212 + $0xe8] sm:$0xff]
      %v326 = vld [vmem:[%s212 + $0xf0] sm:$0xff]
      %v327 = vld [vmem:[%s212 + $0xf8] sm:$0xff]
      %v328 = vld [vmem:[%s219] sm:$0xf]
      %v329 = vld [vmem:[%s219 + $0x4] sm:$0xf]
      %v330 = vld [vmem:[%s219 + $0x8] sm:$0xf]
      %v331 = vld [vmem:[%s219 + $0xc] sm:$0xf]
      %v332 = vld [vmem:[%s219 + $0x10] sm:$0xf]
      %v333 = vld [vmem:[%s219 + $0x14] sm:$0xf]
      %v334 = vld [vmem:[%s219 + $0x18] sm:$0xf]
      %v335 = vld [vmem:[%s219 + $0x1c] sm:$0xf]
      %v336 = vld [vmem:[%s219 + $0x20] sm:$0xf]
      %v337 = vld [vmem:[%s219 + $0x24] sm:$0xf]
      %v338 = vld [vmem:[%s219 + $0x28] sm:$0xf]
      %v339 = vld [vmem:[%s219 + $0x2c] sm:$0xf]
      %v340 = vld [vmem:[%s219 + $0x30] sm:$0xf]
      %v341 = vld [vmem:[%s219 + $0x34] sm:$0xf]
      %v342 = vld [vmem:[%s219 + $0x38] sm:$0xf]
      %v343 = vld [vmem:[%s219 + $0x3c] sm:$0xf]
      %v344 = vld [vmem:[%s219 + $0x40] sm:$0xf]
      %v345 = vld [vmem:[%s219 + $0x44] sm:$0xf]
      %v346 = vld [vmem:[%s219 + $0x48] sm:$0xf]
      %v347 = vld [vmem:[%s219 + $0x4c] sm:$0xf]
      %v348 = vld [vmem:[%s219 + $0x50] sm:$0xf]
      %v349 = vld [vmem:[%s219 + $0x54] sm:$0xf]
      %v350 = vld [vmem:[%s219 + $0x58] sm:$0xf]
      %v351 = vld [vmem:[%s219 + $0x5c] sm:$0xf]
      %v352 = vld [vmem:[%s219 + $0x60] sm:$0xf]
      %v353 = vld [vmem:[%s219 + $0x64] sm:$0xf]
      %v354 = vld [vmem:[%s219 + $0x68] sm:$0xf]
      %v355 = vld [vmem:[%s219 + $0x6c] sm:$0xf]
      %v356 = vld [vmem:[%s219 + $0x70] sm:$0xf]
      %v357 = vld [vmem:[%s219 + $0x74] sm:$0xf]
      %v358 = vld [vmem:[%s219 + $0x78] sm:$0xf]
      %v359 = vld [vmem:[%s219 + $0x7c] sm:$0xf]
      %v392 = vunpack.c.l.b16 %v296
      %v393 = vunpack.c.h.b16 %v296
      %v394 = vunpack.c.l.b16 %v297
      %v395 = vunpack.c.h.b16 %v297
      %v396 = vunpack.c.l.b16 %v298
      %v397 = vunpack.c.h.b16 %v298
      %v398 = vunpack.c.l.b16 %v299
      %v399 = vunpack.c.h.b16 %v299
      %v400 = vunpack.c.l.b16 %v300
      %v401 = vunpack.c.h.b16 %v300
      %v402 = vunpack.c.l.b16 %v301
      %v403 = vunpack.c.h.b16 %v301
      %v404 = vunpack.c.l.b16 %v302
      %v405 = vunpack.c.h.b16 %v302
      %v406 = vunpack.c.l.b16 %v303
      %v407 = vunpack.c.h.b16 %v303
      %v408 = vunpack.c.l.b16 %v304
      %v409 = vunpack.c.h.b16 %v304
      %v410 = vunpack.c.l.b16 %v305
      %v411 = vunpack.c.h.b16 %v305
      %v412 = vunpack.c.l.b16 %v306
      %v413 = vunpack.c.h.b16 %v306
      %v414 = vunpack.c.l.b16 %v307
      %v415 = vunpack.c.h.b16 %v307
      %v416 = vunpack.c.l.b16 %v308
      %v417 = vunpack.c.h.b16 %v308
      %v418 = vunpack.c.l.b16 %v309
      %v419 = vunpack.c.h.b16 %v309
      %v420 = vunpack.c.l.b16 %v310
      %v421 = vunpack.c.h.b16 %v310
      %v422 = vunpack.c.l.b16 %v311
      %v423 = vunpack.c.h.b16 %v311
      %v424 = vunpack.c.l.b16 %v312
      %v425 = vunpack.c.h.b16 %v312
      %v426 = vunpack.c.l.b16 %v313
      %v427 = vunpack.c.h.b16 %v313
      %v428 = vunpack.c.l.b16 %v314
      %v429 = vunpack.c.h.b16 %v314
      %v430 = vunpack.c.l.b16 %v315
      %v431 = vunpack.c.h.b16 %v315
      %v432 = vunpack.c.l.b16 %v316
      %v433 = vunpack.c.h.b16 %v316
      %v434 = vunpack.c.l.b16 %v317
      %v435 = vunpack.c.h.b16 %v317
      %v436 = vunpack.c.l.b16 %v318
      %v437 = vunpack.c.h.b16 %v318
      %v438 = vunpack.c.l.b16 %v319
      %v439 = vunpack.c.h.b16 %v319
      %v440 = vunpack.c.l.b16 %v320
      %v441 = vunpack.c.h.b16 %v320
      %v442 = vunpack.c.l.b16 %v321
      %v443 = vunpack.c.h.b16 %v321
      %v444 = vunpack.c.l.b16 %v322
      %v445 = vunpack.c.h.b16 %v322
      %v446 = vunpack.c.l.b16 %v323
      %v447 = vunpack.c.h.b16 %v323
      %v448 = vunpack.c.l.b16 %v324
      %v449 = vunpack.c.h.b16 %v324
      %v450 = vunpack.c.l.b16 %v325
      %v451 = vunpack.c.h.b16 %v325
      %v452 = vunpack.c.l.b16 %v326
      %v453 = vunpack.c.h.b16 %v326
      %v454 = vunpack.c.l.b16 %v327
      %v455 = vunpack.c.h.b16 %v327
      %v456 = vpack.c.b16 %v394, %v392
      %v457 = vpack.c.b16 %v395, %v393
      %v458 = vpack.c.b16 %v398, %v396
      %v459 = vpack.c.b16 %v399, %v397
      %v460 = vpack.c.b16 %v402, %v400
      %v461 = vpack.c.b16 %v403, %v401
      %v462 = vpack.c.b16 %v406, %v404
      %v463 = vpack.c.b16 %v407, %v405
      %v464 = vpack.c.b16 %v410, %v408
      %v465 = vpack.c.b16 %v411, %v409
      %v466 = vpack.c.b16 %v414, %v412
      %v467 = vpack.c.b16 %v415, %v413
      %v468 = vpack.c.b16 %v418, %v416
      %v469 = vpack.c.b16 %v419, %v417
      %v470 = vpack.c.b16 %v422, %v420
      %v471 = vpack.c.b16 %v423, %v421
      %v472 = vpack.c.b16 %v426, %v424
      %v473 = vpack.c.b16 %v427, %v425
      %v474 = vpack.c.b16 %v430, %v428
      %v475 = vpack.c.b16 %v431, %v429
      %v476 = vpack.c.b16 %v434, %v432
      %v477 = vpack.c.b16 %v435, %v433
      %v478 = vpack.c.b16 %v438, %v436
      %v479 = vpack.c.b16 %v439, %v437
      %v480 = vpack.c.b16 %v442, %v440
      %v481 = vpack.c.b16 %v443, %v441
      %v482 = vpack.c.b16 %v446, %v444
      %v483 = vpack.c.b16 %v447, %v445
      %v484 = vpack.c.b16 %v450, %v448
      %v485 = vpack.c.b16 %v451, %v449
      %v486 = vpack.c.b16 %v454, %v452
      %v487 = vpack.c.b16 %v455, %v453
      %v552 = vunpack.c.l.b16 %v328
      %v553 = vunpack.c.l.b16 %v329
      %v554 = vunpack.c.l.b16 %v330
      %v555 = vunpack.c.l.b16 %v331
      %v556 = vunpack.c.l.b16 %v332
      %v557 = vunpack.c.l.b16 %v333
      %v558 = vunpack.c.l.b16 %v334
      %v559 = vunpack.c.l.b16 %v335
      %v560 = vunpack.c.l.b16 %v336
      %v561 = vunpack.c.l.b16 %v337
      %v562 = vunpack.c.l.b16 %v338
      %v563 = vunpack.c.l.b16 %v339
      %v564 = vunpack.c.l.b16 %v340
      %v565 = vunpack.c.l.b16 %v341
      %v566 = vunpack.c.l.b16 %v342
      %v567 = vunpack.c.l.b16 %v343
      %v568 = vunpack.c.l.b16 %v344
      %v569 = vunpack.c.l.b16 %v345
      %v570 = vunpack.c.l.b16 %v346
      %v571 = vunpack.c.l.b16 %v347
      %v572 = vunpack.c.l.b16 %v348
      %v573 = vunpack.c.l.b16 %v349
      %v574 = vunpack.c.l.b16 %v350
      %v575 = vunpack.c.l.b16 %v351
      %v576 = vunpack.c.l.b16 %v352
      %v577 = vunpack.c.l.b16 %v353
      %v578 = vunpack.c.l.b16 %v354
      %v579 = vunpack.c.l.b16 %v355
      %v580 = vunpack.c.l.b16 %v356
      %v581 = vunpack.c.l.b16 %v357
      %v582 = vunpack.c.l.b16 %v358
      %v583 = vunpack.c.l.b16 %v359
      %v584 = vpack.c.b16 %v553, %v552
      %v585 = vpack.c.b16 %v555, %v554
      %v586 = vpack.c.b16 %v557, %v556
      %v587 = vpack.c.b16 %v559, %v558
      %v588 = vpack.c.b16 %v561, %v560
      %v589 = vpack.c.b16 %v563, %v562
      %v590 = vpack.c.b16 %v565, %v564
      %v591 = vpack.c.b16 %v567, %v566
      %v592 = vpack.c.b16 %v569, %v568
      %v593 = vpack.c.b16 %v571, %v570
      %v594 = vpack.c.b16 %v573, %v572
      %v595 = vpack.c.b16 %v575, %v574
      %v596 = vpack.c.b16 %v577, %v576
      %v597 = vpack.c.b16 %v579, %v578
      %v598 = vpack.c.b16 %v581, %v580
      %v599 = vpack.c.b16 %v583, %v582
      %616 = vmatprep.subr.bf16.mxu0 0
      %617 = vmatpush1.bf16.msra.mxu0 %v591
      %618 = vmatprep.subr.bf16.mxu0 0
      %619 = vmatpush1.bf16.msra.mxu0 %v590
      %620 = vmatprep.subr.bf16.mxu0 0
      %621 = vmatpush1.bf16.msra.mxu0 %v589
      %622 = vmatprep.subr.bf16.mxu0 0
      %623 = vmatpush1.bf16.msra.mxu0 %v588
      %624 = vmatprep.subr.bf16.mxu0 0
      %625 = vmatpush1.bf16.msra.mxu0 %v587
      %626 = vmatprep.subr.bf16.mxu0 0
      %627 = vmatpush1.bf16.msra.mxu0 %v586
      %628 = vmatprep.subr.bf16.mxu0 0
      %629 = vmatpush1.bf16.msra.mxu0 %v585
      %630 = vmatprep.subr.bf16.mxu0 0
      %631 = vmatpush1.bf16.msra.mxu0 %v584
      %632 = vmatprep.subr.bf16.mxu0 0
      %633 = vmatpush2.bf16.msra.mxu0 %v599
      %634 = vmatprep.subr.bf16.mxu0 0
      %635 = vmatpush2.bf16.msra.mxu0 %v598
      %636 = vmatprep.subr.bf16.mxu0 0
      %637 = vmatpush2.bf16.msra.mxu0 %v597
      %638 = vmatprep.subr.bf16.mxu0 0
      %639 = vmatpush2.bf16.msra.mxu0 %v596
      %640 = vmatprep.subr.bf16.mxu0 0
      %641 = vmatpush2.bf16.msra.mxu0 %v595
      %642 = vmatprep.subr.bf16.mxu0 0
      %643 = vmatpush2.bf16.msra.mxu0 %v594
      %644 = vmatprep.subr.bf16.mxu0 0
      %645 = vmatpush2.bf16.msra.mxu0 %v593
      %646 = vmatprep.subr.bf16.mxu0 0
      %647 = vmatpush2.bf16.msra.mxu0 %v592
      %648 = vmatprep.mubr.bf16.mxu0 %v457
      %649 = vmatmul.mubr.bf16.gmra.mxu0 %v456
      %v650 = vpop.f32.mrf.mxu0
      %v651 = vadd.f32 0.0, %v650
      %v652 = vpop.f32.mrf.mxu0
      %v653 = vpop.f32.mrf.mxu0
      %v654 = vadd.f32 0.0, %v653
      %v655 = vpop.f32.mrf.mxu0
      %656 = vmatprep.mubr.bf16.mxu0 %v459
      %657 = vmatmul.mubr.bf16.gmra.mxu0 %v458
      %v658 = vpop.f32.mrf.mxu0
      %v659 = vadd.f32 0.0, %v658
      %v660 = vpop.f32.mrf.mxu0
      %v661 = vpop.f32.mrf.mxu0
      %v662 = vadd.f32 0.0, %v661
      %v663 = vpop.f32.mrf.mxu0
      %664 = vmatprep.mubr.bf16.mxu0 %v461
      %665 = vmatmul.mubr.bf16.gmra.mxu0 %v460
      %v666 = vpop.f32.mrf.mxu0
      %v667 = vadd.f32 0.0, %v666
      %v668 = vpop.f32.mrf.mxu0
      %v669 = vpop.f32.mrf.mxu0
      %v670 = vadd.f32 0.0, %v669
      %v671 = vpop.f32.mrf.mxu0
      %672 = vmatprep.mubr.bf16.mxu0 %v463
      %673 = vmatmul.mubr.bf16.gmra.mxu0 %v462
      %v674 = vpop.f32.mrf.mxu0
      %v675 = vadd.f32 0.0, %v674
      %v676 = vpop.f32.mrf.mxu0
      %v677 = vpop.f32.mrf.mxu0
      %v678 = vadd.f32 0.0, %v677
      %v679 = vpop.f32.mrf.mxu0
      %680 = vmatprep.mubr.bf16.mxu0 %v465
      %681 = vmatmul.mubr.bf16.gmra.mxu0 %v464
      %v682 = vpop.f32.mrf.mxu0
      %v683 = vadd.f32 0.0, %v682
      %v684 = vpop.f32.mrf.mxu0
      %v685 = vpop.f32.mrf.mxu0
      %v686 = vadd.f32 0.0, %v685
      %v687 = vpop.f32.mrf.mxu0
      %688 = vmatprep.mubr.bf16.mxu0 %v467
      %689 = vmatmul.mubr.bf16.gmra.mxu0 %v466
      %v690 = vpop.f32.mrf.mxu0
      %v691 = vadd.f32 0.0, %v690
      %v692 = vpop.f32.mrf.mxu0
      %v693 = vpop.f32.mrf.mxu0
      %v694 = vadd.f32 0.0, %v693
      %v695 = vpop.f32.mrf.mxu0
      %696 = vmatprep.mubr.bf16.mxu0 %v469
      %697 = vmatmul.mubr.bf16.gmra.mxu0 %v468
      %v698 = vpop.f32.mrf.mxu0
      %v699 = vadd.f32 0.0, %v698
      %v700 = vpop.f32.mrf.mxu0
      %v701 = vpop.f32.mrf.mxu0
      %v702 = vadd.f32 0.0, %v701
      %v703 = vpop.f32.mrf.mxu0
      %704 = vmatprep.mubr.bf16.mxu0 %v471
      %705 = vmatmul.mubr.bf16.gmra.mxu0 %v470
      %v706 = vpop.f32.mrf.mxu0
      %v707 = vadd.f32 0.0, %v706
      %v708 = vpop.f32.mrf.mxu0
      %v709 = vpop.f32.mrf.mxu0
      %v710 = vadd.f32 0.0, %v709
      %v711 = vpop.f32.mrf.mxu0
      %712 = vmatprep.mubr.bf16.mxu0 %v473
      %713 = vmatmul.mubr.bf16.gmra.mxu0 %v472
      %v714 = vpop.f32.mrf.mxu0
      %v715 = vadd.f32 0.0, %v714
      %v716 = vpop.f32.mrf.mxu0
      %v717 = vpop.f32.mrf.mxu0
      %v718 = vadd.f32 0.0, %v717
      %v719 = vpop.f32.mrf.mxu0
      %720 = vmatprep.mubr.bf16.mxu0 %v475
      %721 = vmatmul.mubr.bf16.gmra.mxu0 %v474
      %v722 = vpop.f32.mrf.mxu0
      %v723 = vadd.f32 0.0, %v722
      %v724 = vpop.f32.mrf.mxu0
      %v725 = vpop.f32.mrf.mxu0
      %v726 = vadd.f32 0.0, %v725
      %v727 = vpop.f32.mrf.mxu0
      %728 = vmatprep.mubr.bf16.mxu0 %v477
      %729 = vmatmul.mubr.bf16.gmra.mxu0 %v476
      %v730 = vpop.f32.mrf.mxu0
      %v731 = vadd.f32 0.0, %v730
      %v732 = vpop.f32.mrf.mxu0
      %v733 = vpop.f32.mrf.mxu0
      %v734 = vadd.f32 0.0, %v733
      %v735 = vpop.f32.mrf.mxu0
      %736 = vmatprep.mubr.bf16.mxu0 %v479
      %737 = vmatmul.mubr.bf16.gmra.mxu0 %v478
      %v738 = vpop.f32.mrf.mxu0
      %v739 = vadd.f32 0.0, %v738
      %v740 = vpop.f32.mrf.mxu0
      %v741 = vpop.f32.mrf.mxu0
      %v742 = vadd.f32 0.0, %v741
      %v743 = vpop.f32.mrf.mxu0
      %744 = vmatprep.mubr.bf16.mxu0 %v481
      %745 = vmatmul.mubr.bf16.gmra.mxu0 %v480
      %v746 = vpop.f32.mrf.mxu0
      %v747 = vadd.f32 0.0, %v746
      %v748 = vpop.f32.mrf.mxu0
      %v749 = vpop.f32.mrf.mxu0
      %v750 = vadd.f32 0.0, %v749
      %v751 = vpop.f32.mrf.mxu0
      %752 = vmatprep.mubr.bf16.mxu0 %v483
      %753 = vmatmul.mubr.bf16.gmra.mxu0 %v482
      %v754 = vpop.f32.mrf.mxu0
      %v755 = vadd.f32 0.0, %v754
      %v756 = vpop.f32.mrf.mxu0
      %v757 = vpop.f32.mrf.mxu0
      %v758 = vadd.f32 0.0, %v757
      %v759 = vpop.f32.mrf.mxu0
      %760 = vmatprep.mubr.bf16.mxu0 %v485
      %761 = vmatmul.mubr.bf16.gmra.mxu0 %v484
      %v762 = vpop.f32.mrf.mxu0
      %v763 = vadd.f32 0.0, %v762
      %v764 = vpop.f32.mrf.mxu0
      %v765 = vpop.f32.mrf.mxu0
      %v766 = vadd.f32 0.0, %v765
      %v767 = vpop.f32.mrf.mxu0
      %768 = vmatprep.mubr.bf16.mxu0 %v487
      %769 = vmatmul.mubr.bf16.gmra.mxu0 %v486
      %v770 = vpop.f32.mrf.mxu0
      %v771 = vadd.f32 0.0, %v770
      %v772 = vpop.f32.mrf.mxu0
      %v773 = vpop.f32.mrf.mxu0
      %v774 = vadd.f32 0.0, %v773
      %v775 = vpop.f32.mrf.mxu0
      %776 = vdwg.mxu0
      %v777 = vadd.f32 %v264, %v651
      %v778 = vadd.f32 %v265, %v654
      %v779 = vadd.f32 %v266, %v659
      %v780 = vadd.f32 %v267, %v662
      %v781 = vadd.f32 %v268, %v667
      %v782 = vadd.f32 %v269, %v670
      %v783 = vadd.f32 %v270, %v675
      %v784 = vadd.f32 %v271, %v678
      %v785 = vadd.f32 %v272, %v683
      %v786 = vadd.f32 %v273, %v686
      %v787 = vadd.f32 %v274, %v691
      %v788 = vadd.f32 %v275, %v694
      %v789 = vadd.f32 %v276, %v699
      %v790 = vadd.f32 %v277, %v702
      %v791 = vadd.f32 %v278, %v707
      %v792 = vadd.f32 %v279, %v710
      %v793 = vadd.f32 %v280, %v715
      %v794 = vadd.f32 %v281, %v718
      %v795 = vadd.f32 %v282, %v723
      %v796 = vadd.f32 %v283, %v726
      %v797 = vadd.f32 %v284, %v731
      %v798 = vadd.f32 %v285, %v734
      %v799 = vadd.f32 %v286, %v739
      %v800 = vadd.f32 %v287, %v742
      %v801 = vadd.f32 %v288, %v747
      %v802 = vadd.f32 %v289, %v750
      %v803 = vadd.f32 %v290, %v755
      %v804 = vadd.f32 %v291, %v758
      %v805 = vadd.f32 %v292, %v763
      %v806 = vadd.f32 %v293, %v766
      %v807 = vadd.f32 %v294, %v771
      %v808 = vadd.f32 %v295, %v774
      %809 = vst [vmem:[#allocation2] sm:$0xff] %v777
      %810 = vst [vmem:[#allocation2 + $0x8] sm:$0xff] %v778
      %811 = vst [vmem:[#allocation2 + $0x10] sm:$0xff] %v779
      %812 = vst [vmem:[#allocation2 + $0x18] sm:$0xff] %v780
      %813 = vst [vmem:[#allocation2 + $0x20] sm:$0xff] %v781
      %814 = vst [vmem:[#allocation2 + $0x28] sm:$0xff] %v782
      %815 = vst [vmem:[#allocation2 + $0x30] sm:$0xff] %v783
      %816 = vst [vmem:[#allocation2 + $0x38] sm:$0xff] %v784
      %817 = vst [vmem:[#allocation2 + $0x40] sm:$0xff] %v785
      %818 = vst [vmem:[#allocation2 + $0x48] sm:$0xff] %v786
      %819 = vst [vmem:[#allocation2 + $0x50] sm:$0xff] %v787
      %820 = vst [vmem:[#allocation2 + $0x58] sm:$0xff] %v788
      %821 = vst [vmem:[#allocation2 + $0x60] sm:$0xff] %v789
      %822 = vst [vmem:[#allocation2 + $0x68] sm:$0xff] %v790
      %823 = vst [vmem:[#allocation2 + $0x70] sm:$0xff] %v791
      %824 = vst [vmem:[#allocation2 + $0x78] sm:$0xff] %v792
      %825 = vst [vmem:[#allocation2 + $0x80] sm:$0xff] %v793
      %826 = vst [vmem:[#allocation2 + $0x88] sm:$0xff] %v794
      %827 = vst [vmem:[#allocation2 + $0x90] sm:$0xff] %v795
      %828 = vst [vmem:[#allocation2 + $0x98] sm:$0xff] %v796
      %829 = vst [vmem:[#allocation2 + $0xa0] sm:$0xff] %v797
      %830 = vst [vmem:[#allocation2 + $0xa8] sm:$0xff] %v798
      %831 = vst [vmem:[#allocation2 + $0xb0] sm:$0xff] %v799
      %832 = vst [vmem:[#allocation2 + $0xb8] sm:$0xff] %v800
      %833 = vst [vmem:[#allocation2 + $0xc0] sm:$0xff] %v801
      %834 = vst [vmem:[#allocation2 + $0xc8] sm:$0xff] %v802
      %835 = vst [vmem:[#allocation2 + $0xd0] sm:$0xff] %v803
      %836 = vst [vmem:[#allocation2 + $0xd8] sm:$0xff] %v804
      %837 = vst [vmem:[#allocation2 + $0xe0] sm:$0xff] %v805
      %838 = vst [vmem:[#allocation2 + $0xe8] sm:$0xff] %v806
      %839 = vst [vmem:[#allocation2 + $0xf0] sm:$0xff] %v807
      %840 = vst [vmem:[#allocation2 + $0xf8] sm:$0xff] %v808
      // Predicated region
      $region37: #{_forward_impl.11} parent=31 // pred_check
        %p841 = pneg %p228
      $region38: #{_forward_impl.11} parent=31 // pred_check_branch
        %843 = sbr.rel (%p841) target = $region40
      $region39: #{_forward_impl.11} parent=31 // pred_region
        %v844 = vld [vmem:[#allocation2] sm:$0xff]
        %v845 = vld [vmem:[#allocation2 + $0x8] sm:$0xff]
        %v846 = vld [vmem:[#allocation2 + $0x10] sm:$0xff]
        %v847 = vld [vmem:[#allocation2 + $0x18] sm:$0xff]
        %v848 = vld [vmem:[#allocation2 + $0x20] sm:$0xff]
        %v849 = vld [vmem:[#allocation2 + $0x28] sm:$0xff]
        %v850 = vld [vmem:[#allocation2 + $0x30] sm:$0xff]
        %v851 = vld [vmem:[#allocation2 + $0x38] sm:$0xff]
        %v852 = vld [vmem:[#allocation2 + $0x40] sm:$0xff]
        %v853 = vld [vmem:[#allocation2 + $0x48] sm:$0xff]
        %v854 = vld [vmem:[#allocation2 + $0x50] sm:$0xff]
        %v855 = vld [vmem:[#allocation2 + $0x58] sm:$0xff]
        %v856 = vld [vmem:[#allocation2 + $0x60] sm:$0xff]
        %v857 = vld [vmem:[#allocation2 + $0x68] sm:$0xff]
        %v858 = vld [vmem:[#allocation2 + $0x70] sm:$0xff]
        %v859 = vld [vmem:[#allocation2 + $0x78] sm:$0xff]
        %v860 = vld [vmem:[#allocation2 + $0x80] sm:$0xff]
        %v861 = vld [vmem:[#allocation2 + $0x88] sm:$0xff]
        %v862 = vld [vmem:[#allocation2 + $0x90] sm:$0xff]
        %v863 = vld [vmem:[#allocation2 + $0x98] sm:$0xff]
        %v864 = vld [vmem:[#allocation2 + $0xa0] sm:$0xff]
        %v865 = vld [vmem:[#allocation2 + $0xa8] sm:$0xff]
        %v866 = vld [vmem:[#allocation2 + $0xb0] sm:$0xff]
        %v867 = vld [vmem:[#allocation2 + $0xb8] sm:$0xff]
        %v868 = vld [vmem:[#allocation2 + $0xc0] sm:$0xff]
        %v869 = vld [vmem:[#allocation2 + $0xc8] sm:$0xff]
        %v870 = vld [vmem:[#allocation2 + $0xd0] sm:$0xff]
        %v871 = vld [vmem:[#allocation2 + $0xd8] sm:$0xff]
        %v872 = vld [vmem:[#allocation2 + $0xe0] sm:$0xff]
        %v873 = vld [vmem:[#allocation2 + $0xe8] sm:$0xff]
        %v874 = vld [vmem:[#allocation2 + $0xf0] sm:$0xff]
        %v875 = vld [vmem:[#allocation2 + $0xf8] sm:$0xff]
        %v876 = vld [vmem:[%s2] sm:$0x1]
        %v878 = vlaneseq
        %v879 = vshrl.u32 %v878, 7
        %v880 = vsub.s32 0, %v879
        %v881 = vrot.slane %v876, %v880
        %v883 = vadd.f32 %v844, %v881
        %v884 = vadd.f32 %v845, %v881
        %v885 = vadd.f32 %v846, %v881
        %v886 = vadd.f32 %v847, %v881
        %v887 = vadd.f32 %v848, %v881
        %v888 = vadd.f32 %v849, %v881
        %v889 = vadd.f32 %v850, %v881
        %v890 = vadd.f32 %v851, %v881
        %v891 = vadd.f32 %v852, %v881
        %v892 = vadd.f32 %v853, %v881
        %v893 = vadd.f32 %v854, %v881
        %v894 = vadd.f32 %v855, %v881
        %v895 = vadd.f32 %v856, %v881
        %v896 = vadd.f32 %v857, %v881
        %v897 = vadd.f32 %v858, %v881
        %v898 = vadd.f32 %v859, %v881
        %v899 = vadd.f32 %v860, %v881
        %v900 = vadd.f32 %v861, %v881
        %v901 = vadd.f32 %v862, %v881
        %v902 = vadd.f32 %v863, %v881
        %v903 = vadd.f32 %v864, %v881
        %v904 = vadd.f32 %v865, %v881
        %v905 = vadd.f32 %v866, %v881
        %v906 = vadd.f32 %v867, %v881
        %v907 = vadd.f32 %v868, %v881
        %v908 = vadd.f32 %v869, %v881
        %v909 = vadd.f32 %v870, %v881
        %v910 = vadd.f32 %v871, %v881
        %v911 = vadd.f32 %v872, %v881
        %v912 = vadd.f32 %v873, %v881
        %v913 = vadd.f32 %v874, %v881
        %v914 = vadd.f32 %v875, %v881
        %915 = vst [vmem:[%s225] sm:$0xff] %v883
        %916 = vst [vmem:[%s225 + $0x8] sm:$0xff] %v884
        %917 = vst [vmem:[%s225 + $0x10] sm:$0xff] %v885
        %918 = vst [vmem:[%s225 + $0x18] sm:$0xff] %v886
        %919 = vst [vmem:[%s225 + $0x20] sm:$0xff] %v887
        %920 = vst [vmem:[%s225 + $0x28] sm:$0xff] %v888
        %921 = vst [vmem:[%s225 + $0x30] sm:$0xff] %v889
        %922 = vst [vmem:[%s225 + $0x38] sm:$0xff] %v890
        %923 = vst [vmem:[%s225 + $0x40] sm:$0xff] %v891
        %924 = vst [vmem:[%s225 + $0x48] sm:$0xff] %v892
        %925 = vst [vmem:[%s225 + $0x50] sm:$0xff] %v893
        %926 = vst [vmem:[%s225 + $0x58] sm:$0xff] %v894
        %927 = vst [vmem:[%s225 + $0x60] sm:$0xff] %v895
        %928 = vst [vmem:[%s225 + $0x68] sm:$0xff] %v896
        %929 = vst [vmem:[%s225 + $0x70] sm:$0xff] %v897
        %930 = vst [vmem:[%s225 + $0x78] sm:$0xff] %v898
        %931 = vst [vmem:[%s225 + $0x80] sm:$0xff] %v899
        %932 = vst [vmem:[%s225 + $0x88] sm:$0xff] %v900
        %933 = vst [vmem:[%s225 + $0x90] sm:$0xff] %v901
        %934 = vst [vmem:[%s225 + $0x98] sm:$0xff] %v902
        %935 = vst [vmem:[%s225 + $0xa0] sm:$0xff] %v903
        %936 = vst [vmem:[%s225 + $0xa8] sm:$0xff] %v904
        %937 = vst [vmem:[%s225 + $0xb0] sm:$0xff] %v905
        %938 = vst [vmem:[%s225 + $0xb8] sm:$0xff] %v906
        %939 = vst [vmem:[%s225 + $0xc0] sm:$0xff] %v907
        %940 = vst [vmem:[%s225 + $0xc8] sm:$0xff] %v908
        %941 = vst [vmem:[%s225 + $0xd0] sm:$0xff] %v909
        %942 = vst [vmem:[%s225 + $0xd8] sm:$0xff] %v910
        %943 = vst [vmem:[%s225 + $0xe0] sm:$0xff] %v911
        %944 = vst [vmem:[%s225 + $0xe8] sm:$0xff] %v912
        %945 = vst [vmem:[%s225 + $0xf0] sm:$0xff] %v913
        %946 = vst [vmem:[%s225 + $0xf8] sm:$0xff] %v914
      $region40: #{_forward_impl.11} parent=31 // pred_fallthru
        _
      %s947 = smul.u32 32, %s18
      %p948 = scmp.lt.s32.totalorder %s947, 63
      %s949 = scalar_select %p948, %s947, 63
      %s950 = smul.addr %s949, 8
      %s951 = scalar_lea.vmem %s3, %s950
      // Predicated region
      $region41: #{_forward_impl.11} parent=31 // pred_check
        %p952 = pneg %p119
      $region42: #{_forward_impl.11} parent=31 // pred_check_branch
        %954 = sbr.rel (%p952) target = $region44
      $region43: #{_forward_impl.11} parent=31 // pred_region
        %s955 = smul.u32 32, %s18
      $region44: #{_forward_impl.11} parent=31 // pred_fallthru
        _
    $region32: #{_forward_impl.11} parent=5 // pred_fallthru
      _
    %p956 = scmp.le.s32.totalorder 2, %s9
    // Predicated region
    $region45: #{_forward_impl.11} parent=5 // pred_check
      %p957 = pneg %p956
    $region46: #{_forward_impl.11} parent=5 // pred_check_branch
      %959 = sbr.rel (%p957) target = $region48
    $region47: #{_forward_impl.11} parent=5 // pred_region
      %s960 = ssub.s32 %s9, 2
      // Predicated region
      $region49: #{_forward_impl.11} parent=47 // pred_check
        %p961 = pneg %p125
      $region50: #{_forward_impl.11} parent=47 // pred_check_branch
        %963 = sbr.rel (%p961) target = $region52
      $region51: #{_forward_impl.11} parent=47 // pred_region
        %s964 = smul.u32 32, %s20
        %p965 = scmp.lt.s32.totalorder %s964, 63
        %s966 = scalar_select %p965, %s964, 63
        %s967 = smul.addr %s966, 8
        %s968 = scalar_lea.vmem %s3, %s967
      $region52: #{_forward_impl.11} parent=47 // pred_fallthru
        _
    $region48: #{_forward_impl.11} parent=5 // pred_fallthru
      _
  $region6: #{_forward_impl.11} parent=0 // loop_footer
    %s13 = sadd.s32 1, %s9
  $region7: #{_forward_impl.11} parent=0 // loop_footer_branch
    %8 = sbr.rel target = $region3
  $region8: #{_forward_impl.11} parent=0 // loop_exit
    _

// kernel: _forward_impl.10
$region0: #{_forward_impl.10}
  #allocation0 [shape = 'u32[]', space=smem, size = 0x4, offset = 0x4, fixed_abs, tag = 'smem constant byte address 0x4 - core index']
  #allocation1 [shape = 'u32[144,128]{1,0:T(1,128)}', space=vmem, size = 0x12000, scoped, tag = 'internal scratch']
  #allocation2 [shape = 'f32[256,256]{1,0:T(8,128)}', space=vmem, size = 0x40000, scoped, tag = 'scratch operand']
  %s0 = inlined_call_operand.vmem [shape: bf16[512,640], index: 0, kind: input, shape index: {}]
  %s1 = inlined_call_operand.vmem [shape: bf16[640,256], index: 1, kind: input, shape index: {}]
  %s2 = inlined_call_operand.vmem [shape: f32[1,256], index: 2, kind: input, shape index: {}]
  %s3 = inlined_call_operand.vmem [shape: f32[512,256], index: 3, kind: output, shape index: {}]
  %s4 = sld [smem:[#allocation0]]
  $region53: #{_forward_impl.10} parent=0
    _
  %s6 = ssub.s32 1, %s4
  %s7 = scalar_select 0, %s6, %s4
  loop: start=0, step=1, limit=4
  $region2: #{_forward_impl.10} parent=0 // loop_pre_header
    _
  $region3: #{_forward_impl.10} parent=0 // loop_header
    %s9 = sphi 0, %s13
    %p10 = scmp.ge.s32.totalorder %s9, 4
    %s16 = sphi 0, %s28
    %s17 = sphi 0, %s24
    %s18 = sphi 0, %s16
    %s19 = sphi 0, %s17
    %s20 = sphi 0, %s18
    %s21 = sphi 0, %s19
    %s33 = sphi 0, %s35
    %s36 = sphi 0, %s33
    %s37 = sphi 0, %s36
    %s53 = sphi 0, %s37
    %s59 = sphi 0, %s61
    %s62 = sphi 0, %s59
    %s63 = sphi 0, %s62
    %s79 = sphi 0, %s63
    %s83 = sphi 0, %s83
    %s85 = sphi 0, %s83
    %s86 = sphi 0, %s85
    %s100 = sphi 0, %s86
    %s106 = sphi 0, %s108
    %s109 = sphi 0, %s106
    %s110 = sphi 0, %s109
    %s126 = sphi 0, %s110
  $region4: #{_forward_impl.10} parent=0 // loop_header_branch
    %12 = sbr.rel (%p10) target = $region8
  $region5: #{_forward_impl.10} parent=0 // loop_body
    %s14 = ssub.s32 %s9, 1
    %s15 = ssub.s32 %s9, 2
    %s22 = sadd.s32 1, %s17
    %p23 = scmp.ge.s32.totalorder %s22, 1
    %s24 = scalar_select %p23, 0, %s22
    %s25 = sadd.s32 1, %s16
    %s26 = scalar_select %p23, %s25, %s16
    %p27 = scmp.ge.s32.totalorder %s26, 2
    %s28 = scalar_select %p27, 0, %s26
    %s29 = ssub.s32 %s16, %s28
    %s30 = ssub.s32 %s17, %s24
    %s31 = sor.u32 %s29, %s30
    %p32 = scmp.eq.s32.totalorder %s31, 0
    %s34 = sadd.s32 %s33, 1
    %s35 = scalar_select %p32, %s33, %s34
    %p38 = pneg %p32
    %p39 = scmp.eq.s32.totalorder %s9, 1
    %p40 = por %p38, %p39
    %p41 = scmp.ne.s32.totalorder %s33, %s36
    %p42 = scmp.eq.s32.totalorder %s9, 0
    %p43 = por %p41, %p42
    %p44 = scmp.ne.s32.totalorder %s33, %s36
    %p45 = scmp.eq.s32.totalorder %s14, 1
    %p46 = por %p44, %p45
    %p47 = scmp.ne.s32.totalorder %s36, %s37
    %p48 = scmp.eq.s32.totalorder %s14, 0
    %p49 = por %p47, %p48
    %p50 = scmp.ne.s32.totalorder %s36, %s37
    %p51 = scmp.eq.s32.totalorder %s15, 1
    %p52 = por %p50, %p51
    %p54 = scmp.ne.s32.totalorder %s37, %s53
    %p55 = scmp.eq.s32.totalorder %s15, 0
    %p56 = por %p54, %p55
    %s57 = ssub.s32 %s17, %s24
    %p58 = scmp.eq.s32.totalorder %s57, 0
    %s60 = sadd.s32 %s59, 1
    %s61 = scalar_select %p58, %s59, %s60
    %p64 = pneg %p58
    %p65 = scmp.eq.s32.totalorder %s9, 1
    %p66 = por %p64, %p65
    %p67 = scmp.ne.s32.totalorder %s59, %s62
    %p68 = scmp.eq.s32.totalorder %s9, 0
    %p69 = por %p67, %p68
    %p70 = scmp.ne.s32.totalorder %s59, %s62
    %p71 = scmp.eq.s32.totalorder %s14, 1
    %p72 = por %p70, %p71
    %p73 = scmp.ne.s32.totalorder %s62, %s63
    %p74 = scmp.eq.s32.totalorder %s14, 0
    %p75 = por %p73, %p74
    %p76 = scmp.ne.s32.totalorder %s62, %s63
    %p77 = scmp.eq.s32.totalorder %s15, 1
    %p78 = por %p76, %p77
    %p80 = scmp.ne.s32.totalorder %s63, %s79
    %p81 = scmp.eq.s32.totalorder %s15, 0
    %p82 = por %p80, %p81
    %s84 = sadd.s32 %s83, 1
    %p87 = scmp.eq.s32.totalorder %s9, 1
    %p88 = scmp.ne.s32.totalorder %s83, %s85
    %p89 = scmp.eq.s32.totalorder %s9, 0
    %p90 = por %p88, %p89
    %p91 = scmp.ne.s32.totalorder %s83, %s85
    %p92 = scmp.eq.s32.totalorder %s14, 1
    %p93 = por %p91, %p92
    %p94 = scmp.ne.s32.totalorder %s85, %s86
    %p95 = scmp.eq.s32.totalorder %s14, 0
    %p96 = por %p94, %p95
    %p97 = scmp.ne.s32.totalorder %s85, %s86
    %p98 = scmp.eq.s32.totalorder %s15, 1
    %p99 = por %p97, %p98
    %p101 = scmp.ne.s32.totalorder %s86, %s100
    %p102 = scmp.eq.s32.totalorder %s15, 0
    %p103 = por %p101, %p102
    %s104 = ssub.s32 %s16, %s28
    %p105 = scmp.eq.s32.totalorder %s104, 0
    %s107 = sadd.s32 %s106, 1
    %s108 = scalar_select %p105, %s106, %s107
    %p111 = pneg %p105
    %p112 = scmp.eq.s32.totalorder %s9, 1
    %p113 = por %p111, %p112
    %p114 = scmp.ne.s32.totalorder %s106, %s109
    %p115 = scmp.eq.s32.totalorder %s9, 0
    %p116 = por %p114, %p115
    %p117 = scmp.ne.s32.totalorder %s106, %s109
    %p118 = scmp.eq.s32.totalorder %s14, 1
    %p119 = por %p117, %p118
    %p120 = scmp.ne.s32.totalorder %s109, %s110
    %p121 = scmp.eq.s32.totalorder %s14, 0
    %p122 = por %p120, %p121
    %p123 = scmp.ne.s32.totalorder %s109, %s110
    %p124 = scmp.eq.s32.totalorder %s15, 1
    %p125 = por %p123, %p124
    %p127 = scmp.ne.s32.totalorder %s110, %s126
    %p128 = scmp.eq.s32.totalorder %s15, 0
    %p129 = por %p127, %p128
    %p130 = scmp.le.s32.totalorder 1, %s9
    %p131 = scmp.lt.s32.totalorder %s9, 3
    %p132 = pnand %p130, %p131
    %p133 = pneg %p132
    // Predicated region
    $region9: #{_forward_impl.10} parent=5 // pred_check
      _
    $region10: #{_forward_impl.10} parent=5 // pred_check_branch
      %135 = sbr.rel (%p132) target = $region12
    $region11: #{_forward_impl.10} parent=5 // pred_region
      %s136 = ssub.s32 %s9, 1
      // Predicated region
      $region13: #{_forward_impl.10} parent=11 // pred_check
        %p137 = pneg %p75
      $region14: #{_forward_impl.10} parent=11 // pred_check_branch
        %139 = sbr.rel (%p137) target = $region16
      $region15: #{_forward_impl.10} parent=11 // pred_region
        %s140 = smul.u32 80, %s19
        %p141 = scmp.lt.s32.totalorder %s140, 79
        %s142 = scalar_select %p141, %s140, 79
        %s143 = smul.addr %s142, 2
        %s144 = smul.addr %s143, 4
        %s145 = scalar_lea.vmem %s1, %s144
        %s146 = smul.u32 80, %s19
      $region16: #{_forward_impl.10} parent=11 // pred_fallthru
        _
      // Predicated region
      $region17: #{_forward_impl.10} parent=11 // pred_check
        %p147 = pneg %p96
      $region18: #{_forward_impl.10} parent=11 // pred_check_branch
        %149 = sbr.rel (%p147) target = $region20
      $region19: #{_forward_impl.10} parent=11 // pred_region
        _
      $region20: #{_forward_impl.10} parent=11 // pred_fallthru
        _
    $region12: #{_forward_impl.10} parent=5 // pred_fallthru
      _
    %p150 = scmp.lt.s32.totalorder %s9, 2
    // Predicated region
    $region21: #{_forward_impl.10} parent=5 // pred_check
      %p151 = pneg %p150
    $region22: #{_forward_impl.10} parent=5 // pred_check_branch
      %153 = sbr.rel (%p151) target = $region24
    $region23: #{_forward_impl.10} parent=5 // pred_region
      // Predicated region
      $region25: #{_forward_impl.10} parent=23 // pred_check
        %p154 = pneg %p43
      $region26: #{_forward_impl.10} parent=23 // pred_check_branch
        %156 = sbr.rel (%p154) target = $region28
      $region27: #{_forward_impl.10} parent=23 // pred_region
        %s157 = smul.u32 32, %s16
        %s158 = smul.u32 5, %s17
        %p159 = scmp.lt.s32.totalorder %s157, 63
        %s160 = scalar_select %p159, %s157, 63
        %p161 = scmp.lt.s32.totalorder %s158, 4
        %s162 = scalar_select %p161, %s158, 4
        %s163 = smul.addr %s160, 5
        %s164 = sadd.s32 %s162, %s163
        %s165 = smul.addr %s164, 4
        %s166 = scalar_lea.vmem %s0, %s165
        %s167 = smul.u32 32, %s16
        %s168 = smul.u32 5, %s17
      $region28: #{_forward_impl.10} parent=23 // pred_fallthru
        _
    $region24: #{_forward_impl.10} parent=5 // pred_fallthru
      _
    %p169 = scmp.le.s32.totalorder 1, %s9
    %p170 = scmp.lt.s32.totalorder %s9, 3
    %p171 = pnand %p169, %p170
    %p172 = pneg %p171
    // Predicated region
    $region29: #{_forward_impl.10} parent=5 // pred_check
      _
    $region30: #{_forward_impl.10} parent=5 // pred_check_branch
      %174 = sbr.rel (%p171) target = $region32
    $region31: #{_forward_impl.10} parent=5 // pred_region
      %s175 = ssub.s32 %s9, 1
      %s176 = smul.u32 32, %s18
      %s177 = smul.u32 5, %s19
      %p178 = scmp.lt.s32.totalorder %s176, 63
      %s179 = scalar_select %p178, %s176, 63
      %p180 = scmp.lt.s32.totalorder %s177, 4
      %s181 = scalar_select %p180, %s177, 4
      %s182 = smul.addr %s179, 5
      %s183 = sadd.s32 %s181, %s182
      %s184 = smul.addr %s183, 4
      %s185 = scalar_lea.vmem %s0, %s184
      %p186 = pneg %p49
      %p187 = pneg %p46
      %s188 = smul.u32 80, %s19
      %p189 = scmp.lt.s32.totalorder %s188, 79
      %s190 = scalar_select %p189, %s188, 79
      %s191 = smul.addr %s190, 2
      %s192 = smul.addr %s191, 4
      %s193 = scalar_lea.vmem %s1, %s192
      %p194 = pneg %p75
      %p195 = pneg %p72
      %p196 = pneg %p96
      %p197 = pneg %p93
      %p198 = pneg %p122
      %p199 = pneg %p119
      %s200 = smul.u32 32, %s18
      %p201 = scmp.lt.s32.totalorder %s200, 63
      %s202 = scalar_select %p201, %s200, 63
      %s203 = smul.addr %s202, 2
      %s204 = smul.addr %s203, 8
      %s205 = scalar_lea.vmem %s3, %s204
      %s206 = smul.u32 32, %s18
      %s207 = smul.u32 5, %s19
      %p208 = scmp.lt.s32.totalorder %s206, 63
      %s209 = scalar_select %p208, %s206, 63
      %p210 = scmp.lt.s32.totalorder %s207, 4
      %s211 = scalar_select %p210, %s207, 4
      %s212 = smul.addr %s209, 5
      %s213 = sadd.s32 %s211, %s212
      %s214 = smul.addr %s213, 4
      %s215 = scalar_lea.vmem %s0, %s214
      %s216 = smul.u32 32, %s18
      %s217 = smul.u32 5, %s19
      %s218 = smul.u32 80, %s19
      %p219 = scmp.lt.s32.totalorder %s218, 79
      %s220 = scalar_select %p219, %s218, 79
      %s221 = smul.addr %s220, 2
      %s222 = smul.addr %s221, 4
      %s223 = scalar_lea.vmem %s1, %s222
      %s224 = smul.u32 80, %s19
      %s225 = smul.u32 32, %s18
      %p226 = scmp.lt.s32.totalorder %s225, 63
      %s227 = scalar_select %p226, %s225, 63
      %s228 = smul.addr %s227, 2
      %s229 = smul.addr %s228, 8
      %s230 = scalar_lea.vmem %s3, %s229
      %s231 = smul.u32 32, %s18
      %p233 = scmp.eq.s32.totalorder %s19, 0
      // Predicated region
      $region33: #{_forward_impl.10} parent=31 // pred_check
        %p234 = pneg %p233
      $region34: #{_forward_impl.10} parent=31 // pred_check_branch
        %236 = sbr.rel (%p234) target = $region36
      $region35: #{_forward_impl.10} parent=31 // pred_region
        %237 = vst [vmem:[#allocation2] sm:$0xff] 0.0
        %238 = vst [vmem:[#allocation2 + $0x8] sm:$0xff] 0.0
        %239 = vst [vmem:[#allocation2 + $0x10] sm:$0xff] 0.0
        %240 = vst [vmem:[#allocation2 + $0x18] sm:$0xff] 0.0
        %241 = vst [vmem:[#allocation2 + $0x20] sm:$0xff] 0.0
        %242 = vst [vmem:[#allocation2 + $0x28] sm:$0xff] 0.0
        %243 = vst [vmem:[#allocation2 + $0x30] sm:$0xff] 0.0
        %244 = vst [vmem:[#allocation2 + $0x38] sm:$0xff] 0.0
        %245 = vst [vmem:[#allocation2 + $0x40] sm:$0xff] 0.0
        %246 = vst [vmem:[#allocation2 + $0x48] sm:$0xff] 0.0
        %247 = vst [vmem:[#allocation2 + $0x50] sm:$0xff] 0.0
        %248 = vst [vmem:[#allocation2 + $0x58] sm:$0xff] 0.0
        %249 = vst [vmem:[#allocation2 + $0x60] sm:$0xff] 0.0
        %250 = vst [vmem:[#allocation2 + $0x68] sm:$0xff] 0.0
        %251 = vst [vmem:[#allocation2 + $0x70] sm:$0xff] 0.0
        %252 = vst [vmem:[#allocation2 + $0x78] sm:$0xff] 0.0
        %253 = vst [vmem:[#allocation2 + $0x80] sm:$0xff] 0.0
        %254 = vst [vmem:[#allocation2 + $0x88] sm:$0xff] 0.0
        %255 = vst [vmem:[#allocation2 + $0x90] sm:$0xff] 0.0
        %256 = vst [vmem:[#allocation2 + $0x98] sm:$0xff] 0.0
        %257 = vst [vmem:[#allocation2 + $0xa0] sm:$0xff] 0.0
        %258 = vst [vmem:[#allocation2 + $0xa8] sm:$0xff] 0.0
        %259 = vst [vmem:[#allocation2 + $0xb0] sm:$0xff] 0.0
        %260 = vst [vmem:[#allocation2 + $0xb8] sm:$0xff] 0.0
        %261 = vst [vmem:[#allocation2 + $0xc0] sm:$0xff] 0.0
        %262 = vst [vmem:[#allocation2 + $0xc8] sm:$0xff] 0.0
        %263 = vst [vmem:[#allocation2 + $0xd0] sm:$0xff] 0.0
        %264 = vst [vmem:[#allocation2 + $0xd8] sm:$0xff] 0.0
        %265 = vst [vmem:[#allocation2 + $0xe0] sm:$0xff] 0.0
        %266 = vst [vmem:[#allocation2 + $0xe8] sm:$0xff] 0.0
        %267 = vst [vmem:[#allocation2 + $0xf0] sm:$0xff] 0.0
        %268 = vst [vmem:[#allocation2 + $0xf8] sm:$0xff] 0.0
        %269 = vst [vmem:[#allocation2 + $0x100] sm:$0xff] 0.0
        %270 = vst [vmem:[#allocation2 + $0x108] sm:$0xff] 0.0
        %271 = vst [vmem:[#allocation2 + $0x110] sm:$0xff] 0.0
        %272 = vst [vmem:[#allocation2 + $0x118] sm:$0xff] 0.0
        %273 = vst [vmem:[#allocation2 + $0x120] sm:$0xff] 0.0
        %274 = vst [vmem:[#allocation2 + $0x128] sm:$0xff] 0.0
        %275 = vst [vmem:[#allocation2 + $0x130] sm:$0xff] 0.0
        %276 = vst [vmem:[#allocation2 + $0x138] sm:$0xff] 0.0
        %277 = vst [vmem:[#allocation2 + $0x140] sm:$0xff] 0.0
        %278 = vst [vmem:[#allocation2 + $0x148] sm:$0xff] 0.0
        %279 = vst [vmem:[#allocation2 + $0x150] sm:$0xff] 0.0
        %280 = vst [vmem:[#allocation2 + $0x158] sm:$0xff] 0.0
        %281 = vst [vmem:[#allocation2 + $0x160] sm:$0xff] 0.0
        %282 = vst [vmem:[#allocation2 + $0x168] sm:$0xff] 0.0
        %283 = vst [vmem:[#allocation2 + $0x170] sm:$0xff] 0.0
        %284 = vst [vmem:[#allocation2 + $0x178] sm:$0xff] 0.0
        %285 = vst [vmem:[#allocation2 + $0x180] sm:$0xff] 0.0
        %286 = vst [vmem:[#allocation2 + $0x188] sm:$0xff] 0.0
        %287 = vst [vmem:[#allocation2 + $0x190] sm:$0xff] 0.0
        %288 = vst [vmem:[#allocation2 + $0x198] sm:$0xff] 0.0
        %289 = vst [vmem:[#allocation2 + $0x1a0] sm:$0xff] 0.0
        %290 = vst [vmem:[#allocation2 + $0x1a8] sm:$0xff] 0.0
        %291 = vst [vmem:[#allocation2 + $0x1b0] sm:$0xff] 0.0
        %292 = vst [vmem:[#allocation2 + $0x1b8] sm:$0xff] 0.0
        %293 = vst [vmem:[#allocation2 + $0x1c0] sm:$0xff] 0.0
        %294 = vst [vmem:[#allocation2 + $0x1c8] sm:$0xff] 0.0
        %295 = vst [vmem:[#allocation2 + $0x1d0] sm:$0xff] 0.0
        %296 = vst [vmem:[#allocation2 + $0x1d8] sm:$0xff] 0.0
        %297 = vst [vmem:[#allocation2 + $0x1e0] sm:$0xff] 0.0
        %298 = vst [vmem:[#allocation2 + $0x1e8] sm:$0xff] 0.0
        %299 = vst [vmem:[#allocation2 + $0x1f0] sm:$0xff] 0.0
        %300 = vst [vmem:[#allocation2 + $0x1f8] sm:$0xff] 0.0
      $region36: #{_forward_impl.10} parent=31 // pred_fallthru
        _
      %v301 = vld [vmem:[#allocation2] sm:$0xff]
      %v302 = vld [vmem:[#allocation2 + $0x8] sm:$0xff]
      %v303 = vld [vmem:[#allocation2 + $0x10] sm:$0xff]
      %v304 = vld [vmem:[#allocation2 + $0x18] sm:$0xff]
      %v305 = vld [vmem:[#allocation2 + $0x20] sm:$0xff]
      %v306 = vld [vmem:[#allocation2 + $0x28] sm:$0xff]
      %v307 = vld [vmem:[#allocation2 + $0x30] sm:$0xff]
      %v308 = vld [vmem:[#allocation2 + $0x38] sm:$0xff]
      %v309 = vld [vmem:[#allocation2 + $0x40] sm:$0xff]
      %v310 = vld [vmem:[#allocation2 + $0x48] sm:$0xff]
      %v311 = vld [vmem:[#allocation2 + $0x50] sm:$0xff]
      %v312 = vld [vmem:[#allocation2 + $0x58] sm:$0xff]
      %v313 = vld [vmem:[#allocation2 + $0x60] sm:$0xff]
      %v314 = vld [vmem:[#allocation2 + $0x68] sm:$0xff]
      %v315 = vld [vmem:[#allocation2 + $0x70] sm:$0xff]
      %v316 = vld [vmem:[#allocation2 + $0x78] sm:$0xff]
      %v317 = vld [vmem:[#allocation2 + $0x80] sm:$0xff]
      %v318 = vld [vmem:[#allocation2 + $0x88] sm:$0xff]
      %v319 = vld [vmem:[#allocation2 + $0x90] sm:$0xff]
      %v320 = vld [vmem:[#allocation2 + $0x98] sm:$0xff]
      %v321 = vld [vmem:[#allocation2 + $0xa0] sm:$0xff]
      %v322 = vld [vmem:[#allocation2 + $0xa8] sm:$0xff]
      %v323 = vld [vmem:[#allocation2 + $0xb0] sm:$0xff]
      %v324 = vld [vmem:[#allocation2 + $0xb8] sm:$0xff]
      %v325 = vld [vmem:[#allocation2 + $0xc0] sm:$0xff]
      %v326 = vld [vmem:[#allocation2 + $0xc8] sm:$0xff]
      %v327 = vld [vmem:[#allocation2 + $0xd0] sm:$0xff]
      %v328 = vld [vmem:[#allocation2 + $0xd8] sm:$0xff]
      %v329 = vld [vmem:[#allocation2 + $0xe0] sm:$0xff]
      %v330 = vld [vmem:[#allocation2 + $0xe8] sm:$0xff]
      %v331 = vld [vmem:[#allocation2 + $0xf0] sm:$0xff]
      %v332 = vld [vmem:[#allocation2 + $0xf8] sm:$0xff]
      %v333 = vld [vmem:[#allocation2 + $0x100] sm:$0xff]
      %v334 = vld [vmem:[#allocation2 + $0x108] sm:$0xff]
      %v335 = vld [vmem:[#allocation2 + $0x110] sm:$0xff]
      %v336 = vld [vmem:[#allocation2 + $0x118] sm:$0xff]
      %v337 = vld [vmem:[#allocation2 + $0x120] sm:$0xff]
      %v338 = vld [vmem:[#allocation2 + $0x128] sm:$0xff]
      %v339 = vld [vmem:[#allocation2 + $0x130] sm:$0xff]
      %v340 = vld [vmem:[#allocation2 + $0x138] sm:$0xff]
      %v341 = vld [vmem:[#allocation2 + $0x140] sm:$0xff]
      %v342 = vld [vmem:[#allocation2 + $0x148] sm:$0xff]
      %v343 = vld [vmem:[#allocation2 + $0x150] sm:$0xff]
      %v344 = vld [vmem:[#allocation2 + $0x158] sm:$0xff]
      %v345 = vld [vmem:[#allocation2 + $0x160] sm:$0xff]
      %v346 = vld [vmem:[#allocation2 + $0x168] sm:$0xff]
      %v347 = vld [vmem:[#allocation2 + $0x170] sm:$0xff]
      %v348 = vld [vmem:[#allocation2 + $0x178] sm:$0xff]
      %v349 = vld [vmem:[#allocation2 + $0x180] sm:$0xff]
      %v350 = vld [vmem:[#allocation2 + $0x188] sm:$0xff]
      %v351 = vld [vmem:[#allocation2 + $0x190] sm:$0xff]
      %v352 = vld [vmem:[#allocation2 + $0x198] sm:$0xff]
      %v353 = vld [vmem:[#allocation2 + $0x1a0] sm:$0xff]
      %v354 = vld [vmem:[#allocation2 + $0x1a8] sm:$0xff]
      %v355 = vld [vmem:[#allocation2 + $0x1b0] sm:$0xff]
      %v356 = vld [vmem:[#allocation2 + $0x1b8] sm:$0xff]
      %v357 = vld [vmem:[#allocation2 + $0x1c0] sm:$0xff]
      %v358 = vld [vmem:[#allocation2 + $0x1c8] sm:$0xff]
      %v359 = vld [vmem:[#allocation2 + $0x1d0] sm:$0xff]
      %v360 = vld [vmem:[#allocation2 + $0x1d8] sm:$0xff]
      %v361 = vld [vmem:[#allocation2 + $0x1e0] sm:$0xff]
      %v362 = vld [vmem:[#allocation2 + $0x1e8] sm:$0xff]
      %v363 = vld [vmem:[#allocation2 + $0x1f0] sm:$0xff]
      %v364 = vld [vmem:[#allocation2 + $0x1f8] sm:$0xff]
      %v365 = vld [vmem:[%s215] sm:$0xff]
      %v366 = vld [vmem:[%s215 + $0x8] sm:$0xff]
      %v367 = vld [vmem:[%s215 + $0x10] sm:$0xf]
      %v368 = vld [vmem:[%s215 + $0x14] sm:$0xff]
      %v369 = vld [vmem:[%s215 + $0x1c] sm:$0xff]
      %v370 = vld [vmem:[%s215 + $0x24] sm:$0xf]
      %v371 = vld [vmem:[%s215 + $0x28] sm:$0xff]
      %v372 = vld [vmem:[%s215 + $0x30] sm:$0xff]
      %v373 = vld [vmem:[%s215 + $0x38] sm:$0xf]
      %v374 = vld [vmem:[%s215 + $0x3c] sm:$0xff]
      %v375 = vld [vmem:[%s215 + $0x44] sm:$0xff]
      %v376 = vld [vmem:[%s215 + $0x4c] sm:$0xf]
      %v377 = vld [vmem:[%s215 + $0x50] sm:$0xff]
      %v378 = vld [vmem:[%s215 + $0x58] sm:$0xff]
      %v379 = vld [vmem:[%s215 + $0x60] sm:$0xf]
      %v380 = vld [vmem:[%s215 + $0x64] sm:$0xff]
      %v381 = vld [vmem:[%s215 + $0x6c] sm:$0xff]
      %v382 = vld [vmem:[%s215 + $0x74] sm:$0xf]
      %v383 = vld [vmem:[%s215 + $0x78] sm:$0xff]
      %v384 = vld [vmem:[%s215 + $0x80] sm:$0xff]
      %v385 = vld [vmem:[%s215 + $0x88] sm:$0xf]
      %v386 = vld [vmem:[%s215 + $0x8c] sm:$0xff]
      %v387 = vld [vmem:[%s215 + $0x94] sm:$0xff]
      %v388 = vld [vmem:[%s215 + $0x9c] sm:$0xf]
      %v389 = vld [vmem:[%s215 + $0xa0] sm:$0xff]
      %v390 = vld [vmem:[%s215 + $0xa8] sm:$0xff]
      %v391 = vld [vmem:[%s215 + $0xb0] sm:$0xf]
      %v392 = vld [vmem:[%s215 + $0xb4] sm:$0xff]
      %v393 = vld [vmem:[%s215 + $0xbc] sm:$0xff]
      %v394 = vld [vmem:[%s215 + $0xc4] sm:$0xf]
      %v395 = vld [vmem:[%s215 + $0xc8] sm:$0xff]
      %v396 = vld [vmem:[%s215 + $0xd0] sm:$0xff]
      %v397 = vld [vmem:[%s215 + $0xd8] sm:$0xf]
      %v398 = vld [vmem:[%s215 + $0xdc] sm:$0xff]
      %v399 = vld [vmem:[%s215 + $0xe4] sm:$0xff]
      %v400 = vld [vmem:[%s215 + $0xec] sm:$0xf]
      %v401 = vld [vmem:[%s215 + $0xf0] sm:$0xff]
      %v402 = vld [vmem:[%s215 + $0xf8] sm:$0xff]
      %v403 = vld [vmem:[%s215 + $0x100] sm:$0xf]
      %v404 = vld [vmem:[%s215 + $0x104] sm:$0xff]
      %v405 = vld [vmem:[%s215 + $0x10c] sm:$0xff]
      %v406 = vld [vmem:[%s215 + $0x114] sm:$0xf]
      %v407 = vld [vmem:[%s215 + $0x118] sm:$0xff]
      %v408 = vld [vmem:[%s215 + $0x120] sm:$0xff]
      %v409 = vld [vmem:[%s215 + $0x128] sm:$0xf]
      %v410 = vld [vmem:[%s215 + $0x12c] sm:$0xff]
      %v411 = vld [vmem:[%s215 + $0x134] sm:$0xff]
      %v412 = vld [vmem:[%s215 + $0x13c] sm:$0xf]
      %v413 = vld [vmem:[%s215 + $0x140] sm:$0xff]
      %v414 = vld [vmem:[%s215 + $0x148] sm:$0xff]
      %v415 = vld [vmem:[%s215 + $0x150] sm:$0xf]
      %v416 = vld [vmem:[%s215 + $0x154] sm:$0xff]
      %v417 = vld [vmem:[%s215 + $0x15c] sm:$0xff]
      %v418 = vld [vmem:[%s215 + $0x164] sm:$0xf]
      %v419 = vld [vmem:[%s215 + $0x168] sm:$0xff]
      %v420 = vld [vmem:[%s215 + $0x170] sm:$0xff]
      %v421 = vld [vmem:[%s215 + $0x178] sm:$0xf]
      %v422 = vld [vmem:[%s215 + $0x17c] sm:$0xff]
      %v423 = vld [vmem:[%s215 + $0x184] sm:$0xff]
      %v424 = vld [vmem:[%s215 + $0x18c] sm:$0xf]
      %v425 = vld [vmem:[%s215 + $0x190] sm:$0xff]
      %v426 = vld [vmem:[%s215 + $0x198] sm:$0xff]
      %v427 = vld [vmem:[%s215 + $0x1a0] sm:$0xf]
      %v428 = vld [vmem:[%s215 + $0x1a4] sm:$0xff]
      %v429 = vld [vmem:[%s215 + $0x1ac] sm:$0xff]
      %v430 = vld [vmem:[%s215 + $0x1b4] sm:$0xf]
      %v431 = vld [vmem:[%s215 + $0x1b8] sm:$0xff]
      %v432 = vld [vmem:[%s215 + $0x1c0] sm:$0xff]
      %v433 = vld [vmem:[%s215 + $0x1c8] sm:$0xf]
      %v434 = vld [vmem:[%s215 + $0x1cc] sm:$0xff]
      %v435 = vld [vmem:[%s215 + $0x1d4] sm:$0xff]
      %v436 = vld [vmem:[%s215 + $0x1dc] sm:$0xf]
      %v437 = vld [vmem:[%s215 + $0x1e0] sm:$0xff]
      %v438 = vld [vmem:[%s215 + $0x1e8] sm:$0xff]
      %v439 = vld [vmem:[%s215 + $0x1f0] sm:$0xf]
      %v440 = vld [vmem:[%s215 + $0x1f4] sm:$0xff]
      %v441 = vld [vmem:[%s215 + $0x1fc] sm:$0xff]
      %v442 = vld [vmem:[%s215 + $0x204] sm:$0xf]
      %v443 = vld [vmem:[%s215 + $0x208] sm:$0xff]
      %v444 = vld [vmem:[%s215 + $0x210] sm:$0xff]
      %v445 = vld [vmem:[%s215 + $0x218] sm:$0xf]
      %v446 = vld [vmem:[%s215 + $0x21c] sm:$0xff]
      %v447 = vld [vmem:[%s215 + $0x224] sm:$0xff]
      %v448 = vld [vmem:[%s215 + $0x22c] sm:$0xf]
      %v449 = vld [vmem:[%s215 + $0x230] sm:$0xff]
      %v450 = vld [vmem:[%s215 + $0x238] sm:$0xff]
      %v451 = vld [vmem:[%s215 + $0x240] sm:$0xf]
      %v452 = vld [vmem:[%s215 + $0x244] sm:$0xff]
      %v453 = vld [vmem:[%s215 + $0x24c] sm:$0xff]
      %v454 = vld [vmem:[%s215 + $0x254] sm:$0xf]
      %v455 = vld [vmem:[%s215 + $0x258] sm:$0xff]
      %v456 = vld [vmem:[%s215 + $0x260] sm:$0xff]
      %v457 = vld [vmem:[%s215 + $0x268] sm:$0xf]
      %v458 = vld [vmem:[%s215 + $0x26c] sm:$0xff]
      %v459 = vld [vmem:[%s215 + $0x274] sm:$0xff]
      %v460 = vld [vmem:[%s215 + $0x27c] sm:$0xf]
      %v461 = vld [vmem:[%s223] sm:$0xff]
      %v462 = vld [vmem:[%s223 + $0x8] sm:$0xff]
      %v463 = vld [vmem:[%s223 + $0x10] sm:$0xff]
      %v464 = vld [vmem:[%s223 + $0x18] sm:$0xff]
      %v465 = vld [vmem:[%s223 + $0x20] sm:$0xff]
      %v466 = vld [vmem:[%s223 + $0x28] sm:$0xff]
      %v467 = vld [vmem:[%s223 + $0x30] sm:$0xff]
      %v468 = vld [vmem:[%s223 + $0x38] sm:$0xff]
      %v469 = vld [vmem:[%s223 + $0x40] sm:$0xff]
      %v470 = vld [vmem:[%s223 + $0x48] sm:$0xff]
      %v471 = vld [vmem:[%s223 + $0x50] sm:$0xff]
      %v472 = vld [vmem:[%s223 + $0x58] sm:$0xff]
      %v473 = vld [vmem:[%s223 + $0x60] sm:$0xff]
      %v474 = vld [vmem:[%s223 + $0x68] sm:$0xff]
      %v475 = vld [vmem:[%s223 + $0x70] sm:$0xff]
      %v476 = vld [vmem:[%s223 + $0x78] sm:$0xff]
      %v477 = vld [vmem:[%s223 + $0x80] sm:$0xff]
      %v478 = vld [vmem:[%s223 + $0x88] sm:$0xff]
      %v479 = vld [vmem:[%s223 + $0x90] sm:$0xff]
      %v480 = vld [vmem:[%s223 + $0x98] sm:$0xff]
      %v481 = vld [vmem:[%s223 + $0xa0] sm:$0xff]
      %v482 = vld [vmem:[%s223 + $0xa8] sm:$0xff]
      %v483 = vld [vmem:[%s223 + $0xb0] sm:$0xff]
      %v484 = vld [vmem:[%s223 + $0xb8] sm:$0xff]
      %v485 = vld [vmem:[%s223 + $0xc0] sm:$0xff]
      %v486 = vld [vmem:[%s223 + $0xc8] sm:$0xff]
      %v487 = vld [vmem:[%s223 + $0xd0] sm:$0xff]
      %v488 = vld [vmem:[%s223 + $0xd8] sm:$0xff]
      %v489 = vld [vmem:[%s223 + $0xe0] sm:$0xff]
      %v490 = vld [vmem:[%s223 + $0xe8] sm:$0xff]
      %v491 = vld [vmem:[%s223 + $0xf0] sm:$0xff]
      %v492 = vld [vmem:[%s223 + $0xf8] sm:$0xff]
      %v493 = vld [vmem:[%s223 + $0x100] sm:$0xff]
      %v494 = vld [vmem:[%s223 + $0x108] sm:$0xff]
      %v495 = vld [vmem:[%s223 + $0x110] sm:$0xff]
      %v496 = vld [vmem:[%s223 + $0x118] sm:$0xff]
      %v497 = vld [vmem:[%s223 + $0x120] sm:$0xff]
      %v498 = vld [vmem:[%s223 + $0x128] sm:$0xff]
      %v499 = vld [vmem:[%s223 + $0x130] sm:$0xff]
      %v500 = vld [vmem:[%s223 + $0x138] sm:$0xff]
      %v501 = vld [vmem:[%s223 + $0x140] sm:$0xff]
      %v502 = vld [vmem:[%s223 + $0x148] sm:$0xff]
      %v503 = vld [vmem:[%s223 + $0x150] sm:$0xff]
      %v504 = vld [vmem:[%s223 + $0x158] sm:$0xff]
      %v505 = vld [vmem:[%s223 + $0x160] sm:$0xff]
      %v506 = vld [vmem:[%s223 + $0x168] sm:$0xff]
      %v507 = vld [vmem:[%s223 + $0x170] sm:$0xff]
      %v508 = vld [vmem:[%s223 + $0x178] sm:$0xff]
      %v509 = vld [vmem:[%s223 + $0x180] sm:$0xff]
      %v510 = vld [vmem:[%s223 + $0x188] sm:$0xff]
      %v511 = vld [vmem:[%s223 + $0x190] sm:$0xff]
      %v512 = vld [vmem:[%s223 + $0x198] sm:$0xff]
      %v513 = vld [vmem:[%s223 + $0x1a0] sm:$0xff]
      %v514 = vld [vmem:[%s223 + $0x1a8] sm:$0xff]
      %v515 = vld [vmem:[%s223 + $0x1b0] sm:$0xff]
      %v516 = vld [vmem:[%s223 + $0x1b8] sm:$0xff]
      %v517 = vld [vmem:[%s223 + $0x1c0] sm:$0xff]
      %v518 = vld [vmem:[%s223 + $0x1c8] sm:$0xff]
      %v519 = vld [vmem:[%s223 + $0x1d0] sm:$0xff]
      %v520 = vld [vmem:[%s223 + $0x1d8] sm:$0xff]
      %v521 = vld [vmem:[%s223 + $0x1e0] sm:$0xff]
      %v522 = vld [vmem:[%s223 + $0x1e8] sm:$0xff]
      %v523 = vld [vmem:[%s223 + $0x1f0] sm:$0xff]
      %v524 = vld [vmem:[%s223 + $0x1f8] sm:$0xff]
      %v525 = vld [vmem:[%s223 + $0x200] sm:$0xff]
      %v526 = vld [vmem:[%s223 + $0x208] sm:$0xff]
      %v527 = vld [vmem:[%s223 + $0x210] sm:$0xff]
      %v528 = vld [vmem:[%s223 + $0x218] sm:$0xff]
      %v529 = vld [vmem:[%s223 + $0x220] sm:$0xff]
      %v530 = vld [vmem:[%s223 + $0x228] sm:$0xff]
      %v531 = vld [vmem:[%s223 + $0x230] sm:$0xff]
      %v532 = vld [vmem:[%s223 + $0x238] sm:$0xff]
      %v533 = vld [vmem:[%s223 + $0x240] sm:$0xff]
      %v534 = vld [vmem:[%s223 + $0x248] sm:$0xff]
      %v535 = vld [vmem:[%s223 + $0x250] sm:$0xff]
      %v536 = vld [vmem:[%s223 + $0x258] sm:$0xff]
      %v537 = vld [vmem:[%s223 + $0x260] sm:$0xff]
      %v538 = vld [vmem:[%s223 + $0x268] sm:$0xff]
      %v539 = vld [vmem:[%s223 + $0x270] sm:$0xff]
      %v540 = vld [vmem:[%s223 + $0x278] sm:$0xff]
      %v637 = vunpack.c.l.b16 %v365
      %v638 = vunpack.c.h.b16 %v365
      %v639 = vunpack.c.l.b16 %v366
      %v640 = vunpack.c.h.b16 %v366
      %v641 = vunpack.c.l.b16 %v367
      %v642 = vunpack.c.l.b16 %v368
      %v643 = vunpack.c.h.b16 %v368
      %v644 = vunpack.c.l.b16 %v369
      %v645 = vunpack.c.h.b16 %v369
      %v646 = vunpack.c.l.b16 %v370
      %v647 = vunpack.c.l.b16 %v371
      %v648 = vunpack.c.h.b16 %v371
      %v649 = vunpack.c.l.b16 %v372
      %v650 = vunpack.c.h.b16 %v372
      %v651 = vunpack.c.l.b16 %v373
      %v652 = vunpack.c.l.b16 %v374
      %v653 = vunpack.c.h.b16 %v374
      %v654 = vunpack.c.l.b16 %v375
      %v655 = vunpack.c.h.b16 %v375
      %v656 = vunpack.c.l.b16 %v376
      %v657 = vunpack.c.l.b16 %v377
      %v658 = vunpack.c.h.b16 %v377
      %v659 = vunpack.c.l.b16 %v378
      %v660 = vunpack.c.h.b16 %v378
      %v661 = vunpack.c.l.b16 %v379
      %v662 = vunpack.c.l.b16 %v380
      %v663 = vunpack.c.h.b16 %v380
      %v664 = vunpack.c.l.b16 %v381
      %v665 = vunpack.c.h.b16 %v381
      %v666 = vunpack.c.l.b16 %v382
      %v667 = vunpack.c.l.b16 %v383
      %v668 = vunpack.c.h.b16 %v383
      %v669 = vunpack.c.l.b16 %v384
      %v670 = vunpack.c.h.b16 %v384
      %v671 = vunpack.c.l.b16 %v385
      %v672 = vunpack.c.l.b16 %v386
      %v673 = vunpack.c.h.b16 %v386
      %v674 = vunpack.c.l.b16 %v387
      %v675 = vunpack.c.h.b16 %v387
      %v676 = vunpack.c.l.b16 %v388
      %v677 = vunpack.c.l.b16 %v389
      %v678 = vunpack.c.h.b16 %v389
      %v679 = vunpack.c.l.b16 %v390
      %v680 = vunpack.c.h.b16 %v390
      %v681 = vunpack.c.l.b16 %v391
      %v682 = vunpack.c.l.b16 %v392
      %v683 = vunpack.c.h.b16 %v392
      %v684 = vunpack.c.l.b16 %v393
      %v685 = vunpack.c.h.b16 %v393
      %v686 = vunpack.c.l.b16 %v394
      %v687 = vunpack.c.l.b16 %v395
      %v688 = vunpack.c.h.b16 %v395
      %v689 = vunpack.c.l.b16 %v396
      %v690 = vunpack.c.h.b16 %v396
      %v691 = vunpack.c.l.b16 %v397
      %v692 = vunpack.c.l.b16 %v398
      %v693 = vunpack.c.h.b16 %v398
      %v694 = vunpack.c.l.b16 %v399
      %v695 = vunpack.c.h.b16 %v399
      %v696 = vunpack.c.l.b16 %v400
      %v697 = vunpack.c.l.b16 %v401
      %v698 = vunpack.c.h.b16 %v401
      %v699 = vunpack.c.l.b16 %v402
      %v700 = vunpack.c.h.b16 %v402
      %v701 = vunpack.c.l.b16 %v403
      %v702 = vunpack.c.l.b16 %v404
      %v703 = vunpack.c.h.b16 %v404
      %v704 = vunpack.c.l.b16 %v405
      %v705 = vunpack.c.h.b16 %v405
      %v706 = vunpack.c.l.b16 %v406
      %v707 = vunpack.c.l.b16 %v407
      %v708 = vunpack.c.h.b16 %v407
      %v709 = vunpack.c.l.b16 %v408
      %v710 = vunpack.c.h.b16 %v408
      %v711 = vunpack.c.l.b16 %v409
      %v712 = vunpack.c.l.b16 %v410
      %v713 = vunpack.c.h.b16 %v410
      %v714 = vunpack.c.l.b16 %v411
      %v715 = vunpack.c.h.b16 %v411
      %v716 = vunpack.c.l.b16 %v412
      %v717 = vunpack.c.l.b16 %v413
      %v718 = vunpack.c.h.b16 %v413
      %v719 = vunpack.c.l.b16 %v414
      %v720 = vunpack.c.h.b16 %v414
      %v721 = vunpack.c.l.b16 %v415
      %v722 = vunpack.c.l.b16 %v416
      %v723 = vunpack.c.h.b16 %v416
      %v724 = vunpack.c.l.b16 %v417
      %v725 = vunpack.c.h.b16 %v417
      %v726 = vunpack.c.l.b16 %v418
      %v727 = vunpack.c.l.b16 %v419
      %v728 = vunpack.c.h.b16 %v419
      %v729 = vunpack.c.l.b16 %v420
      %v730 = vunpack.c.h.b16 %v420
      %v731 = vunpack.c.l.b16 %v421
      %v732 = vunpack.c.l.b16 %v422
      %v733 = vunpack.c.h.b16 %v422
      %v734 = vunpack.c.l.b16 %v423
      %v735 = vunpack.c.h.b16 %v423
      %v736 = vunpack.c.l.b16 %v424
      %v737 = vunpack.c.l.b16 %v425
      %v738 = vunpack.c.h.b16 %v425
      %v739 = vunpack.c.l.b16 %v426
      %v740 = vunpack.c.h.b16 %v426
      %v741 = vunpack.c.l.b16 %v427
      %v742 = vunpack.c.l.b16 %v428
      %v743 = vunpack.c.h.b16 %v428
      %v744 = vunpack.c.l.b16 %v429
      %v745 = vunpack.c.h.b16 %v429
      %v746 = vunpack.c.l.b16 %v430
      %v747 = vunpack.c.l.b16 %v431
      %v748 = vunpack.c.h.b16 %v431
      %v749 = vunpack.c.l.b16 %v432
      %v750 = vunpack.c.h.b16 %v432
      %v751 = vunpack.c.l.b16 %v433
      %v752 = vunpack.c.l.b16 %v434
      %v753 = vunpack.c.h.b16 %v434
      %v754 = vunpack.c.l.b16 %v435
      %v755 = vunpack.c.h.b16 %v435
      %v756 = vunpack.c.l.b16 %v436
      %v757 = vunpack.c.l.b16 %v437
      %v758 = vunpack.c.h.b16 %v437
      %v759 = vunpack.c.l.b16 %v438
      %v760 = vunpack.c.h.b16 %v438
      %v761 = vunpack.c.l.b16 %v439
      %v762 = vunpack.c.l.b16 %v440
      %v763 = vunpack.c.h.b16 %v440
      %v764 = vunpack.c.l.b16 %v441
      %v765 = vunpack.c.h.b16 %v441
      %v766 = vunpack.c.l.b16 %v442
      %v767 = vunpack.c.l.b16 %v443
      %v768 = vunpack.c.h.b16 %v443
      %v769 = vunpack.c.l.b16 %v444
      %v770 = vunpack.c.h.b16 %v444
      %v771 = vunpack.c.l.b16 %v445
      %v772 = vunpack.c.l.b16 %v446
      %v773 = vunpack.c.h.b16 %v446
      %v774 = vunpack.c.l.b16 %v447
      %v775 = vunpack.c.h.b16 %v447
      %v776 = vunpack.c.l.b16 %v448
      %v777 = vunpack.c.l.b16 %v449
      %v778 = vunpack.c.h.b16 %v449
      %v779 = vunpack.c.l.b16 %v450
      %v780 = vunpack.c.h.b16 %v450
      %v781 = vunpack.c.l.b16 %v451
      %v782 = vunpack.c.l.b16 %v452
      %v783 = vunpack.c.h.b16 %v452
      %v784 = vunpack.c.l.b16 %v453
      %v785 = vunpack.c.h.b16 %v453
      %v786 = vunpack.c.l.b16 %v454
      %v787 = vunpack.c.l.b16 %v455
      %v788 = vunpack.c.h.b16 %v455
      %v789 = vunpack.c.l.b16 %v456
      %v790 = vunpack.c.h.b16 %v456
      %v791 = vunpack.c.l.b16 %v457
      %v792 = vunpack.c.l.b16 %v458
      %v793 = vunpack.c.h.b16 %v458
      %v794 = vunpack.c.l.b16 %v459
      %v795 = vunpack.c.h.b16 %v459
      %v796 = vunpack.c.l.b16 %v460
      %v797 = vpack.c.b16 %v642, %v637
      %v798 = vpack.c.b16 %v643, %v638
      %v799 = vpack.c.b16 %v644, %v639
      %v800 = vpack.c.b16 %v645, %v640
      %v801 = vpack.c.b16 %v646, %v641
      %v802 = vpack.c.b16 %v652, %v647
      %v803 = vpack.c.b16 %v653, %v648
      %v804 = vpack.c.b16 %v654, %v649
      %v805 = vpack.c.b16 %v655, %v650
      %v806 = vpack.c.b16 %v656, %v651
      %v807 = vpack.c.b16 %v662, %v657
      %v808 = vpack.c.b16 %v663, %v658
      %v809 = vpack.c.b16 %v664, %v659
      %v810 = vpack.c.b16 %v665, %v660
      %v811 = vpack.c.b16 %v666, %v661
      %v812 = vpack.c.b16 %v672, %v667
      %v813 = vpack.c.b16 %v673, %v668
      %v814 = vpack.c.b16 %v674, %v669
      %v815 = vpack.c.b16 %v675, %v670
      %v816 = vpack.c.b16 %v676, %v671
      %v817 = vpack.c.b16 %v682, %v677
      %v818 = vpack.c.b16 %v683, %v678
      %v819 = vpack.c.b16 %v684, %v679
      %v820 = vpack.c.b16 %v685, %v680
      %v821 = vpack.c.b16 %v686, %v681
      %v822 = vpack.c.b16 %v692, %v687
      %v823 = vpack.c.b16 %v693, %v688
      %v824 = vpack.c.b16 %v694, %v689
      %v825 = vpack.c.b16 %v695, %v690
      %v826 = vpack.c.b16 %v696, %v691
      %v827 = vpack.c.b16 %v702, %v697
      %v828 = vpack.c.b16 %v703, %v698
      %v829 = vpack.c.b16 %v704, %v699
      %v830 = vpack.c.b16 %v705, %v700
      %v831 = vpack.c.b16 %v706, %v701
      %v832 = vpack.c.b16 %v712, %v707
      %v833 = vpack.c.b16 %v713, %v708
      %v834 = vpack.c.b16 %v714, %v709
      %v835 = vpack.c.b16 %v715, %v710
      %v836 = vpack.c.b16 %v716, %v711
      %v837 = vpack.c.b16 %v722, %v717
      %v838 = vpack.c.b16 %v723, %v718
      %v839 = vpack.c.b16 %v724, %v719
      %v840 = vpack.c.b16 %v725, %v720
      %v841 = vpack.c.b16 %v726, %v721
      %v842 = vpack.c.b16 %v732, %v727
      %v843 = vpack.c.b16 %v733, %v728
      %v844 = vpack.c.b16 %v734, %v729
      %v845 = vpack.c.b16 %v735, %v730
      %v846 = vpack.c.b16 %v736, %v731
      %v847 = vpack.c.b16 %v742, %v737
      %v848 = vpack.c.b16 %v743, %v738
      %v849 = vpack.c.b16 %v744, %v739
      %v850 = vpack.c.b16 %v745, %v740
      %v851 = vpack.c.b16 %v746, %v741
      %v852 = vpack.c.b16 %v752, %v747
      %v853 = vpack.c.b16 %v753, %v748
      %v854 = vpack.c.b16 %v754, %v749
      %v855 = vpack.c.b16 %v755, %v750
      %v856 = vpack.c.b16 %v756, %v751
      %v857 = vpack.c.b16 %v762, %v757
      %v858 = vpack.c.b16 %v763, %v758
      %v859 = vpack.c.b16 %v764, %v759
      %v860 = vpack.c.b16 %v765, %v760
      %v861 = vpack.c.b16 %v766, %v761
      %v862 = vpack.c.b16 %v772, %v767
      %v863 = vpack.c.b16 %v773, %v768
      %v864 = vpack.c.b16 %v774, %v769
      %v865 = vpack.c.b16 %v775, %v770
      %v866 = vpack.c.b16 %v776, %v771
      %v867 = vpack.c.b16 %v782, %v777
      %v868 = vpack.c.b16 %v783, %v778
      %v869 = vpack.c.b16 %v784, %v779
      %v870 = vpack.c.b16 %v785, %v780
      %v871 = vpack.c.b16 %v786, %v781
      %v872 = vpack.c.b16 %v792, %v787
      %v873 = vpack.c.b16 %v793, %v788
      %v874 = vpack.c.b16 %v794, %v789
      %v875 = vpack.c.b16 %v795, %v790
      %v876 = vpack.c.b16 %v796, %v791
      %v1037 = vunpack.c.l.b16 %v461
      %v1038 = vunpack.c.h.b16 %v461
      %v1039 = vunpack.c.l.b16 %v462
      %v1040 = vunpack.c.h.b16 %v462
      %v1041 = vunpack.c.l.b16 %v463
      %v1042 = vunpack.c.h.b16 %v463
      %v1043 = vunpack.c.l.b16 %v464
      %v1044 = vunpack.c.h.b16 %v464
      %v1045 = vunpack.c.l.b16 %v465
      %v1046 = vunpack.c.h.b16 %v465
      %v1047 = vunpack.c.l.b16 %v466
      %v1048 = vunpack.c.h.b16 %v466
      %v1049 = vunpack.c.l.b16 %v467
      %v1050 = vunpack.c.h.b16 %v467
      %v1051 = vunpack.c.l.b16 %v468
      %v1052 = vunpack.c.h.b16 %v468
      %v1053 = vunpack.c.l.b16 %v469
      %v1054 = vunpack.c.h.b16 %v469
      %v1055 = vunpack.c.l.b16 %v470
      %v1056 = vunpack.c.h.b16 %v470
      %v1057 = vunpack.c.l.b16 %v471
      %v1058 = vunpack.c.h.b16 %v471
      %v1059 = vunpack.c.l.b16 %v472
      %v1060 = vunpack.c.h.b16 %v472
      %v1061 = vunpack.c.l.b16 %v473
      %v1062 = vunpack.c.h.b16 %v473
      %v1063 = vunpack.c.l.b16 %v474
      %v1064 = vunpack.c.h.b16 %v474
      %v1065 = vunpack.c.l.b16 %v475
      %v1066 = vunpack.c.h.b16 %v475
      %v1067 = vunpack.c.l.b16 %v476
      %v1068 = vunpack.c.h.b16 %v476
      %v1069 = vunpack.c.l.b16 %v477
      %v1070 = vunpack.c.h.b16 %v477
      %v1071 = vunpack.c.l.b16 %v478
      %v1072 = vunpack.c.h.b16 %v478
      %v1073 = vunpack.c.l.b16 %v479
      %v1074 = vunpack.c.h.b16 %v479
      %v1075 = vunpack.c.l.b16 %v480
      %v1076 = vunpack.c.h.b16 %v480
      %v1077 = vunpack.c.l.b16 %v481
      %v1078 = vunpack.c.h.b16 %v481
      %v1079 = vunpack.c.l.b16 %v482
      %v1080 = vunpack.c.h.b16 %v482
      %v1081 = vunpack.c.l.b16 %v483
      %v1082 = vunpack.c.h.b16 %v483
      %v1083 = vunpack.c.l.b16 %v484
      %v1084 = vunpack.c.h.b16 %v484
      %v1085 = vunpack.c.l.b16 %v485
      %v1086 = vunpack.c.h.b16 %v485
      %v1087 = vunpack.c.l.b16 %v486
      %v1088 = vunpack.c.h.b16 %v486
      %v1089 = vunpack.c.l.b16 %v487
      %v1090 = vunpack.c.h.b16 %v487
      %v1091 = vunpack.c.l.b16 %v488
      %v1092 = vunpack.c.h.b16 %v488
      %v1093 = vunpack.c.l.b16 %v489
      %v1094 = vunpack.c.h.b16 %v489
      %v1095 = vunpack.c.l.b16 %v490
      %v1096 = vunpack.c.h.b16 %v490
      %v1097 = vunpack.c.l.b16 %v491
      %v1098 = vunpack.c.h.b16 %v491
      %v1099 = vunpack.c.l.b16 %v492
      %v1100 = vunpack.c.h.b16 %v492
      %v1101 = vunpack.c.l.b16 %v493
      %v1102 = vunpack.c.h.b16 %v493
      %v1103 = vunpack.c.l.b16 %v494
      %v1104 = vunpack.c.h.b16 %v494
      %v1105 = vunpack.c.l.b16 %v495
      %v1106 = vunpack.c.h.b16 %v495
      %v1107 = vunpack.c.l.b16 %v496
      %v1108 = vunpack.c.h.b16 %v496
      %v1109 = vunpack.c.l.b16 %v497
      %v1110 = vunpack.c.h.b16 %v497
      %v1111 = vunpack.c.l.b16 %v498
      %v1112 = vunpack.c.h.b16 %v498
      %v1113 = vunpack.c.l.b16 %v499
      %v1114 = vunpack.c.h.b16 %v499
      %v1115 = vunpack.c.l.b16 %v500
      %v1116 = vunpack.c.h.b16 %v500
      %v1117 = vunpack.c.l.b16 %v501
      %v1118 = vunpack.c.h.b16 %v501
      %v1119 = vunpack.c.l.b16 %v502
      %v1120 = vunpack.c.h.b16 %v502
      %v1121 = vunpack.c.l.b16 %v503
      %v1122 = vunpack.c.h.b16 %v503
      %v1123 = vunpack.c.l.b16 %v504
      %v1124 = vunpack.c.h.b16 %v504
      %v1125 = vunpack.c.l.b16 %v505
      %v1126 = vunpack.c.h.b16 %v505
      %v1127 = vunpack.c.l.b16 %v506
      %v1128 = vunpack.c.h.b16 %v506
      %v1129 = vunpack.c.l.b16 %v507
      %v1130 = vunpack.c.h.b16 %v507
      %v1131 = vunpack.c.l.b16 %v508
      %v1132 = vunpack.c.h.b16 %v508
      %v1133 = vunpack.c.l.b16 %v509
      %v1134 = vunpack.c.h.b16 %v509
      %v1135 = vunpack.c.l.b16 %v510
      %v1136 = vunpack.c.h.b16 %v510
      %v1137 = vunpack.c.l.b16 %v511
      %v1138 = vunpack.c.h.b16 %v511
      %v1139 = vunpack.c.l.b16 %v512
      %v1140 = vunpack.c.h.b16 %v512
      %v1141 = vunpack.c.l.b16 %v513
      %v1142 = vunpack.c.h.b16 %v513
      %v1143 = vunpack.c.l.b16 %v514
      %v1144 = vunpack.c.h.b16 %v514
      %v1145 = vunpack.c.l.b16 %v515
      %v1146 = vunpack.c.h.b16 %v515
      %v1147 = vunpack.c.l.b16 %v516
      %v1148 = vunpack.c.h.b16 %v516
      %v1149 = vunpack.c.l.b16 %v517
      %v1150 = vunpack.c.h.b16 %v517
      %v1151 = vunpack.c.l.b16 %v518
      %v1152 = vunpack.c.h.b16 %v518
      %v1153 = vunpack.c.l.b16 %v519
      %v1154 = vunpack.c.h.b16 %v519
      %v1155 = vunpack.c.l.b16 %v520
      %v1156 = vunpack.c.h.b16 %v520
      %v1157 = vunpack.c.l.b16 %v521
      %v1158 = vunpack.c.h.b16 %v521
      %v1159 = vunpack.c.l.b16 %v522
      %v1160 = vunpack.c.h.b16 %v522
      %v1161 = vunpack.c.l.b16 %v523
      %v1162 = vunpack.c.h.b16 %v523
      %v1163 = vunpack.c.l.b16 %v524
      %v1164 = vunpack.c.h.b16 %v524
      %v1165 = vunpack.c.l.b16 %v525
      %v1166 = vunpack.c.h.b16 %v525
      %v1167 = vunpack.c.l.b16 %v526
      %v1168 = vunpack.c.h.b16 %v526
      %v1169 = vunpack.c.l.b16 %v527
      %v1170 = vunpack.c.h.b16 %v527
      %v1171 = vunpack.c.l.b16 %v528
      %v1172 = vunpack.c.h.b16 %v528
      %v1173 = vunpack.c.l.b16 %v529
      %v1174 = vunpack.c.h.b16 %v529
      %v1175 = vunpack.c.l.b16 %v530
      %v1176 = vunpack.c.h.b16 %v530
      %v1177 = vunpack.c.l.b16 %v531
      %v1178 = vunpack.c.h.b16 %v531
      %v1179 = vunpack.c.l.b16 %v532
      %v1180 = vunpack.c.h.b16 %v532
      %v1181 = vunpack.c.l.b16 %v533
      %v1182 = vunpack.c.h.b16 %v533
      %v1183 = vunpack.c.l.b16 %v534
      %v1184 = vunpack.c.h.b16 %v534
      %v1185 = vunpack.c.l.b16 %v535
      %v1186 = vunpack.c.h.b16 %v535
      %v1187 = vunpack.c.l.b16 %v536
      %v1188 = vunpack.c.h.b16 %v536
      %v1189 = vunpack.c.l.b16 %v537
      %v1190 = vunpack.c.h.b16 %v537
      %v1191 = vunpack.c.l.b16 %v538
      %v1192 = vunpack.c.h.b16 %v538
      %v1193 = vunpack.c.l.b16 %v539
      %v1194 = vunpack.c.h.b16 %v539
      %v1195 = vunpack.c.l.b16 %v540
      %v1196 = vunpack.c.h.b16 %v540
      %v1197 = vpack.c.b16 %v1039, %v1037
      %v1198 = vpack.c.b16 %v1040, %v1038
      %v1199 = vpack.c.b16 %v1043, %v1041
      %v1200 = vpack.c.b16 %v1044, %v1042
      %v1201 = vpack.c.b16 %v1047, %v1045
      %v1202 = vpack.c.b16 %v1048, %v1046
      %v1203 = vpack.c.b16 %v1051, %v1049
      %v1204 = vpack.c.b16 %v1052, %v1050
      %v1205 = vpack.c.b16 %v1055, %v1053
      %v1206 = vpack.c.b16 %v1056, %v1054
      %v1207 = vpack.c.b16 %v1059, %v1057
      %v1208 = vpack.c.b16 %v1060, %v1058
      %v1209 = vpack.c.b16 %v1063, %v1061
      %v1210 = vpack.c.b16 %v1064, %v1062
      %v1211 = vpack.c.b16 %v1067, %v1065
      %v1212 = vpack.c.b16 %v1068, %v1066
      %v1213 = vpack.c.b16 %v1071, %v1069
      %v1214 = vpack.c.b16 %v1072, %v1070
      %v1215 = vpack.c.b16 %v1075, %v1073
      %v1216 = vpack.c.b16 %v1076, %v1074
      %v1217 = vpack.c.b16 %v1079, %v1077
      %v1218 = vpack.c.b16 %v1080, %v1078
      %v1219 = vpack.c.b16 %v1083, %v1081
      %v1220 = vpack.c.b16 %v1084, %v1082
      %v1221 = vpack.c.b16 %v1087, %v1085
      %v1222 = vpack.c.b16 %v1088, %v1086
      %v1223 = vpack.c.b16 %v1091, %v1089
      %v1224 = vpack.c.b16 %v1092, %v1090
      %v1225 = vpack.c.b16 %v1095, %v1093
      %v1226 = vpack.c.b16 %v1096, %v1094
      %v1227 = vpack.c.b16 %v1099, %v1097
      %v1228 = vpack.c.b16 %v1100, %v1098
      %v1229 = vpack.c.b16 %v1103, %v1101
      %v1230 = vpack.c.b16 %v1104, %v1102
      %v1231 = vpack.c.b16 %v1107, %v1105
      %v1232 = vpack.c.b16 %v1108, %v1106
      %v1233 = vpack.c.b16 %v1111, %v1109
      %v1234 = vpack.c.b16 %v1112, %v1110
      %v1235 = vpack.c.b16 %v1115, %v1113
      %v1236 = vpack.c.b16 %v1116, %v1114
      %v1237 = vpack.c.b16 %v1119, %v1117
      %v1238 = vpack.c.b16 %v1120, %v1118
      %v1239 = vpack.c.b16 %v1123, %v1121
      %v1240 = vpack.c.b16 %v1124, %v1122
      %v1241 = vpack.c.b16 %v1127, %v1125
      %v1242 = vpack.c.b16 %v1128, %v1126
      %v1243 = vpack.c.b16 %v1131, %v1129
      %v1244 = vpack.c.b16 %v1132, %v1130
      %v1245 = vpack.c.b16 %v1135, %v1133
      %v1246 = vpack.c.b16 %v1136, %v1134
      %v1247 = vpack.c.b16 %v1139, %v1137
      %v1248 = vpack.c.b16 %v1140, %v1138
      %v1249 = vpack.c.b16 %v1143, %v1141
      %v1250 = vpack.c.b16 %v1144, %v1142
      %v1251 = vpack.c.b16 %v1147, %v1145
      %v1252 = vpack.c.b16 %v1148, %v1146
      %v1253 = vpack.c.b16 %v1151, %v1149
      %v1254 = vpack.c.b16 %v1152, %v1150
      %v1255 = vpack.c.b16 %v1155, %v1153
      %v1256 = vpack.c.b16 %v1156, %v1154
      %v1257 = vpack.c.b16 %v1159, %v1157
      %v1258 = vpack.c.b16 %v1160, %v1158
      %v1259 = vpack.c.b16 %v1163, %v1161
      %v1260 = vpack.c.b16 %v1164, %v1162
      %v1261 = vpack.c.b16 %v1167, %v1165
      %v1262 = vpack.c.b16 %v1168, %v1166
      %v1263 = vpack.c.b16 %v1171, %v1169
      %v1264 = vpack.c.b16 %v1172, %v1170
      %v1265 = vpack.c.b16 %v1175, %v1173
      %v1266 = vpack.c.b16 %v1176, %v1174
      %v1267 = vpack.c.b16 %v1179, %v1177
      %v1268 = vpack.c.b16 %v1180, %v1178
      %v1269 = vpack.c.b16 %v1183, %v1181
      %v1270 = vpack.c.b16 %v1184, %v1182
      %v1271 = vpack.c.b16 %v1187, %v1185
      %v1272 = vpack.c.b16 %v1188, %v1186
      %v1273 = vpack.c.b16 %v1191, %v1189
      %v1274 = vpack.c.b16 %v1192, %v1190
      %v1275 = vpack.c.b16 %v1195, %v1193
      %v1276 = vpack.c.b16 %v1196, %v1194
      %1357 = vmatprep.subr.bf16.mxu0 %v1212
      %1358 = vmatpush1.bf16.msra.mxu0 %v1211
      %1359 = vmatprep.subr.bf16.mxu0 %v1210
      %1360 = vmatpush1.bf16.msra.mxu0 %v1209
      %1361 = vmatprep.subr.bf16.mxu0 %v1208
      %1362 = vmatpush1.bf16.msra.mxu0 %v1207
      %1363 = vmatprep.subr.bf16.mxu0 %v1206
      %1364 = vmatpush1.bf16.msra.mxu0 %v1205
      %1365 = vmatprep.subr.bf16.mxu0 %v1204
      %1366 = vmatpush1.bf16.msra.mxu0 %v1203
      %1367 = vmatprep.subr.bf16.mxu0 %v1202
      %1368 = vmatpush1.bf16.msra.mxu0 %v1201
      %1369 = vmatprep.subr.bf16.mxu0 %v1200
      %1370 = vmatpush1.bf16.msra.mxu0 %v1199
      %1371 = vmatprep.subr.bf16.mxu0 %v1198
      %1372 = vmatpush1.bf16.msra.mxu0 %v1197
      %1373 = vmatprep.subr.bf16.mxu0 %v1228
      %1374 = vmatpush2.bf16.msra.mxu0 %v1227
      %1375 = vmatprep.subr.bf16.mxu0 %v1226
      %1376 = vmatpush2.bf16.msra.mxu0 %v1225
      %1377 = vmatprep.subr.bf16.mxu0 %v1224
      %1378 = vmatpush2.bf16.msra.mxu0 %v1223
      %1379 = vmatprep.subr.bf16.mxu0 %v1222
      %1380 = vmatpush2.bf16.msra.mxu0 %v1221
      %1381 = vmatprep.subr.bf16.mxu0 %v1220
      %1382 = vmatpush2.bf16.msra.mxu0 %v1219
      %1383 = vmatprep.subr.bf16.mxu0 %v1218
      %1384 = vmatpush2.bf16.msra.mxu0 %v1217
      %1385 = vmatprep.subr.bf16.mxu0 %v1216
      %1386 = vmatpush2.bf16.msra.mxu0 %v1215
      %1387 = vmatprep.subr.bf16.mxu0 %v1214
      %1388 = vmatpush2.bf16.msra.mxu0 %v1213
      %1389 = vmatprep.mubr.bf16.mxu0 %v798
      %1390 = vmatmul.mubr.bf16.gmra.mxu0 %v797
      %v1391 = vpop.f32.mrf.mxu0
      %v1392 = vadd.f32 0.0, %v1391
      %v1393 = vpop.f32.mrf.mxu0
      %v1394 = vadd.f32 0.0, %v1393
      %v1395 = vpop.f32.mrf.mxu0
      %v1396 = vadd.f32 0.0, %v1395
      %v1397 = vpop.f32.mrf.mxu0
      %v1398 = vadd.f32 0.0, %v1397
      %1399 = vmatprep.mubr.bf16.mxu0 %v803
      %1400 = vmatmul.mubr.bf16.gmra.mxu0 %v802
      %v1401 = vpop.f32.mrf.mxu0
      %v1402 = vadd.f32 0.0, %v1401
      %v1403 = vpop.f32.mrf.mxu0
      %v1404 = vadd.f32 0.0, %v1403
      %v1405 = vpop.f32.mrf.mxu0
      %v1406 = vadd.f32 0.0, %v1405
      %v1407 = vpop.f32.mrf.mxu0
      %v1408 = vadd.f32 0.0, %v1407
      %1409 = vmatprep.mubr.bf16.mxu0 %v808
      %1410 = vmatmul.mubr.bf16.gmra.mxu0 %v807
      %v1411 = vpop.f32.mrf.mxu0
      %v1412 = vadd.f32 0.0, %v1411
      %v1413 = vpop.f32.mrf.mxu0
      %v1414 = vadd.f32 0.0, %v1413
      %v1415 = vpop.f32.mrf.mxu0
      %v1416 = vadd.f32 0.0, %v1415
      %v1417 = vpop.f32.mrf.mxu0
      %v1418 = vadd.f32 0.0, %v1417
      %1419 = vmatprep.mubr.bf16.mxu0 %v813
      %1420 = vmatmul.mubr.bf16.gmra.mxu0 %v812
      %v1421 = vpop.f32.mrf.mxu0
      %v1422 = vadd.f32 0.0, %v1421
      %v1423 = vpop.f32.mrf.mxu0
      %v1424 = vadd.f32 0.0, %v1423
      %v1425 = vpop.f32.mrf.mxu0
      %v1426 = vadd.f32 0.0, %v1425
      %v1427 = vpop.f32.mrf.mxu0
      %v1428 = vadd.f32 0.0, %v1427
      %1429 = vmatprep.mubr.bf16.mxu0 %v818
      %1430 = vmatmul.mubr.bf16.gmra.mxu0 %v817
      %v1431 = vpop.f32.mrf.mxu0
      %v1432 = vadd.f32 0.0, %v1431
      %v1433 = vpop.f32.mrf.mxu0
      %v1434 = vadd.f32 0.0, %v1433
      %v1435 = vpop.f32.mrf.mxu0
      %v1436 = vadd.f32 0.0, %v1435
      %v1437 = vpop.f32.mrf.mxu0
      %v1438 = vadd.f32 0.0, %v1437
      %1439 = vmatprep.mubr.bf16.mxu0 %v823
      %1440 = vmatmul.mubr.bf16.gmra.mxu0 %v822
      %v1441 = vpop.f32.mrf.mxu0
      %v1442 = vadd.f32 0.0, %v1441
      %v1443 = vpop.f32.mrf.mxu0
      %v1444 = vadd.f32 0.0, %v1443
      %v1445 = vpop.f32.mrf.mxu0
      %v1446 = vadd.f32 0.0, %v1445
      %v1447 = vpop.f32.mrf.mxu0
      %v1448 = vadd.f32 0.0, %v1447
      %1449 = vmatprep.mubr.bf16.mxu0 %v828
      %1450 = vmatmul.mubr.bf16.gmra.mxu0 %v827
      %v1451 = vpop.f32.mrf.mxu0
      %v1452 = vadd.f32 0.0, %v1451
      %v1453 = vpop.f32.mrf.mxu0
      %v1454 = vadd.f32 0.0, %v1453
      %v1455 = vpop.f32.mrf.mxu0
      %v1456 = vadd.f32 0.0, %v1455
      %v1457 = vpop.f32.mrf.mxu0
      %v1458 = vadd.f32 0.0, %v1457
      %1459 = vmatprep.mubr.bf16.mxu0 %v833
      %1460 = vmatmul.mubr.bf16.gmra.mxu0 %v832
      %v1461 = vpop.f32.mrf.mxu0
      %v1462 = vadd.f32 0.0, %v1461
      %v1463 = vpop.f32.mrf.mxu0
      %v1464 = vadd.f32 0.0, %v1463
      %v1465 = vpop.f32.mrf.mxu0
      %v1466 = vadd.f32 0.0, %v1465
      %v1467 = vpop.f32.mrf.mxu0
      %v1468 = vadd.f32 0.0, %v1467
      %1469 = vmatprep.mubr.bf16.mxu0 %v838
      %1470 = vmatmul.mubr.bf16.gmra.mxu0 %v837
      %v1471 = vpop.f32.mrf.mxu0
      %v1472 = vadd.f32 0.0, %v1471
      %v1473 = vpop.f32.mrf.mxu0
      %v1474 = vadd.f32 0.0, %v1473
      %v1475 = vpop.f32.mrf.mxu0
      %v1476 = vadd.f32 0.0, %v1475
      %v1477 = vpop.f32.mrf.mxu0
      %v1478 = vadd.f32 0.0, %v1477
      %1479 = vmatprep.mubr.bf16.mxu0 %v843
      %1480 = vmatmul.mubr.bf16.gmra.mxu0 %v842
      %v1481 = vpop.f32.mrf.mxu0
      %v1482 = vadd.f32 0.0, %v1481
      %v1483 = vpop.f32.mrf.mxu0
      %v1484 = vadd.f32 0.0, %v1483
      %v1485 = vpop.f32.mrf.mxu0
      %v1486 = vadd.f32 0.0, %v1485
      %v1487 = vpop.f32.mrf.mxu0
      %v1488 = vadd.f32 0.0, %v1487
      %1489 = vmatprep.mubr.bf16.mxu0 %v848
      %1490 = vmatmul.mubr.bf16.gmra.mxu0 %v847
      %v1491 = vpop.f32.mrf.mxu0
      %v1492 = vadd.f32 0.0, %v1491
      %v1493 = vpop.f32.mrf.mxu0
      %v1494 = vadd.f32 0.0, %v1493
      %v1495 = vpop.f32.mrf.mxu0
      %v1496 = vadd.f32 0.0, %v1495
      %v1497 = vpop.f32.mrf.mxu0
      %v1498 = vadd.f32 0.0, %v1497
      %1499 = vmatprep.mubr.bf16.mxu0 %v853
      %1500 = vmatmul.mubr.bf16.gmra.mxu0 %v852
      %v1501 = vpop.f32.mrf.mxu0
      %v1502 = vadd.f32 0.0, %v1501
      %v1503 = vpop.f32.mrf.mxu0
      %v1504 = vadd.f32 0.0, %v1503
      %v1505 = vpop.f32.mrf.mxu0
      %v1506 = vadd.f32 0.0, %v1505
      %v1507 = vpop.f32.mrf.mxu0
      %v1508 = vadd.f32 0.0, %v1507
      %1509 = vmatprep.mubr.bf16.mxu0 %v858
      %1510 = vmatmul.mubr.bf16.gmra.mxu0 %v857
      %v1511 = vpop.f32.mrf.mxu0
      %v1512 = vadd.f32 0.0, %v1511
      %v1513 = vpop.f32.mrf.mxu0
      %v1514 = vadd.f32 0.0, %v1513
      %v1515 = vpop.f32.mrf.mxu0
      %v1516 = vadd.f32 0.0, %v1515
      %v1517 = vpop.f32.mrf.mxu0
      %v1518 = vadd.f32 0.0, %v1517
      %1519 = vmatprep.mubr.bf16.mxu0 %v863
      %1520 = vmatmul.mubr.bf16.gmra.mxu0 %v862
      %v1521 = vpop.f32.mrf.mxu0
      %v1522 = vadd.f32 0.0, %v1521
      %v1523 = vpop.f32.mrf.mxu0
      %v1524 = vadd.f32 0.0, %v1523
      %v1525 = vpop.f32.mrf.mxu0
      %v1526 = vadd.f32 0.0, %v1525
      %v1527 = vpop.f32.mrf.mxu0
      %v1528 = vadd.f32 0.0, %v1527
      %1529 = vmatprep.mubr.bf16.mxu0 %v868
      %1530 = vmatmul.mubr.bf16.gmra.mxu0 %v867
      %v1531 = vpop.f32.mrf.mxu0
      %v1532 = vadd.f32 0.0, %v1531
      %v1533 = vpop.f32.mrf.mxu0
      %v1534 = vadd.f32 0.0, %v1533
      %v1535 = vpop.f32.mrf.mxu0
      %v1536 = vadd.f32 0.0, %v1535
      %v1537 = vpop.f32.mrf.mxu0
      %v1538 = vadd.f32 0.0, %v1537
      %1539 = vmatprep.mubr.bf16.mxu0 %v873
      %1540 = vmatmul.mubr.bf16.gmra.mxu0 %v872
      %v1541 = vpop.f32.mrf.mxu0
      %v1542 = vadd.f32 0.0, %v1541
      %v1543 = vpop.f32.mrf.mxu0
      %v1544 = vadd.f32 0.0, %v1543
      %v1545 = vpop.f32.mrf.mxu0
      %v1546 = vadd.f32 0.0, %v1545
      %v1547 = vpop.f32.mrf.mxu0
      %v1548 = vadd.f32 0.0, %v1547
      %1549 = vdwg.mxu0
      %1550 = vmatprep.subr.bf16.mxu0 %v1244
      %1551 = vmatpush1.bf16.msra.mxu0 %v1243
      %1552 = vmatprep.subr.bf16.mxu0 %v1242
      %1553 = vmatpush1.bf16.msra.mxu0 %v1241
      %1554 = vmatprep.subr.bf16.mxu0 %v1240
      %1555 = vmatpush1.bf16.msra.mxu0 %v1239
      %1556 = vmatprep.subr.bf16.mxu0 %v1238
      %1557 = vmatpush1.bf16.msra.mxu0 %v1237
      %1558 = vmatprep.subr.bf16.mxu0 %v1236
      %1559 = vmatpush1.bf16.msra.mxu0 %v1235
      %1560 = vmatprep.subr.bf16.mxu0 %v1234
      %1561 = vmatpush1.bf16.msra.mxu0 %v1233
      %1562 = vmatprep.subr.bf16.mxu0 %v1232
      %1563 = vmatpush1.bf16.msra.mxu0 %v1231
      %1564 = vmatprep.subr.bf16.mxu0 %v1230
      %1565 = vmatpush1.bf16.msra.mxu0 %v1229
      %1566 = vmatprep.subr.bf16.mxu0 %v1260
      %1567 = vmatpush2.bf16.msra.mxu0 %v1259
      %1568 = vmatprep.subr.bf16.mxu0 %v1258
      %1569 = vmatpush2.bf16.msra.mxu0 %v1257
      %1570 = vmatprep.subr.bf16.mxu0 %v1256
      %1571 = vmatpush2.bf16.msra.mxu0 %v1255
      %1572 = vmatprep.subr.bf16.mxu0 %v1254
      %1573 = vmatpush2.bf16.msra.mxu0 %v1253
      %1574 = vmatprep.subr.bf16.mxu0 %v1252
      %1575 = vmatpush2.bf16.msra.mxu0 %v1251
      %1576 = vmatprep.subr.bf16.mxu0 %v1250
      %1577 = vmatpush2.bf16.msra.mxu0 %v1249
      %1578 = vmatprep.subr.bf16.mxu0 %v1248
      %1579 = vmatpush2.bf16.msra.mxu0 %v1247
      %1580 = vmatprep.subr.bf16.mxu0 %v1246
      %1581 = vmatpush2.bf16.msra.mxu0 %v1245
      %1582 = vmatprep.mubr.bf16.mxu0 %v800
      %1583 = vmatmul.mubr.bf16.gmra.mxu0 %v799
      %v1584 = vpop.f32.mrf.mxu0
      %v1585 = vadd.f32 %v1392, %v1584
      %v1586 = vpop.f32.mrf.mxu0
      %v1587 = vadd.f32 %v1394, %v1586
      %v1588 = vpop.f32.mrf.mxu0
      %v1589 = vadd.f32 %v1396, %v1588
      %v1590 = vpop.f32.mrf.mxu0
      %v1591 = vadd.f32 %v1398, %v1590
      %1592 = vmatprep.mubr.bf16.mxu0 %v805
      %1593 = vmatmul.mubr.bf16.gmra.mxu0 %v804
      %v1594 = vpop.f32.mrf.mxu0
      %v1595 = vadd.f32 %v1402, %v1594
      %v1596 = vpop.f32.mrf.mxu0
      %v1597 = vadd.f32 %v1404, %v1596
      %v1598 = vpop.f32.mrf.mxu0
      %v1599 = vadd.f32 %v1406, %v1598
      %v1600 = vpop.f32.mrf.mxu0
      %v1601 = vadd.f32 %v1408, %v1600
      %1602 = vmatprep.mubr.bf16.mxu0 %v810
      %1603 = vmatmul.mubr.bf16.gmra.mxu0 %v809
      %v1604 = vpop.f32.mrf.mxu0
      %v1605 = vadd.f32 %v1412, %v1604
      %v1606 = vpop.f32.mrf.mxu0
      %v1607 = vadd.f32 %v1414, %v1606
      %v1608 = vpop.f32.mrf.mxu0
      %v1609 = vadd.f32 %v1416, %v1608
      %v1610 = vpop.f32.mrf.mxu0
      %v1611 = vadd.f32 %v1418, %v1610
      %1612 = vmatprep.mubr.bf16.mxu0 %v815
      %1613 = vmatmul.mubr.bf16.gmra.mxu0 %v814
      %v1614 = vpop.f32.mrf.mxu0
      %v1615 = vadd.f32 %v1422, %v1614
      %v1616 = vpop.f32.mrf.mxu0
      %v1617 = vadd.f32 %v1424, %v1616
      %v1618 = vpop.f32.mrf.mxu0
      %v1619 = vadd.f32 %v1426, %v1618
      %v1620 = vpop.f32.mrf.mxu0
      %v1621 = vadd.f32 %v1428, %v1620
      %1622 = vmatprep.mubr.bf16.mxu0 %v820
      %1623 = vmatmul.mubr.bf16.gmra.mxu0 %v819
      %v1624 = vpop.f32.mrf.mxu0
      %v1625 = vadd.f32 %v1432, %v1624
      %v1626 = vpop.f32.mrf.mxu0
      %v1627 = vadd.f32 %v1434, %v1626
      %v1628 = vpop.f32.mrf.mxu0
      %v1629 = vadd.f32 %v1436, %v1628
      %v1630 = vpop.f32.mrf.mxu0
      %v1631 = vadd.f32 %v1438, %v1630
      %1632 = vmatprep.mubr.bf16.mxu0 %v825
      %1633 = vmatmul.mubr.bf16.gmra.mxu0 %v824
      %v1634 = vpop.f32.mrf.mxu0
      %v1635 = vadd.f32 %v1442, %v1634
      %v1636 = vpop.f32.mrf.mxu0
      %v1637 = vadd.f32 %v1444, %v1636
      %v1638 = vpop.f32.mrf.mxu0
      %v1639 = vadd.f32 %v1446, %v1638
      %v1640 = vpop.f32.mrf.mxu0
      %v1641 = vadd.f32 %v1448, %v1640
      %1642 = vmatprep.mubr.bf16.mxu0 %v830
      %1643 = vmatmul.mubr.bf16.gmra.mxu0 %v829
      %v1644 = vpop.f32.mrf.mxu0
      %v1645 = vadd.f32 %v1452, %v1644
      %v1646 = vpop.f32.mrf.mxu0
      %v1647 = vadd.f32 %v1454, %v1646
      %v1648 = vpop.f32.mrf.mxu0
      %v1649 = vadd.f32 %v1456, %v1648
      %v1650 = vpop.f32.mrf.mxu0
      %v1651 = vadd.f32 %v1458, %v1650
      %1652 = vmatprep.mubr.bf16.mxu0 %v835
      %1653 = vmatmul.mubr.bf16.gmra.mxu0 %v834
      %v1654 = vpop.f32.mrf.mxu0
      %v1655 = vadd.f32 %v1462, %v1654
      %v1656 = vpop.f32.mrf.mxu0
      %v1657 = vadd.f32 %v1464, %v1656
      %v1658 = vpop.f32.mrf.mxu0
      %v1659 = vadd.f32 %v1466, %v1658
      %v1660 = vpop.f32.mrf.mxu0
      %v1661 = vadd.f32 %v1468, %v1660
      %1662 = vmatprep.mubr.bf16.mxu0 %v840
      %1663 = vmatmul.mubr.bf16.gmra.mxu0 %v839
      %v1664 = vpop.f32.mrf.mxu0
      %v1665 = vadd.f32 %v1472, %v1664
      %v1666 = vpop.f32.mrf.mxu0
      %v1667 = vadd.f32 %v1474, %v1666
      %v1668 = vpop.f32.mrf.mxu0
      %v1669 = vadd.f32 %v1476, %v1668
      %v1670 = vpop.f32.mrf.mxu0
      %v1671 = vadd.f32 %v1478, %v1670
      %1672 = vmatprep.mubr.bf16.mxu0 %v845
      %1673 = vmatmul.mubr.bf16.gmra.mxu0 %v844
      %v1674 = vpop.f32.mrf.mxu0
      %v1675 = vadd.f32 %v1482, %v1674
      %v1676 = vpop.f32.mrf.mxu0
      %v1677 = vadd.f32 %v1484, %v1676
      %v1678 = vpop.f32.mrf.mxu0
      %v1679 = vadd.f32 %v1486, %v1678
      %v1680 = vpop.f32.mrf.mxu0
      %v1681 = vadd.f32 %v1488, %v1680
      %1682 = vmatprep.mubr.bf16.mxu0 %v850
      %1683 = vmatmul.mubr.bf16.gmra.mxu0 %v849
      %v1684 = vpop.f32.mrf.mxu0
      %v1685 = vadd.f32 %v1492, %v1684
      %v1686 = vpop.f32.mrf.mxu0
      %v1687 = vadd.f32 %v1494, %v1686
      %v1688 = vpop.f32.mrf.mxu0
      %v1689 = vadd.f32 %v1496, %v1688
      %v1690 = vpop.f32.mrf.mxu0
      %v1691 = vadd.f32 %v1498, %v1690
      %1692 = vmatprep.mubr.bf16.mxu0 %v855
      %1693 = vmatmul.mubr.bf16.gmra.mxu0 %v854
      %v1694 = vpop.f32.mrf.mxu0
      %v1695 = vadd.f32 %v1502, %v1694
      %v1696 = vpop.f32.mrf.mxu0
      %v1697 = vadd.f32 %v1504, %v1696
      %v1698 = vpop.f32.mrf.mxu0
      %v1699 = vadd.f32 %v1506, %v1698
      %v1700 = vpop.f32.mrf.mxu0
      %v1701 = vadd.f32 %v1508, %v1700
      %1702 = vmatprep.mubr.bf16.mxu0 %v860
      %1703 = vmatmul.mubr.bf16.gmra.mxu0 %v859
      %v1704 = vpop.f32.mrf.mxu0
      %v1705 = vadd.f32 %v1512, %v1704
      %v1706 = vpop.f32.mrf.mxu0
      %v1707 = vadd.f32 %v1514, %v1706
      %v1708 = vpop.f32.mrf.mxu0
      %v1709 = vadd.f32 %v1516, %v1708
      %v1710 = vpop.f32.mrf.mxu0
      %v1711 = vadd.f32 %v1518, %v1710
      %1712 = vmatprep.mubr.bf16.mxu0 %v865
      %1713 = vmatmul.mubr.bf16.gmra.mxu0 %v864
      %v1714 = vpop.f32.mrf.mxu0
      %v1715 = vadd.f32 %v1522, %v1714
      %v1716 = vpop.f32.mrf.mxu0
      %v1717 = vadd.f32 %v1524, %v1716
      %v1718 = vpop.f32.mrf.mxu0
      %v1719 = vadd.f32 %v1526, %v1718
      %v1720 = vpop.f32.mrf.mxu0
      %v1721 = vadd.f32 %v1528, %v1720
      %1722 = vmatprep.mubr.bf16.mxu0 %v870
      %1723 = vmatmul.mubr.bf16.gmra.mxu0 %v869
      %v1724 = vpop.f32.mrf.mxu0
      %v1725 = vadd.f32 %v1532, %v1724
      %v1726 = vpop.f32.mrf.mxu0
      %v1727 = vadd.f32 %v1534, %v1726
      %v1728 = vpop.f32.mrf.mxu0
      %v1729 = vadd.f32 %v1536, %v1728
      %v1730 = vpop.f32.mrf.mxu0
      %v1731 = vadd.f32 %v1538, %v1730
      %1732 = vmatprep.mubr.bf16.mxu0 %v875
      %1733 = vmatmul.mubr.bf16.gmra.mxu0 %v874
      %v1734 = vpop.f32.mrf.mxu0
      %v1735 = vadd.f32 %v1542, %v1734
      %v1736 = vpop.f32.mrf.mxu0
      %v1737 = vadd.f32 %v1544, %v1736
      %v1738 = vpop.f32.mrf.mxu0
      %v1739 = vadd.f32 %v1546, %v1738
      %v1740 = vpop.f32.mrf.mxu0
      %v1741 = vadd.f32 %v1548, %v1740
      %1742 = vdwg.mxu0
      %1743 = vmatprep.subr.bf16.mxu0 %v1276
      %1744 = vmatpush1.bf16.msra.mxu0 %v1275
      %1745 = vmatprep.subr.bf16.mxu0 %v1274
      %1746 = vmatpush1.bf16.msra.mxu0 %v1273
      %1747 = vmatprep.subr.bf16.mxu0 %v1272
      %1748 = vmatpush1.bf16.msra.mxu0 %v1271
      %1749 = vmatprep.subr.bf16.mxu0 %v1270
      %1750 = vmatpush1.bf16.msra.mxu0 %v1269
      %1751 = vmatprep.subr.bf16.mxu0 %v1268
      %1752 = vmatpush1.bf16.msra.mxu0 %v1267
      %1753 = vmatprep.subr.bf16.mxu0 %v1266
      %1754 = vmatpush1.bf16.msra.mxu0 %v1265
      %1755 = vmatprep.subr.bf16.mxu0 %v1264
      %1756 = vmatpush1.bf16.msra.mxu0 %v1263
      %1757 = vmatprep.subr.bf16.mxu0 %v1262
      %1758 = vmatpush1.bf16.msra.mxu0 %v1261
      %1759 = vmatprep.subr.bf16.mxu0 0
      %1760 = vmatpush2.bf16.msra.mxu0 0
      %1761 = vmatprep.subr.bf16.mxu0 0
      %1762 = vmatpush2.bf16.msra.mxu0 0
      %1763 = vmatprep.subr.bf16.mxu0 0
      %1764 = vmatpush2.bf16.msra.mxu0 0
      %1765 = vmatprep.subr.bf16.mxu0 0
      %1766 = vmatpush2.bf16.msra.mxu0 0
      %1767 = vmatprep.subr.bf16.mxu0 0
      %1768 = vmatpush2.bf16.msra.mxu0 0
      %1769 = vmatprep.subr.bf16.mxu0 0
      %1770 = vmatpush2.bf16.msra.mxu0 0
      %1771 = vmatprep.subr.bf16.mxu0 0
      %1772 = vmatpush2.bf16.msra.mxu0 0
      %1773 = vmatprep.subr.bf16.mxu0 0
      %1774 = vmatpush2.bf16.msra.mxu0 0
      %1775 = vmatprep.mubr.bf16.mxu0 0
      %1776 = vmatmul.mubr.bf16.gmra.mxu0 %v801
      %v1777 = vpop.f32.mrf.mxu0
      %v1778 = vadd.f32 %v1585, %v1777
      %v1779 = vpop.f32.mrf.mxu0
      %v1780 = vadd.f32 %v1587, %v1779
      %v1781 = vpop.f32.mrf.mxu0
      %v1782 = vadd.f32 %v1589, %v1781
      %v1783 = vpop.f32.mrf.mxu0
      %v1784 = vadd.f32 %v1591, %v1783
      %1785 = vmatprep.mubr.bf16.mxu0 0
      %1786 = vmatmul.mubr.bf16.gmra.mxu0 %v806
      %v1787 = vpop.f32.mrf.mxu0
      %v1788 = vadd.f32 %v1595, %v1787
      %v1789 = vpop.f32.mrf.mxu0
      %v1790 = vadd.f32 %v1597, %v1789
      %v1791 = vpop.f32.mrf.mxu0
      %v1792 = vadd.f32 %v1599, %v1791
      %v1793 = vpop.f32.mrf.mxu0
      %v1794 = vadd.f32 %v1601, %v1793
      %1795 = vmatprep.mubr.bf16.mxu0 0
      %1796 = vmatmul.mubr.bf16.gmra.mxu0 %v811
      %v1797 = vpop.f32.mrf.mxu0
      %v1798 = vadd.f32 %v1605, %v1797
      %v1799 = vpop.f32.mrf.mxu0
      %v1800 = vadd.f32 %v1607, %v1799
      %v1801 = vpop.f32.mrf.mxu0
      %v1802 = vadd.f32 %v1609, %v1801
      %v1803 = vpop.f32.mrf.mxu0
      %v1804 = vadd.f32 %v1611, %v1803
      %1805 = vmatprep.mubr.bf16.mxu0 0
      %1806 = vmatmul.mubr.bf16.gmra.mxu0 %v816
      %v1807 = vpop.f32.mrf.mxu0
      %v1808 = vadd.f32 %v1615, %v1807
      %v1809 = vpop.f32.mrf.mxu0
      %v1810 = vadd.f32 %v1617, %v1809
      %v1811 = vpop.f32.mrf.mxu0
      %v1812 = vadd.f32 %v1619, %v1811
      %v1813 = vpop.f32.mrf.mxu0
      %v1814 = vadd.f32 %v1621, %v1813
      %1815 = vmatprep.mubr.bf16.mxu0 0
      %1816 = vmatmul.mubr.bf16.gmra.mxu0 %v821
      %v1817 = vpop.f32.mrf.mxu0
      %v1818 = vadd.f32 %v1625, %v1817
      %v1819 = vpop.f32.mrf.mxu0
      %v1820 = vadd.f32 %v1627, %v1819
      %v1821 = vpop.f32.mrf.mxu0
      %v1822 = vadd.f32 %v1629, %v1821
      %v1823 = vpop.f32.mrf.mxu0
      %v1824 = vadd.f32 %v1631, %v1823
      %1825 = vmatprep.mubr.bf16.mxu0 0
      %1826 = vmatmul.mubr.bf16.gmra.mxu0 %v826
      %v1827 = vpop.f32.mrf.mxu0
      %v1828 = vadd.f32 %v1635, %v1827
      %v1829 = vpop.f32.mrf.mxu0
      %v1830 = vadd.f32 %v1637, %v1829
      %v1831 = vpop.f32.mrf.mxu0
      %v1832 = vadd.f32 %v1639, %v1831
      %v1833 = vpop.f32.mrf.mxu0
      %v1834 = vadd.f32 %v1641, %v1833
      %1835 = vmatprep.mubr.bf16.mxu0 0
      %1836 = vmatmul.mubr.bf16.gmra.mxu0 %v831
      %v1837 = vpop.f32.mrf.mxu0
      %v1838 = vadd.f32 %v1645, %v1837
      %v1839 = vpop.f32.mrf.mxu0
      %v1840 = vadd.f32 %v1647, %v1839
      %v1841 = vpop.f32.mrf.mxu0
      %v1842 = vadd.f32 %v1649, %v1841
      %v1843 = vpop.f32.mrf.mxu0
      %v1844 = vadd.f32 %v1651, %v1843
      %1845 = vmatprep.mubr.bf16.mxu0 0
      %1846 = vmatmul.mubr.bf16.gmra.mxu0 %v836
      %v1847 = vpop.f32.mrf.mxu0
      %v1848 = vadd.f32 %v1655, %v1847
      %v1849 = vpop.f32.mrf.mxu0
      %v1850 = vadd.f32 %v1657, %v1849
      %v1851 = vpop.f32.mrf.mxu0
      %v1852 = vadd.f32 %v1659, %v1851
      %v1853 = vpop.f32.mrf.mxu0
      %v1854 = vadd.f32 %v1661, %v1853
      %1855 = vmatprep.mubr.bf16.mxu0 0
      %1856 = vmatmul.mubr.bf16.gmra.mxu0 %v841
      %v1857 = vpop.f32.mrf.mxu0
      %v1858 = vadd.f32 %v1665, %v1857
      %v1859 = vpop.f32.mrf.mxu0
      %v1860 = vadd.f32 %v1667, %v1859
      %v1861 = vpop.f32.mrf.mxu0
      %v1862 = vadd.f32 %v1669, %v1861
      %v1863 = vpop.f32.mrf.mxu0
      %v1864 = vadd.f32 %v1671, %v1863
      %1865 = vmatprep.mubr.bf16.mxu0 0
      %1866 = vmatmul.mubr.bf16.gmra.mxu0 %v846
      %v1867 = vpop.f32.mrf.mxu0
      %v1868 = vadd.f32 %v1675, %v1867
      %v1869 = vpop.f32.mrf.mxu0
      %v1870 = vadd.f32 %v1677, %v1869
      %v1871 = vpop.f32.mrf.mxu0
      %v1872 = vadd.f32 %v1679, %v1871
      %v1873 = vpop.f32.mrf.mxu0
      %v1874 = vadd.f32 %v1681, %v1873
      %1875 = vmatprep.mubr.bf16.mxu0 0
      %1876 = vmatmul.mubr.bf16.gmra.mxu0 %v851
      %v1877 = vpop.f32.mrf.mxu0
      %v1878 = vadd.f32 %v1685, %v1877
      %v1879 = vpop.f32.mrf.mxu0
      %v1880 = vadd.f32 %v1687, %v1879
      %v1881 = vpop.f32.mrf.mxu0
      %v1882 = vadd.f32 %v1689, %v1881
      %v1883 = vpop.f32.mrf.mxu0
      %v1884 = vadd.f32 %v1691, %v1883
      %1885 = vmatprep.mubr.bf16.mxu0 0
      %1886 = vmatmul.mubr.bf16.gmra.mxu0 %v856
      %v1887 = vpop.f32.mrf.mxu0
      %v1888 = vadd.f32 %v1695, %v1887
      %v1889 = vpop.f32.mrf.mxu0
      %v1890 = vadd.f32 %v1697, %v1889
      %v1891 = vpop.f32.mrf.mxu0
      %v1892 = vadd.f32 %v1699, %v1891
      %v1893 = vpop.f32.mrf.mxu0
      %v1894 = vadd.f32 %v1701, %v1893
      %1895 = vmatprep.mubr.bf16.mxu0 0
      %1896 = vmatmul.mubr.bf16.gmra.mxu0 %v861
      %v1897 = vpop.f32.mrf.mxu0
      %v1898 = vadd.f32 %v1705, %v1897
      %v1899 = vpop.f32.mrf.mxu0
      %v1900 = vadd.f32 %v1707, %v1899
      %v1901 = vpop.f32.mrf.mxu0
      %v1902 = vadd.f32 %v1709, %v1901
      %v1903 = vpop.f32.mrf.mxu0
      %v1904 = vadd.f32 %v1711, %v1903
      %1905 = vmatprep.mubr.bf16.mxu0 0
      %1906 = vmatmul.mubr.bf16.gmra.mxu0 %v866
      %v1907 = vpop.f32.mrf.mxu0
      %v1908 = vadd.f32 %v1715, %v1907
      %v1909 = vpop.f32.mrf.mxu0
      %v1910 = vadd.f32 %v1717, %v1909
      %v1911 = vpop.f32.mrf.mxu0
      %v1912 = vadd.f32 %v1719, %v1911
      %v1913 = vpop.f32.mrf.mxu0
      %v1914 = vadd.f32 %v1721, %v1913
      %1915 = vmatprep.mubr.bf16.mxu0 0
      %1916 = vmatmul.mubr.bf16.gmra.mxu0 %v871
      %v1917 = vpop.f32.mrf.mxu0
      %v1918 = vadd.f32 %v1725, %v1917
      %v1919 = vpop.f32.mrf.mxu0
      %v1920 = vadd.f32 %v1727, %v1919
      %v1921 = vpop.f32.mrf.mxu0
      %v1922 = vadd.f32 %v1729, %v1921
      %v1923 = vpop.f32.mrf.mxu0
      %v1924 = vadd.f32 %v1731, %v1923
      %1925 = vmatprep.mubr.bf16.mxu0 0
      %1926 = vmatmul.mubr.bf16.gmra.mxu0 %v876
      %v1927 = vpop.f32.mrf.mxu0
      %v1928 = vadd.f32 %v1735, %v1927
      %v1929 = vpop.f32.mrf.mxu0
      %v1930 = vadd.f32 %v1737, %v1929
      %v1931 = vpop.f32.mrf.mxu0
      %v1932 = vadd.f32 %v1739, %v1931
      %v1933 = vpop.f32.mrf.mxu0
      %v1934 = vadd.f32 %v1741, %v1933
      %1935 = vdwg.mxu0
      %v1936 = vadd.f32 %v301, %v1778
      %v1937 = vadd.f32 %v302, %v1780
      %v1938 = vadd.f32 %v303, %v1782
      %v1939 = vadd.f32 %v304, %v1784
      %v1940 = vadd.f32 %v305, %v1788
      %v1941 = vadd.f32 %v306, %v1790
      %v1942 = vadd.f32 %v307, %v1792
      %v1943 = vadd.f32 %v308, %v1794
      %v1944 = vadd.f32 %v309, %v1798
      %v1945 = vadd.f32 %v310, %v1800
      %v1946 = vadd.f32 %v311, %v1802
      %v1947 = vadd.f32 %v312, %v1804
      %v1948 = vadd.f32 %v313, %v1808
      %v1949 = vadd.f32 %v314, %v1810
      %v1950 = vadd.f32 %v315, %v1812
      %v1951 = vadd.f32 %v316, %v1814
      %v1952 = vadd.f32 %v317, %v1818
      %v1953 = vadd.f32 %v318, %v1820
      %v1954 = vadd.f32 %v319, %v1822
      %v1955 = vadd.f32 %v320, %v1824
      %v1956 = vadd.f32 %v321, %v1828
      %v1957 = vadd.f32 %v322, %v1830
      %v1958 = vadd.f32 %v323, %v1832
      %v1959 = vadd.f32 %v324, %v1834
      %v1960 = vadd.f32 %v325, %v1838
      %v1961 = vadd.f32 %v326, %v1840
      %v1962 = vadd.f32 %v327, %v1842
      %v1963 = vadd.f32 %v328, %v1844
      %v1964 = vadd.f32 %v329, %v1848
      %v1965 = vadd.f32 %v330, %v1850
      %v1966 = vadd.f32 %v331, %v1852
      %v1967 = vadd.f32 %v332, %v1854
      %v1968 = vadd.f32 %v333, %v1858
      %v1969 = vadd.f32 %v334, %v1860
      %v1970 = vadd.f32 %v335, %v1862
      %v1971 = vadd.f32 %v336, %v1864
      %v1972 = vadd.f32 %v337, %v1868
      %v1973 = vadd.f32 %v338, %v1870
      %v1974 = vadd.f32 %v339, %v1872
      %v1975 = vadd.f32 %v340, %v1874
      %v1976 = vadd.f32 %v341, %v1878
      %v1977 = vadd.f32 %v342, %v1880
      %v1978 = vadd.f32 %v343, %v1882
      %v1979 = vadd.f32 %v344, %v1884
      %v1980 = vadd.f32 %v345, %v1888
      %v1981 = vadd.f32 %v346, %v1890
      %v1982 = vadd.f32 %v347, %v1892
      %v1983 = vadd.f32 %v348, %v1894
      %v1984 = vadd.f32 %v349, %v1898
      %v1985 = vadd.f32 %v350, %v1900
      %v1986 = vadd.f32 %v351, %v1902
      %v1987 = vadd.f32 %v352, %v1904
      %v1988 = vadd.f32 %v353, %v1908
      %v1989 = vadd.f32 %v354, %v1910
      %v1990 = vadd.f32 %v355, %v1912
      %v1991 = vadd.f32 %v356, %v1914
      %v1992 = vadd.f32 %v357, %v1918
      %v1993 = vadd.f32 %v358, %v1920
      %v1994 = vadd.f32 %v359, %v1922
      %v1995 = vadd.f32 %v360, %v1924
      %v1996 = vadd.f32 %v361, %v1928
      %v1997 = vadd.f32 %v362, %v1930
      %v1998 = vadd.f32 %v363, %v1932
      %v1999 = vadd.f32 %v364, %v1934
      %2000 = vst [vmem:[#allocation2] sm:$0xff] %v1936
      %2001 = vst [vmem:[#allocation2 + $0x8] sm:$0xff] %v1937
      %2002 = vst [vmem:[#allocation2 + $0x10] sm:$0xff] %v1938
      %2003 = vst [vmem:[#allocation2 + $0x18] sm:$0xff] %v1939
      %2004 = vst [vmem:[#allocation2 + $0x20] sm:$0xff] %v1940
      %2005 = vst [vmem:[#allocation2 + $0x28] sm:$0xff] %v1941
      %2006 = vst [vmem:[#allocation2 + $0x30] sm:$0xff] %v1942
      %2007 = vst [vmem:[#allocation2 + $0x38] sm:$0xff] %v1943
      %2008 = vst [vmem:[#allocation2 + $0x40] sm:$0xff] %v1944
      %2009 = vst [vmem:[#allocation2 + $0x48] sm:$0xff] %v1945
      %2010 = vst [vmem:[#allocation2 + $0x50] sm:$0xff] %v1946
      %2011 = vst [vmem:[#allocation2 + $0x58] sm:$0xff] %v1947
      %2012 = vst [vmem:[#allocation2 + $0x60] sm:$0xff] %v1948
      %2013 = vst [vmem:[#allocation2 + $0x68] sm:$0xff] %v1949
      %2014 = vst [vmem:[#allocation2 + $0x70] sm:$0xff] %v1950
      %2015 = vst [vmem:[#allocation2 + $0x78] sm:$0xff] %v1951
      %2016 = vst [vmem:[#allocation2 + $0x80] sm:$0xff] %v1952
      %2017 = vst [vmem:[#allocation2 + $0x88] sm:$0xff] %v1953
      %2018 = vst [vmem:[#allocation2 + $0x90] sm:$0xff] %v1954
      %2019 = vst [vmem:[#allocation2 + $0x98] sm:$0xff] %v1955
      %2020 = vst [vmem:[#allocation2 + $0xa0] sm:$0xff] %v1956
      %2021 = vst [vmem:[#allocation2 + $0xa8] sm:$0xff] %v1957
      %2022 = vst [vmem:[#allocation2 + $0xb0] sm:$0xff] %v1958
      %2023 = vst [vmem:[#allocation2 + $0xb8] sm:$0xff] %v1959
      %2024 = vst [vmem:[#allocation2 + $0xc0] sm:$0xff] %v1960
      %2025 = vst [vmem:[#allocation2 + $0xc8] sm:$0xff] %v1961
      %2026 = vst [vmem:[#allocation2 + $0xd0] sm:$0xff] %v1962
      %2027 = vst [vmem:[#allocation2 + $0xd8] sm:$0xff] %v1963
      %2028 = vst [vmem:[#allocation2 + $0xe0] sm:$0xff] %v1964
      %2029 = vst [vmem:[#allocation2 + $0xe8] sm:$0xff] %v1965
      %2030 = vst [vmem:[#allocation2 + $0xf0] sm:$0xff] %v1966
      %2031 = vst [vmem:[#allocation2 + $0xf8] sm:$0xff] %v1967
      %2032 = vst [vmem:[#allocation2 + $0x100] sm:$0xff] %v1968
      %2033 = vst [vmem:[#allocation2 + $0x108] sm:$0xff] %v1969
      %2034 = vst [vmem:[#allocation2 + $0x110] sm:$0xff] %v1970
      %2035 = vst [vmem:[#allocation2 + $0x118] sm:$0xff] %v1971
      %2036 = vst [vmem:[#allocation2 + $0x120] sm:$0xff] %v1972
      %2037 = vst [vmem:[#allocation2 + $0x128] sm:$0xff] %v1973
      %2038 = vst [vmem:[#allocation2 + $0x130] sm:$0xff] %v1974
      %2039 = vst [vmem:[#allocation2 + $0x138] sm:$0xff] %v1975
      %2040 = vst [vmem:[#allocation2 + $0x140] sm:$0xff] %v1976
      %2041 = vst [vmem:[#allocation2 + $0x148] sm:$0xff] %v1977
      %2042 = vst [vmem:[#allocation2 + $0x150] sm:$0xff] %v1978
      %2043 = vst [vmem:[#allocation2 + $0x158] sm:$0xff] %v1979
      %2044 = vst [vmem:[#allocation2 + $0x160] sm:$0xff] %v1980
      %2045 = vst [vmem:[#allocation2 + $0x168] sm:$0xff] %v1981
      %2046 = vst [vmem:[#allocation2 + $0x170] sm:$0xff] %v1982
      %2047 = vst [vmem:[#allocation2 + $0x178] sm:$0xff] %v1983
      %2048 = vst [vmem:[#allocation2 + $0x180] sm:$0xff] %v1984
      %2049 = vst [vmem:[#allocation2 + $0x188] sm:$0xff] %v1985
      %2050 = vst [vmem:[#allocation2 + $0x190] sm:$0xff] %v1986
      %2051 = vst [vmem:[#allocation2 + $0x198] sm:$0xff] %v1987
      %2052 = vst [vmem:[#allocation2 + $0x1a0] sm:$0xff] %v1988
      %2053 = vst [vmem:[#allocation2 + $0x1a8] sm:$0xff] %v1989
      %2054 = vst [vmem:[#allocation2 + $0x1b0] sm:$0xff] %v1990
      %2055 = vst [vmem:[#allocation2 + $0x1b8] sm:$0xff] %v1991
      %2056 = vst [vmem:[#allocation2 + $0x1c0] sm:$0xff] %v1992
      %2057 = vst [vmem:[#allocation2 + $0x1c8] sm:$0xff] %v1993
      %2058 = vst [vmem:[#allocation2 + $0x1d0] sm:$0xff] %v1994
      %2059 = vst [vmem:[#allocation2 + $0x1d8] sm:$0xff] %v1995
      %2060 = vst [vmem:[#allocation2 + $0x1e0] sm:$0xff] %v1996
      %2061 = vst [vmem:[#allocation2 + $0x1e8] sm:$0xff] %v1997
      %2062 = vst [vmem:[#allocation2 + $0x1f0] sm:$0xff] %v1998
      %2063 = vst [vmem:[#allocation2 + $0x1f8] sm:$0xff] %v1999
      // Predicated region
      $region37: #{_forward_impl.10} parent=31 // pred_check
        %p2064 = pneg %p233
      $region38: #{_forward_impl.10} parent=31 // pred_check_branch
        %2066 = sbr.rel (%p2064) target = $region40
      $region39: #{_forward_impl.10} parent=31 // pred_region
        %v2067 = vld [vmem:[#allocation2] sm:$0xff]
        %v2068 = vld [vmem:[#allocation2 + $0x8] sm:$0xff]
        %v2069 = vld [vmem:[#allocation2 + $0x10] sm:$0xff]
        %v2070 = vld [vmem:[#allocation2 + $0x18] sm:$0xff]
        %v2071 = vld [vmem:[#allocation2 + $0x20] sm:$0xff]
        %v2072 = vld [vmem:[#allocation2 + $0x28] sm:$0xff]
        %v2073 = vld [vmem:[#allocation2 + $0x30] sm:$0xff]
        %v2074 = vld [vmem:[#allocation2 + $0x38] sm:$0xff]
        %v2075 = vld [vmem:[#allocation2 + $0x40] sm:$0xff]
        %v2076 = vld [vmem:[#allocation2 + $0x48] sm:$0xff]
        %v2077 = vld [vmem:[#allocation2 + $0x50] sm:$0xff]
        %v2078 = vld [vmem:[#allocation2 + $0x58] sm:$0xff]
        %v2079 = vld [vmem:[#allocation2 + $0x60] sm:$0xff]
        %v2080 = vld [vmem:[#allocation2 + $0x68] sm:$0xff]
        %v2081 = vld [vmem:[#allocation2 + $0x70] sm:$0xff]
        %v2082 = vld [vmem:[#allocation2 + $0x78] sm:$0xff]
        %v2083 = vld [vmem:[#allocation2 + $0x80] sm:$0xff]
        %v2084 = vld [vmem:[#allocation2 + $0x88] sm:$0xff]
        %v2085 = vld [vmem:[#allocation2 + $0x90] sm:$0xff]
        %v2086 = vld [vmem:[#allocation2 + $0x98] sm:$0xff]
        %v2087 = vld [vmem:[#allocation2 + $0xa0] sm:$0xff]
        %v2088 = vld [vmem:[#allocation2 + $0xa8] sm:$0xff]
        %v2089 = vld [vmem:[#allocation2 + $0xb0] sm:$0xff]
        %v2090 = vld [vmem:[#allocation2 + $0xb8] sm:$0xff]
        %v2091 = vld [vmem:[#allocation2 + $0xc0] sm:$0xff]
        %v2092 = vld [vmem:[#allocation2 + $0xc8] sm:$0xff]
        %v2093 = vld [vmem:[#allocation2 + $0xd0] sm:$0xff]
        %v2094 = vld [vmem:[#allocation2 + $0xd8] sm:$0xff]
        %v2095 = vld [vmem:[#allocation2 + $0xe0] sm:$0xff]
        %v2096 = vld [vmem:[#allocation2 + $0xe8] sm:$0xff]
        %v2097 = vld [vmem:[#allocation2 + $0xf0] sm:$0xff]
        %v2098 = vld [vmem:[#allocation2 + $0xf8] sm:$0xff]
        %v2099 = vld [vmem:[#allocation2 + $0x100] sm:$0xff]
        %v2100 = vld [vmem:[#allocation2 + $0x108] sm:$0xff]
        %v2101 = vld [vmem:[#allocation2 + $0x110] sm:$0xff]
        %v2102 = vld [vmem:[#allocation2 + $0x118] sm:$0xff]
        %v2103 = vld [vmem:[#allocation2 + $0x120] sm:$0xff]
        %v2104 = vld [vmem:[#allocation2 + $0x128] sm:$0xff]
        %v2105 = vld [vmem:[#allocation2 + $0x130] sm:$0xff]
        %v2106 = vld [vmem:[#allocation2 + $0x138] sm:$0xff]
        %v2107 = vld [vmem:[#allocation2 + $0x140] sm:$0xff]
        %v2108 = vld [vmem:[#allocation2 + $0x148] sm:$0xff]
        %v2109 = vld [vmem:[#allocation2 + $0x150] sm:$0xff]
        %v2110 = vld [vmem:[#allocation2 + $0x158] sm:$0xff]
        %v2111 = vld [vmem:[#allocation2 + $0x160] sm:$0xff]
        %v2112 = vld [vmem:[#allocation2 + $0x168] sm:$0xff]
        %v2113 = vld [vmem:[#allocation2 + $0x170] sm:$0xff]
        %v2114 = vld [vmem:[#allocation2 + $0x178] sm:$0xff]
        %v2115 = vld [vmem:[#allocation2 + $0x180] sm:$0xff]
        %v2116 = vld [vmem:[#allocation2 + $0x188] sm:$0xff]
        %v2117 = vld [vmem:[#allocation2 + $0x190] sm:$0xff]
        %v2118 = vld [vmem:[#allocation2 + $0x198] sm:$0xff]
        %v2119 = vld [vmem:[#allocation2 + $0x1a0] sm:$0xff]
        %v2120 = vld [vmem:[#allocation2 + $0x1a8] sm:$0xff]
        %v2121 = vld [vmem:[#allocation2 + $0x1b0] sm:$0xff]
        %v2122 = vld [vmem:[#allocation2 + $0x1b8] sm:$0xff]
        %v2123 = vld [vmem:[#allocation2 + $0x1c0] sm:$0xff]
        %v2124 = vld [vmem:[#allocation2 + $0x1c8] sm:$0xff]
        %v2125 = vld [vmem:[#allocation2 + $0x1d0] sm:$0xff]
        %v2126 = vld [vmem:[#allocation2 + $0x1d8] sm:$0xff]
        %v2127 = vld [vmem:[#allocation2 + $0x1e0] sm:$0xff]
        %v2128 = vld [vmem:[#allocation2 + $0x1e8] sm:$0xff]
        %v2129 = vld [vmem:[#allocation2 + $0x1f0] sm:$0xff]
        %v2130 = vld [vmem:[#allocation2 + $0x1f8] sm:$0xff]
        %v2131 = vld [vmem:[%s2] sm:$0x3]
        %v2133 = vlaneseq
        %v2134 = vshrl.u32 %v2133, 7
        %v2135 = vsub.s32 0, %v2134
        %v2136 = vrot.slane %v2131, %v2135
        %v2137 = vlaneseq
        %v2138 = vshrl.u32 %v2137, 7
        %v2139 = vsub.s32 1, %v2138
        %v2140 = vrot.slane %v2131, %v2139
        %v2143 = vadd.f32 %v2067, %v2136
        %v2144 = vadd.f32 %v2068, %v2140
        %v2145 = vadd.f32 %v2069, %v2136
        %v2146 = vadd.f32 %v2070, %v2140
        %v2147 = vadd.f32 %v2071, %v2136
        %v2148 = vadd.f32 %v2072, %v2140
        %v2149 = vadd.f32 %v2073, %v2136
        %v2150 = vadd.f32 %v2074, %v2140
        %v2151 = vadd.f32 %v2075, %v2136
        %v2152 = vadd.f32 %v2076, %v2140
        %v2153 = vadd.f32 %v2077, %v2136
        %v2154 = vadd.f32 %v2078, %v2140
        %v2155 = vadd.f32 %v2079, %v2136
        %v2156 = vadd.f32 %v2080, %v2140
        %v2157 = vadd.f32 %v2081, %v2136
        %v2158 = vadd.f32 %v2082, %v2140
        %v2159 = vadd.f32 %v2083, %v2136
        %v2160 = vadd.f32 %v2084, %v2140
        %v2161 = vadd.f32 %v2085, %v2136
        %v2162 = vadd.f32 %v2086, %v2140
        %v2163 = vadd.f32 %v2087, %v2136
        %v2164 = vadd.f32 %v2088, %v2140
        %v2165 = vadd.f32 %v2089, %v2136
        %v2166 = vadd.f32 %v2090, %v2140
        %v2167 = vadd.f32 %v2091, %v2136
        %v2168 = vadd.f32 %v2092, %v2140
        %v2169 = vadd.f32 %v2093, %v2136
        %v2170 = vadd.f32 %v2094, %v2140
        %v2171 = vadd.f32 %v2095, %v2136
        %v2172 = vadd.f32 %v2096, %v2140
        %v2173 = vadd.f32 %v2097, %v2136
        %v2174 = vadd.f32 %v2098, %v2140
        %v2175 = vadd.f32 %v2099, %v2136
        %v2176 = vadd.f32 %v2100, %v2140
        %v2177 = vadd.f32 %v2101, %v2136
        %v2178 = vadd.f32 %v2102, %v2140
        %v2179 = vadd.f32 %v2103, %v2136
        %v2180 = vadd.f32 %v2104, %v2140
        %v2181 = vadd.f32 %v2105, %v2136
        %v2182 = vadd.f32 %v2106, %v2140
        %v2183 = vadd.f32 %v2107, %v2136
        %v2184 = vadd.f32 %v2108, %v2140
        %v2185 = vadd.f32 %v2109, %v2136
        %v2186 = vadd.f32 %v2110, %v2140
        %v2187 = vadd.f32 %v2111, %v2136
        %v2188 = vadd.f32 %v2112, %v2140
        %v2189 = vadd.f32 %v2113, %v2136
        %v2190 = vadd.f32 %v2114, %v2140
        %v2191 = vadd.f32 %v2115, %v2136
        %v2192 = vadd.f32 %v2116, %v2140
        %v2193 = vadd.f32 %v2117, %v2136
        %v2194 = vadd.f32 %v2118, %v2140
        %v2195 = vadd.f32 %v2119, %v2136
        %v2196 = vadd.f32 %v2120, %v2140
        %v2197 = vadd.f32 %v2121, %v2136
        %v2198 = vadd.f32 %v2122, %v2140
        %v2199 = vadd.f32 %v2123, %v2136
        %v2200 = vadd.f32 %v2124, %v2140
        %v2201 = vadd.f32 %v2125, %v2136
        %v2202 = vadd.f32 %v2126, %v2140
        %v2203 = vadd.f32 %v2127, %v2136
        %v2204 = vadd.f32 %v2128, %v2140
        %v2205 = vadd.f32 %v2129, %v2136
        %v2206 = vadd.f32 %v2130, %v2140
        %v2207 = vmax.f32 %v2143, 0.0
        %v2208 = vmax.f32 %v2144, 0.0
        %v2209 = vmax.f32 %v2145, 0.0
        %v2210 = vmax.f32 %v2146, 0.0
        %v2211 = vmax.f32 %v2147, 0.0
        %v2212 = vmax.f32 %v2148, 0.0
        %v2213 = vmax.f32 %v2149, 0.0
        %v2214 = vmax.f32 %v2150, 0.0
        %v2215 = vmax.f32 %v2151, 0.0
        %v2216 = vmax.f32 %v2152, 0.0
        %v2217 = vmax.f32 %v2153, 0.0
        %v2218 = vmax.f32 %v2154, 0.0
        %v2219 = vmax.f32 %v2155, 0.0
        %v2220 = vmax.f32 %v2156, 0.0
        %v2221 = vmax.f32 %v2157, 0.0
        %v2222 = vmax.f32 %v2158, 0.0
        %v2223 = vmax.f32 %v2159, 0.0
        %v2224 = vmax.f32 %v2160, 0.0
        %v2225 = vmax.f32 %v2161, 0.0
        %v2226 = vmax.f32 %v2162, 0.0
        %v2227 = vmax.f32 %v2163, 0.0
        %v2228 = vmax.f32 %v2164, 0.0
        %v2229 = vmax.f32 %v2165, 0.0
        %v2230 = vmax.f32 %v2166, 0.0
        %v2231 = vmax.f32 %v2167, 0.0
        %v2232 = vmax.f32 %v2168, 0.0
        %v2233 = vmax.f32 %v2169, 0.0
        %v2234 = vmax.f32 %v2170, 0.0
        %v2235 = vmax.f32 %v2171, 0.0
        %v2236 = vmax.f32 %v2172, 0.0
        %v2237 = vmax.f32 %v2173, 0.0
        %v2238 = vmax.f32 %v2174, 0.0
        %v2239 = vmax.f32 %v2175, 0.0
        %v2240 = vmax.f32 %v2176, 0.0
        %v2241 = vmax.f32 %v2177, 0.0
        %v2242 = vmax.f32 %v2178, 0.0
        %v2243 = vmax.f32 %v2179, 0.0
        %v2244 = vmax.f32 %v2180, 0.0
        %v2245 = vmax.f32 %v2181, 0.0
        %v2246 = vmax.f32 %v2182, 0.0
        %v2247 = vmax.f32 %v2183, 0.0
        %v2248 = vmax.f32 %v2184, 0.0
        %v2249 = vmax.f32 %v2185, 0.0
        %v2250 = vmax.f32 %v2186, 0.0
        %v2251 = vmax.f32 %v2187, 0.0
        %v2252 = vmax.f32 %v2188, 0.0
        %v2253 = vmax.f32 %v2189, 0.0
        %v2254 = vmax.f32 %v2190, 0.0
        %v2255 = vmax.f32 %v2191, 0.0
        %v2256 = vmax.f32 %v2192, 0.0
        %v2257 = vmax.f32 %v2193, 0.0
        %v2258 = vmax.f32 %v2194, 0.0
        %v2259 = vmax.f32 %v2195, 0.0
        %v2260 = vmax.f32 %v2196, 0.0
        %v2261 = vmax.f32 %v2197, 0.0
        %v2262 = vmax.f32 %v2198, 0.0
        %v2263 = vmax.f32 %v2199, 0.0
        %v2264 = vmax.f32 %v2200, 0.0
        %v2265 = vmax.f32 %v2201, 0.0
        %v2266 = vmax.f32 %v2202, 0.0
        %v2267 = vmax.f32 %v2203, 0.0
        %v2268 = vmax.f32 %v2204, 0.0
        %v2269 = vmax.f32 %v2205, 0.0
        %v2270 = vmax.f32 %v2206, 0.0
        %2271 = vst [vmem:[%s230] sm:$0xff] %v2207
        %2272 = vst [vmem:[%s230 + $0x8] sm:$0xff] %v2208
        %2273 = vst [vmem:[%s230 + $0x10] sm:$0xff] %v2209
        %2274 = vst [vmem:[%s230 + $0x18] sm:$0xff] %v2210
        %2275 = vst [vmem:[%s230 + $0x20] sm:$0xff] %v2211
        %2276 = vst [vmem:[%s230 + $0x28] sm:$0xff] %v2212
        %2277 = vst [vmem:[%s230 + $0x30] sm:$0xff] %v2213
        %2278 = vst [vmem:[%s230 + $0x38] sm:$0xff] %v2214
        %2279 = vst [vmem:[%s230 + $0x40] sm:$0xff] %v2215
        %2280 = vst [vmem:[%s230 + $0x48] sm:$0xff] %v2216
        %2281 = vst [vmem:[%s230 + $0x50] sm:$0xff] %v2217
        %2282 = vst [vmem:[%s230 + $0x58] sm:$0xff] %v2218
        %2283 = vst [vmem:[%s230 + $0x60] sm:$0xff] %v2219
        %2284 = vst [vmem:[%s230 + $0x68] sm:$0xff] %v2220
        %2285 = vst [vmem:[%s230 + $0x70] sm:$0xff] %v2221
        %2286 = vst [vmem:[%s230 + $0x78] sm:$0xff] %v2222
        %2287 = vst [vmem:[%s230 + $0x80] sm:$0xff] %v2223
        %2288 = vst [vmem:[%s230 + $0x88] sm:$0xff] %v2224
        %2289 = vst [vmem:[%s230 + $0x90] sm:$0xff] %v2225
        %2290 = vst [vmem:[%s230 + $0x98] sm:$0xff] %v2226
        %2291 = vst [vmem:[%s230 + $0xa0] sm:$0xff] %v2227
        %2292 = vst [vmem:[%s230 + $0xa8] sm:$0xff] %v2228
        %2293 = vst [vmem:[%s230 + $0xb0] sm:$0xff] %v2229
        %2294 = vst [vmem:[%s230 + $0xb8] sm:$0xff] %v2230
        %2295 = vst [vmem:[%s230 + $0xc0] sm:$0xff] %v2231
        %2296 = vst [vmem:[%s230 + $0xc8] sm:$0xff] %v2232
        %2297 = vst [vmem:[%s230 + $0xd0] sm:$0xff] %v2233
        %2298 = vst [vmem:[%s230 + $0xd8] sm:$0xff] %v2234
        %2299 = vst [vmem:[%s230 + $0xe0] sm:$0xff] %v2235
        %2300 = vst [vmem:[%s230 + $0xe8] sm:$0xff] %v2236
        %2301 = vst [vmem:[%s230 + $0xf0] sm:$0xff] %v2237
        %2302 = vst [vmem:[%s230 + $0xf8] sm:$0xff] %v2238
        %2303 = vst [vmem:[%s230 + $0x100] sm:$0xff] %v2239
        %2304 = vst [vmem:[%s230 + $0x108] sm:$0xff] %v2240
        %2305 = vst [vmem:[%s230 + $0x110] sm:$0xff] %v2241
        %2306 = vst [vmem:[%s230 + $0x118] sm:$0xff] %v2242
        %2307 = vst [vmem:[%s230 + $0x120] sm:$0xff] %v2243
        %2308 = vst [vmem:[%s230 + $0x128] sm:$0xff] %v2244
        %2309 = vst [vmem:[%s230 + $0x130] sm:$0xff] %v2245
        %2310 = vst [vmem:[%s230 + $0x138] sm:$0xff] %v2246
        %2311 = vst [vmem:[%s230 + $0x140] sm:$0xff] %v2247
        %2312 = vst [vmem:[%s230 + $0x148] sm:$0xff] %v2248
        %2313 = vst [vmem:[%s230 + $0x150] sm:$0xff] %v2249
        %2314 = vst [vmem:[%s230 + $0x158] sm:$0xff] %v2250
        %2315 = vst [vmem:[%s230 + $0x160] sm:$0xff] %v2251
        %2316 = vst [vmem:[%s230 + $0x168] sm:$0xff] %v2252
        %2317 = vst [vmem:[%s230 + $0x170] sm:$0xff] %v2253
        %2318 = vst [vmem:[%s230 + $0x178] sm:$0xff] %v2254
        %2319 = vst [vmem:[%s230 + $0x180] sm:$0xff] %v2255
        %2320 = vst [vmem:[%s230 + $0x188] sm:$0xff] %v2256
        %2321 = vst [vmem:[%s230 + $0x190] sm:$0xff] %v2257
        %2322 = vst [vmem:[%s230 + $0x198] sm:$0xff] %v2258
        %2323 = vst [vmem:[%s230 + $0x1a0] sm:$0xff] %v2259
        %2324 = vst [vmem:[%s230 + $0x1a8] sm:$0xff] %v2260
        %2325 = vst [vmem:[%s230 + $0x1b0] sm:$0xff] %v2261
        %2326 = vst [vmem:[%s230 + $0x1b8] sm:$0xff] %v2262
        %2327 = vst [vmem:[%s230 + $0x1c0] sm:$0xff] %v2263
        %2328 = vst [vmem:[%s230 + $0x1c8] sm:$0xff] %v2264
        %2329 = vst [vmem:[%s230 + $0x1d0] sm:$0xff] %v2265
        %2330 = vst [vmem:[%s230 + $0x1d8] sm:$0xff] %v2266
        %2331 = vst [vmem:[%s230 + $0x1e0] sm:$0xff] %v2267
        %2332 = vst [vmem:[%s230 + $0x1e8] sm:$0xff] %v2268
        %2333 = vst [vmem:[%s230 + $0x1f0] sm:$0xff] %v2269
        %2334 = vst [vmem:[%s230 + $0x1f8] sm:$0xff] %v2270
      $region40: #{_forward_impl.10} parent=31 // pred_fallthru
        _
      %s2335 = smul.u32 32, %s18
      %p2336 = scmp.lt.s32.totalorder %s2335, 63
      %s2337 = scalar_select %p2336, %s2335, 63
      %s2338 = smul.addr %s2337, 2
      %s2339 = smul.addr %s2338, 8
      %s2340 = scalar_lea.vmem %s3, %s2339
      // Predicated region
      $region41: #{_forward_impl.10} parent=31 // pred_check
        %p2341 = pneg %p119
      $region42: #{_forward_impl.10} parent=31 // pred_check_branch
        %2343 = sbr.rel (%p2341) target = $region44
      $region43: #{_forward_impl.10} parent=31 // pred_region
        %s2344 = smul.u32 32, %s18
      $region44: #{_forward_impl.10} parent=31 // pred_fallthru
        _
    $region32: #{_forward_impl.10} parent=5 // pred_fallthru
      _
    %p2345 = scmp.le.s32.totalorder 2, %s9
    // Predicated region
    $region45: #{_forward_impl.10} parent=5 // pred_check
      %p2346 = pneg %p2345
    $region46: #{_forward_impl.10} parent=5 // pred_check_branch
      %2348 = sbr.rel (%p2346) target = $region48
    $region47: #{_forward_impl.10} parent=5 // pred_region
      %s2349 = ssub.s32 %s9, 2
      // Predicated region
      $region49: #{_forward_impl.10} parent=47 // pred_check
        %p2350 = pneg %p125
      $region50: #{_forward_impl.10} parent=47 // pred_check_branch
        %2352 = sbr.rel (%p2350) target = $region52
      $region51: #{_forward_impl.10} parent=47 // pred_region
        %s2353 = smul.u32 32, %s20
        %p2354 = scmp.lt.s32.totalorder %s2353, 63
        %s2355 = scalar_select %p2354, %s2353, 63
        %s2356 = smul.addr %s2355, 2
        %s2357 = smul.addr %s2356, 8
        %s2358 = scalar_lea.vmem %s3, %s2357
      $region52: #{_forward_impl.10} parent=47 // pred_fallthru
        _
    $region48: #{_forward_impl.10} parent=5 // pred_fallthru
      _
  $region6: #{_forward_impl.10} parent=0 // loop_footer
    %s13 = sadd.s32 1, %s9
  $region7: #{_forward_impl.10} parent=0 // loop_footer_branch
    %8 = sbr.rel target = $region3
  $region8: #{_forward_impl.10} parent=0 // loop_exit
    _

</llo_original>
